<compile_context>
chip_gen: v5e
topology: v5e:2x2
jax: 0.10.0
libtpu: 0.0.40
codegen_flags: <defaults>
</compile_context>

<pallas_src>
import functools

import jax
import jax.numpy as jnp
from jax.experimental import pallas as pl
from jax.experimental.pallas import tpu as pltpu

EPS = 1e-5


def _round_up(x, m):
    return ((x + m - 1) // m) * m


def _detect_vmem_capacity():
    try:
        info = pltpu.get_tpu_info()
        cap = getattr(info, "vmem_capacity_bytes", None)
        if cap:
            return int(cap)
    except Exception:
        pass
    return 64 * 1024 * 1024  # conservative (v7x-sized) fallback


_VMEM_CAP = _detect_vmem_capacity()
# Mem-bound streaming passes: ~1024 rows reaches ~85% of the HBM roofline on
# v5e/v6e (128 MiB VMEM); keep 512 on 64 MiB-VMEM chips (v7x).
ROW_TILE_TARGET = 1024 if _VMEM_CAP > (64 << 20) else 512
# Scoped VMEM limit: ~3/4 of physical, capped at 96 MiB (48 MiB on v7x).
VMEM_LIMIT_BYTES = int(min(96 << 20, (_VMEM_CAP * 3) // 4))


def _row_tiling(m, target=None):
    """Pick (tile, padded_rows): tile is a multiple of 8 that divides padded_rows.

    Avoids the 'largest divisor of m' trap (tiny tiles or whole-array blocks);
    padding waste is bounded by ~8 rows per tile.
    """
    if target is None:
        target = ROW_TILE_TARGET
    target = max(8, target - target % 8)
    nt = max(1, (m + target - 1) // target)
    tm = _round_up((m + nt - 1) // nt, 8)
    return tm, nt * tm


def _split2(n):
    """2-way 'parallel' split of a grid extent (v7x megacore); 1 if it doesn't divide."""
    return 2 if (n >= 2 and n % 2 == 0) else 1


# ---------------- Pallas kernels ----------------
#
# BatchNorm needs full-batch statistics, so each BN is split into two passes:
#   pass 1: matmul (MXU) + per-channel sum / sum-of-squares accumulated across
#           the inner ("arbitrary") grid axis into a per-parallel-slice
#           resident VMEM output (pl.when init); partials reduced in wrapper.
#   pass 2: apply (z - mean) * rsqrt(var + eps) * gamma + beta, ReLU (and for
#           the highway block: sigmoid gate + blend) per row tile.

def pre_matmul_kernel(x_ref, w_ref, z_ref, sum_ref, sq_ref):
    """pre_layer 1x1 conv (plain matmul) + per-slice BN statistics."""
    z = jnp.dot(x_ref[...], w_ref[...], preferred_element_type=jnp.float32)
    z_ref[...] = z

    @pl.when(pl.program_id(1) == 0)
    def _():
        sum_ref[...] = jnp.zeros_like(sum_ref)
        sq_ref[...] = jnp.zeros_like(sq_ref)

    sum_ref[...] += jnp.sum(z, axis=0, keepdims=True)
    sq_ref[...] += jnp.sum(z * z, axis=0, keepdims=True)


def bn_relu_kernel(z_ref, sum_ref, sq_ref, g_ref, b_ref, o_ref, *, count):
    """Apply training-mode BN + ReLU per row tile (stats already reduced)."""
    inv_n = 1.0 / count
    mean = sum_ref[...] * inv_n
    var = jnp.maximum(sq_ref[...] * inv_n - mean * mean, 0.0)
    inv = jax.lax.rsqrt(var + EPS)
    o_ref[...] = jnp.maximum(
        (z_ref[...] - mean) * inv * g_ref[...] + b_ref[...], 0.0)


def conv_stats_kernel(y_ref, w_ref, z_ref, sum_ref, sq_ref, *,
                      k, wp2, r_out, w_real, cp):
    """k x k 'same' conv for block|gate fused on the output axis.

    The padded image is pre-flattened to rows = hp2*wp2 (+ k-1 zero tail rows)
    so every tap (dh, dw) is a contiguous-row pl.ds slice at offset dh*wp2+dw
    (no per-tap window+reshape copies).  The k*k tap matmuls are accumulated
    in a live f32 value and stored to z_ref exactly once.  Output rows whose
    column index >= w_real are junk (pad columns) and are masked out of the
    BN statistics (they are discarded by the wrapper at the end).
    """
    def tap(t):
        dh, dw = divmod(t, k)
        lhs = y_ref[pl.ds(dh * wp2 + dw, r_out), :]
        return jnp.dot(lhs, w_ref[pl.ds(t * cp, cp), :],
                       preferred_element_type=jnp.float32)

    z = tap(0)
    for t in range(1, k * k):
        z = z + tap(t)
    z_ref[...] = z

    col = jax.lax.broadcasted_iota(jnp.int32, (r_out, 1), 0) % wp2
    zm = jnp.where(col < w_real, z, 0.0)

    @pl.when(pl.program_id(1) == 0)
    def _():
        sum_ref[...] = jnp.zeros_like(sum_ref)
        sq_ref[...] = jnp.zeros_like(sq_ref)

    sum_ref[...] += jnp.sum(zm, axis=0, keepdims=True)
    sq_ref[...] += jnp.sum(zm * zm, axis=0, keepdims=True)


def highway_out_kernel(z_ref, y_ref, sum_ref, sq_ref, g_ref, b_ref, o_ref, *,
                       count, cp):
    """BN + ReLU on fused block|gate pre-activations, sigmoid gate, blend."""
    inv_n = 1.0 / count
    mean = sum_ref[...] * inv_n
    var = jnp.maximum(sq_ref[...] * inv_n - mean * mean, 0.0)
    inv = jax.lax.rsqrt(var + EPS)
    hidden = jnp.maximum(
        (z_ref[...] - mean) * inv * g_ref[...] + b_ref[...], 0.0)
    hb = hidden[:, :cp]                      # block path
    gate = jax.nn.sigmoid(hidden[:, cp:])    # gate path
    o_ref[...] = gate * hb + (1.0 - gate) * y_ref[...]


# ---------------- pallas_call wrappers ----------------

def _cparams(semantics):
    return pltpu.CompilerParams(dimension_semantics=semantics,
                                vmem_limit_bytes=VMEM_LIMIT_BYTES)


def run_pre_matmul(x, w_p, tm):
    m, cin = x.shape
    cp = w_p.shape[1]
    nt = m // tm
    npar = _split2(nt)
    chunk = nt // npar
    return pl.pallas_call(
        pre_matmul_kernel,
        out_shape=(jax.ShapeDtypeStruct((m, cp), jnp.float32),
                   jax.ShapeDtypeStruct((npar, 1, cp), jnp.float32),
                   jax.ShapeDtypeStruct((npar, 1, cp), jnp.float32)),
        grid_spec=pltpu.PrefetchScalarGridSpec(
            num_scalar_prefetch=0,
            grid=(npar, chunk),
            in_specs=[pl.BlockSpec((tm, cin), lambda p, i: (p * chunk + i, 0)),
                      pl.BlockSpec((cin, cp), lambda p, i: (0, 0))],
            out_specs=[pl.BlockSpec((tm, cp), lambda p, i: (p * chunk + i, 0)),
                       pl.BlockSpec((None, 1, cp), lambda p, i: (p, 0, 0)),
                       pl.BlockSpec((None, 1, cp), lambda p, i: (p, 0, 0))]),
        compiler_params=_cparams(("parallel", "arbitrary")),
        cost_estimate=pl.CostEstimate(
            flops=2 * m * cin * cp, transcendentals=0,
            bytes_accessed=(x.dtype.itemsize * (m * cin + cin * cp)
                            + 4 * m * cp)),
    )(x, w_p)


def run_bn_relu(z, s, q, g, b, tm, count):
    m, cp = z.shape
    kernel = functools.partial(bn_relu_kernel, count=float(count))
    return pl.pallas_call(
        kernel,
        out_shape=jax.ShapeDtypeStruct((m, cp), jnp.float32),
        grid_spec=pltpu.PrefetchScalarGridSpec(
            num_scalar_prefetch=0,
            grid=(m // tm,),
            in_specs=[pl.BlockSpec((tm, cp), lambda i: (i, 0)),
                      pl.BlockSpec((1, cp), lambda i: (0, 0)),
                      pl.BlockSpec((1, cp), lambda i: (0, 0)),
                      pl.BlockSpec((1, cp), lambda i: (0, 0)),
                      pl.BlockSpec((1, cp), lambda i: (0, 0))],
            out_specs=pl.BlockSpec((tm, cp), lambda i: (i, 0))),
        compiler_params=_cparams(("parallel",)),
        cost_estimate=pl.CostEstimate(
            flops=6 * m * cp, transcendentals=0,
            bytes_accessed=4 * (2 * m * cp + 4 * cp)),
    )(z, s, q, g, b)


def run_conv_stats(y_conv, w_fused, n, k, wp2, r_in, r_out, w_real, cp):
    npar = _split2(n)
    chunk = n // npar
    kk = k * k
    kernel = functools.partial(conv_stats_kernel, k=k, wp2=wp2, r_out=r_out,
                               w_real=w_real, cp=cp)
    return pl.pallas_call(
        kernel,
        out_shape=(jax.ShapeDtypeStruct((n, r_out, 2 * cp), jnp.float32),
                   jax.ShapeDtypeStruct((npar, 1, 2 * cp), jnp.float32),
                   jax.ShapeDtypeStruct((npar, 1, 2 * cp), jnp.float32)),
        grid_spec=pltpu.PrefetchScalarGridSpec(
            num_scalar_prefetch=0,
            grid=(npar, chunk),
            in_specs=[pl.BlockSpec((None, r_in, cp),
                                   lambda p, i: (p * chunk + i, 0, 0)),
                      pl.BlockSpec((kk * cp, 2 * cp), lambda p, i: (0, 0))],
            out_specs=[pl.BlockSpec((None, r_out, 2 * cp),
                                    lambda p, i: (p * chunk + i, 0, 0)),
                       pl.BlockSpec((None, 1, 2 * cp), lambda p, i: (p, 0, 0)),
                       pl.BlockSpec((None, 1, 2 * cp), lambda p, i: (p, 0, 0))]),
        compiler_params=_cparams(("parallel", "arbitrary")),
        cost_estimate=pl.CostEstimate(
            flops=2 * n * r_out * kk * cp * 2 * cp, transcendentals=0,
            bytes_accessed=(y_conv.dtype.itemsize * n * r_in * cp
                            + w_fused.dtype.itemsize * kk * cp * 2 * cp
                            + 4 * n * r_out * 2 * cp)),
    )(y_conv, w_fused)


def run_highway_out(z, y_res, s, q, g, b, tm, count, cp):
    m = z.shape[0]
    kernel = functools.partial(highway_out_kernel, count=float(count), cp=cp)
    return pl.pallas_call(
        kernel,
        out_shape=jax.ShapeDtypeStruct((m, cp), jnp.float32),
        grid_spec=pltpu.PrefetchScalarGridSpec(
            num_scalar_prefetch=0,
            grid=(m // tm,),
            in_specs=[pl.BlockSpec((tm, 2 * cp), lambda i: (i, 0)),
                      pl.BlockSpec((tm, cp), lambda i: (i, 0)),
                      pl.BlockSpec((1, 2 * cp), lambda i: (0, 0)),
                      pl.BlockSpec((1, 2 * cp), lambda i: (0, 0)),
                      pl.BlockSpec((1, 2 * cp), lambda i: (0, 0)),
                      pl.BlockSpec((1, 2 * cp), lambda i: (0, 0))],
            out_specs=pl.BlockSpec((tm, cp), lambda i: (i, 0))),
        compiler_params=_cparams(("parallel",)),
        cost_estimate=pl.CostEstimate(
            flops=12 * m * cp, transcendentals=m * cp,
            bytes_accessed=4 * (m * 2 * cp + 2 * m * cp + 8 * cp)),
    )(z, y_res, s, q, g, b)


# ---------------- JAX wrapper (NCHW <-> lane-padded NHWC plumbing) ----------------

@functools.partial(jax.jit, static_argnames=("in_channel", "out_channel",
                                              "kernel_size", "use_bf16"))
def highway_layer(x_nchw, params, in_channel, out_channel, kernel_size,
                  use_bf16=False):
    n, _, h, w = x_nchw.shape
    k = kernel_size
    assert k % 2 == 1, "only odd ('same'-padding) kernel sizes are supported"
    kk = k * k
    pad = (k - 1) // 2
    m1 = n * h * w
    # lane padding: per-path width cp so the fused block|gate width 2*cp is a
    # multiple of 128 lanes (lane-dense MXU / store path).
    cp = 64 if out_channel <= 64 else _round_up(out_channel, 128)
    mm_dtype = jnp.bfloat16 if use_bf16 else jnp.float32

    tm1, m1_pad = _row_tiling(m1)

    def pad_cols(a):
        return jnp.pad(a, ((0, 0), (0, cp - a.shape[1])))

    x_flat = jnp.transpose(x_nchw, (0, 2, 3, 1)).astype(jnp.float32)
    x_flat = x_flat.reshape(m1, in_channel)

    # ---- pre_layer: Identity, or 1x1 Conv + BN + ReLU (two-pass BN) ----
    if in_channel == out_channel:
        y_flat = jnp.pad(x_flat, ((0, 0), (0, cp - in_channel)))   # nn.Identity
    else:
        # zero row padding is stats-neutral (conv has no bias -> z rows = 0)
        x_rows = x_flat if m1_pad == m1 else jnp.pad(
            x_flat, ((0, m1_pad - m1), (0, 0)))
        z_pre, s_p, q_p = run_pre_matmul(
            x_rows.astype(mm_dtype),
            pad_cols(params["w_pre"]).astype(mm_dtype), tm1)
        s_pre = jnp.sum(s_p, axis=0)          # reduce per-core partial stats
        q_pre = jnp.sum(q_p, axis=0)
        y_full = run_bn_relu(z_pre, s_pre, q_pre,
                             pad_cols(params["g_pre"]), pad_cols(params["b_pre"]),
                             tm1, m1)
        y_flat = y_full if m1_pad == m1 else y_full[:m1]

    # ---- fused (block | gate) conv weight / BN params, zero / lane padded ----
    wb = params["w_block"].reshape(kk, out_channel, out_channel)
    wg = params["w_gate"].reshape(kk, out_channel, out_channel)
    wb_p = jnp.zeros((kk, cp, cp), jnp.float32).at[:, :out_channel, :out_channel].set(wb)
    wg_p = jnp.zeros((kk, cp, cp), jnp.float32).at[:, :out_channel, :out_channel].set(wg)
    w_fused = jnp.concatenate([wb_p, wg_p], axis=-1).reshape(kk * cp, 2 * cp)
    g_fused = jnp.concatenate([pad_cols(params["g_block"]),
                               pad_cols(params["g_gate"])], axis=-1)
    b_fused = jnp.concatenate([pad_cols(params["b_block"]),
                               pad_cols(params["b_gate"])], axis=-1)

    # ---- highway block: conv + stats, then BN / ReLU / sigmoid / blend ----
    hp2, wp2 = h + 2 * pad, w + 2 * pad
    r_out = h * wp2                 # conv output rows per image (cols >= w are junk)
    r_in = hp2 * wp2 + (k - 1)      # flattened padded image + zero tail for junk taps
    y_nhwc = y_flat.reshape(n, h, w, cp)
    y_conv = jnp.pad(y_nhwc, ((0, 0), (pad, pad), (pad, pad), (0, 0)))
    y_conv = jnp.pad(y_conv.reshape(n, hp2 * wp2, cp),
                     ((0, 0), (0, k - 1), (0, 0)))
    y_res = jnp.pad(y_nhwc, ((0, 0), (0, 0), (0, k - 1), (0, 0))
                    ).reshape(n * r_out, cp)

    z_bg, s_b, q_b = run_conv_stats(y_conv.astype(mm_dtype),
                                    w_fused.astype(mm_dtype),
                                    n, k, wp2, r_in, r_out, w, cp)
    s_bg = jnp.sum(s_b, axis=0)
    q_bg = jnp.sum(q_b, axis=0)

    m2 = n * r_out
    tm2, m2_pad = _row_tiling(m2)
    z_flat = z_bg.reshape(m2, 2 * cp)
    if m2_pad != m2:
        z_flat = jnp.pad(z_flat, ((0, m2_pad - m2), (0, 0)))
        y_res = jnp.pad(y_res, ((0, m2_pad - m2), (0, 0)))
    out_p = run_highway_out(z_flat, y_res, s_bg, q_bg, g_fused, b_fused,
                            tm2, m1, cp)
    if m2_pad != m2:
        out_p = out_p[:m2]
    out = out_p.reshape(n, h, wp2, cp)[:, :, :w, :out_channel]
    return jnp.transpose(out, (0, 3, 1, 2))                        # back to NCHW


# ---------------- reference (pure JAX, for sanity check) ----------------

def _bn_relu_ref(z, gamma, beta):
    mean = jnp.mean(z, axis=0, keepdims=True)
    var = jnp.mean((z - mean) ** 2, axis=0, keepdims=True)
    return jnp.maximum((z - mean) * jax.lax.rsqrt(var + EPS) * gamma + beta, 0.0)


def extract_patches(y_nhwc, k):
    n, h, w, c = y_nhwc.shape
    pad = (k - 1) // 2
    yp = jnp.pad(y_nhwc, ((0, 0), (pad, pad), (pad, pad), (0, 0)))
    cols = []
    for dh in range(k):
        for dw in range(k):
            cols.append(yp[:, dh:dh + h, dw:dw + w, :])
    return jnp.concatenate(cols, axis=-1).reshape(n * h * w, k * k * c)


def highway_layer_ref(x_nchw, params, in_channel, out_channel, kernel_size):
    n, c, h, w = x_nchw.shape
    x = jnp.transpose(x_nchw, (0, 2, 3, 1)).astype(jnp.float32)
    x_flat = x.reshape(n * h * w, c)
    if in_channel == out_channel:
        y_flat = x_flat
    else:
        y_flat = _bn_relu_ref(x_flat @ params["w_pre"], params["g_pre"], params["b_pre"])
    y = y_flat.reshape(n, h, w, out_channel)
    patches = extract_patches(y, kernel_size)
    hb = _bn_relu_ref(patches @ params["w_block"], params["g_block"], params["b_block"])
    hg = _bn_relu_ref(patches @ params["w_gate"], params["g_gate"], params["b_gate"])
    g = jax.nn.sigmoid(hg)
    out = (g * hb + (1.0 - g) * y_flat).reshape(n, h, w, out_channel)
    return jnp.transpose(out, (0, 3, 1, 2))


# ---------------- parameter construction ----------------

def init_params(key, in_channel, out_channel, kernel_size):
    k1, k2, k3 = jax.random.split(key, 3)
    kk = kernel_size * kernel_size
    params = {}
    # Conv weights stored in im2col layout: [kh*kw*Cin, Cout].
    params["w_pre"] = (jax.random.normal(k1, (in_channel, out_channel), jnp.float32)
                       / jnp.sqrt(in_channel))
    params["g_pre"] = jnp.ones((1, out_channel), jnp.float32)
    params["b_pre"] = jnp.zeros((1, out_channel), jnp.float32)
    params["w_block"] = (jax.random.normal(k2, (kk * out_channel, out_channel), jnp.float32)
                         / jnp.sqrt(kk * out_channel))
    params["g_block"] = jnp.ones((1, out_channel), jnp.float32)
    params["b_block"] = jnp.zeros((1, out_channel), jnp.float32)
    params["w_gate"] = (jax.random.normal(k3, (kk * out_channel, out_channel), jnp.float32)
                        / jnp.sqrt(kk * out_channel))
    params["g_gate"] = jnp.ones((1, out_channel), jnp.float32)
    params["b_gate"] = jnp.zeros((1, out_channel), jnp.float32)
    return params


if __name__ == "__main__":
    key = jax.random.PRNGKey(0)
    kernel_size = 3
    N, H, W = 2, 16, 16

    # (4, 8): pre_layer = Conv+BN+ReLU;  (8, 8): pre_layer = nn.Identity
    for (cin, cout) in [(4, 8), (8, 8)]:
        kx, kp, key = jax.random.split(key, 3)
        x = jax.random.normal(kx, (N, cin, H, W), jnp.float32)     # NCHW like PyTorch
        params = init_params(kp, cin, cout, kernel_size)

        out = jax.block_until_ready(highway_layer(x, params, cin, cout, kernel_size))
        ref = highway_layer_ref(x, params, cin, cout, kernel_size)

        assert out.shape == (N, cout, H, W)
        err = float(jnp.max(jnp.abs(out - ref)))
        assert err < 5e-4, f"mismatch vs pure-JAX reference: {err}"

    print("KERNEL_OK")
</pallas_src>

<mosaic_0001>
module attributes {stable_mosaic.version = 11 : i64} {
  func.func @bn_relu_kernel(%arg0: i32, %arg1: memref<512x64xf32, #tpu.memory_space<vmem>>, %arg2: memref<1x64xf32, #tpu.memory_space<vmem>>, %arg3: memref<1x64xf32, #tpu.memory_space<vmem>>, %arg4: memref<1x64xf32, #tpu.memory_space<vmem>>, %arg5: memref<1x64xf32, #tpu.memory_space<vmem>>, %arg6: memref<512x64xf32, #tpu.memory_space<vmem>>) attributes {dimension_semantics = [#tpu.dimension_semantics<parallel>], iteration_bounds = array<i64: 1>, scalar_prefetch = 0 : i64, scratch_operands = 0 : i64, tpu.core_type = #tpu.core_type<tc>, window_params = [{transform_indices = @transform_0, window_bounds = array<i64: 512, 64>}, {pipeline_mode = #tpu.pipeline_mode<synchronous>, transform_indices = @transform_1, window_bounds = array<i64: 1, 64>}, {pipeline_mode = #tpu.pipeline_mode<synchronous>, transform_indices = @transform_2, window_bounds = array<i64: 1, 64>}, {pipeline_mode = #tpu.pipeline_mode<synchronous>, transform_indices = @transform_3, window_bounds = array<i64: 1, 64>}, {pipeline_mode = #tpu.pipeline_mode<synchronous>, transform_indices = @transform_4, window_bounds = array<i64: 1, 64>}, {transform_indices = @transform_5, window_bounds = array<i64: 512, 64>}]} {
    %c0 = arith.constant 0 : index
    %c0_0 = arith.constant 0 : index
    %0 = vector.load %arg2[%c0, %c0_0] : memref<1x64xf32, #tpu.memory_space<vmem>>, vector<1x64xf32>
    %cst = arith.constant 0.001953125 : f32
    %1 = vector.broadcast %cst : f32 to vector<1x64xf32>
    %2 = arith.mulf %0, %1 : vector<1x64xf32>
    %c0_1 = arith.constant 0 : index
    %c0_2 = arith.constant 0 : index
    %3 = vector.load %arg3[%c0_1, %c0_2] : memref<1x64xf32, #tpu.memory_space<vmem>>, vector<1x64xf32>
    %cst_3 = arith.constant 0.001953125 : f32
    %4 = vector.broadcast %cst_3 : f32 to vector<1x64xf32>
    %5 = arith.mulf %3, %4 : vector<1x64xf32>
    %6 = arith.mulf %2, %2 : vector<1x64xf32>
    %7 = arith.subf %5, %6 : vector<1x64xf32>
    %cst_4 = arith.constant 0.000000e+00 : f32
    %8 = vector.broadcast %cst_4 : f32 to vector<1x64xf32>
    %9 = arith.maximumf %7, %8 : vector<1x64xf32>
    %cst_5 = arith.constant 9.99999974E-6 : f32
    %10 = vector.broadcast %cst_5 : f32 to vector<1x64xf32>
    %11 = arith.addf %9, %10 : vector<1x64xf32>
    %12 = math.rsqrt %11 : vector<1x64xf32>
    %c0_6 = arith.constant 0 : index
    %c0_7 = arith.constant 0 : index
    %13 = vector.load %arg1[%c0_6, %c0_7] : memref<512x64xf32, #tpu.memory_space<vmem>>, vector<512x64xf32>
    %14 = vector.broadcast %2 : vector<1x64xf32> to vector<512x64xf32>
    %15 = arith.subf %13, %14 : vector<512x64xf32>
    %16 = vector.broadcast %12 : vector<1x64xf32> to vector<512x64xf32>
    %17 = arith.mulf %15, %16 : vector<512x64xf32>
    %c0_8 = arith.constant 0 : index
    %c0_9 = arith.constant 0 : index
    %18 = vector.load %arg4[%c0_8, %c0_9] : memref<1x64xf32, #tpu.memory_space<vmem>>, vector<1x64xf32>
    %19 = vector.broadcast %18 : vector<1x64xf32> to vector<512x64xf32>
    %20 = arith.mulf %17, %19 : vector<512x64xf32>
    %c0_10 = arith.constant 0 : index
    %c0_11 = arith.constant 0 : index
    %21 = vector.load %arg5[%c0_10, %c0_11] : memref<1x64xf32, #tpu.memory_space<vmem>>, vector<1x64xf32>
    %22 = vector.broadcast %21 : vector<1x64xf32> to vector<512x64xf32>
    %23 = arith.addf %20, %22 : vector<512x64xf32>
    %cst_12 = arith.constant 0.000000e+00 : f32
    %24 = vector.broadcast %cst_12 : f32 to vector<512x64xf32>
    %25 = arith.maximumf %23, %24 : vector<512x64xf32>
    %c0_13 = arith.constant 0 : index
    %c0_14 = arith.constant 0 : index
    %26 = vector.load %arg6[%c0_13, %c0_14] : memref<512x64xf32, #tpu.memory_space<vmem>>, vector<512x64xf32>
    tpu.vector_store %arg6[%c0_13, %c0_14], %25 {strides = array<i32>} : memref<512x64xf32, #tpu.memory_space<vmem>>, vector<512x64xf32>,
    return
  }
  func.func @transform_0(%arg0: i32) -> (i32, i32) {
    %c0_i32 = arith.constant 0 : i32
    %c0_i32_0 = arith.constant 0 : i32
    return %arg0, %c0_i32 : i32, i32
  }
  func.func @transform_1(%arg0: i32) -> (i32, i32) {
    %c0_i32 = arith.constant 0 : i32
    %c0_i32_0 = arith.constant 0 : i32
    %c0_i32_1 = arith.constant 0 : i32
    return %c0_i32, %c0_i32_0 : i32, i32
  }
  func.func @transform_2(%arg0: i32) -> (i32, i32) {
    %c0_i32 = arith.constant 0 : i32
    %c0_i32_0 = arith.constant 0 : i32
    %c0_i32_1 = arith.constant 0 : i32
    return %c0_i32, %c0_i32_0 : i32, i32
  }
  func.func @transform_3(%arg0: i32) -> (i32, i32) {
    %c0_i32 = arith.constant 0 : i32
    %c0_i32_0 = arith.constant 0 : i32
    %c0_i32_1 = arith.constant 0 : i32
    return %c0_i32, %c0_i32_0 : i32, i32
  }
  func.func @transform_4(%arg0: i32) -> (i32, i32) {
    %c0_i32 = arith.constant 0 : i32
    %c0_i32_0 = arith.constant 0 : i32
    %c0_i32_1 = arith.constant 0 : i32
    return %c0_i32, %c0_i32_0 : i32, i32
  }
  func.func @transform_5(%arg0: i32) -> (i32, i32) {
    %c0_i32 = arith.constant 0 : i32
    %c0_i32_0 = arith.constant 0 : i32
    return %arg0, %c0_i32 : i32, i32
  }
}

module attributes {stable_mosaic.version = 11 : i64} {
  func.func @pre_matmul_kernel(%arg0: i32, %arg1: i32, %arg2: memref<512x4xf32, #tpu.memory_space<vmem>>, %arg3: memref<4x64xf32, #tpu.memory_space<vmem>>, %arg4: memref<512x64xf32, #tpu.memory_space<vmem>>, %arg5: memref<1x1x64xf32, #tpu.memory_space<vmem>>, %arg6: memref<1x1x64xf32, #tpu.memory_space<vmem>>) attributes {dimension_semantics = [#tpu.dimension_semantics<parallel>, #tpu.dimension_semantics<arbitrary>], iteration_bounds = array<i64: 1, 1>, scalar_prefetch = 0 : i64, scratch_operands = 0 : i64, tpu.core_type = #tpu.core_type<tc>, window_params = [{transform_indices = @transform_0, window_bounds = array<i64: 512, 4>}, {pipeline_mode = #tpu.pipeline_mode<synchronous>, transform_indices = @transform_1, window_bounds = array<i64: 4, 64>}, {transform_indices = @transform_2, window_bounds = array<i64: 512, 64>}, {transform_indices = @transform_3, window_bounds = array<i64: 1, 1, 64>}, {transform_indices = @transform_4, window_bounds = array<i64: 1, 1, 64>}]} {
    %c0 = arith.constant 0 : index
    %c0_0 = arith.constant 0 : index
    %0 = vector.load %arg2[%c0, %c0_0] : memref<512x4xf32, #tpu.memory_space<vmem>>, vector<512x4xf32>
    %c0_1 = arith.constant 0 : index
    %c0_2 = arith.constant 0 : index
    %1 = vector.load %arg3[%c0_1, %c0_2] : memref<4x64xf32, #tpu.memory_space<vmem>>, vector<4x64xf32>
    %cst = arith.constant dense<0.000000e+00> : vector<512x64xf32>
    %2 = tpu.matmul %0, %1, %cst {dimension_numbers = #tpu.dot_dimension_numbers<[1], [0], [0], [1], [0, 0, 1, 1], [], []>} : vector<512x4xf32>, vector<4x64xf32>, vector<512x64xf32> -> vector<512x64xf32>
    %c0_3 = arith.constant 0 : index
    %c0_4 = arith.constant 0 : index
    %3 = vector.load %arg4[%c0_3, %c0_4] : memref<512x64xf32, #tpu.memory_space<vmem>>, vector<512x64xf32>
    tpu.vector_store %arg4[%c0_3, %c0_4], %2 {strides = array<i32>} : memref<512x64xf32, #tpu.memory_space<vmem>>, vector<512x64xf32>,
    %c0_i32 = arith.constant 0 : i32
    %4 = arith.cmpi eq, %arg1, %c0_i32 : i32
    %5 = arith.extui %4 : i1 to i32
    %c0_i32_5 = arith.constant 0 : i32
    %6 = arith.cmpi ne, %5, %c0_i32_5 : i32
    scf.if %6 {
      %cst_20 = arith.constant 0.000000e+00 : f32
      %24 = vector.broadcast %cst_20 : f32 to vector<1x64xf32>
      %c0_21 = arith.constant 0 : index
      %c0_22 = arith.constant 0 : index
      %c0_23 = arith.constant 0 : index
      %25 = vector.load %arg5[%c0_21, %c0_22, %c0_23] : memref<1x1x64xf32, #tpu.memory_space<vmem>>, vector<1x1x64xf32>
      %26 = vector.shape_cast %25 : vector<1x1x64xf32> to vector<1x64xf32>
      %27 = vector.shape_cast %24 : vector<1x64xf32> to vector<1x1x64xf32>
      tpu.vector_store %arg5[%c0_21, %c0_22, %c0_23], %27 {strides = array<i32>} : memref<1x1x64xf32, #tpu.memory_space<vmem>>, vector<1x1x64xf32>,
      %cst_24 = arith.constant 0.000000e+00 : f32
      %28 = vector.broadcast %cst_24 : f32 to vector<1x64xf32>
      %c0_25 = arith.constant 0 : index
      %c0_26 = arith.constant 0 : index
      %c0_27 = arith.constant 0 : index
      %29 = vector.load %arg6[%c0_25, %c0_26, %c0_27] : memref<1x1x64xf32, #tpu.memory_space<vmem>>, vector<1x1x64xf32>
      %30 = vector.shape_cast %29 : vector<1x1x64xf32> to vector<1x64xf32>
      %31 = vector.shape_cast %28 : vector<1x64xf32> to vector<1x1x64xf32>
      tpu.vector_store %arg6[%c0_25, %c0_26, %c0_27], %31 {strides = array<i32>} : memref<1x1x64xf32, #tpu.memory_space<vmem>>, vector<1x1x64xf32>,
    } else {
    }
    %c0_6 = arith.constant 0 : index
    %c0_7 = arith.constant 0 : index
    %c0_8 = arith.constant 0 : index
    %7 = vector.load %arg5[%c0_6, %c0_7, %c0_8] : memref<1x1x64xf32, #tpu.memory_space<vmem>>, vector<1x1x64xf32>
    %8 = vector.shape_cast %7 : vector<1x1x64xf32> to vector<1x64xf32>
    %cst_9 = arith.constant dense<0.000000e+00> : vector<64xf32>
    %9 = vector.multi_reduction <add>, %2, %cst_9 [0] : vector<512x64xf32> to vector<64xf32>
    %10 = vector.shape_cast %9 : vector<64xf32> to vector<1x64xf32>
    %11 = arith.addf %8, %10 : vector<1x64xf32>
    %c0_10 = arith.constant 0 : index
    %c0_11 = arith.constant 0 : index
    %c0_12 = arith.constant 0 : index
    %12 = vector.load %arg5[%c0_10, %c0_11, %c0_12] : memref<1x1x64xf32, #tpu.memory_space<vmem>>, vector<1x1x64xf32>
    %13 = vector.shape_cast %12 : vector<1x1x64xf32> to vector<1x64xf32>
    %14 = vector.shape_cast %11 : vector<1x64xf32> to vector<1x1x64xf32>
    tpu.vector_store %arg5[%c0_10, %c0_11, %c0_12], %14 {strides = array<i32>} : memref<1x1x64xf32, #tpu.memory_space<vmem>>, vector<1x1x64xf32>,
    %c0_13 = arith.constant 0 : index
    %c0_14 = arith.constant 0 : index
    %c0_15 = arith.constant 0 : index
    %15 = vector.load %arg6[%c0_13, %c0_14, %c0_15] : memref<1x1x64xf32, #tpu.memory_space<vmem>>, vector<1x1x64xf32>
    %16 = vector.shape_cast %15 : vector<1x1x64xf32> to vector<1x64xf32>
    %17 = arith.mulf %2, %2 : vector<512x64xf32>
    %cst_16 = arith.constant dense<0.000000e+00> : vector<64xf32>
    %18 = vector.multi_reduction <add>, %17, %cst_16 [0] : vector<512x64xf32> to vector<64xf32>
    %19 = vector.shape_cast %18 : vector<64xf32> to vector<1x64xf32>
    %20 = arith.addf %16, %19 : vector<1x64xf32>
    %c0_17 = arith.constant 0 : index
    %c0_18 = arith.constant 0 : index
    %c0_19 = arith.constant 0 : index
    %21 = vector.load %arg6[%c0_17, %c0_18, %c0_19] : memref<1x1x64xf32, #tpu.memory_space<vmem>>, vector<1x1x64xf32>
    %22 = vector.shape_cast %21 : vector<1x1x64xf32> to vector<1x64xf32>
    %23 = vector.shape_cast %20 : vector<1x64xf32> to vector<1x1x64xf32>
    tpu.vector_store %arg6[%c0_17, %c0_18, %c0_19], %23 {strides = array<i32>} : memref<1x1x64xf32, #tpu.memory_space<vmem>>, vector<1x1x64xf32>,
    return
  }
  func.func @transform_0(%arg0: i32, %arg1: i32) -> (i32, i32) {
    %c1_i32 = arith.constant 1 : i32
    %0 = arith.muli %arg0, %c1_i32 : i32
    %1 = arith.addi %0, %arg1 : i32
    %c0_i32 = arith.constant 0 : i32
    %c0_i32_0 = arith.constant 0 : i32
    return %1, %c0_i32 : i32, i32
  }
  func.func @transform_1(%arg0: i32, %arg1: i32) -> (i32, i32) {
    %c0_i32 = arith.constant 0 : i32
    %c0_i32_0 = arith.constant 0 : i32
    %c0_i32_1 = arith.constant 0 : i32
    return %c0_i32, %c0_i32_0 : i32, i32
  }
  func.func @transform_2(%arg0: i32, %arg1: i32) -> (i32, i32) {
    %c1_i32 = arith.constant 1 : i32
    %0 = arith.muli %arg0, %c1_i32 : i32
    %1 = arith.addi %0, %arg1 : i32
    %c0_i32 = arith.constant 0 : i32
    %c0_i32_0 = arith.constant 0 : i32
    return %1, %c0_i32 : i32, i32
  }
  func.func @transform_3(%arg0: i32, %arg1: i32) -> (i32, i32, i32) {
    %c0_i32 = arith.constant 0 : i32
    %c0_i32_0 = arith.constant 0 : i32
    %c0_i32_1 = arith.constant 0 : i32
    return %arg0, %c0_i32, %c0_i32_0 : i32, i32, i32
  }
  func.func @transform_4(%arg0: i32, %arg1: i32) -> (i32, i32, i32) {
    %c0_i32 = arith.constant 0 : i32
    %c0_i32_0 = arith.constant 0 : i32
    %c0_i32_1 = arith.constant 0 : i32
    return %arg0, %c0_i32, %c0_i32_0 : i32, i32, i32
  }
}

module attributes {stable_mosaic.version = 11 : i64} {
  func.func @conv_stats_kernel(%arg0: i32, %arg1: i32, %arg2: memref<1x326x64xf32, #tpu.memory_space<vmem>>, %arg3: memref<576x128xf32, #tpu.memory_space<vmem>>, %arg4: memref<1x288x128xf32, #tpu.memory_space<vmem>>, %arg5: memref<1x1x128xf32, #tpu.memory_space<vmem>>, %arg6: memref<1x1x128xf32, #tpu.memory_space<vmem>>) attributes {dimension_semantics = [#tpu.dimension_semantics<parallel>, #tpu.dimension_semantics<arbitrary>], iteration_bounds = array<i64: 2, 1>, scalar_prefetch = 0 : i64, scratch_operands = 0 : i64, tpu.core_type = #tpu.core_type<tc>, window_params = [{transform_indices = @transform_0, window_bounds = array<i64: 1, 326, 64>}, {pipeline_mode = #tpu.pipeline_mode<synchronous>, transform_indices = @transform_1, window_bounds = array<i64: 576, 128>}, {transform_indices = @transform_2, window_bounds = array<i64: 1, 288, 128>}, {transform_indices = @transform_3, window_bounds = array<i64: 1, 1, 128>}, {transform_indices = @transform_4, window_bounds = array<i64: 1, 1, 128>}]} {
    %c0 = arith.constant 0 : index
    %c0_0 = arith.constant 0 : index
    %c0_1 = arith.constant 0 : index
    %0 = vector.load %arg2[%c0, %c0_0, %c0_1] : memref<1x326x64xf32, #tpu.memory_space<vmem>>, vector<1x288x64xf32>
    %1 = vector.shape_cast %0 : vector<1x288x64xf32> to vector<288x64xf32>
    %c0_2 = arith.constant 0 : index
    %c0_3 = arith.constant 0 : index
    %2 = vector.load %arg3[%c0_2, %c0_3] : memref<576x128xf32, #tpu.memory_space<vmem>>, vector<64x128xf32>
    %cst = arith.constant dense<0.000000e+00> : vector<288x128xf32>
    %3 = tpu.matmul %1, %2, %cst {dimension_numbers = #tpu.dot_dimension_numbers<[1], [0], [0], [1], [0, 0, 1, 1], [], []>} : vector<288x64xf32>, vector<64x128xf32>, vector<288x128xf32> -> vector<288x128xf32>
    %c0_4 = arith.constant 0 : index
    %c1 = arith.constant 1 : index
    %c0_5 = arith.constant 0 : index
    %4 = vector.load %arg2[%c0_4, %c1, %c0_5] : memref<1x326x64xf32, #tpu.memory_space<vmem>>, vector<1x288x64xf32>
    %5 = vector.shape_cast %4 : vector<1x288x64xf32> to vector<288x64xf32>
    %c64 = arith.constant 64 : index
    %c0_6 = arith.constant 0 : index
    %6 = vector.load %arg3[%c64, %c0_6] : memref<576x128xf32, #tpu.memory_space<vmem>>, vector<64x128xf32>
    %cst_7 = arith.constant dense<0.000000e+00> : vector<288x128xf32>
    %7 = tpu.matmul %5, %6, %cst_7 {dimension_numbers = #tpu.dot_dimension_numbers<[1], [0], [0], [1], [0, 0, 1, 1], [], []>} : vector<288x64xf32>, vector<64x128xf32>, vector<288x128xf32> -> vector<288x128xf32>
    %8 = arith.addf %3, %7 : vector<288x128xf32>
    %c0_8 = arith.constant 0 : index
    %c2 = arith.constant 2 : index
    %c0_9 = arith.constant 0 : index
    %9 = vector.load %arg2[%c0_8, %c2, %c0_9] : memref<1x326x64xf32, #tpu.memory_space<vmem>>, vector<1x288x64xf32>
    %10 = vector.shape_cast %9 : vector<1x288x64xf32> to vector<288x64xf32>
    %c128 = arith.constant 128 : index
    %c0_10 = arith.constant 0 : index
    %11 = vector.load %arg3[%c128, %c0_10] : memref<576x128xf32, #tpu.memory_space<vmem>>, vector<64x128xf32>
    %cst_11 = arith.constant dense<0.000000e+00> : vector<288x128xf32>
    %12 = tpu.matmul %10, %11, %cst_11 {dimension_numbers = #tpu.dot_dimension_numbers<[1], [0], [0], [1], [0, 0, 1, 1], [], []>} : vector<288x64xf32>, vector<64x128xf32>, vector<288x128xf32> -> vector<288x128xf32>
    %13 = arith.addf %8, %12 : vector<288x128xf32>
    %c0_12 = arith.constant 0 : index
    %c18 = arith.constant 18 : index
    %c0_13 = arith.constant 0 : index
    %14 = vector.load %arg2[%c0_12, %c18, %c0_13] : memref<1x326x64xf32, #tpu.memory_space<vmem>>, vector<1x288x64xf32>
    %15 = vector.shape_cast %14 : vector<1x288x64xf32> to vector<288x64xf32>
    %c192 = arith.constant 192 : index
    %c0_14 = arith.constant 0 : index
    %16 = vector.load %arg3[%c192, %c0_14] : memref<576x128xf32, #tpu.memory_space<vmem>>, vector<64x128xf32>
    %cst_15 = arith.constant dense<0.000000e+00> : vector<288x128xf32>
    %17 = tpu.matmul %15, %16, %cst_15 {dimension_numbers = #tpu.dot_dimension_numbers<[1], [0], [0], [1], [0, 0, 1, 1], [], []>} : vector<288x64xf32>, vector<64x128xf32>, vector<288x128xf32> -> vector<288x128xf32>
    %18 = arith.addf %13, %17 : vector<288x128xf32>
    %c0_16 = arith.constant 0 : index
    %c19 = arith.constant 19 : index
    %c0_17 = arith.constant 0 : index
    %19 = vector.load %arg2[%c0_16, %c19, %c0_17] : memref<1x326x64xf32, #tpu.memory_space<vmem>>, vector<1x288x64xf32>
    %20 = vector.shape_cast %19 : vector<1x288x64xf32> to vector<288x64xf32>
    %c256 = arith.constant 256 : index
    %c0_18 = arith.constant 0 : index
    %21 = vector.load %arg3[%c256, %c0_18] : memref<576x128xf32, #tpu.memory_space<vmem>>, vector<64x128xf32>
    %cst_19 = arith.constant dense<0.000000e+00> : vector<288x128xf32>
    %22 = tpu.matmul %20, %21, %cst_19 {dimension_numbers = #tpu.dot_dimension_numbers<[1], [0], [0], [1], [0, 0, 1, 1], [], []>} : vector<288x64xf32>, vector<64x128xf32>, vector<288x128xf32> -> vector<288x128xf32>
    %23 = arith.addf %18, %22 : vector<288x128xf32>
    %c0_20 = arith.constant 0 : index
    %c20 = arith.constant 20 : index
    %c0_21 = arith.constant 0 : index
    %24 = vector.load %arg2[%c0_20, %c20, %c0_21] : memref<1x326x64xf32, #tpu.memory_space<vmem>>, vector<1x288x64xf32>
    %25 = vector.shape_cast %24 : vector<1x288x64xf32> to vector<288x64xf32>
    %c320 = arith.constant 320 : index
    %c0_22 = arith.constant 0 : index
    %26 = vector.load %arg3[%c320, %c0_22] : memref<576x128xf32, #tpu.memory_space<vmem>>, vector<64x128xf32>
    %cst_23 = arith.constant dense<0.000000e+00> : vector<288x128xf32>
    %27 = tpu.matmul %25, %26, %cst_23 {dimension_numbers = #tpu.dot_dimension_numbers<[1], [0], [0], [1], [0, 0, 1, 1], [], []>} : vector<288x64xf32>, vector<64x128xf32>, vector<288x128xf32> -> vector<288x128xf32>
    %28 = arith.addf %23, %27 : vector<288x128xf32>
    %c0_24 = arith.constant 0 : index
    %c36 = arith.constant 36 : index
    %c0_25 = arith.constant 0 : index
    %29 = vector.load %arg2[%c0_24, %c36, %c0_25] : memref<1x326x64xf32, #tpu.memory_space<vmem>>, vector<1x288x64xf32>
    %30 = vector.shape_cast %29 : vector<1x288x64xf32> to vector<288x64xf32>
    %c384 = arith.constant 384 : index
    %c0_26 = arith.constant 0 : index
    %31 = vector.load %arg3[%c384, %c0_26] : memref<576x128xf32, #tpu.memory_space<vmem>>, vector<64x128xf32>
    %cst_27 = arith.constant dense<0.000000e+00> : vector<288x128xf32>
    %32 = tpu.matmul %30, %31, %cst_27 {dimension_numbers = #tpu.dot_dimension_numbers<[1], [0], [0], [1], [0, 0, 1, 1], [], []>} : vector<288x64xf32>, vector<64x128xf32>, vector<288x128xf32> -> vector<288x128xf32>
    %33 = arith.addf %28, %32 : vector<288x128xf32>
    %c0_28 = arith.constant 0 : index
    %c37 = arith.constant 37 : index
    %c0_29 = arith.constant 0 : index
    %34 = vector.load %arg2[%c0_28, %c37, %c0_29] : memref<1x326x64xf32, #tpu.memory_space<vmem>>, vector<1x288x64xf32>
    %35 = vector.shape_cast %34 : vector<1x288x64xf32> to vector<288x64xf32>
    %c448 = arith.constant 448 : index
    %c0_30 = arith.constant 0 : index
    %36 = vector.load %arg3[%c448, %c0_30] : memref<576x128xf32, #tpu.memory_space<vmem>>, vector<64x128xf32>
    %cst_31 = arith.constant dense<0.000000e+00> : vector<288x128xf32>
    %37 = tpu.matmul %35, %36, %cst_31 {dimension_numbers = #tpu.dot_dimension_numbers<[1], [0], [0], [1], [0, 0, 1, 1], [], []>} : vector<288x64xf32>, vector<64x128xf32>, vector<288x128xf32> -> vector<288x128xf32>
    %38 = arith.addf %33, %37 : vector<288x128xf32>
    %c0_32 = arith.constant 0 : index
    %c38 = arith.constant 38 : index
    %c0_33 = arith.constant 0 : index
    %39 = vector.load %arg2[%c0_32, %c38, %c0_33] : memref<1x326x64xf32, #tpu.memory_space<vmem>>, vector<1x288x64xf32>
    %40 = vector.shape_cast %39 : vector<1x288x64xf32> to vector<288x64xf32>
    %c512 = arith.constant 512 : index
    %c0_34 = arith.constant 0 : index
    %41 = vector.load %arg3[%c512, %c0_34] : memref<576x128xf32, #tpu.memory_space<vmem>>, vector<64x128xf32>
    %cst_35 = arith.constant dense<0.000000e+00> : vector<288x128xf32>
    %42 = tpu.matmul %40, %41, %cst_35 {dimension_numbers = #tpu.dot_dimension_numbers<[1], [0], [0], [1], [0, 0, 1, 1], [], []>} : vector<288x64xf32>, vector<64x128xf32>, vector<288x128xf32> -> vector<288x128xf32>
    %43 = arith.addf %38, %42 : vector<288x128xf32>
    %c0_36 = arith.constant 0 : index
    %c0_37 = arith.constant 0 : index
    %c0_38 = arith.constant 0 : index
    %44 = vector.load %arg4[%c0_36, %c0_37, %c0_38] : memref<1x288x128xf32, #tpu.memory_space<vmem>>, vector<1x288x128xf32>
    %45 = vector.shape_cast %44 : vector<1x288x128xf32> to vector<288x128xf32>
    %46 = vector.shape_cast %43 : vector<288x128xf32> to vector<1x288x128xf32>
    tpu.vector_store %arg4[%c0_36, %c0_37, %c0_38], %46 {strides = array<i32>} : memref<1x288x128xf32, #tpu.memory_space<vmem>>, vector<1x288x128xf32>,
    %47 = tpu.iota {dimensions = array<i32: 0>} : vector<288x1xi32>
    %c18_i32 = arith.constant 18 : i32
    %c0_i32 = arith.constant 0 : i32
    %48 = arith.cmpi eq, %c18_i32, %c0_i32 : i32
    %c1_i32 = arith.constant 1 : i32
    %49 = arith.select %48, %c1_i32, %c18_i32 : i32
    %50 = vector.broadcast %49 : i32 to vector<288x1xi32>
    %51 = arith.remsi %47, %50 : vector<288x1xi32>
    %c0_i32_39 = arith.constant 0 : i32
    %52 = vector.broadcast %c0_i32_39 : i32 to vector<288x1xi32>
    %53 = arith.cmpi ne, %51, %52 : vector<288x1xi32>
    %c0_i32_40 = arith.constant 0 : i32
    %54 = vector.broadcast %c0_i32_40 : i32 to vector<288x1xi32>
    %55 = arith.cmpi slt, %51, %54 : vector<288x1xi32>
    %c0_i32_41 = arith.constant 0 : i32
    %56 = arith.cmpi slt, %49, %c0_i32_41 : i32
    %57 = vector.broadcast %56 : i1 to vector<288x1xi1>
    %58 = vector.broadcast %57 : vector<288x1xi1> to vector<288x1xi1>
    %59 = arith.xori %55, %58 : vector<288x1xi1>
    %60 = arith.andi %59, %53 : vector<288x1xi1>
    %61 = vector.broadcast %49 : i32 to vector<288x1xi32>
    %62 = arith.addi %51, %61 : vector<288x1xi32>
    %63 = arith.select %60, %62, %51 : vector<288x1xi1>, vector<288x1xi32>
    %c16_i32 = arith.constant 16 : i32
    %64 = vector.broadcast %c16_i32 : i32 to vector<288x1xi32>
    %65 = arith.cmpi slt, %63, %64 : vector<288x1xi32>
    %cst_42 = arith.constant 0.000000e+00 : f32
    %66 = vector.shape_cast %65 : vector<288x1xi1> to vector<288x1xi1>
    %67 = vector.broadcast %66 : vector<288x1xi1> to vector<288x128xi1>
    %68 = vector.broadcast %cst_42 : f32 to vector<288x128xf32>
    %69 = arith.select %67, %43, %68 : vector<288x128xi1>, vector<288x128xf32>
    %c0_i32_43 = arith.constant 0 : i32
    %70 = arith.cmpi eq, %arg1, %c0_i32_43 : i32
    %71 = arith.extui %70 : i1 to i32
    %c0_i32_44 = arith.constant 0 : i32
    %72 = arith.cmpi ne, %71, %c0_i32_44 : i32
    scf.if %72 {
      %cst_59 = arith.constant 0.000000e+00 : f32
      %90 = vector.broadcast %cst_59 : f32 to vector<1x128xf32>
      %c0_60 = arith.constant 0 : index
      %c0_61 = arith.constant 0 : index
      %c0_62 = arith.constant 0 : index
      %91 = vector.load %arg5[%c0_60, %c0_61, %c0_62] : memref<1x1x128xf32, #tpu.memory_space<vmem>>, vector<1x1x128xf32>
      %92 = vector.shape_cast %91 : vector<1x1x128xf32> to vector<1x128xf32>
      %93 = vector.shape_cast %90 : vector<1x128xf32> to vector<1x1x128xf32>
      tpu.vector_store %arg5[%c0_60, %c0_61, %c0_62], %93 {strides = array<i32>} : memref<1x1x128xf32, #tpu.memory_space<vmem>>, vector<1x1x128xf32>,
      %cst_63 = arith.constant 0.000000e+00 : f32
      %94 = vector.broadcast %cst_63 : f32 to vector<1x128xf32>
      %c0_64 = arith.constant 0 : index
      %c0_65 = arith.constant 0 : index
      %c0_66 = arith.constant 0 : index
      %95 = vector.load %arg6[%c0_64, %c0_65, %c0_66] : memref<1x1x128xf32, #tpu.memory_space<vmem>>, vector<1x1x128xf32>
      %96 = vector.shape_cast %95 : vector<1x1x128xf32> to vector<1x128xf32>
      %97 = vector.shape_cast %94 : vector<1x128xf32> to vector<1x1x128xf32>
      tpu.vector_store %arg6[%c0_64, %c0_65, %c0_66], %97 {strides = array<i32>} : memref<1x1x128xf32, #tpu.memory_space<vmem>>, vector<1x1x128xf32>,
    } else {
    }
    %c0_45 = arith.constant 0 : index
    %c0_46 = arith.constant 0 : index
    %c0_47 = arith.constant 0 : index
    %73 = vector.load %arg5[%c0_45, %c0_46, %c0_47] : memref<1x1x128xf32, #tpu.memory_space<vmem>>, vector<1x1x128xf32>
    %74 = vector.shape_cast %73 : vector<1x1x128xf32> to vector<1x128xf32>
    %cst_48 = arith.constant dense<0.000000e+00> : vector<128xf32>
    %75 = vector.multi_reduction <add>, %69, %cst_48 [0] : vector<288x128xf32> to vector<128xf32>
    %76 = vector.shape_cast %75 : vector<128xf32> to vector<1x128xf32>
    %77 = arith.addf %74, %76 : vector<1x128xf32>
    %c0_49 = arith.constant 0 : index
    %c0_50 = arith.constant 0 : index
    %c0_51 = arith.constant 0 : index
    %78 = vector.load %arg5[%c0_49, %c0_50, %c0_51] : memref<1x1x128xf32, #tpu.memory_space<vmem>>, vector<1x1x128xf32>
    %79 = vector.shape_cast %78 : vector<1x1x128xf32> to vector<1x128xf32>
    %80 = vector.shape_cast %77 : vector<1x128xf32> to vector<1x1x128xf32>
    tpu.vector_store %arg5[%c0_49, %c0_50, %c0_51], %80 {strides = array<i32>} : memref<1x1x128xf32, #tpu.memory_space<vmem>>, vector<1x1x128xf32>,
    %c0_52 = arith.constant 0 : index
    %c0_53 = arith.constant 0 : index
    %c0_54 = arith.constant 0 : index
    %81 = vector.load %arg6[%c0_52, %c0_53, %c0_54] : memref<1x1x128xf32, #tpu.memory_space<vmem>>, vector<1x1x128xf32>
    %82 = vector.shape_cast %81 : vector<1x1x128xf32> to vector<1x128xf32>
    %83 = arith.mulf %69, %69 : vector<288x128xf32>
    %cst_55 = arith.constant dense<0.000000e+00> : vector<128xf32>
    %84 = vector.multi_reduction <add>, %83, %cst_55 [0] : vector<288x128xf32> to vector<128xf32>
    %85 = vector.shape_cast %84 : vector<128xf32> to vector<1x128xf32>
    %86 = arith.addf %82, %85 : vector<1x128xf32>
    %c0_56 = arith.constant 0 : index
    %c0_57 = arith.constant 0 : index
    %c0_58 = arith.constant 0 : index
    %87 = vector.load %arg6[%c0_56, %c0_57, %c0_58] : memref<1x1x128xf32, #tpu.memory_space<vmem>>, vector<1x1x128xf32>
    %88 = vector.shape_cast %87 : vector<1x1x128xf32> to vector<1x128xf32>
    %89 = vector.shape_cast %86 : vector<1x128xf32> to vector<1x1x128xf32>
    tpu.vector_store %arg6[%c0_56, %c0_57, %c0_58], %89 {strides = array<i32>} : memref<1x1x128xf32, #tpu.memory_space<vmem>>, vector<1x1x128xf32>,
    return
  }
  func.func @transform_0(%arg0: i32, %arg1: i32) -> (i32, i32, i32) {
    %c1_i32 = arith.constant 1 : i32
    %0 = arith.muli %arg0, %c1_i32 : i32
    %1 = arith.addi %0, %arg1 : i32
    %c0_i32 = arith.constant 0 : i32
    %c0_i32_0 = arith.constant 0 : i32
    %c0_i32_1 = arith.constant 0 : i32
    return %1, %c0_i32, %c0_i32_0 : i32, i32, i32
  }
  func.func @transform_1(%arg0: i32, %arg1: i32) -> (i32, i32) {
    %c0_i32 = arith.constant 0 : i32
    %c0_i32_0 = arith.constant 0 : i32
    %c0_i32_1 = arith.constant 0 : i32
    return %c0_i32, %c0_i32_0 : i32, i32
  }
  func.func @transform_2(%arg0: i32, %arg1: i32) -> (i32, i32, i32) {
    %c1_i32 = arith.constant 1 : i32
    %0 = arith.muli %arg0, %c1_i32 : i32
    %1 = arith.addi %0, %arg1 : i32
    %c0_i32 = arith.constant 0 : i32
    %c0_i32_0 = arith.constant 0 : i32
    %c0_i32_1 = arith.constant 0 : i32
    return %1, %c0_i32, %c0_i32_0 : i32, i32, i32
  }
  func.func @transform_3(%arg0: i32, %arg1: i32) -> (i32, i32, i32) {
    %c0_i32 = arith.constant 0 : i32
    %c0_i32_0 = arith.constant 0 : i32
    %c0_i32_1 = arith.constant 0 : i32
    return %arg0, %c0_i32, %c0_i32_0 : i32, i32, i32
  }
  func.func @transform_4(%arg0: i32, %arg1: i32) -> (i32, i32, i32) {
    %c0_i32 = arith.constant 0 : i32
    %c0_i32_0 = arith.constant 0 : i32
    %c0_i32_1 = arith.constant 0 : i32
    return %arg0, %c0_i32, %c0_i32_0 : i32, i32, i32
  }
}

module attributes {stable_mosaic.version = 11 : i64} {
  func.func @highway_out_kernel(%arg0: i32, %arg1: memref<288x128xf32, #tpu.memory_space<vmem>>, %arg2: memref<288x64xf32, #tpu.memory_space<vmem>>, %arg3: memref<1x128xf32, #tpu.memory_space<vmem>>, %arg4: memref<1x128xf32, #tpu.memory_space<vmem>>, %arg5: memref<1x128xf32, #tpu.memory_space<vmem>>, %arg6: memref<1x128xf32, #tpu.memory_space<vmem>>, %arg7: memref<288x64xf32, #tpu.memory_space<vmem>>) attributes {dimension_semantics = [#tpu.dimension_semantics<parallel>], iteration_bounds = array<i64: 2>, scalar_prefetch = 0 : i64, scratch_operands = 0 : i64, tpu.core_type = #tpu.core_type<tc>, window_params = [{transform_indices = @transform_0, window_bounds = array<i64: 288, 128>}, {transform_indices = @transform_1, window_bounds = array<i64: 288, 64>}, {pipeline_mode = #tpu.pipeline_mode<synchronous>, transform_indices = @transform_2, window_bounds = array<i64: 1, 128>}, {pipeline_mode = #tpu.pipeline_mode<synchronous>, transform_indices = @transform_3, window_bounds = array<i64: 1, 128>}, {pipeline_mode = #tpu.pipeline_mode<synchronous>, transform_indices = @transform_4, window_bounds = array<i64: 1, 128>}, {pipeline_mode = #tpu.pipeline_mode<synchronous>, transform_indices = @transform_5, window_bounds = array<i64: 1, 128>}, {transform_indices = @transform_6, window_bounds = array<i64: 288, 64>}]} {
    %c0 = arith.constant 0 : index
    %c0_0 = arith.constant 0 : index
    %0 = vector.load %arg3[%c0, %c0_0] : memref<1x128xf32, #tpu.memory_space<vmem>>, vector<1x128xf32>
    %cst = arith.constant 0.001953125 : f32
    %1 = vector.broadcast %cst : f32 to vector<1x128xf32>
    %2 = arith.mulf %0, %1 : vector<1x128xf32>
    %c0_1 = arith.constant 0 : index
    %c0_2 = arith.constant 0 : index
    %3 = vector.load %arg4[%c0_1, %c0_2] : memref<1x128xf32, #tpu.memory_space<vmem>>, vector<1x128xf32>
    %cst_3 = arith.constant 0.001953125 : f32
    %4 = vector.broadcast %cst_3 : f32 to vector<1x128xf32>
    %5 = arith.mulf %3, %4 : vector<1x128xf32>
    %6 = arith.mulf %2, %2 : vector<1x128xf32>
    %7 = arith.subf %5, %6 : vector<1x128xf32>
    %cst_4 = arith.constant 0.000000e+00 : f32
    %8 = vector.broadcast %cst_4 : f32 to vector<1x128xf32>
    %9 = arith.maximumf %7, %8 : vector<1x128xf32>
    %cst_5 = arith.constant 9.99999974E-6 : f32
    %10 = vector.broadcast %cst_5 : f32 to vector<1x128xf32>
    %11 = arith.addf %9, %10 : vector<1x128xf32>
    %12 = math.rsqrt %11 : vector<1x128xf32>
    %c0_6 = arith.constant 0 : index
    %c0_7 = arith.constant 0 : index
    %13 = vector.load %arg1[%c0_6, %c0_7] : memref<288x128xf32, #tpu.memory_space<vmem>>, vector<288x128xf32>
    %14 = vector.broadcast %2 : vector<1x128xf32> to vector<288x128xf32>
    %15 = arith.subf %13, %14 : vector<288x128xf32>
    %16 = vector.broadcast %12 : vector<1x128xf32> to vector<288x128xf32>
    %17 = arith.mulf %15, %16 : vector<288x128xf32>
    %c0_8 = arith.constant 0 : index
    %c0_9 = arith.constant 0 : index
    %18 = vector.load %arg5[%c0_8, %c0_9] : memref<1x128xf32, #tpu.memory_space<vmem>>, vector<1x128xf32>
    %19 = vector.broadcast %18 : vector<1x128xf32> to vector<288x128xf32>
    %20 = arith.mulf %17, %19 : vector<288x128xf32>
    %c0_10 = arith.constant 0 : index
    %c0_11 = arith.constant 0 : index
    %21 = vector.load %arg6[%c0_10, %c0_11] : memref<1x128xf32, #tpu.memory_space<vmem>>, vector<1x128xf32>
    %22 = vector.broadcast %21 : vector<1x128xf32> to vector<288x128xf32>
    %23 = arith.addf %20, %22 : vector<288x128xf32>
    %cst_12 = arith.constant 0.000000e+00 : f32
    %24 = vector.broadcast %cst_12 : f32 to vector<288x128xf32>
    %25 = arith.maximumf %23, %24 : vector<288x128xf32>
    %26 = vector.extract_strided_slice %25 {offsets = [0, 0], sizes = [288, 64], strides = [1, 1]} : vector<288x128xf32> to vector<288x64xf32>
    %27 = vector.extract_strided_slice %25 {offsets = [0, 64], sizes = [288, 64], strides = [1, 1]} : vector<288x128xf32> to vector<288x64xf32>
    %28 = arith.negf %27 : vector<288x64xf32>
    %29 = math.exp %28 : vector<288x64xf32>
    %cst_13 = arith.constant 1.000000e+00 : f32
    %30 = vector.broadcast %cst_13 : f32 to vector<288x64xf32>
    %31 = arith.addf %30, %29 : vector<288x64xf32>
    %32 = arith.divf %30, %31 : vector<288x64xf32>
    %33 = arith.mulf %32, %26 : vector<288x64xf32>
    %cst_14 = arith.constant 1.000000e+00 : f32
    %34 = vector.broadcast %cst_14 : f32 to vector<288x64xf32>
    %35 = arith.subf %34, %32 : vector<288x64xf32>
    %c0_15 = arith.constant 0 : index
    %c0_16 = arith.constant 0 : index
    %36 = vector.load %arg2[%c0_15, %c0_16] : memref<288x64xf32, #tpu.memory_space<vmem>>, vector<288x64xf32>
    %37 = arith.mulf %35, %36 : vector<288x64xf32>
    %38 = arith.addf %33, %37 : vector<288x64xf32>
    %c0_17 = arith.constant 0 : index
    %c0_18 = arith.constant 0 : index
    %39 = vector.load %arg7[%c0_17, %c0_18] : memref<288x64xf32, #tpu.memory_space<vmem>>, vector<288x64xf32>
    tpu.vector_store %arg7[%c0_17, %c0_18], %38 {strides = array<i32>} : memref<288x64xf32, #tpu.memory_space<vmem>>, vector<288x64xf32>,
    return
  }
  func.func @transform_0(%arg0: i32) -> (i32, i32) {
    %c0_i32 = arith.constant 0 : i32
    %c0_i32_0 = arith.constant 0 : i32
    return %arg0, %c0_i32 : i32, i32
  }
  func.func @transform_1(%arg0: i32) -> (i32, i32) {
    %c0_i32 = arith.constant 0 : i32
    %c0_i32_0 = arith.constant 0 : i32
    return %arg0, %c0_i32 : i32, i32
  }
  func.func @transform_2(%arg0: i32) -> (i32, i32) {
    %c0_i32 = arith.constant 0 : i32
    %c0_i32_0 = arith.constant 0 : i32
    %c0_i32_1 = arith.constant 0 : i32
    return %c0_i32, %c0_i32_0 : i32, i32
  }
  func.func @transform_3(%arg0: i32) -> (i32, i32) {
    %c0_i32 = arith.constant 0 : i32
    %c0_i32_0 = arith.constant 0 : i32
    %c0_i32_1 = arith.constant 0 : i32
    return %c0_i32, %c0_i32_0 : i32, i32
  }
  func.func @transform_4(%arg0: i32) -> (i32, i32) {
    %c0_i32 = arith.constant 0 : i32
    %c0_i32_0 = arith.constant 0 : i32
    %c0_i32_1 = arith.constant 0 : i32
    return %c0_i32, %c0_i32_0 : i32, i32
  }
  func.func @transform_5(%arg0: i32) -> (i32, i32) {
    %c0_i32 = arith.constant 0 : i32
    %c0_i32_0 = arith.constant 0 : i32
    %c0_i32_1 = arith.constant 0 : i32
    return %c0_i32, %c0_i32_0 : i32, i32
  }
  func.func @transform_6(%arg0: i32) -> (i32, i32) {
    %c0_i32 = arith.constant 0 : i32
    %c0_i32_0 = arith.constant 0 : i32
    return %arg0, %c0_i32 : i32, i32
  }
}

</mosaic_0001>

<llo_original>
// kernel: highway_layer.5
$region0: #{highway_layer.5}
  #allocation0 [shape = 'u32[]', space=smem, size = 0x4, offset = 0x4, fixed_abs, tag = 'smem constant byte address 0x4 - core index']
  #allocation1 [shape = 'u32[72,128]{1,0:T(1,128)}', space=vmem, size = 0x9000, scoped, tag = 'internal scratch']
  %s0 = inlined_call_operand.vmem [shape: f32[512,64], index: 0, kind: input, shape index: {}]
  %s1 = inlined_call_operand.vmem [shape: f32[1,64], index: 1, kind: input, shape index: {}]
  %s2 = inlined_call_operand.vmem [shape: f32[1,64], index: 2, kind: input, shape index: {}]
  %s3 = inlined_call_operand.vmem [shape: f32[1,64], index: 3, kind: input, shape index: {}]
  %s4 = inlined_call_operand.vmem [shape: f32[1,64], index: 4, kind: input, shape index: {}]
  %s5 = inlined_call_operand.vmem [shape: f32[512,64], index: 5, kind: output, shape index: {}]
  %s6 = sld [smem:[#allocation0]]
  $region30: #{highway_layer.5} parent=0
    _
  %s8 = ssub.s32 1, %s6
  %s9 = scalar_select 0, %s8, %s6
  // Predicated region
  $region2: #{highway_layer.5} parent=0 // pred_check
    _
  $region3: #{highway_layer.5} parent=0 // pred_check_branch
    %11 = sbr.rel (0) target = $region5
  $region4: #{highway_layer.5} parent=0 // pred_region
    _
  $region5: #{highway_layer.5} parent=0 // pred_fallthru
    _
  // Predicated region
  $region6: #{highway_layer.5} parent=0 // pred_check
    _
  $region7: #{highway_layer.5} parent=0 // pred_check_branch
    %13 = sbr.rel (0) target = $region9
  $region8: #{highway_layer.5} parent=0 // pred_region
    _
  $region9: #{highway_layer.5} parent=0 // pred_fallthru
    _
  // Predicated region
  $region10: #{highway_layer.5} parent=0 // pred_check
    _
  $region11: #{highway_layer.5} parent=0 // pred_check_branch
    %15 = sbr.rel (0) target = $region13
  $region12: #{highway_layer.5} parent=0 // pred_region
    _
  $region13: #{highway_layer.5} parent=0 // pred_fallthru
    _
  // Predicated region
  $region14: #{highway_layer.5} parent=0 // pred_check
    _
  $region15: #{highway_layer.5} parent=0 // pred_check_branch
    %17 = sbr.rel (0) target = $region17
  $region16: #{highway_layer.5} parent=0 // pred_region
    _
  $region17: #{highway_layer.5} parent=0 // pred_fallthru
    _
  // Predicated region
  $region18: #{highway_layer.5} parent=0 // pred_check
    _
  $region19: #{highway_layer.5} parent=0 // pred_check_branch
    %19 = sbr.rel (0) target = $region21
  $region20: #{highway_layer.5} parent=0 // pred_region
    _
  $region21: #{highway_layer.5} parent=0 // pred_fallthru
    _
  %v20 = vld [vmem:[%s1] sm:$0x1]
  %v21 = vmul.f32 %v20, 0.001953125
  %v22 = vld [vmem:[%s2] sm:$0x1]
  %v23 = vmul.f32 %v22, 0.001953125
  %v24 = vmul.f32 %v21, %v21
  %v25 = vsub.f32 %v23, %v24
  %v26 = vmax.f32 %v25, 0.0
  %v27 = vadd.f32 %v26, 1e-05
  %v28 = vrsqrt.pop %v27
  %v29 = vmul.f32 %v28, %v27
  %v30 = vmul.f32 %v29, %v28
  %v31 = vmul.f32 0.5, %v30
  %v32 = vsub.f32 1.5, %v31
  %v33 = vmul.f32 %v28, %v32
  %vm34 = vweird.f32 %v27
  %vm35 = vweird.f32 %v28
  %vm36 = vmor %vm34, %vm35
  %v37 = vsel %vm36, %v28, %v33
  %v38 = vld [vmem:[%s0] sm:$0xff]
  %v39 = vld [vmem:[%s0 + $0x8] sm:$0xff]
  %v40 = vld [vmem:[%s0 + $0x10] sm:$0xff]
  %v41 = vld [vmem:[%s0 + $0x18] sm:$0xff]
  %v42 = vld [vmem:[%s0 + $0x20] sm:$0xff]
  %v43 = vld [vmem:[%s0 + $0x28] sm:$0xff]
  %v44 = vld [vmem:[%s0 + $0x30] sm:$0xff]
  %v45 = vld [vmem:[%s0 + $0x38] sm:$0xff]
  %v46 = vld [vmem:[%s0 + $0x40] sm:$0xff]
  %v47 = vld [vmem:[%s0 + $0x48] sm:$0xff]
  %v48 = vld [vmem:[%s0 + $0x50] sm:$0xff]
  %v49 = vld [vmem:[%s0 + $0x58] sm:$0xff]
  %v50 = vld [vmem:[%s0 + $0x60] sm:$0xff]
  %v51 = vld [vmem:[%s0 + $0x68] sm:$0xff]
  %v52 = vld [vmem:[%s0 + $0x70] sm:$0xff]
  %v53 = vld [vmem:[%s0 + $0x78] sm:$0xff]
  %v54 = vld [vmem:[%s0 + $0x80] sm:$0xff]
  %v55 = vld [vmem:[%s0 + $0x88] sm:$0xff]
  %v56 = vld [vmem:[%s0 + $0x90] sm:$0xff]
  %v57 = vld [vmem:[%s0 + $0x98] sm:$0xff]
  %v58 = vld [vmem:[%s0 + $0xa0] sm:$0xff]
  %v59 = vld [vmem:[%s0 + $0xa8] sm:$0xff]
  %v60 = vld [vmem:[%s0 + $0xb0] sm:$0xff]
  %v61 = vld [vmem:[%s0 + $0xb8] sm:$0xff]
  %v62 = vld [vmem:[%s0 + $0xc0] sm:$0xff]
  %v63 = vld [vmem:[%s0 + $0xc8] sm:$0xff]
  %v64 = vld [vmem:[%s0 + $0xd0] sm:$0xff]
  %v65 = vld [vmem:[%s0 + $0xd8] sm:$0xff]
  %v66 = vld [vmem:[%s0 + $0xe0] sm:$0xff]
  %v67 = vld [vmem:[%s0 + $0xe8] sm:$0xff]
  %v68 = vld [vmem:[%s0 + $0xf0] sm:$0xff]
  %v69 = vld [vmem:[%s0 + $0xf8] sm:$0xff]
  %v70 = vld [vmem:[%s0 + $0x100] sm:$0xff]
  %v71 = vld [vmem:[%s0 + $0x108] sm:$0xff]
  %v72 = vld [vmem:[%s0 + $0x110] sm:$0xff]
  %v73 = vld [vmem:[%s0 + $0x118] sm:$0xff]
  %v74 = vld [vmem:[%s0 + $0x120] sm:$0xff]
  %v75 = vld [vmem:[%s0 + $0x128] sm:$0xff]
  %v76 = vld [vmem:[%s0 + $0x130] sm:$0xff]
  %v77 = vld [vmem:[%s0 + $0x138] sm:$0xff]
  %v78 = vld [vmem:[%s0 + $0x140] sm:$0xff]
  %v79 = vld [vmem:[%s0 + $0x148] sm:$0xff]
  %v80 = vld [vmem:[%s0 + $0x150] sm:$0xff]
  %v81 = vld [vmem:[%s0 + $0x158] sm:$0xff]
  %v82 = vld [vmem:[%s0 + $0x160] sm:$0xff]
  %v83 = vld [vmem:[%s0 + $0x168] sm:$0xff]
  %v84 = vld [vmem:[%s0 + $0x170] sm:$0xff]
  %v85 = vld [vmem:[%s0 + $0x178] sm:$0xff]
  %v86 = vld [vmem:[%s0 + $0x180] sm:$0xff]
  %v87 = vld [vmem:[%s0 + $0x188] sm:$0xff]
  %v88 = vld [vmem:[%s0 + $0x190] sm:$0xff]
  %v89 = vld [vmem:[%s0 + $0x198] sm:$0xff]
  %v90 = vld [vmem:[%s0 + $0x1a0] sm:$0xff]
  %v91 = vld [vmem:[%s0 + $0x1a8] sm:$0xff]
  %v92 = vld [vmem:[%s0 + $0x1b0] sm:$0xff]
  %v93 = vld [vmem:[%s0 + $0x1b8] sm:$0xff]
  %v94 = vld [vmem:[%s0 + $0x1c0] sm:$0xff]
  %v95 = vld [vmem:[%s0 + $0x1c8] sm:$0xff]
  %v96 = vld [vmem:[%s0 + $0x1d0] sm:$0xff]
  %v97 = vld [vmem:[%s0 + $0x1d8] sm:$0xff]
  %v98 = vld [vmem:[%s0 + $0x1e0] sm:$0xff]
  %v99 = vld [vmem:[%s0 + $0x1e8] sm:$0xff]
  %v100 = vld [vmem:[%s0 + $0x1f0] sm:$0xff]
  %v101 = vld [vmem:[%s0 + $0x1f8] sm:$0xff]
  %v103 = vperm.slane %v21, 0
  %v105 = vsub.f32 %v38, %v103
  %v106 = vsub.f32 %v39, %v103
  %v107 = vsub.f32 %v40, %v103
  %v108 = vsub.f32 %v41, %v103
  %v109 = vsub.f32 %v42, %v103
  %v110 = vsub.f32 %v43, %v103
  %v111 = vsub.f32 %v44, %v103
  %v112 = vsub.f32 %v45, %v103
  %v113 = vsub.f32 %v46, %v103
  %v114 = vsub.f32 %v47, %v103
  %v115 = vsub.f32 %v48, %v103
  %v116 = vsub.f32 %v49, %v103
  %v117 = vsub.f32 %v50, %v103
  %v118 = vsub.f32 %v51, %v103
  %v119 = vsub.f32 %v52, %v103
  %v120 = vsub.f32 %v53, %v103
  %v121 = vsub.f32 %v54, %v103
  %v122 = vsub.f32 %v55, %v103
  %v123 = vsub.f32 %v56, %v103
  %v124 = vsub.f32 %v57, %v103
  %v125 = vsub.f32 %v58, %v103
  %v126 = vsub.f32 %v59, %v103
  %v127 = vsub.f32 %v60, %v103
  %v128 = vsub.f32 %v61, %v103
  %v129 = vsub.f32 %v62, %v103
  %v130 = vsub.f32 %v63, %v103
  %v131 = vsub.f32 %v64, %v103
  %v132 = vsub.f32 %v65, %v103
  %v133 = vsub.f32 %v66, %v103
  %v134 = vsub.f32 %v67, %v103
  %v135 = vsub.f32 %v68, %v103
  %v136 = vsub.f32 %v69, %v103
  %v137 = vsub.f32 %v70, %v103
  %v138 = vsub.f32 %v71, %v103
  %v139 = vsub.f32 %v72, %v103
  %v140 = vsub.f32 %v73, %v103
  %v141 = vsub.f32 %v74, %v103
  %v142 = vsub.f32 %v75, %v103
  %v143 = vsub.f32 %v76, %v103
  %v144 = vsub.f32 %v77, %v103
  %v145 = vsub.f32 %v78, %v103
  %v146 = vsub.f32 %v79, %v103
  %v147 = vsub.f32 %v80, %v103
  %v148 = vsub.f32 %v81, %v103
  %v149 = vsub.f32 %v82, %v103
  %v150 = vsub.f32 %v83, %v103
  %v151 = vsub.f32 %v84, %v103
  %v152 = vsub.f32 %v85, %v103
  %v153 = vsub.f32 %v86, %v103
  %v154 = vsub.f32 %v87, %v103
  %v155 = vsub.f32 %v88, %v103
  %v156 = vsub.f32 %v89, %v103
  %v157 = vsub.f32 %v90, %v103
  %v158 = vsub.f32 %v91, %v103
  %v159 = vsub.f32 %v92, %v103
  %v160 = vsub.f32 %v93, %v103
  %v161 = vsub.f32 %v94, %v103
  %v162 = vsub.f32 %v95, %v103
  %v163 = vsub.f32 %v96, %v103
  %v164 = vsub.f32 %v97, %v103
  %v165 = vsub.f32 %v98, %v103
  %v166 = vsub.f32 %v99, %v103
  %v167 = vsub.f32 %v100, %v103
  %v168 = vsub.f32 %v101, %v103
  %v170 = vperm.slane %v37, 0
  %v172 = vmul.f32 %v105, %v170
  %v173 = vmul.f32 %v106, %v170
  %v174 = vmul.f32 %v107, %v170
  %v175 = vmul.f32 %v108, %v170
  %v176 = vmul.f32 %v109, %v170
  %v177 = vmul.f32 %v110, %v170
  %v178 = vmul.f32 %v111, %v170
  %v179 = vmul.f32 %v112, %v170
  %v180 = vmul.f32 %v113, %v170
  %v181 = vmul.f32 %v114, %v170
  %v182 = vmul.f32 %v115, %v170
  %v183 = vmul.f32 %v116, %v170
  %v184 = vmul.f32 %v117, %v170
  %v185 = vmul.f32 %v118, %v170
  %v186 = vmul.f32 %v119, %v170
  %v187 = vmul.f32 %v120, %v170
  %v188 = vmul.f32 %v121, %v170
  %v189 = vmul.f32 %v122, %v170
  %v190 = vmul.f32 %v123, %v170
  %v191 = vmul.f32 %v124, %v170
  %v192 = vmul.f32 %v125, %v170
  %v193 = vmul.f32 %v126, %v170
  %v194 = vmul.f32 %v127, %v170
  %v195 = vmul.f32 %v128, %v170
  %v196 = vmul.f32 %v129, %v170
  %v197 = vmul.f32 %v130, %v170
  %v198 = vmul.f32 %v131, %v170
  %v199 = vmul.f32 %v132, %v170
  %v200 = vmul.f32 %v133, %v170
  %v201 = vmul.f32 %v134, %v170
  %v202 = vmul.f32 %v135, %v170
  %v203 = vmul.f32 %v136, %v170
  %v204 = vmul.f32 %v137, %v170
  %v205 = vmul.f32 %v138, %v170
  %v206 = vmul.f32 %v139, %v170
  %v207 = vmul.f32 %v140, %v170
  %v208 = vmul.f32 %v141, %v170
  %v209 = vmul.f32 %v142, %v170
  %v210 = vmul.f32 %v143, %v170
  %v211 = vmul.f32 %v144, %v170
  %v212 = vmul.f32 %v145, %v170
  %v213 = vmul.f32 %v146, %v170
  %v214 = vmul.f32 %v147, %v170
  %v215 = vmul.f32 %v148, %v170
  %v216 = vmul.f32 %v149, %v170
  %v217 = vmul.f32 %v150, %v170
  %v218 = vmul.f32 %v151, %v170
  %v219 = vmul.f32 %v152, %v170
  %v220 = vmul.f32 %v153, %v170
  %v221 = vmul.f32 %v154, %v170
  %v222 = vmul.f32 %v155, %v170
  %v223 = vmul.f32 %v156, %v170
  %v224 = vmul.f32 %v157, %v170
  %v225 = vmul.f32 %v158, %v170
  %v226 = vmul.f32 %v159, %v170
  %v227 = vmul.f32 %v160, %v170
  %v228 = vmul.f32 %v161, %v170
  %v229 = vmul.f32 %v162, %v170
  %v230 = vmul.f32 %v163, %v170
  %v231 = vmul.f32 %v164, %v170
  %v232 = vmul.f32 %v165, %v170
  %v233 = vmul.f32 %v166, %v170
  %v234 = vmul.f32 %v167, %v170
  %v235 = vmul.f32 %v168, %v170
  %v236 = vld [vmem:[%s3] sm:$0x1]
  %v238 = vperm.slane %v236, 0
  %v240 = vmul.f32 %v172, %v238
  %v241 = vmul.f32 %v173, %v238
  %v242 = vmul.f32 %v174, %v238
  %v243 = vmul.f32 %v175, %v238
  %v244 = vmul.f32 %v176, %v238
  %v245 = vmul.f32 %v177, %v238
  %v246 = vmul.f32 %v178, %v238
  %v247 = vmul.f32 %v179, %v238
  %v248 = vmul.f32 %v180, %v238
  %v249 = vmul.f32 %v181, %v238
  %v250 = vmul.f32 %v182, %v238
  %v251 = vmul.f32 %v183, %v238
  %v252 = vmul.f32 %v184, %v238
  %v253 = vmul.f32 %v185, %v238
  %v254 = vmul.f32 %v186, %v238
  %v255 = vmul.f32 %v187, %v238
  %v256 = vmul.f32 %v188, %v238
  %v257 = vmul.f32 %v189, %v238
  %v258 = vmul.f32 %v190, %v238
  %v259 = vmul.f32 %v191, %v238
  %v260 = vmul.f32 %v192, %v238
  %v261 = vmul.f32 %v193, %v238
  %v262 = vmul.f32 %v194, %v238
  %v263 = vmul.f32 %v195, %v238
  %v264 = vmul.f32 %v196, %v238
  %v265 = vmul.f32 %v197, %v238
  %v266 = vmul.f32 %v198, %v238
  %v267 = vmul.f32 %v199, %v238
  %v268 = vmul.f32 %v200, %v238
  %v269 = vmul.f32 %v201, %v238
  %v270 = vmul.f32 %v202, %v238
  %v271 = vmul.f32 %v203, %v238
  %v272 = vmul.f32 %v204, %v238
  %v273 = vmul.f32 %v205, %v238
  %v274 = vmul.f32 %v206, %v238
  %v275 = vmul.f32 %v207, %v238
  %v276 = vmul.f32 %v208, %v238
  %v277 = vmul.f32 %v209, %v238
  %v278 = vmul.f32 %v210, %v238
  %v279 = vmul.f32 %v211, %v238
  %v280 = vmul.f32 %v212, %v238
  %v281 = vmul.f32 %v213, %v238
  %v282 = vmul.f32 %v214, %v238
  %v283 = vmul.f32 %v215, %v238
  %v284 = vmul.f32 %v216, %v238
  %v285 = vmul.f32 %v217, %v238
  %v286 = vmul.f32 %v218, %v238
  %v287 = vmul.f32 %v219, %v238
  %v288 = vmul.f32 %v220, %v238
  %v289 = vmul.f32 %v221, %v238
  %v290 = vmul.f32 %v222, %v238
  %v291 = vmul.f32 %v223, %v238
  %v292 = vmul.f32 %v224, %v238
  %v293 = vmul.f32 %v225, %v238
  %v294 = vmul.f32 %v226, %v238
  %v295 = vmul.f32 %v227, %v238
  %v296 = vmul.f32 %v228, %v238
  %v297 = vmul.f32 %v229, %v238
  %v298 = vmul.f32 %v230, %v238
  %v299 = vmul.f32 %v231, %v238
  %v300 = vmul.f32 %v232, %v238
  %v301 = vmul.f32 %v233, %v238
  %v302 = vmul.f32 %v234, %v238
  %v303 = vmul.f32 %v235, %v238
  %v304 = vld [vmem:[%s4] sm:$0x1]
  %v306 = vperm.slane %v304, 0
  %v308 = vadd.f32 %v240, %v306
  %v309 = vadd.f32 %v241, %v306
  %v310 = vadd.f32 %v242, %v306
  %v311 = vadd.f32 %v243, %v306
  %v312 = vadd.f32 %v244, %v306
  %v313 = vadd.f32 %v245, %v306
  %v314 = vadd.f32 %v246, %v306
  %v315 = vadd.f32 %v247, %v306
  %v316 = vadd.f32 %v248, %v306
  %v317 = vadd.f32 %v249, %v306
  %v318 = vadd.f32 %v250, %v306
  %v319 = vadd.f32 %v251, %v306
  %v320 = vadd.f32 %v252, %v306
  %v321 = vadd.f32 %v253, %v306
  %v322 = vadd.f32 %v254, %v306
  %v323 = vadd.f32 %v255, %v306
  %v324 = vadd.f32 %v256, %v306
  %v325 = vadd.f32 %v257, %v306
  %v326 = vadd.f32 %v258, %v306
  %v327 = vadd.f32 %v259, %v306
  %v328 = vadd.f32 %v260, %v306
  %v329 = vadd.f32 %v261, %v306
  %v330 = vadd.f32 %v262, %v306
  %v331 = vadd.f32 %v263, %v306
  %v332 = vadd.f32 %v264, %v306
  %v333 = vadd.f32 %v265, %v306
  %v334 = vadd.f32 %v266, %v306
  %v335 = vadd.f32 %v267, %v306
  %v336 = vadd.f32 %v268, %v306
  %v337 = vadd.f32 %v269, %v306
  %v338 = vadd.f32 %v270, %v306
  %v339 = vadd.f32 %v271, %v306
  %v340 = vadd.f32 %v272, %v306
  %v341 = vadd.f32 %v273, %v306
  %v342 = vadd.f32 %v274, %v306
  %v343 = vadd.f32 %v275, %v306
  %v344 = vadd.f32 %v276, %v306
  %v345 = vadd.f32 %v277, %v306
  %v346 = vadd.f32 %v278, %v306
  %v347 = vadd.f32 %v279, %v306
  %v348 = vadd.f32 %v280, %v306
  %v349 = vadd.f32 %v281, %v306
  %v350 = vadd.f32 %v282, %v306
  %v351 = vadd.f32 %v283, %v306
  %v352 = vadd.f32 %v284, %v306
  %v353 = vadd.f32 %v285, %v306
  %v354 = vadd.f32 %v286, %v306
  %v355 = vadd.f32 %v287, %v306
  %v356 = vadd.f32 %v288, %v306
  %v357 = vadd.f32 %v289, %v306
  %v358 = vadd.f32 %v290, %v306
  %v359 = vadd.f32 %v291, %v306
  %v360 = vadd.f32 %v292, %v306
  %v361 = vadd.f32 %v293, %v306
  %v362 = vadd.f32 %v294, %v306
  %v363 = vadd.f32 %v295, %v306
  %v364 = vadd.f32 %v296, %v306
  %v365 = vadd.f32 %v297, %v306
  %v366 = vadd.f32 %v298, %v306
  %v367 = vadd.f32 %v299, %v306
  %v368 = vadd.f32 %v300, %v306
  %v369 = vadd.f32 %v301, %v306
  %v370 = vadd.f32 %v302, %v306
  %v371 = vadd.f32 %v303, %v306
  %v372 = vmax.f32 %v308, 0.0
  %v373 = vmax.f32 %v309, 0.0
  %v374 = vmax.f32 %v310, 0.0
  %v375 = vmax.f32 %v311, 0.0
  %v376 = vmax.f32 %v312, 0.0
  %v377 = vmax.f32 %v313, 0.0
  %v378 = vmax.f32 %v314, 0.0
  %v379 = vmax.f32 %v315, 0.0
  %v380 = vmax.f32 %v316, 0.0
  %v381 = vmax.f32 %v317, 0.0
  %v382 = vmax.f32 %v318, 0.0
  %v383 = vmax.f32 %v319, 0.0
  %v384 = vmax.f32 %v320, 0.0
  %v385 = vmax.f32 %v321, 0.0
  %v386 = vmax.f32 %v322, 0.0
  %v387 = vmax.f32 %v323, 0.0
  %v388 = vmax.f32 %v324, 0.0
  %v389 = vmax.f32 %v325, 0.0
  %v390 = vmax.f32 %v326, 0.0
  %v391 = vmax.f32 %v327, 0.0
  %v392 = vmax.f32 %v328, 0.0
  %v393 = vmax.f32 %v329, 0.0
  %v394 = vmax.f32 %v330, 0.0
  %v395 = vmax.f32 %v331, 0.0
  %v396 = vmax.f32 %v332, 0.0
  %v397 = vmax.f32 %v333, 0.0
  %v398 = vmax.f32 %v334, 0.0
  %v399 = vmax.f32 %v335, 0.0
  %v400 = vmax.f32 %v336, 0.0
  %v401 = vmax.f32 %v337, 0.0
  %v402 = vmax.f32 %v338, 0.0
  %v403 = vmax.f32 %v339, 0.0
  %v404 = vmax.f32 %v340, 0.0
  %v405 = vmax.f32 %v341, 0.0
  %v406 = vmax.f32 %v342, 0.0
  %v407 = vmax.f32 %v343, 0.0
  %v408 = vmax.f32 %v344, 0.0
  %v409 = vmax.f32 %v345, 0.0
  %v410 = vmax.f32 %v346, 0.0
  %v411 = vmax.f32 %v347, 0.0
  %v412 = vmax.f32 %v348, 0.0
  %v413 = vmax.f32 %v349, 0.0
  %v414 = vmax.f32 %v350, 0.0
  %v415 = vmax.f32 %v351, 0.0
  %v416 = vmax.f32 %v352, 0.0
  %v417 = vmax.f32 %v353, 0.0
  %v418 = vmax.f32 %v354, 0.0
  %v419 = vmax.f32 %v355, 0.0
  %v420 = vmax.f32 %v356, 0.0
  %v421 = vmax.f32 %v357, 0.0
  %v422 = vmax.f32 %v358, 0.0
  %v423 = vmax.f32 %v359, 0.0
  %v424 = vmax.f32 %v360, 0.0
  %v425 = vmax.f32 %v361, 0.0
  %v426 = vmax.f32 %v362, 0.0
  %v427 = vmax.f32 %v363, 0.0
  %v428 = vmax.f32 %v364, 0.0
  %v429 = vmax.f32 %v365, 0.0
  %v430 = vmax.f32 %v366, 0.0
  %v431 = vmax.f32 %v367, 0.0
  %v432 = vmax.f32 %v368, 0.0
  %v433 = vmax.f32 %v369, 0.0
  %v434 = vmax.f32 %v370, 0.0
  %v435 = vmax.f32 %v371, 0.0
  %vm436 = vcmask 523264
  %437 = vst.msk [vmem:[%s5] sm:$0xff] %vm436, %v372
  %438 = vst.msk [vmem:[%s5 + $0x8] sm:$0xff] %vm436, %v373
  %439 = vst.msk [vmem:[%s5 + $0x10] sm:$0xff] %vm436, %v374
  %440 = vst.msk [vmem:[%s5 + $0x18] sm:$0xff] %vm436, %v375
  %441 = vst.msk [vmem:[%s5 + $0x20] sm:$0xff] %vm436, %v376
  %442 = vst.msk [vmem:[%s5 + $0x28] sm:$0xff] %vm436, %v377
  %443 = vst.msk [vmem:[%s5 + $0x30] sm:$0xff] %vm436, %v378
  %444 = vst.msk [vmem:[%s5 + $0x38] sm:$0xff] %vm436, %v379
  %445 = vst.msk [vmem:[%s5 + $0x40] sm:$0xff] %vm436, %v380
  %446 = vst.msk [vmem:[%s5 + $0x48] sm:$0xff] %vm436, %v381
  %447 = vst.msk [vmem:[%s5 + $0x50] sm:$0xff] %vm436, %v382
  %448 = vst.msk [vmem:[%s5 + $0x58] sm:$0xff] %vm436, %v383
  %449 = vst.msk [vmem:[%s5 + $0x60] sm:$0xff] %vm436, %v384
  %450 = vst.msk [vmem:[%s5 + $0x68] sm:$0xff] %vm436, %v385
  %451 = vst.msk [vmem:[%s5 + $0x70] sm:$0xff] %vm436, %v386
  %452 = vst.msk [vmem:[%s5 + $0x78] sm:$0xff] %vm436, %v387
  %453 = vst.msk [vmem:[%s5 + $0x80] sm:$0xff] %vm436, %v388
  %454 = vst.msk [vmem:[%s5 + $0x88] sm:$0xff] %vm436, %v389
  %455 = vst.msk [vmem:[%s5 + $0x90] sm:$0xff] %vm436, %v390
  %456 = vst.msk [vmem:[%s5 + $0x98] sm:$0xff] %vm436, %v391
  %457 = vst.msk [vmem:[%s5 + $0xa0] sm:$0xff] %vm436, %v392
  %458 = vst.msk [vmem:[%s5 + $0xa8] sm:$0xff] %vm436, %v393
  %459 = vst.msk [vmem:[%s5 + $0xb0] sm:$0xff] %vm436, %v394
  %460 = vst.msk [vmem:[%s5 + $0xb8] sm:$0xff] %vm436, %v395
  %461 = vst.msk [vmem:[%s5 + $0xc0] sm:$0xff] %vm436, %v396
  %462 = vst.msk [vmem:[%s5 + $0xc8] sm:$0xff] %vm436, %v397
  %463 = vst.msk [vmem:[%s5 + $0xd0] sm:$0xff] %vm436, %v398
  %464 = vst.msk [vmem:[%s5 + $0xd8] sm:$0xff] %vm436, %v399
  %465 = vst.msk [vmem:[%s5 + $0xe0] sm:$0xff] %vm436, %v400
  %466 = vst.msk [vmem:[%s5 + $0xe8] sm:$0xff] %vm436, %v401
  %467 = vst.msk [vmem:[%s5 + $0xf0] sm:$0xff] %vm436, %v402
  %468 = vst.msk [vmem:[%s5 + $0xf8] sm:$0xff] %vm436, %v403
  %469 = vst.msk [vmem:[%s5 + $0x100] sm:$0xff] %vm436, %v404
  %470 = vst.msk [vmem:[%s5 + $0x108] sm:$0xff] %vm436, %v405
  %471 = vst.msk [vmem:[%s5 + $0x110] sm:$0xff] %vm436, %v406
  %472 = vst.msk [vmem:[%s5 + $0x118] sm:$0xff] %vm436, %v407
  %473 = vst.msk [vmem:[%s5 + $0x120] sm:$0xff] %vm436, %v408
  %474 = vst.msk [vmem:[%s5 + $0x128] sm:$0xff] %vm436, %v409
  %475 = vst.msk [vmem:[%s5 + $0x130] sm:$0xff] %vm436, %v410
  %476 = vst.msk [vmem:[%s5 + $0x138] sm:$0xff] %vm436, %v411
  %477 = vst.msk [vmem:[%s5 + $0x140] sm:$0xff] %vm436, %v412
  %478 = vst.msk [vmem:[%s5 + $0x148] sm:$0xff] %vm436, %v413
  %479 = vst.msk [vmem:[%s5 + $0x150] sm:$0xff] %vm436, %v414
  %480 = vst.msk [vmem:[%s5 + $0x158] sm:$0xff] %vm436, %v415
  %481 = vst.msk [vmem:[%s5 + $0x160] sm:$0xff] %vm436, %v416
  %482 = vst.msk [vmem:[%s5 + $0x168] sm:$0xff] %vm436, %v417
  %483 = vst.msk [vmem:[%s5 + $0x170] sm:$0xff] %vm436, %v418
  %484 = vst.msk [vmem:[%s5 + $0x178] sm:$0xff] %vm436, %v419
  %485 = vst.msk [vmem:[%s5 + $0x180] sm:$0xff] %vm436, %v420
  %486 = vst.msk [vmem:[%s5 + $0x188] sm:$0xff] %vm436, %v421
  %487 = vst.msk [vmem:[%s5 + $0x190] sm:$0xff] %vm436, %v422
  %488 = vst.msk [vmem:[%s5 + $0x198] sm:$0xff] %vm436, %v423
  %489 = vst.msk [vmem:[%s5 + $0x1a0] sm:$0xff] %vm436, %v424
  %490 = vst.msk [vmem:[%s5 + $0x1a8] sm:$0xff] %vm436, %v425
  %491 = vst.msk [vmem:[%s5 + $0x1b0] sm:$0xff] %vm436, %v426
  %492 = vst.msk [vmem:[%s5 + $0x1b8] sm:$0xff] %vm436, %v427
  %493 = vst.msk [vmem:[%s5 + $0x1c0] sm:$0xff] %vm436, %v428
  %494 = vst.msk [vmem:[%s5 + $0x1c8] sm:$0xff] %vm436, %v429
  %495 = vst.msk [vmem:[%s5 + $0x1d0] sm:$0xff] %vm436, %v430
  %496 = vst.msk [vmem:[%s5 + $0x1d8] sm:$0xff] %vm436, %v431
  %497 = vst.msk [vmem:[%s5 + $0x1e0] sm:$0xff] %vm436, %v432
  %498 = vst.msk [vmem:[%s5 + $0x1e8] sm:$0xff] %vm436, %v433
  %499 = vst.msk [vmem:[%s5 + $0x1f0] sm:$0xff] %vm436, %v434
  %500 = vst.msk [vmem:[%s5 + $0x1f8] sm:$0xff] %vm436, %v435
  // Predicated region
  $region22: #{highway_layer.5} parent=0 // pred_check
    _
  $region23: #{highway_layer.5} parent=0 // pred_check_branch
    %502 = sbr.rel (0) target = $region25
  $region24: #{highway_layer.5} parent=0 // pred_region
    _
  $region25: #{highway_layer.5} parent=0 // pred_fallthru
    _
  // Predicated region
  $region26: #{highway_layer.5} parent=0 // pred_check
    _
  $region27: #{highway_layer.5} parent=0 // pred_check_branch
    %504 = sbr.rel (0) target = $region29
  $region28: #{highway_layer.5} parent=0 // pred_region
    _
  $region29: #{highway_layer.5} parent=0 // pred_fallthru
    _

// kernel: highway_layer.4
$region0: #{highway_layer.4}
  #allocation0 [shape = 'u32[]', space=smem, size = 0x4, offset = 0x4, fixed_abs, tag = 'smem constant byte address 0x4 - core index']
  #allocation1 [shape = 'u32[72,128]{1,0:T(1,128)}', space=vmem, size = 0x9000, scoped, tag = 'internal scratch']
  %s0 = inlined_call_operand.vmem [shape: f32[512,4], index: 0, kind: input, shape index: {}]
  %s1 = inlined_call_operand.vmem [shape: f32[4,64], index: 1, kind: input, shape index: {}]
  %s2 = inlined_call_operand.vmem [shape: f32[512,64], index: 2, kind: output, shape index: {0}]
  %s3 = inlined_call_operand.vmem [shape: f32[1,1,64], index: 3, kind: output, shape index: {1}]
  %s4 = inlined_call_operand.vmem [shape: f32[1,1,64], index: 4, kind: output, shape index: {2}]
  %5 = xla_tuple %s2, %s3, %s4
  %s6 = sld [smem:[#allocation0]]
  $region38: #{highway_layer.4} parent=0
    _
  %s8 = ssub.s32 1, %s6
  %s9 = scalar_select 0, %s8, %s6
  // Predicated region
  $region2: #{highway_layer.4} parent=0 // pred_check
    _
  $region3: #{highway_layer.4} parent=0 // pred_check_branch
    %11 = sbr.rel (0) target = $region5
  $region4: #{highway_layer.4} parent=0 // pred_region
    %s12 = sadd.s32 0, 0
    %s13 = smul.u32 64, %s12
    %p14 = scmp.lt.s32.totalorder %s13, 63
    %s15 = scalar_select %p14, %s13, 63
    %s16 = smul.addr %s15, 8
    %s17 = scalar_lea.vmem %s0, %s16
    %s18 = sadd.s32 0, 0
    %s19 = smul.u32 64, %s18
  $region5: #{highway_layer.4} parent=0 // pred_fallthru
    _
  // Predicated region
  $region6: #{highway_layer.4} parent=0 // pred_check
    _
  $region7: #{highway_layer.4} parent=0 // pred_check_branch
    %21 = sbr.rel (0) target = $region9
  $region8: #{highway_layer.4} parent=0 // pred_region
    _
  $region9: #{highway_layer.4} parent=0 // pred_fallthru
    _
  %s22 = sadd.s32 0, 0
  %s23 = smul.u32 64, %s22
  %p24 = scmp.lt.s32.totalorder %s23, 63
  %s25 = scalar_select %p24, %s23, 63
  %s26 = smul.addr %s25, 8
  %s27 = scalar_lea.vmem %s0, %s26
  %s28 = sadd.s32 0, 0
  %s29 = smul.u32 64, %s28
  %p30 = scmp.lt.s32.totalorder %s29, 63
  %s31 = scalar_select %p30, %s29, 63
  %s32 = smul.addr %s31, 8
  %s33 = scalar_lea.vmem %s2, %s32
  %s34 = sadd.s32 0, 0
  %s35 = smul.u32 64, %s34
  %p36 = scmp.lt.s32.totalorder %s35, 63
  %s37 = scalar_select %p36, %s35, 63
  %s38 = smul.addr %s37, 8
  %s39 = scalar_lea.vmem %s0, %s38
  %s40 = sadd.s32 0, 0
  %s41 = smul.u32 64, %s40
  %s42 = sadd.s32 0, 0
  %s43 = smul.u32 64, %s42
  %p44 = scmp.lt.s32.totalorder %s43, 63
  %s45 = scalar_select %p44, %s43, 63
  %s46 = smul.addr %s45, 8
  %s47 = scalar_lea.vmem %s2, %s46
  %s48 = sadd.s32 0, 0
  %s49 = smul.u32 64, %s48
  %v50 = vld [vmem:[%s39] sm:$0xff]
  %v51 = vld [vmem:[%s39 + $0x8] sm:$0xff]
  %v52 = vld [vmem:[%s39 + $0x10] sm:$0xff]
  %v53 = vld [vmem:[%s39 + $0x18] sm:$0xff]
  %v54 = vld [vmem:[%s39 + $0x20] sm:$0xff]
  %v55 = vld [vmem:[%s39 + $0x28] sm:$0xff]
  %v56 = vld [vmem:[%s39 + $0x30] sm:$0xff]
  %v57 = vld [vmem:[%s39 + $0x38] sm:$0xff]
  %v58 = vld [vmem:[%s39 + $0x40] sm:$0xff]
  %v59 = vld [vmem:[%s39 + $0x48] sm:$0xff]
  %v60 = vld [vmem:[%s39 + $0x50] sm:$0xff]
  %v61 = vld [vmem:[%s39 + $0x58] sm:$0xff]
  %v62 = vld [vmem:[%s39 + $0x60] sm:$0xff]
  %v63 = vld [vmem:[%s39 + $0x68] sm:$0xff]
  %v64 = vld [vmem:[%s39 + $0x70] sm:$0xff]
  %v65 = vld [vmem:[%s39 + $0x78] sm:$0xff]
  %v66 = vld [vmem:[%s39 + $0x80] sm:$0xff]
  %v67 = vld [vmem:[%s39 + $0x88] sm:$0xff]
  %v68 = vld [vmem:[%s39 + $0x90] sm:$0xff]
  %v69 = vld [vmem:[%s39 + $0x98] sm:$0xff]
  %v70 = vld [vmem:[%s39 + $0xa0] sm:$0xff]
  %v71 = vld [vmem:[%s39 + $0xa8] sm:$0xff]
  %v72 = vld [vmem:[%s39 + $0xb0] sm:$0xff]
  %v73 = vld [vmem:[%s39 + $0xb8] sm:$0xff]
  %v74 = vld [vmem:[%s39 + $0xc0] sm:$0xff]
  %v75 = vld [vmem:[%s39 + $0xc8] sm:$0xff]
  %v76 = vld [vmem:[%s39 + $0xd0] sm:$0xff]
  %v77 = vld [vmem:[%s39 + $0xd8] sm:$0xff]
  %v78 = vld [vmem:[%s39 + $0xe0] sm:$0xff]
  %v79 = vld [vmem:[%s39 + $0xe8] sm:$0xff]
  %v80 = vld [vmem:[%s39 + $0xf0] sm:$0xff]
  %v81 = vld [vmem:[%s39 + $0xf8] sm:$0xff]
  %v82 = vld [vmem:[%s39 + $0x100] sm:$0xff]
  %v83 = vld [vmem:[%s39 + $0x108] sm:$0xff]
  %v84 = vld [vmem:[%s39 + $0x110] sm:$0xff]
  %v85 = vld [vmem:[%s39 + $0x118] sm:$0xff]
  %v86 = vld [vmem:[%s39 + $0x120] sm:$0xff]
  %v87 = vld [vmem:[%s39 + $0x128] sm:$0xff]
  %v88 = vld [vmem:[%s39 + $0x130] sm:$0xff]
  %v89 = vld [vmem:[%s39 + $0x138] sm:$0xff]
  %v90 = vld [vmem:[%s39 + $0x140] sm:$0xff]
  %v91 = vld [vmem:[%s39 + $0x148] sm:$0xff]
  %v92 = vld [vmem:[%s39 + $0x150] sm:$0xff]
  %v93 = vld [vmem:[%s39 + $0x158] sm:$0xff]
  %v94 = vld [vmem:[%s39 + $0x160] sm:$0xff]
  %v95 = vld [vmem:[%s39 + $0x168] sm:$0xff]
  %v96 = vld [vmem:[%s39 + $0x170] sm:$0xff]
  %v97 = vld [vmem:[%s39 + $0x178] sm:$0xff]
  %v98 = vld [vmem:[%s39 + $0x180] sm:$0xff]
  %v99 = vld [vmem:[%s39 + $0x188] sm:$0xff]
  %v100 = vld [vmem:[%s39 + $0x190] sm:$0xff]
  %v101 = vld [vmem:[%s39 + $0x198] sm:$0xff]
  %v102 = vld [vmem:[%s39 + $0x1a0] sm:$0xff]
  %v103 = vld [vmem:[%s39 + $0x1a8] sm:$0xff]
  %v104 = vld [vmem:[%s39 + $0x1b0] sm:$0xff]
  %v105 = vld [vmem:[%s39 + $0x1b8] sm:$0xff]
  %v106 = vld [vmem:[%s39 + $0x1c0] sm:$0xff]
  %v107 = vld [vmem:[%s39 + $0x1c8] sm:$0xff]
  %v108 = vld [vmem:[%s39 + $0x1d0] sm:$0xff]
  %v109 = vld [vmem:[%s39 + $0x1d8] sm:$0xff]
  %v110 = vld [vmem:[%s39 + $0x1e0] sm:$0xff]
  %v111 = vld [vmem:[%s39 + $0x1e8] sm:$0xff]
  %v112 = vld [vmem:[%s39 + $0x1f0] sm:$0xff]
  %v113 = vld [vmem:[%s39 + $0x1f8] sm:$0xff]
  %v114 = vld [vmem:[%s1] sm:$0xf]
  %vm115 = vcmask 31744
  %v117 = vsel %vm115, %v50, 0
  %v120 = vsel %vm115, %v51, 0
  %v123 = vsel %vm115, %v52, 0
  %v126 = vsel %vm115, %v53, 0
  %v129 = vsel %vm115, %v54, 0
  %v132 = vsel %vm115, %v55, 0
  %v135 = vsel %vm115, %v56, 0
  %v138 = vsel %vm115, %v57, 0
  %v141 = vsel %vm115, %v58, 0
  %v144 = vsel %vm115, %v59, 0
  %v147 = vsel %vm115, %v60, 0
  %v150 = vsel %vm115, %v61, 0
  %v153 = vsel %vm115, %v62, 0
  %v156 = vsel %vm115, %v63, 0
  %v159 = vsel %vm115, %v64, 0
  %v162 = vsel %vm115, %v65, 0
  %v165 = vsel %vm115, %v66, 0
  %v168 = vsel %vm115, %v67, 0
  %v171 = vsel %vm115, %v68, 0
  %v174 = vsel %vm115, %v69, 0
  %v177 = vsel %vm115, %v70, 0
  %v180 = vsel %vm115, %v71, 0
  %v183 = vsel %vm115, %v72, 0
  %v186 = vsel %vm115, %v73, 0
  %v189 = vsel %vm115, %v74, 0
  %v192 = vsel %vm115, %v75, 0
  %v195 = vsel %vm115, %v76, 0
  %v198 = vsel %vm115, %v77, 0
  %v201 = vsel %vm115, %v78, 0
  %v204 = vsel %vm115, %v79, 0
  %v207 = vsel %vm115, %v80, 0
  %v210 = vsel %vm115, %v81, 0
  %v213 = vsel %vm115, %v82, 0
  %v216 = vsel %vm115, %v83, 0
  %v219 = vsel %vm115, %v84, 0
  %v222 = vsel %vm115, %v85, 0
  %v225 = vsel %vm115, %v86, 0
  %v228 = vsel %vm115, %v87, 0
  %v231 = vsel %vm115, %v88, 0
  %v234 = vsel %vm115, %v89, 0
  %v237 = vsel %vm115, %v90, 0
  %v240 = vsel %vm115, %v91, 0
  %v243 = vsel %vm115, %v92, 0
  %v246 = vsel %vm115, %v93, 0
  %v249 = vsel %vm115, %v94, 0
  %v252 = vsel %vm115, %v95, 0
  %v255 = vsel %vm115, %v96, 0
  %v258 = vsel %vm115, %v97, 0
  %v261 = vsel %vm115, %v98, 0
  %v264 = vsel %vm115, %v99, 0
  %v267 = vsel %vm115, %v100, 0
  %v270 = vsel %vm115, %v101, 0
  %v273 = vsel %vm115, %v102, 0
  %v276 = vsel %vm115, %v103, 0
  %v279 = vsel %vm115, %v104, 0
  %v282 = vsel %vm115, %v105, 0
  %v285 = vsel %vm115, %v106, 0
  %v288 = vsel %vm115, %v107, 0
  %v291 = vsel %vm115, %v108, 0
  %v294 = vsel %vm115, %v109, 0
  %v297 = vsel %vm115, %v110, 0
  %v300 = vsel %vm115, %v111, 0
  %v303 = vsel %vm115, %v112, 0
  %v306 = vsel %vm115, %v113, 0
  %vm308 = vcmask 1043456
  %v310 = vsel %vm308, %v114, 0
  %312 = vmatpush.msra.mxu0 0.0
  %313 = vmatpush.msra.mxu0 0.0
  %314 = vmatpush.msra.mxu0 0.0
  %315 = vmatpush.msra.mxu0 0.0
  %316 = vmatpush.msra.mxu0 0.0
  %317 = vmatpush.msra.mxu0 0.0
  %318 = vmatpush.msra.mxu0 0.0
  %319 = vmatpush.msra.mxu0 0.0
  %320 = vmatpush.msra.mxu0 0.0
  %321 = vmatpush.msra.mxu0 0.0
  %322 = vmatpush.msra.mxu0 0.0
  %323 = vmatpush.msra.mxu0 0.0
  %324 = vmatpush.msra.mxu0 0.0
  %325 = vmatpush.msra.mxu0 0.0
  %326 = vmatpush.msra.mxu0 0.0
  %327 = vmatpush.msra.mxu0 %v310
  %328 = vmatmul.f32.gmra.mxu0 %v117
  %v329 = vpop.f32.mrf.mxu0
  %v330 = vadd.f32 0.0, %v329
  %331 = vmatmul.f32.gmra.mxu0 %v120
  %v332 = vpop.f32.mrf.mxu0
  %v333 = vadd.f32 0.0, %v332
  %334 = vmatmul.f32.gmra.mxu0 %v123
  %v335 = vpop.f32.mrf.mxu0
  %v336 = vadd.f32 0.0, %v335
  %337 = vmatmul.f32.gmra.mxu0 %v126
  %v338 = vpop.f32.mrf.mxu0
  %v339 = vadd.f32 0.0, %v338
  %340 = vmatmul.f32.gmra.mxu0 %v129
  %v341 = vpop.f32.mrf.mxu0
  %v342 = vadd.f32 0.0, %v341
  %343 = vmatmul.f32.gmra.mxu0 %v132
  %v344 = vpop.f32.mrf.mxu0
  %v345 = vadd.f32 0.0, %v344
  %346 = vmatmul.f32.gmra.mxu0 %v135
  %v347 = vpop.f32.mrf.mxu0
  %v348 = vadd.f32 0.0, %v347
  %349 = vmatmul.f32.gmra.mxu0 %v138
  %v350 = vpop.f32.mrf.mxu0
  %v351 = vadd.f32 0.0, %v350
  %352 = vmatmul.f32.gmra.mxu0 %v141
  %v353 = vpop.f32.mrf.mxu0
  %v354 = vadd.f32 0.0, %v353
  %355 = vmatmul.f32.gmra.mxu0 %v144
  %v356 = vpop.f32.mrf.mxu0
  %v357 = vadd.f32 0.0, %v356
  %358 = vmatmul.f32.gmra.mxu0 %v147
  %v359 = vpop.f32.mrf.mxu0
  %v360 = vadd.f32 0.0, %v359
  %361 = vmatmul.f32.gmra.mxu0 %v150
  %v362 = vpop.f32.mrf.mxu0
  %v363 = vadd.f32 0.0, %v362
  %364 = vmatmul.f32.gmra.mxu0 %v153
  %v365 = vpop.f32.mrf.mxu0
  %v366 = vadd.f32 0.0, %v365
  %367 = vmatmul.f32.gmra.mxu0 %v156
  %v368 = vpop.f32.mrf.mxu0
  %v369 = vadd.f32 0.0, %v368
  %370 = vmatmul.f32.gmra.mxu0 %v159
  %v371 = vpop.f32.mrf.mxu0
  %v372 = vadd.f32 0.0, %v371
  %373 = vmatmul.f32.gmra.mxu0 %v162
  %v374 = vpop.f32.mrf.mxu0
  %v375 = vadd.f32 0.0, %v374
  %376 = vmatmul.f32.gmra.mxu0 %v165
  %v377 = vpop.f32.mrf.mxu0
  %v378 = vadd.f32 0.0, %v377
  %379 = vmatmul.f32.gmra.mxu0 %v168
  %v380 = vpop.f32.mrf.mxu0
  %v381 = vadd.f32 0.0, %v380
  %382 = vmatmul.f32.gmra.mxu0 %v171
  %v383 = vpop.f32.mrf.mxu0
  %v384 = vadd.f32 0.0, %v383
  %385 = vmatmul.f32.gmra.mxu0 %v174
  %v386 = vpop.f32.mrf.mxu0
  %v387 = vadd.f32 0.0, %v386
  %388 = vmatmul.f32.gmra.mxu0 %v177
  %v389 = vpop.f32.mrf.mxu0
  %v390 = vadd.f32 0.0, %v389
  %391 = vmatmul.f32.gmra.mxu0 %v180
  %v392 = vpop.f32.mrf.mxu0
  %v393 = vadd.f32 0.0, %v392
  %394 = vmatmul.f32.gmra.mxu0 %v183
  %v395 = vpop.f32.mrf.mxu0
  %v396 = vadd.f32 0.0, %v395
  %397 = vmatmul.f32.gmra.mxu0 %v186
  %v398 = vpop.f32.mrf.mxu0
  %v399 = vadd.f32 0.0, %v398
  %400 = vmatmul.f32.gmra.mxu0 %v189
  %v401 = vpop.f32.mrf.mxu0
  %v402 = vadd.f32 0.0, %v401
  %403 = vmatmul.f32.gmra.mxu0 %v192
  %v404 = vpop.f32.mrf.mxu0
  %v405 = vadd.f32 0.0, %v404
  %406 = vmatmul.f32.gmra.mxu0 %v195
  %v407 = vpop.f32.mrf.mxu0
  %v408 = vadd.f32 0.0, %v407
  %409 = vmatmul.f32.gmra.mxu0 %v198
  %v410 = vpop.f32.mrf.mxu0
  %v411 = vadd.f32 0.0, %v410
  %412 = vmatmul.f32.gmra.mxu0 %v201
  %v413 = vpop.f32.mrf.mxu0
  %v414 = vadd.f32 0.0, %v413
  %415 = vmatmul.f32.gmra.mxu0 %v204
  %v416 = vpop.f32.mrf.mxu0
  %v417 = vadd.f32 0.0, %v416
  %418 = vmatmul.f32.gmra.mxu0 %v207
  %v419 = vpop.f32.mrf.mxu0
  %v420 = vadd.f32 0.0, %v419
  %421 = vmatmul.f32.gmra.mxu0 %v210
  %v422 = vpop.f32.mrf.mxu0
  %v423 = vadd.f32 0.0, %v422
  %424 = vmatmul.f32.gmra.mxu0 %v213
  %v425 = vpop.f32.mrf.mxu0
  %v426 = vadd.f32 0.0, %v425
  %427 = vmatmul.f32.gmra.mxu0 %v216
  %v428 = vpop.f32.mrf.mxu0
  %v429 = vadd.f32 0.0, %v428
  %430 = vmatmul.f32.gmra.mxu0 %v219
  %v431 = vpop.f32.mrf.mxu0
  %v432 = vadd.f32 0.0, %v431
  %433 = vmatmul.f32.gmra.mxu0 %v222
  %v434 = vpop.f32.mrf.mxu0
  %v435 = vadd.f32 0.0, %v434
  %436 = vmatmul.f32.gmra.mxu0 %v225
  %v437 = vpop.f32.mrf.mxu0
  %v438 = vadd.f32 0.0, %v437
  %439 = vmatmul.f32.gmra.mxu0 %v228
  %v440 = vpop.f32.mrf.mxu0
  %v441 = vadd.f32 0.0, %v440
  %442 = vmatmul.f32.gmra.mxu0 %v231
  %v443 = vpop.f32.mrf.mxu0
  %v444 = vadd.f32 0.0, %v443
  %445 = vmatmul.f32.gmra.mxu0 %v234
  %v446 = vpop.f32.mrf.mxu0
  %v447 = vadd.f32 0.0, %v446
  %448 = vmatmul.f32.gmra.mxu0 %v237
  %v449 = vpop.f32.mrf.mxu0
  %v450 = vadd.f32 0.0, %v449
  %451 = vmatmul.f32.gmra.mxu0 %v240
  %v452 = vpop.f32.mrf.mxu0
  %v453 = vadd.f32 0.0, %v452
  %454 = vmatmul.f32.gmra.mxu0 %v243
  %v455 = vpop.f32.mrf.mxu0
  %v456 = vadd.f32 0.0, %v455
  %457 = vmatmul.f32.gmra.mxu0 %v246
  %v458 = vpop.f32.mrf.mxu0
  %v459 = vadd.f32 0.0, %v458
  %460 = vmatmul.f32.gmra.mxu0 %v249
  %v461 = vpop.f32.mrf.mxu0
  %v462 = vadd.f32 0.0, %v461
  %463 = vmatmul.f32.gmra.mxu0 %v252
  %v464 = vpop.f32.mrf.mxu0
  %v465 = vadd.f32 0.0, %v464
  %466 = vmatmul.f32.gmra.mxu0 %v255
  %v467 = vpop.f32.mrf.mxu0
  %v468 = vadd.f32 0.0, %v467
  %469 = vmatmul.f32.gmra.mxu0 %v258
  %v470 = vpop.f32.mrf.mxu0
  %v471 = vadd.f32 0.0, %v470
  %472 = vmatmul.f32.gmra.mxu0 %v261
  %v473 = vpop.f32.mrf.mxu0
  %v474 = vadd.f32 0.0, %v473
  %475 = vmatmul.f32.gmra.mxu0 %v264
  %v476 = vpop.f32.mrf.mxu0
  %v477 = vadd.f32 0.0, %v476
  %478 = vmatmul.f32.gmra.mxu0 %v267
  %v479 = vpop.f32.mrf.mxu0
  %v480 = vadd.f32 0.0, %v479
  %481 = vmatmul.f32.gmra.mxu0 %v270
  %v482 = vpop.f32.mrf.mxu0
  %v483 = vadd.f32 0.0, %v482
  %484 = vmatmul.f32.gmra.mxu0 %v273
  %v485 = vpop.f32.mrf.mxu0
  %v486 = vadd.f32 0.0, %v485
  %487 = vmatmul.f32.gmra.mxu0 %v276
  %v488 = vpop.f32.mrf.mxu0
  %v489 = vadd.f32 0.0, %v488
  %490 = vmatmul.f32.gmra.mxu0 %v279
  %v491 = vpop.f32.mrf.mxu0
  %v492 = vadd.f32 0.0, %v491
  %493 = vmatmul.f32.gmra.mxu0 %v282
  %v494 = vpop.f32.mrf.mxu0
  %v495 = vadd.f32 0.0, %v494
  %496 = vmatmul.f32.gmra.mxu0 %v285
  %v497 = vpop.f32.mrf.mxu0
  %v498 = vadd.f32 0.0, %v497
  %499 = vmatmul.f32.gmra.mxu0 %v288
  %v500 = vpop.f32.mrf.mxu0
  %v501 = vadd.f32 0.0, %v500
  %502 = vmatmul.f32.gmra.mxu0 %v291
  %v503 = vpop.f32.mrf.mxu0
  %v504 = vadd.f32 0.0, %v503
  %505 = vmatmul.f32.gmra.mxu0 %v294
  %v506 = vpop.f32.mrf.mxu0
  %v507 = vadd.f32 0.0, %v506
  %508 = vmatmul.f32.gmra.mxu0 %v297
  %v509 = vpop.f32.mrf.mxu0
  %v510 = vadd.f32 0.0, %v509
  %511 = vmatmul.f32.gmra.mxu0 %v300
  %v512 = vpop.f32.mrf.mxu0
  %v513 = vadd.f32 0.0, %v512
  %514 = vmatmul.f32.gmra.mxu0 %v303
  %v515 = vpop.f32.mrf.mxu0
  %v516 = vadd.f32 0.0, %v515
  %517 = vmatmul.f32.gmra.mxu0 %v306
  %v518 = vpop.f32.mrf.mxu0
  %v519 = vadd.f32 0.0, %v518
  %520 = vdwg.mxu0
  %vm521 = vcmask 523264
  %522 = vst.msk [vmem:[%s47] sm:$0xff] %vm521, %v330
  %523 = vst.msk [vmem:[%s47 + $0x8] sm:$0xff] %vm521, %v333
  %524 = vst.msk [vmem:[%s47 + $0x10] sm:$0xff] %vm521, %v336
  %525 = vst.msk [vmem:[%s47 + $0x18] sm:$0xff] %vm521, %v339
  %526 = vst.msk [vmem:[%s47 + $0x20] sm:$0xff] %vm521, %v342
  %527 = vst.msk [vmem:[%s47 + $0x28] sm:$0xff] %vm521, %v345
  %528 = vst.msk [vmem:[%s47 + $0x30] sm:$0xff] %vm521, %v348
  %529 = vst.msk [vmem:[%s47 + $0x38] sm:$0xff] %vm521, %v351
  %530 = vst.msk [vmem:[%s47 + $0x40] sm:$0xff] %vm521, %v354
  %531 = vst.msk [vmem:[%s47 + $0x48] sm:$0xff] %vm521, %v357
  %532 = vst.msk [vmem:[%s47 + $0x50] sm:$0xff] %vm521, %v360
  %533 = vst.msk [vmem:[%s47 + $0x58] sm:$0xff] %vm521, %v363
  %534 = vst.msk [vmem:[%s47 + $0x60] sm:$0xff] %vm521, %v366
  %535 = vst.msk [vmem:[%s47 + $0x68] sm:$0xff] %vm521, %v369
  %536 = vst.msk [vmem:[%s47 + $0x70] sm:$0xff] %vm521, %v372
  %537 = vst.msk [vmem:[%s47 + $0x78] sm:$0xff] %vm521, %v375
  %538 = vst.msk [vmem:[%s47 + $0x80] sm:$0xff] %vm521, %v378
  %539 = vst.msk [vmem:[%s47 + $0x88] sm:$0xff] %vm521, %v381
  %540 = vst.msk [vmem:[%s47 + $0x90] sm:$0xff] %vm521, %v384
  %541 = vst.msk [vmem:[%s47 + $0x98] sm:$0xff] %vm521, %v387
  %542 = vst.msk [vmem:[%s47 + $0xa0] sm:$0xff] %vm521, %v390
  %543 = vst.msk [vmem:[%s47 + $0xa8] sm:$0xff] %vm521, %v393
  %544 = vst.msk [vmem:[%s47 + $0xb0] sm:$0xff] %vm521, %v396
  %545 = vst.msk [vmem:[%s47 + $0xb8] sm:$0xff] %vm521, %v399
  %546 = vst.msk [vmem:[%s47 + $0xc0] sm:$0xff] %vm521, %v402
  %547 = vst.msk [vmem:[%s47 + $0xc8] sm:$0xff] %vm521, %v405
  %548 = vst.msk [vmem:[%s47 + $0xd0] sm:$0xff] %vm521, %v408
  %549 = vst.msk [vmem:[%s47 + $0xd8] sm:$0xff] %vm521, %v411
  %550 = vst.msk [vmem:[%s47 + $0xe0] sm:$0xff] %vm521, %v414
  %551 = vst.msk [vmem:[%s47 + $0xe8] sm:$0xff] %vm521, %v417
  %552 = vst.msk [vmem:[%s47 + $0xf0] sm:$0xff] %vm521, %v420
  %553 = vst.msk [vmem:[%s47 + $0xf8] sm:$0xff] %vm521, %v423
  %554 = vst.msk [vmem:[%s47 + $0x100] sm:$0xff] %vm521, %v426
  %555 = vst.msk [vmem:[%s47 + $0x108] sm:$0xff] %vm521, %v429
  %556 = vst.msk [vmem:[%s47 + $0x110] sm:$0xff] %vm521, %v432
  %557 = vst.msk [vmem:[%s47 + $0x118] sm:$0xff] %vm521, %v435
  %558 = vst.msk [vmem:[%s47 + $0x120] sm:$0xff] %vm521, %v438
  %559 = vst.msk [vmem:[%s47 + $0x128] sm:$0xff] %vm521, %v441
  %560 = vst.msk [vmem:[%s47 + $0x130] sm:$0xff] %vm521, %v444
  %561 = vst.msk [vmem:[%s47 + $0x138] sm:$0xff] %vm521, %v447
  %562 = vst.msk [vmem:[%s47 + $0x140] sm:$0xff] %vm521, %v450
  %563 = vst.msk [vmem:[%s47 + $0x148] sm:$0xff] %vm521, %v453
  %564 = vst.msk [vmem:[%s47 + $0x150] sm:$0xff] %vm521, %v456
  %565 = vst.msk [vmem:[%s47 + $0x158] sm:$0xff] %vm521, %v459
  %566 = vst.msk [vmem:[%s47 + $0x160] sm:$0xff] %vm521, %v462
  %567 = vst.msk [vmem:[%s47 + $0x168] sm:$0xff] %vm521, %v465
  %568 = vst.msk [vmem:[%s47 + $0x170] sm:$0xff] %vm521, %v468
  %569 = vst.msk [vmem:[%s47 + $0x178] sm:$0xff] %vm521, %v471
  %570 = vst.msk [vmem:[%s47 + $0x180] sm:$0xff] %vm521, %v474
  %571 = vst.msk [vmem:[%s47 + $0x188] sm:$0xff] %vm521, %v477
  %572 = vst.msk [vmem:[%s47 + $0x190] sm:$0xff] %vm521, %v480
  %573 = vst.msk [vmem:[%s47 + $0x198] sm:$0xff] %vm521, %v483
  %574 = vst.msk [vmem:[%s47 + $0x1a0] sm:$0xff] %vm521, %v486
  %575 = vst.msk [vmem:[%s47 + $0x1a8] sm:$0xff] %vm521, %v489
  %576 = vst.msk [vmem:[%s47 + $0x1b0] sm:$0xff] %vm521, %v492
  %577 = vst.msk [vmem:[%s47 + $0x1b8] sm:$0xff] %vm521, %v495
  %578 = vst.msk [vmem:[%s47 + $0x1c0] sm:$0xff] %vm521, %v498
  %579 = vst.msk [vmem:[%s47 + $0x1c8] sm:$0xff] %vm521, %v501
  %580 = vst.msk [vmem:[%s47 + $0x1d0] sm:$0xff] %vm521, %v504
  %581 = vst.msk [vmem:[%s47 + $0x1d8] sm:$0xff] %vm521, %v507
  %582 = vst.msk [vmem:[%s47 + $0x1e0] sm:$0xff] %vm521, %v510
  %583 = vst.msk [vmem:[%s47 + $0x1e8] sm:$0xff] %vm521, %v513
  %584 = vst.msk [vmem:[%s47 + $0x1f0] sm:$0xff] %vm521, %v516
  %585 = vst.msk [vmem:[%s47 + $0x1f8] sm:$0xff] %vm521, %v519
  %p586 = scmp.eq.s32.totalorder 0, 0
  // Predicated region
  $region10: #{highway_layer.4} parent=0 // pred_check
    %p587 = pneg %p586
  $region11: #{highway_layer.4} parent=0 // pred_check_branch
    %589 = sbr.rel (%p587) target = $region13
  $region12: #{highway_layer.4} parent=0 // pred_region
    %vm590 = vcmask 516096
    %591 = vst.msk [vmem:[%s3] sm:$0x1] %vm590, 0.0
    %592 = vst.msk [vmem:[%s4] sm:$0x1] %vm590, 0.0
  $region13: #{highway_layer.4} parent=0 // pred_fallthru
    _
  %v593 = vld [vmem:[%s3] sm:$0x1]
  %v594 = vsel %vm521, %v330, 0.0
  %v595 = vsel %vm521, %v333, 0.0
  %v596 = vadd.f32 %v594, %v595
  %v597 = vsel %vm521, %v336, 0.0
  %v598 = vadd.f32 %v596, %v597
  %v599 = vsel %vm521, %v339, 0.0
  %v600 = vadd.f32 %v598, %v599
  %v601 = vsel %vm521, %v342, 0.0
  %v602 = vadd.f32 %v600, %v601
  %v603 = vsel %vm521, %v345, 0.0
  %v604 = vadd.f32 %v602, %v603
  %v605 = vsel %vm521, %v348, 0.0
  %v606 = vadd.f32 %v604, %v605
  %v607 = vsel %vm521, %v351, 0.0
  %v608 = vadd.f32 %v606, %v607
  %v609 = vsel %vm521, %v354, 0.0
  %v610 = vadd.f32 %v608, %v609
  %v611 = vsel %vm521, %v357, 0.0
  %v612 = vadd.f32 %v610, %v611
  %v613 = vsel %vm521, %v360, 0.0
  %v614 = vadd.f32 %v612, %v613
  %v615 = vsel %vm521, %v363, 0.0
  %v616 = vadd.f32 %v614, %v615
  %v617 = vsel %vm521, %v366, 0.0
  %v618 = vadd.f32 %v616, %v617
  %v619 = vsel %vm521, %v369, 0.0
  %v620 = vadd.f32 %v618, %v619
  %v621 = vsel %vm521, %v372, 0.0
  %v622 = vadd.f32 %v620, %v621
  %v623 = vsel %vm521, %v375, 0.0
  %v624 = vadd.f32 %v622, %v623
  %v625 = vsel %vm521, %v378, 0.0
  %v626 = vadd.f32 %v624, %v625
  %v627 = vsel %vm521, %v381, 0.0
  %v628 = vadd.f32 %v626, %v627
  %v629 = vsel %vm521, %v384, 0.0
  %v630 = vadd.f32 %v628, %v629
  %v631 = vsel %vm521, %v387, 0.0
  %v632 = vadd.f32 %v630, %v631
  %v633 = vsel %vm521, %v390, 0.0
  %v634 = vadd.f32 %v632, %v633
  %v635 = vsel %vm521, %v393, 0.0
  %v636 = vadd.f32 %v634, %v635
  %v637 = vsel %vm521, %v396, 0.0
  %v638 = vadd.f32 %v636, %v637
  %v639 = vsel %vm521, %v399, 0.0
  %v640 = vadd.f32 %v638, %v639
  %v641 = vsel %vm521, %v402, 0.0
  %v642 = vadd.f32 %v640, %v641
  %v643 = vsel %vm521, %v405, 0.0
  %v644 = vadd.f32 %v642, %v643
  %v645 = vsel %vm521, %v408, 0.0
  %v646 = vadd.f32 %v644, %v645
  %v647 = vsel %vm521, %v411, 0.0
  %v648 = vadd.f32 %v646, %v647
  %v649 = vsel %vm521, %v414, 0.0
  %v650 = vadd.f32 %v648, %v649
  %v651 = vsel %vm521, %v417, 0.0
  %v652 = vadd.f32 %v650, %v651
  %v653 = vsel %vm521, %v420, 0.0
  %v654 = vadd.f32 %v652, %v653
  %v655 = vsel %vm521, %v423, 0.0
  %v656 = vadd.f32 %v654, %v655
  %v657 = vsel %vm521, %v426, 0.0
  %v658 = vadd.f32 %v656, %v657
  %v659 = vsel %vm521, %v429, 0.0
  %v660 = vadd.f32 %v658, %v659
  %v661 = vsel %vm521, %v432, 0.0
  %v662 = vadd.f32 %v660, %v661
  %v663 = vsel %vm521, %v435, 0.0
  %v664 = vadd.f32 %v662, %v663
  %v665 = vsel %vm521, %v438, 0.0
  %v666 = vadd.f32 %v664, %v665
  %v667 = vsel %vm521, %v441, 0.0
  %v668 = vadd.f32 %v666, %v667
  %v669 = vsel %vm521, %v444, 0.0
  %v670 = vadd.f32 %v668, %v669
  %v671 = vsel %vm521, %v447, 0.0
  %v672 = vadd.f32 %v670, %v671
  %v673 = vsel %vm521, %v450, 0.0
  %v674 = vadd.f32 %v672, %v673
  %v675 = vsel %vm521, %v453, 0.0
  %v676 = vadd.f32 %v674, %v675
  %v677 = vsel %vm521, %v456, 0.0
  %v678 = vadd.f32 %v676, %v677
  %v679 = vsel %vm521, %v459, 0.0
  %v680 = vadd.f32 %v678, %v679
  %v681 = vsel %vm521, %v462, 0.0
  %v682 = vadd.f32 %v680, %v681
  %v683 = vsel %vm521, %v465, 0.0
  %v684 = vadd.f32 %v682, %v683
  %v685 = vsel %vm521, %v468, 0.0
  %v686 = vadd.f32 %v684, %v685
  %v687 = vsel %vm521, %v471, 0.0
  %v688 = vadd.f32 %v686, %v687
  %v689 = vsel %vm521, %v474, 0.0
  %v690 = vadd.f32 %v688, %v689
  %v691 = vsel %vm521, %v477, 0.0
  %v692 = vadd.f32 %v690, %v691
  %v693 = vsel %vm521, %v480, 0.0
  %v694 = vadd.f32 %v692, %v693
  %v695 = vsel %vm521, %v483, 0.0
  %v696 = vadd.f32 %v694, %v695
  %v697 = vsel %vm521, %v486, 0.0
  %v698 = vadd.f32 %v696, %v697
  %v699 = vsel %vm521, %v489, 0.0
  %v700 = vadd.f32 %v698, %v699
  %v701 = vsel %vm521, %v492, 0.0
  %v702 = vadd.f32 %v700, %v701
  %v703 = vsel %vm521, %v495, 0.0
  %v704 = vadd.f32 %v702, %v703
  %v705 = vsel %vm521, %v498, 0.0
  %v706 = vadd.f32 %v704, %v705
  %v707 = vsel %vm521, %v501, 0.0
  %v708 = vadd.f32 %v706, %v707
  %v709 = vsel %vm521, %v504, 0.0
  %v710 = vadd.f32 %v708, %v709
  %v711 = vsel %vm521, %v507, 0.0
  %v712 = vadd.f32 %v710, %v711
  %v713 = vsel %vm521, %v510, 0.0
  %v714 = vadd.f32 %v712, %v713
  %v715 = vsel %vm521, %v513, 0.0
  %v716 = vadd.f32 %v714, %v715
  %v717 = vsel %vm521, %v516, 0.0
  %v718 = vadd.f32 %v716, %v717
  %v719 = vsel %vm521, %v519, 0.0
  %v720 = vadd.f32 %v718, %v719
  %v721 = vrot.slane %v720, 4
  %v722 = vadd.f32 %v720, %v721
  %v723 = vrot.slane %v722, 2
  %v724 = vadd.f32 %v722, %v723
  %v725 = vrot.slane %v724, 1
  %v726 = vadd.f32 %v724, %v725
  %v727 = vadd.f32 %v593, %v726
  %vm728 = vcmask 516096
  %729 = vst.msk [vmem:[%s3] sm:$0x1] %vm728, %v727
  %v730 = vld [vmem:[%s4] sm:$0x1]
  %v731 = vmul.f32 %v330, %v330
  %v732 = vmul.f32 %v333, %v333
  %v733 = vmul.f32 %v336, %v336
  %v734 = vmul.f32 %v339, %v339
  %v735 = vmul.f32 %v342, %v342
  %v736 = vmul.f32 %v345, %v345
  %v737 = vmul.f32 %v348, %v348
  %v738 = vmul.f32 %v351, %v351
  %v739 = vmul.f32 %v354, %v354
  %v740 = vmul.f32 %v357, %v357
  %v741 = vmul.f32 %v360, %v360
  %v742 = vmul.f32 %v363, %v363
  %v743 = vmul.f32 %v366, %v366
  %v744 = vmul.f32 %v369, %v369
  %v745 = vmul.f32 %v372, %v372
  %v746 = vmul.f32 %v375, %v375
  %v747 = vmul.f32 %v378, %v378
  %v748 = vmul.f32 %v381, %v381
  %v749 = vmul.f32 %v384, %v384
  %v750 = vmul.f32 %v387, %v387
  %v751 = vmul.f32 %v390, %v390
  %v752 = vmul.f32 %v393, %v393
  %v753 = vmul.f32 %v396, %v396
  %v754 = vmul.f32 %v399, %v399
  %v755 = vmul.f32 %v402, %v402
  %v756 = vmul.f32 %v405, %v405
  %v757 = vmul.f32 %v408, %v408
  %v758 = vmul.f32 %v411, %v411
  %v759 = vmul.f32 %v414, %v414
  %v760 = vmul.f32 %v417, %v417
  %v761 = vmul.f32 %v420, %v420
  %v762 = vmul.f32 %v423, %v423
  %v763 = vmul.f32 %v426, %v426
  %v764 = vmul.f32 %v429, %v429
  %v765 = vmul.f32 %v432, %v432
  %v766 = vmul.f32 %v435, %v435
  %v767 = vmul.f32 %v438, %v438
  %v768 = vmul.f32 %v441, %v441
  %v769 = vmul.f32 %v444, %v444
  %v770 = vmul.f32 %v447, %v447
  %v771 = vmul.f32 %v450, %v450
  %v772 = vmul.f32 %v453, %v453
  %v773 = vmul.f32 %v456, %v456
  %v774 = vmul.f32 %v459, %v459
  %v775 = vmul.f32 %v462, %v462
  %v776 = vmul.f32 %v465, %v465
  %v777 = vmul.f32 %v468, %v468
  %v778 = vmul.f32 %v471, %v471
  %v779 = vmul.f32 %v474, %v474
  %v780 = vmul.f32 %v477, %v477
  %v781 = vmul.f32 %v480, %v480
  %v782 = vmul.f32 %v483, %v483
  %v783 = vmul.f32 %v486, %v486
  %v784 = vmul.f32 %v489, %v489
  %v785 = vmul.f32 %v492, %v492
  %v786 = vmul.f32 %v495, %v495
  %v787 = vmul.f32 %v498, %v498
  %v788 = vmul.f32 %v501, %v501
  %v789 = vmul.f32 %v504, %v504
  %v790 = vmul.f32 %v507, %v507
  %v791 = vmul.f32 %v510, %v510
  %v792 = vmul.f32 %v513, %v513
  %v793 = vmul.f32 %v516, %v516
  %v794 = vmul.f32 %v519, %v519
  %v795 = vsel %vm521, %v731, 0.0
  %v796 = vsel %vm521, %v732, 0.0
  %v797 = vadd.f32 %v795, %v796
  %v798 = vsel %vm521, %v733, 0.0
  %v799 = vadd.f32 %v797, %v798
  %v800 = vsel %vm521, %v734, 0.0
  %v801 = vadd.f32 %v799, %v800
  %v802 = vsel %vm521, %v735, 0.0
  %v803 = vadd.f32 %v801, %v802
  %v804 = vsel %vm521, %v736, 0.0
  %v805 = vadd.f32 %v803, %v804
  %v806 = vsel %vm521, %v737, 0.0
  %v807 = vadd.f32 %v805, %v806
  %v808 = vsel %vm521, %v738, 0.0
  %v809 = vadd.f32 %v807, %v808
  %v810 = vsel %vm521, %v739, 0.0
  %v811 = vadd.f32 %v809, %v810
  %v812 = vsel %vm521, %v740, 0.0
  %v813 = vadd.f32 %v811, %v812
  %v814 = vsel %vm521, %v741, 0.0
  %v815 = vadd.f32 %v813, %v814
  %v816 = vsel %vm521, %v742, 0.0
  %v817 = vadd.f32 %v815, %v816
  %v818 = vsel %vm521, %v743, 0.0
  %v819 = vadd.f32 %v817, %v818
  %v820 = vsel %vm521, %v744, 0.0
  %v821 = vadd.f32 %v819, %v820
  %v822 = vsel %vm521, %v745, 0.0
  %v823 = vadd.f32 %v821, %v822
  %v824 = vsel %vm521, %v746, 0.0
  %v825 = vadd.f32 %v823, %v824
  %v826 = vsel %vm521, %v747, 0.0
  %v827 = vadd.f32 %v825, %v826
  %v828 = vsel %vm521, %v748, 0.0
  %v829 = vadd.f32 %v827, %v828
  %v830 = vsel %vm521, %v749, 0.0
  %v831 = vadd.f32 %v829, %v830
  %v832 = vsel %vm521, %v750, 0.0
  %v833 = vadd.f32 %v831, %v832
  %v834 = vsel %vm521, %v751, 0.0
  %v835 = vadd.f32 %v833, %v834
  %v836 = vsel %vm521, %v752, 0.0
  %v837 = vadd.f32 %v835, %v836
  %v838 = vsel %vm521, %v753, 0.0
  %v839 = vadd.f32 %v837, %v838
  %v840 = vsel %vm521, %v754, 0.0
  %v841 = vadd.f32 %v839, %v840
  %v842 = vsel %vm521, %v755, 0.0
  %v843 = vadd.f32 %v841, %v842
  %v844 = vsel %vm521, %v756, 0.0
  %v845 = vadd.f32 %v843, %v844
  %v846 = vsel %vm521, %v757, 0.0
  %v847 = vadd.f32 %v845, %v846
  %v848 = vsel %vm521, %v758, 0.0
  %v849 = vadd.f32 %v847, %v848
  %v850 = vsel %vm521, %v759, 0.0
  %v851 = vadd.f32 %v849, %v850
  %v852 = vsel %vm521, %v760, 0.0
  %v853 = vadd.f32 %v851, %v852
  %v854 = vsel %vm521, %v761, 0.0
  %v855 = vadd.f32 %v853, %v854
  %v856 = vsel %vm521, %v762, 0.0
  %v857 = vadd.f32 %v855, %v856
  %v858 = vsel %vm521, %v763, 0.0
  %v859 = vadd.f32 %v857, %v858
  %v860 = vsel %vm521, %v764, 0.0
  %v861 = vadd.f32 %v859, %v860
  %v862 = vsel %vm521, %v765, 0.0
  %v863 = vadd.f32 %v861, %v862
  %v864 = vsel %vm521, %v766, 0.0
  %v865 = vadd.f32 %v863, %v864
  %v866 = vsel %vm521, %v767, 0.0
  %v867 = vadd.f32 %v865, %v866
  %v868 = vsel %vm521, %v768, 0.0
  %v869 = vadd.f32 %v867, %v868
  %v870 = vsel %vm521, %v769, 0.0
  %v871 = vadd.f32 %v869, %v870
  %v872 = vsel %vm521, %v770, 0.0
  %v873 = vadd.f32 %v871, %v872
  %v874 = vsel %vm521, %v771, 0.0
  %v875 = vadd.f32 %v873, %v874
  %v876 = vsel %vm521, %v772, 0.0
  %v877 = vadd.f32 %v875, %v876
  %v878 = vsel %vm521, %v773, 0.0
  %v879 = vadd.f32 %v877, %v878
  %v880 = vsel %vm521, %v774, 0.0
  %v881 = vadd.f32 %v879, %v880
  %v882 = vsel %vm521, %v775, 0.0
  %v883 = vadd.f32 %v881, %v882
  %v884 = vsel %vm521, %v776, 0.0
  %v885 = vadd.f32 %v883, %v884
  %v886 = vsel %vm521, %v777, 0.0
  %v887 = vadd.f32 %v885, %v886
  %v888 = vsel %vm521, %v778, 0.0
  %v889 = vadd.f32 %v887, %v888
  %v890 = vsel %vm521, %v779, 0.0
  %v891 = vadd.f32 %v889, %v890
  %v892 = vsel %vm521, %v780, 0.0
  %v893 = vadd.f32 %v891, %v892
  %v894 = vsel %vm521, %v781, 0.0
  %v895 = vadd.f32 %v893, %v894
  %v896 = vsel %vm521, %v782, 0.0
  %v897 = vadd.f32 %v895, %v896
  %v898 = vsel %vm521, %v783, 0.0
  %v899 = vadd.f32 %v897, %v898
  %v900 = vsel %vm521, %v784, 0.0
  %v901 = vadd.f32 %v899, %v900
  %v902 = vsel %vm521, %v785, 0.0
  %v903 = vadd.f32 %v901, %v902
  %v904 = vsel %vm521, %v786, 0.0
  %v905 = vadd.f32 %v903, %v904
  %v906 = vsel %vm521, %v787, 0.0
  %v907 = vadd.f32 %v905, %v906
  %v908 = vsel %vm521, %v788, 0.0
  %v909 = vadd.f32 %v907, %v908
  %v910 = vsel %vm521, %v789, 0.0
  %v911 = vadd.f32 %v909, %v910
  %v912 = vsel %vm521, %v790, 0.0
  %v913 = vadd.f32 %v911, %v912
  %v914 = vsel %vm521, %v791, 0.0
  %v915 = vadd.f32 %v913, %v914
  %v916 = vsel %vm521, %v792, 0.0
  %v917 = vadd.f32 %v915, %v916
  %v918 = vsel %vm521, %v793, 0.0
  %v919 = vadd.f32 %v917, %v918
  %v920 = vsel %vm521, %v794, 0.0
  %v921 = vadd.f32 %v919, %v920
  %v922 = vrot.slane %v921, 4
  %v923 = vadd.f32 %v921, %v922
  %v924 = vrot.slane %v923, 2
  %v925 = vadd.f32 %v923, %v924
  %v926 = vrot.slane %v925, 1
  %v927 = vadd.f32 %v925, %v926
  %v928 = vadd.f32 %v730, %v927
  %929 = vst.msk [vmem:[%s4] sm:$0x1] %vm728, %v928
  %s930 = sadd.s32 0, 0
  %s931 = smul.u32 64, %s930
  %p932 = scmp.lt.s32.totalorder %s931, 63
  %s933 = scalar_select %p932, %s931, 63
  %s934 = smul.addr %s933, 8
  %s935 = scalar_lea.vmem %s2, %s934
  // Predicated region
  $region14: #{highway_layer.4} parent=0 // pred_check
    _
  $region15: #{highway_layer.4} parent=0 // pred_check_branch
    %937 = sbr.rel (0) target = $region17
  $region16: #{highway_layer.4} parent=0 // pred_region
    %s938 = sadd.s32 0, 0
    %s939 = smul.u32 64, %s938
  $region17: #{highway_layer.4} parent=0 // pred_fallthru
    _
  // Predicated region
  $region18: #{highway_layer.4} parent=0 // pred_check
    _
  $region19: #{highway_layer.4} parent=0 // pred_check_branch
    %941 = sbr.rel (0) target = $region21
  $region20: #{highway_layer.4} parent=0 // pred_region
    _
  $region21: #{highway_layer.4} parent=0 // pred_fallthru
    _
  // Predicated region
  $region22: #{highway_layer.4} parent=0 // pred_check
    _
  $region23: #{highway_layer.4} parent=0 // pred_check_branch
    %943 = sbr.rel (0) target = $region25
  $region24: #{highway_layer.4} parent=0 // pred_region
    _
  $region25: #{highway_layer.4} parent=0 // pred_fallthru
    _
  // Predicated region
  $region26: #{highway_layer.4} parent=0 // pred_check
    _
  $region27: #{highway_layer.4} parent=0 // pred_check_branch
    %945 = sbr.rel (0) target = $region29
  $region28: #{highway_layer.4} parent=0 // pred_region
    %s946 = sadd.s32 0, 0
    %s947 = smul.u32 64, %s946
    %p948 = scmp.lt.s32.totalorder %s947, 63
    %s949 = scalar_select %p948, %s947, 63
    %s950 = smul.addr %s949, 8
    %s951 = scalar_lea.vmem %s2, %s950
  $region29: #{highway_layer.4} parent=0 // pred_fallthru
    _
  // Predicated region
  $region30: #{highway_layer.4} parent=0 // pred_check
    _
  $region31: #{highway_layer.4} parent=0 // pred_check_branch
    %953 = sbr.rel (0) target = $region33
  $region32: #{highway_layer.4} parent=0 // pred_region
    _
  $region33: #{highway_layer.4} parent=0 // pred_fallthru
    _
  // Predicated region
  $region34: #{highway_layer.4} parent=0 // pred_check
    _
  $region35: #{highway_layer.4} parent=0 // pred_check_branch
    %955 = sbr.rel (0) target = $region37
  $region36: #{highway_layer.4} parent=0 // pred_region
    _
  $region37: #{highway_layer.4} parent=0 // pred_fallthru
    _

// kernel: highway_layer.7
$region0: #{highway_layer.7}
  #allocation0 [shape = 'u32[]', space=smem, size = 0x4, offset = 0x4, fixed_abs, tag = 'smem constant byte address 0x4 - core index']
  #allocation1 [shape = 'u32[72,128]{1,0:T(1,128)}', space=vmem, size = 0x9000, scoped, tag = 'internal scratch']
  %s0 = inlined_call_operand.vmem [shape: f32[576,128], index: 0, kind: input, shape index: {}]
  %s1 = inlined_call_operand.vmem [shape: f32[576,64], index: 1, kind: input, shape index: {}]
  %s2 = inlined_call_operand.vmem [shape: f32[1,128], index: 2, kind: input, shape index: {}]
  %s3 = inlined_call_operand.vmem [shape: f32[1,128], index: 3, kind: input, shape index: {}]
  %s4 = inlined_call_operand.vmem [shape: f32[1,128], index: 4, kind: input, shape index: {}]
  %s5 = inlined_call_operand.vmem [shape: f32[1,128], index: 5, kind: input, shape index: {}]
  %s6 = inlined_call_operand.vmem [shape: f32[576,64], index: 6, kind: output, shape index: {}]
  %s7 = sld [smem:[#allocation0]]
  $region57: #{highway_layer.7} parent=0
    _
  %s9 = ssub.s32 1, %s7
  %s10 = scalar_select 0, %s9, %s7
  loop: start=0, step=1, limit=4
  $region2: #{highway_layer.7} parent=0 // loop_pre_header
    _
  $region3: #{highway_layer.7} parent=0 // loop_header
    %s12 = sphi 0, %s16
    %p13 = scmp.ge.s32.totalorder %s12, 4
    %s22 = sphi 0, %s24
    %s25 = sphi 0, %s22
    %s26 = sphi 0, %s25
    %s42 = sphi 0, %s26
    %s48 = sphi 0, %s50
    %s51 = sphi 0, %s48
    %s52 = sphi 0, %s51
    %s68 = sphi 0, %s52
    %s72 = sphi 0, %s72
    %s74 = sphi 0, %s72
    %s75 = sphi 0, %s74
    %s89 = sphi 0, %s75
    %s93 = sphi 0, %s93
    %s95 = sphi 0, %s93
    %s96 = sphi 0, %s95
    %s110 = sphi 0, %s96
    %s114 = sphi 0, %s114
    %s116 = sphi 0, %s114
    %s117 = sphi 0, %s116
    %s131 = sphi 0, %s117
    %s135 = sphi 0, %s135
    %s137 = sphi 0, %s135
    %s138 = sphi 0, %s137
    %s152 = sphi 0, %s138
    %s158 = sphi 0, %s160
    %s161 = sphi 0, %s158
    %s162 = sphi 0, %s161
    %s178 = sphi 0, %s162
  $region4: #{highway_layer.7} parent=0 // loop_header_branch
    %15 = sbr.rel (%p13) target = $region8
  $region5: #{highway_layer.7} parent=0 // loop_body
    %s17 = ssub.s32 %s12, 1
    %s18 = ssub.s32 %s12, 2
    %s19 = sadd.s32 %s12, 1
    %s20 = ssub.s32 %s12, %s19
    %p21 = scmp.eq.s32.totalorder %s20, 0
    %s23 = sadd.s32 %s22, 1
    %s24 = scalar_select %p21, %s22, %s23
    %p27 = pneg %p21
    %p28 = scmp.eq.s32.totalorder %s12, 1
    %p29 = por %p27, %p28
    %p30 = scmp.ne.s32.totalorder %s22, %s25
    %p31 = scmp.eq.s32.totalorder %s12, 0
    %p32 = por %p30, %p31
    %p33 = scmp.ne.s32.totalorder %s22, %s25
    %p34 = scmp.eq.s32.totalorder %s17, 1
    %p35 = por %p33, %p34
    %p36 = scmp.ne.s32.totalorder %s25, %s26
    %p37 = scmp.eq.s32.totalorder %s17, 0
    %p38 = por %p36, %p37
    %p39 = scmp.ne.s32.totalorder %s25, %s26
    %p40 = scmp.eq.s32.totalorder %s18, 1
    %p41 = por %p39, %p40
    %p43 = scmp.ne.s32.totalorder %s26, %s42
    %p44 = scmp.eq.s32.totalorder %s18, 0
    %p45 = por %p43, %p44
    %s46 = ssub.s32 %s12, %s19
    %p47 = scmp.eq.s32.totalorder %s46, 0
    %s49 = sadd.s32 %s48, 1
    %s50 = scalar_select %p47, %s48, %s49
    %p53 = pneg %p47
    %p54 = scmp.eq.s32.totalorder %s12, 1
    %p55 = por %p53, %p54
    %p56 = scmp.ne.s32.totalorder %s48, %s51
    %p57 = scmp.eq.s32.totalorder %s12, 0
    %p58 = por %p56, %p57
    %p59 = scmp.ne.s32.totalorder %s48, %s51
    %p60 = scmp.eq.s32.totalorder %s17, 1
    %p61 = por %p59, %p60
    %p62 = scmp.ne.s32.totalorder %s51, %s52
    %p63 = scmp.eq.s32.totalorder %s17, 0
    %p64 = por %p62, %p63
    %p65 = scmp.ne.s32.totalorder %s51, %s52
    %p66 = scmp.eq.s32.totalorder %s18, 1
    %p67 = por %p65, %p66
    %p69 = scmp.ne.s32.totalorder %s52, %s68
    %p70 = scmp.eq.s32.totalorder %s18, 0
    %p71 = por %p69, %p70
    %s73 = sadd.s32 %s72, 1
    %p76 = scmp.eq.s32.totalorder %s12, 1
    %p77 = scmp.ne.s32.totalorder %s72, %s74
    %p78 = scmp.eq.s32.totalorder %s12, 0
    %p79 = por %p77, %p78
    %p80 = scmp.ne.s32.totalorder %s72, %s74
    %p81 = scmp.eq.s32.totalorder %s17, 1
    %p82 = por %p80, %p81
    %p83 = scmp.ne.s32.totalorder %s74, %s75
    %p84 = scmp.eq.s32.totalorder %s17, 0
    %p85 = por %p83, %p84
    %p86 = scmp.ne.s32.totalorder %s74, %s75
    %p87 = scmp.eq.s32.totalorder %s18, 1
    %p88 = por %p86, %p87
    %p90 = scmp.ne.s32.totalorder %s75, %s89
    %p91 = scmp.eq.s32.totalorder %s18, 0
    %p92 = por %p90, %p91
    %s94 = sadd.s32 %s93, 1
    %p97 = scmp.eq.s32.totalorder %s12, 1
    %p98 = scmp.ne.s32.totalorder %s93, %s95
    %p99 = scmp.eq.s32.totalorder %s12, 0
    %p100 = por %p98, %p99
    %p101 = scmp.ne.s32.totalorder %s93, %s95
    %p102 = scmp.eq.s32.totalorder %s17, 1
    %p103 = por %p101, %p102
    %p104 = scmp.ne.s32.totalorder %s95, %s96
    %p105 = scmp.eq.s32.totalorder %s17, 0
    %p106 = por %p104, %p105
    %p107 = scmp.ne.s32.totalorder %s95, %s96
    %p108 = scmp.eq.s32.totalorder %s18, 1
    %p109 = por %p107, %p108
    %p111 = scmp.ne.s32.totalorder %s96, %s110
    %p112 = scmp.eq.s32.totalorder %s18, 0
    %p113 = por %p111, %p112
    %s115 = sadd.s32 %s114, 1
    %p118 = scmp.eq.s32.totalorder %s12, 1
    %p119 = scmp.ne.s32.totalorder %s114, %s116
    %p120 = scmp.eq.s32.totalorder %s12, 0
    %p121 = por %p119, %p120
    %p122 = scmp.ne.s32.totalorder %s114, %s116
    %p123 = scmp.eq.s32.totalorder %s17, 1
    %p124 = por %p122, %p123
    %p125 = scmp.ne.s32.totalorder %s116, %s117
    %p126 = scmp.eq.s32.totalorder %s17, 0
    %p127 = por %p125, %p126
    %p128 = scmp.ne.s32.totalorder %s116, %s117
    %p129 = scmp.eq.s32.totalorder %s18, 1
    %p130 = por %p128, %p129
    %p132 = scmp.ne.s32.totalorder %s117, %s131
    %p133 = scmp.eq.s32.totalorder %s18, 0
    %p134 = por %p132, %p133
    %s136 = sadd.s32 %s135, 1
    %p139 = scmp.eq.s32.totalorder %s12, 1
    %p140 = scmp.ne.s32.totalorder %s135, %s137
    %p141 = scmp.eq.s32.totalorder %s12, 0
    %p142 = por %p140, %p141
    %p143 = scmp.ne.s32.totalorder %s135, %s137
    %p144 = scmp.eq.s32.totalorder %s17, 1
    %p145 = por %p143, %p144
    %p146 = scmp.ne.s32.totalorder %s137, %s138
    %p147 = scmp.eq.s32.totalorder %s17, 0
    %p148 = por %p146, %p147
    %p149 = scmp.ne.s32.totalorder %s137, %s138
    %p150 = scmp.eq.s32.totalorder %s18, 1
    %p151 = por %p149, %p150
    %p153 = scmp.ne.s32.totalorder %s138, %s152
    %p154 = scmp.eq.s32.totalorder %s18, 0
    %p155 = por %p153, %p154
    %s156 = ssub.s32 %s12, %s19
    %p157 = scmp.eq.s32.totalorder %s156, 0
    %s159 = sadd.s32 %s158, 1
    %s160 = scalar_select %p157, %s158, %s159
    %p163 = pneg %p157
    %p164 = scmp.eq.s32.totalorder %s12, 1
    %p165 = por %p163, %p164
    %p166 = scmp.ne.s32.totalorder %s158, %s161
    %p167 = scmp.eq.s32.totalorder %s12, 0
    %p168 = por %p166, %p167
    %p169 = scmp.ne.s32.totalorder %s158, %s161
    %p170 = scmp.eq.s32.totalorder %s17, 1
    %p171 = por %p169, %p170
    %p172 = scmp.ne.s32.totalorder %s161, %s162
    %p173 = scmp.eq.s32.totalorder %s17, 0
    %p174 = por %p172, %p173
    %p175 = scmp.ne.s32.totalorder %s161, %s162
    %p176 = scmp.eq.s32.totalorder %s18, 1
    %p177 = por %p175, %p176
    %p179 = scmp.ne.s32.totalorder %s162, %s178
    %p180 = scmp.eq.s32.totalorder %s18, 0
    %p181 = por %p179, %p180
    %p182 = scmp.le.s32.totalorder 1, %s12
    %p183 = scmp.lt.s32.totalorder %s12, 3
    %p184 = pnand %p182, %p183
    %p185 = pneg %p184
    // Predicated region
    $region9: #{highway_layer.7} parent=5 // pred_check
      _
    $region10: #{highway_layer.7} parent=5 // pred_check_branch
      %187 = sbr.rel (%p184) target = $region12
    $region11: #{highway_layer.7} parent=5 // pred_region
      %s188 = ssub.s32 %s12, 1
      // Predicated region
      $region13: #{highway_layer.7} parent=11 // pred_check
        %p189 = pneg %p85
      $region14: #{highway_layer.7} parent=11 // pred_check_branch
        %191 = sbr.rel (%p189) target = $region16
      $region15: #{highway_layer.7} parent=11 // pred_region
        _
      $region16: #{highway_layer.7} parent=11 // pred_fallthru
        _
      // Predicated region
      $region17: #{highway_layer.7} parent=11 // pred_check
        %p192 = pneg %p106
      $region18: #{highway_layer.7} parent=11 // pred_check_branch
        %194 = sbr.rel (%p192) target = $region20
      $region19: #{highway_layer.7} parent=11 // pred_region
        _
      $region20: #{highway_layer.7} parent=11 // pred_fallthru
        _
      // Predicated region
      $region21: #{highway_layer.7} parent=11 // pred_check
        %p195 = pneg %p127
      $region22: #{highway_layer.7} parent=11 // pred_check_branch
        %197 = sbr.rel (%p195) target = $region24
      $region23: #{highway_layer.7} parent=11 // pred_region
        _
      $region24: #{highway_layer.7} parent=11 // pred_fallthru
        _
      // Predicated region
      $region25: #{highway_layer.7} parent=11 // pred_check
        %p198 = pneg %p148
      $region26: #{highway_layer.7} parent=11 // pred_check_branch
        %200 = sbr.rel (%p198) target = $region28
      $region27: #{highway_layer.7} parent=11 // pred_region
        _
      $region28: #{highway_layer.7} parent=11 // pred_fallthru
        _
    $region12: #{highway_layer.7} parent=5 // pred_fallthru
      _
    %p201 = scmp.lt.s32.totalorder %s12, 2
    // Predicated region
    $region29: #{highway_layer.7} parent=5 // pred_check
      %p202 = pneg %p201
    $region30: #{highway_layer.7} parent=5 // pred_check_branch
      %204 = sbr.rel (%p202) target = $region32
    $region31: #{highway_layer.7} parent=5 // pred_region
      // Predicated region
      $region33: #{highway_layer.7} parent=31 // pred_check
        %p205 = pneg %p32
      $region34: #{highway_layer.7} parent=31 // pred_check_branch
        %207 = sbr.rel (%p205) target = $region36
      $region35: #{highway_layer.7} parent=31 // pred_region
        %s208 = smul.u32 36, %s12
        %p209 = scmp.lt.s32.totalorder %s208, 71
        %s210 = scalar_select %p209, %s208, 71
        %s211 = smul.addr %s210, 8
        %s212 = scalar_lea.vmem %s0, %s211
        %s213 = smul.u32 36, %s12
      $region36: #{highway_layer.7} parent=31 // pred_fallthru
        _
      // Predicated region
      $region37: #{highway_layer.7} parent=31 // pred_check
        %p214 = pneg %p58
      $region38: #{highway_layer.7} parent=31 // pred_check_branch
        %216 = sbr.rel (%p214) target = $region40
      $region39: #{highway_layer.7} parent=31 // pred_region
        %s217 = smul.u32 36, %s12
        %p218 = scmp.lt.s32.totalorder %s217, 71
        %s219 = scalar_select %p218, %s217, 71
        %s220 = smul.addr %s219, 8
        %s221 = scalar_lea.vmem %s1, %s220
        %s222 = smul.u32 36, %s12
      $region40: #{highway_layer.7} parent=31 // pred_fallthru
        _
    $region32: #{highway_layer.7} parent=5 // pred_fallthru
      _
    %p223 = scmp.le.s32.totalorder 1, %s12
    %p224 = scmp.lt.s32.totalorder %s12, 3
    %p225 = pnand %p223, %p224
    %p226 = pneg %p225
    // Predicated region
    $region41: #{highway_layer.7} parent=5 // pred_check
      _
    $region42: #{highway_layer.7} parent=5 // pred_check_branch
      %228 = sbr.rel (%p225) target = $region44
    $region43: #{highway_layer.7} parent=5 // pred_region
      %s229 = ssub.s32 %s12, 1
      %s230 = smul.u32 36, %s17
      %p231 = scmp.lt.s32.totalorder %s230, 71
      %s232 = scalar_select %p231, %s230, 71
      %s233 = smul.addr %s232, 8
      %s234 = scalar_lea.vmem %s0, %s233
      %p235 = pneg %p38
      %p236 = pneg %p35
      %s237 = smul.u32 36, %s17
      %p238 = scmp.lt.s32.totalorder %s237, 71
      %s239 = scalar_select %p238, %s237, 71
      %s240 = smul.addr %s239, 8
      %s241 = scalar_lea.vmem %s1, %s240
      %p242 = pneg %p64
      %p243 = pneg %p61
      %p244 = pneg %p85
      %p245 = pneg %p82
      %p246 = pneg %p106
      %p247 = pneg %p103
      %p248 = pneg %p127
      %p249 = pneg %p124
      %p250 = pneg %p148
      %p251 = pneg %p145
      %p252 = pneg %p174
      %p253 = pneg %p171
      %s254 = smul.u32 36, %s17
      %p255 = scmp.lt.s32.totalorder %s254, 71
      %s256 = scalar_select %p255, %s254, 71
      %s257 = smul.addr %s256, 8
      %s258 = scalar_lea.vmem %s6, %s257
      %s259 = smul.u32 36, %s17
      %p260 = scmp.lt.s32.totalorder %s259, 71
      %s261 = scalar_select %p260, %s259, 71
      %s262 = smul.addr %s261, 8
      %s263 = scalar_lea.vmem %s0, %s262
      %s264 = smul.u32 36, %s17
      %s265 = smul.u32 36, %s17
      %p266 = scmp.lt.s32.totalorder %s265, 71
      %s267 = scalar_select %p266, %s265, 71
      %s268 = smul.addr %s267, 8
      %s269 = scalar_lea.vmem %s1, %s268
      %s270 = smul.u32 36, %s17
      %s271 = smul.u32 36, %s17
      %p272 = scmp.lt.s32.totalorder %s271, 71
      %s273 = scalar_select %p272, %s271, 71
      %s274 = smul.addr %s273, 8
      %s275 = scalar_lea.vmem %s6, %s274
      %s276 = smul.u32 36, %s17
      %v277 = vld [vmem:[%s2] sm:$0x1]
      %v278 = vmul.f32 %v277, 0.001953125
      %v279 = vld [vmem:[%s3] sm:$0x1]
      %v280 = vmul.f32 %v279, 0.001953125
      %v281 = vmul.f32 %v278, %v278
      %v282 = vsub.f32 %v280, %v281
      %v283 = vmax.f32 %v282, 0.0
      %v284 = vadd.f32 %v283, 1e-05
      %v285 = vrsqrt.pop %v284
      %v286 = vmul.f32 %v285, %v284
      %v287 = vmul.f32 %v286, %v285
      %v288 = vmul.f32 0.5, %v287
      %v289 = vsub.f32 1.5, %v288
      %v290 = vmul.f32 %v285, %v289
      %vm291 = vweird.f32 %v284
      %vm292 = vweird.f32 %v285
      %vm293 = vmor %vm291, %vm292
      %v294 = vsel %vm293, %v285, %v290
      %v295 = vld [vmem:[%s263] sm:$0xff]
      %v296 = vld [vmem:[%s263 + $0x8] sm:$0xff]
      %v297 = vld [vmem:[%s263 + $0x10] sm:$0xff]
      %v298 = vld [vmem:[%s263 + $0x18] sm:$0xff]
      %v299 = vld [vmem:[%s263 + $0x20] sm:$0xff]
      %v300 = vld [vmem:[%s263 + $0x28] sm:$0xff]
      %v301 = vld [vmem:[%s263 + $0x30] sm:$0xff]
      %v302 = vld [vmem:[%s263 + $0x38] sm:$0xff]
      %v303 = vld [vmem:[%s263 + $0x40] sm:$0xff]
      %v304 = vld [vmem:[%s263 + $0x48] sm:$0xff]
      %v305 = vld [vmem:[%s263 + $0x50] sm:$0xff]
      %v306 = vld [vmem:[%s263 + $0x58] sm:$0xff]
      %v307 = vld [vmem:[%s263 + $0x60] sm:$0xff]
      %v308 = vld [vmem:[%s263 + $0x68] sm:$0xff]
      %v309 = vld [vmem:[%s263 + $0x70] sm:$0xff]
      %v310 = vld [vmem:[%s263 + $0x78] sm:$0xff]
      %v311 = vld [vmem:[%s263 + $0x80] sm:$0xff]
      %v312 = vld [vmem:[%s263 + $0x88] sm:$0xff]
      %v313 = vld [vmem:[%s263 + $0x90] sm:$0xff]
      %v314 = vld [vmem:[%s263 + $0x98] sm:$0xff]
      %v315 = vld [vmem:[%s263 + $0xa0] sm:$0xff]
      %v316 = vld [vmem:[%s263 + $0xa8] sm:$0xff]
      %v317 = vld [vmem:[%s263 + $0xb0] sm:$0xff]
      %v318 = vld [vmem:[%s263 + $0xb8] sm:$0xff]
      %v319 = vld [vmem:[%s263 + $0xc0] sm:$0xff]
      %v320 = vld [vmem:[%s263 + $0xc8] sm:$0xff]
      %v321 = vld [vmem:[%s263 + $0xd0] sm:$0xff]
      %v322 = vld [vmem:[%s263 + $0xd8] sm:$0xff]
      %v323 = vld [vmem:[%s263 + $0xe0] sm:$0xff]
      %v324 = vld [vmem:[%s263 + $0xe8] sm:$0xff]
      %v325 = vld [vmem:[%s263 + $0xf0] sm:$0xff]
      %v326 = vld [vmem:[%s263 + $0xf8] sm:$0xff]
      %v327 = vld [vmem:[%s263 + $0x100] sm:$0xff]
      %v328 = vld [vmem:[%s263 + $0x108] sm:$0xff]
      %v329 = vld [vmem:[%s263 + $0x110] sm:$0xff]
      %v330 = vld [vmem:[%s263 + $0x118] sm:$0xff]
      %v332 = vperm.slane %v278, 0
      %v334 = vsub.f32 %v295, %v332
      %v335 = vsub.f32 %v296, %v332
      %v336 = vsub.f32 %v297, %v332
      %v337 = vsub.f32 %v298, %v332
      %v338 = vsub.f32 %v299, %v332
      %v339 = vsub.f32 %v300, %v332
      %v340 = vsub.f32 %v301, %v332
      %v341 = vsub.f32 %v302, %v332
      %v342 = vsub.f32 %v303, %v332
      %v343 = vsub.f32 %v304, %v332
      %v344 = vsub.f32 %v305, %v332
      %v345 = vsub.f32 %v306, %v332
      %v346 = vsub.f32 %v307, %v332
      %v347 = vsub.f32 %v308, %v332
      %v348 = vsub.f32 %v309, %v332
      %v349 = vsub.f32 %v310, %v332
      %v350 = vsub.f32 %v311, %v332
      %v351 = vsub.f32 %v312, %v332
      %v352 = vsub.f32 %v313, %v332
      %v353 = vsub.f32 %v314, %v332
      %v354 = vsub.f32 %v315, %v332
      %v355 = vsub.f32 %v316, %v332
      %v356 = vsub.f32 %v317, %v332
      %v357 = vsub.f32 %v318, %v332
      %v358 = vsub.f32 %v319, %v332
      %v359 = vsub.f32 %v320, %v332
      %v360 = vsub.f32 %v321, %v332
      %v361 = vsub.f32 %v322, %v332
      %v362 = vsub.f32 %v323, %v332
      %v363 = vsub.f32 %v324, %v332
      %v364 = vsub.f32 %v325, %v332
      %v365 = vsub.f32 %v326, %v332
      %v366 = vsub.f32 %v327, %v332
      %v367 = vsub.f32 %v328, %v332
      %v368 = vsub.f32 %v329, %v332
      %v369 = vsub.f32 %v330, %v332
      %v371 = vperm.slane %v294, 0
      %v373 = vmul.f32 %v334, %v371
      %v374 = vmul.f32 %v335, %v371
      %v375 = vmul.f32 %v336, %v371
      %v376 = vmul.f32 %v337, %v371
      %v377 = vmul.f32 %v338, %v371
      %v378 = vmul.f32 %v339, %v371
      %v379 = vmul.f32 %v340, %v371
      %v380 = vmul.f32 %v341, %v371
      %v381 = vmul.f32 %v342, %v371
      %v382 = vmul.f32 %v343, %v371
      %v383 = vmul.f32 %v344, %v371
      %v384 = vmul.f32 %v345, %v371
      %v385 = vmul.f32 %v346, %v371
      %v386 = vmul.f32 %v347, %v371
      %v387 = vmul.f32 %v348, %v371
      %v388 = vmul.f32 %v349, %v371
      %v389 = vmul.f32 %v350, %v371
      %v390 = vmul.f32 %v351, %v371
      %v391 = vmul.f32 %v352, %v371
      %v392 = vmul.f32 %v353, %v371
      %v393 = vmul.f32 %v354, %v371
      %v394 = vmul.f32 %v355, %v371
      %v395 = vmul.f32 %v356, %v371
      %v396 = vmul.f32 %v357, %v371
      %v397 = vmul.f32 %v358, %v371
      %v398 = vmul.f32 %v359, %v371
      %v399 = vmul.f32 %v360, %v371
      %v400 = vmul.f32 %v361, %v371
      %v401 = vmul.f32 %v362, %v371
      %v402 = vmul.f32 %v363, %v371
      %v403 = vmul.f32 %v364, %v371
      %v404 = vmul.f32 %v365, %v371
      %v405 = vmul.f32 %v366, %v371
      %v406 = vmul.f32 %v367, %v371
      %v407 = vmul.f32 %v368, %v371
      %v408 = vmul.f32 %v369, %v371
      %v409 = vld [vmem:[%s4] sm:$0x1]
      %v411 = vperm.slane %v409, 0
      %v413 = vmul.f32 %v373, %v411
      %v414 = vmul.f32 %v374, %v411
      %v415 = vmul.f32 %v375, %v411
      %v416 = vmul.f32 %v376, %v411
      %v417 = vmul.f32 %v377, %v411
      %v418 = vmul.f32 %v378, %v411
      %v419 = vmul.f32 %v379, %v411
      %v420 = vmul.f32 %v380, %v411
      %v421 = vmul.f32 %v381, %v411
      %v422 = vmul.f32 %v382, %v411
      %v423 = vmul.f32 %v383, %v411
      %v424 = vmul.f32 %v384, %v411
      %v425 = vmul.f32 %v385, %v411
      %v426 = vmul.f32 %v386, %v411
      %v427 = vmul.f32 %v387, %v411
      %v428 = vmul.f32 %v388, %v411
      %v429 = vmul.f32 %v389, %v411
      %v430 = vmul.f32 %v390, %v411
      %v431 = vmul.f32 %v391, %v411
      %v432 = vmul.f32 %v392, %v411
      %v433 = vmul.f32 %v393, %v411
      %v434 = vmul.f32 %v394, %v411
      %v435 = vmul.f32 %v395, %v411
      %v436 = vmul.f32 %v396, %v411
      %v437 = vmul.f32 %v397, %v411
      %v438 = vmul.f32 %v398, %v411
      %v439 = vmul.f32 %v399, %v411
      %v440 = vmul.f32 %v400, %v411
      %v441 = vmul.f32 %v401, %v411
      %v442 = vmul.f32 %v402, %v411
      %v443 = vmul.f32 %v403, %v411
      %v444 = vmul.f32 %v404, %v411
      %v445 = vmul.f32 %v405, %v411
      %v446 = vmul.f32 %v406, %v411
      %v447 = vmul.f32 %v407, %v411
      %v448 = vmul.f32 %v408, %v411
      %v449 = vld [vmem:[%s5] sm:$0x1]
      %v451 = vperm.slane %v449, 0
      %v453 = vadd.f32 %v413, %v451
      %v454 = vadd.f32 %v414, %v451
      %v455 = vadd.f32 %v415, %v451
      %v456 = vadd.f32 %v416, %v451
      %v457 = vadd.f32 %v417, %v451
      %v458 = vadd.f32 %v418, %v451
      %v459 = vadd.f32 %v419, %v451
      %v460 = vadd.f32 %v420, %v451
      %v461 = vadd.f32 %v421, %v451
      %v462 = vadd.f32 %v422, %v451
      %v463 = vadd.f32 %v423, %v451
      %v464 = vadd.f32 %v424, %v451
      %v465 = vadd.f32 %v425, %v451
      %v466 = vadd.f32 %v426, %v451
      %v467 = vadd.f32 %v427, %v451
      %v468 = vadd.f32 %v428, %v451
      %v469 = vadd.f32 %v429, %v451
      %v470 = vadd.f32 %v430, %v451
      %v471 = vadd.f32 %v431, %v451
      %v472 = vadd.f32 %v432, %v451
      %v473 = vadd.f32 %v433, %v451
      %v474 = vadd.f32 %v434, %v451
      %v475 = vadd.f32 %v435, %v451
      %v476 = vadd.f32 %v436, %v451
      %v477 = vadd.f32 %v437, %v451
      %v478 = vadd.f32 %v438, %v451
      %v479 = vadd.f32 %v439, %v451
      %v480 = vadd.f32 %v440, %v451
      %v481 = vadd.f32 %v441, %v451
      %v482 = vadd.f32 %v442, %v451
      %v483 = vadd.f32 %v443, %v451
      %v484 = vadd.f32 %v444, %v451
      %v485 = vadd.f32 %v445, %v451
      %v486 = vadd.f32 %v446, %v451
      %v487 = vadd.f32 %v447, %v451
      %v488 = vadd.f32 %v448, %v451
      %v489 = vmax.f32 %v453, 0.0
      %v490 = vmax.f32 %v454, 0.0
      %v491 = vmax.f32 %v455, 0.0
      %v492 = vmax.f32 %v456, 0.0
      %v493 = vmax.f32 %v457, 0.0
      %v494 = vmax.f32 %v458, 0.0
      %v495 = vmax.f32 %v459, 0.0
      %v496 = vmax.f32 %v460, 0.0
      %v497 = vmax.f32 %v461, 0.0
      %v498 = vmax.f32 %v462, 0.0
      %v499 = vmax.f32 %v463, 0.0
      %v500 = vmax.f32 %v464, 0.0
      %v501 = vmax.f32 %v465, 0.0
      %v502 = vmax.f32 %v466, 0.0
      %v503 = vmax.f32 %v467, 0.0
      %v504 = vmax.f32 %v468, 0.0
      %v505 = vmax.f32 %v469, 0.0
      %v506 = vmax.f32 %v470, 0.0
      %v507 = vmax.f32 %v471, 0.0
      %v508 = vmax.f32 %v472, 0.0
      %v509 = vmax.f32 %v473, 0.0
      %v510 = vmax.f32 %v474, 0.0
      %v511 = vmax.f32 %v475, 0.0
      %v512 = vmax.f32 %v476, 0.0
      %v513 = vmax.f32 %v477, 0.0
      %v514 = vmax.f32 %v478, 0.0
      %v515 = vmax.f32 %v479, 0.0
      %v516 = vmax.f32 %v480, 0.0
      %v517 = vmax.f32 %v481, 0.0
      %v518 = vmax.f32 %v482, 0.0
      %v519 = vmax.f32 %v483, 0.0
      %v520 = vmax.f32 %v484, 0.0
      %v521 = vmax.f32 %v485, 0.0
      %v522 = vmax.f32 %v486, 0.0
      %v523 = vmax.f32 %v487, 0.0
      %v524 = vmax.f32 %v488, 0.0
      %v525 = vxor.u32 %v489, 2147483648
      %v526 = vxor.u32 %v490, 2147483648
      %v527 = vxor.u32 %v491, 2147483648
      %v528 = vxor.u32 %v492, 2147483648
      %v529 = vxor.u32 %v493, 2147483648
      %v530 = vxor.u32 %v494, 2147483648
      %v531 = vxor.u32 %v495, 2147483648
      %v532 = vxor.u32 %v496, 2147483648
      %v533 = vxor.u32 %v497, 2147483648
      %v534 = vxor.u32 %v498, 2147483648
      %v535 = vxor.u32 %v499, 2147483648
      %v536 = vxor.u32 %v500, 2147483648
      %v537 = vxor.u32 %v501, 2147483648
      %v538 = vxor.u32 %v502, 2147483648
      %v539 = vxor.u32 %v503, 2147483648
      %v540 = vxor.u32 %v504, 2147483648
      %v541 = vxor.u32 %v505, 2147483648
      %v542 = vxor.u32 %v506, 2147483648
      %v543 = vxor.u32 %v507, 2147483648
      %v544 = vxor.u32 %v508, 2147483648
      %v545 = vxor.u32 %v509, 2147483648
      %v546 = vxor.u32 %v510, 2147483648
      %v547 = vxor.u32 %v511, 2147483648
      %v548 = vxor.u32 %v512, 2147483648
      %v549 = vxor.u32 %v513, 2147483648
      %v550 = vxor.u32 %v514, 2147483648
      %v551 = vxor.u32 %v515, 2147483648
      %v552 = vxor.u32 %v516, 2147483648
      %v553 = vxor.u32 %v517, 2147483648
      %v554 = vxor.u32 %v518, 2147483648
      %v555 = vxor.u32 %v519, 2147483648
      %v556 = vxor.u32 %v520, 2147483648
      %v557 = vxor.u32 %v521, 2147483648
      %v558 = vxor.u32 %v522, 2147483648
      %v559 = vxor.u32 %v523, 2147483648
      %v560 = vxor.u32 %v524, 2147483648
      %v561 = vmul.f32 %v525, 1.442695
      %v562 = vpow.pop %v561
      %v563 = vmul.f32 %v526, 1.442695
      %v564 = vpow.pop %v563
      %v565 = vmul.f32 %v527, 1.442695
      %v566 = vpow.pop %v565
      %v567 = vmul.f32 %v528, 1.442695
      %v568 = vpow.pop %v567
      %v569 = vmul.f32 %v529, 1.442695
      %v570 = vpow.pop %v569
      %v571 = vmul.f32 %v530, 1.442695
      %v572 = vpow.pop %v571
      %v573 = vmul.f32 %v531, 1.442695
      %v574 = vpow.pop %v573
      %v575 = vmul.f32 %v532, 1.442695
      %v576 = vpow.pop %v575
      %v577 = vmul.f32 %v533, 1.442695
      %v578 = vpow.pop %v577
      %v579 = vmul.f32 %v534, 1.442695
      %v580 = vpow.pop %v579
      %v581 = vmul.f32 %v535, 1.442695
      %v582 = vpow.pop %v581
      %v583 = vmul.f32 %v536, 1.442695
      %v584 = vpow.pop %v583
      %v585 = vmul.f32 %v537, 1.442695
      %v586 = vpow.pop %v585
      %v587 = vmul.f32 %v538, 1.442695
      %v588 = vpow.pop %v587
      %v589 = vmul.f32 %v539, 1.442695
      %v590 = vpow.pop %v589
      %v591 = vmul.f32 %v540, 1.442695
      %v592 = vpow.pop %v591
      %v593 = vmul.f32 %v541, 1.442695
      %v594 = vpow.pop %v593
      %v595 = vmul.f32 %v542, 1.442695
      %v596 = vpow.pop %v595
      %v597 = vmul.f32 %v543, 1.442695
      %v598 = vpow.pop %v597
      %v599 = vmul.f32 %v544, 1.442695
      %v600 = vpow.pop %v599
      %v601 = vmul.f32 %v545, 1.442695
      %v602 = vpow.pop %v601
      %v603 = vmul.f32 %v546, 1.442695
      %v604 = vpow.pop %v603
      %v605 = vmul.f32 %v547, 1.442695
      %v606 = vpow.pop %v605
      %v607 = vmul.f32 %v548, 1.442695
      %v608 = vpow.pop %v607
      %v609 = vmul.f32 %v549, 1.442695
      %v610 = vpow.pop %v609
      %v611 = vmul.f32 %v550, 1.442695
      %v612 = vpow.pop %v611
      %v613 = vmul.f32 %v551, 1.442695
      %v614 = vpow.pop %v613
      %v615 = vmul.f32 %v552, 1.442695
      %v616 = vpow.pop %v615
      %v617 = vmul.f32 %v553, 1.442695
      %v618 = vpow.pop %v617
      %v619 = vmul.f32 %v554, 1.442695
      %v620 = vpow.pop %v619
      %v621 = vmul.f32 %v555, 1.442695
      %v622 = vpow.pop %v621
      %v623 = vmul.f32 %v556, 1.442695
      %v624 = vpow.pop %v623
      %v625 = vmul.f32 %v557, 1.442695
      %v626 = vpow.pop %v625
      %v627 = vmul.f32 %v558, 1.442695
      %v628 = vpow.pop %v627
      %v629 = vmul.f32 %v559, 1.442695
      %v630 = vpow.pop %v629
      %v631 = vmul.f32 %v560, 1.442695
      %v632 = vpow.pop %v631
      %v633 = vadd.f32 %v562, 1.0
      %v634 = vadd.f32 %v564, 1.0
      %v635 = vadd.f32 %v566, 1.0
      %v636 = vadd.f32 %v568, 1.0
      %v637 = vadd.f32 %v570, 1.0
      %v638 = vadd.f32 %v572, 1.0
      %v639 = vadd.f32 %v574, 1.0
      %v640 = vadd.f32 %v576, 1.0
      %v641 = vadd.f32 %v578, 1.0
      %v642 = vadd.f32 %v580, 1.0
      %v643 = vadd.f32 %v582, 1.0
      %v644 = vadd.f32 %v584, 1.0
      %v645 = vadd.f32 %v586, 1.0
      %v646 = vadd.f32 %v588, 1.0
      %v647 = vadd.f32 %v590, 1.0
      %v648 = vadd.f32 %v592, 1.0
      %v649 = vadd.f32 %v594, 1.0
      %v650 = vadd.f32 %v596, 1.0
      %v651 = vadd.f32 %v598, 1.0
      %v652 = vadd.f32 %v600, 1.0
      %v653 = vadd.f32 %v602, 1.0
      %v654 = vadd.f32 %v604, 1.0
      %v655 = vadd.f32 %v606, 1.0
      %v656 = vadd.f32 %v608, 1.0
      %v657 = vadd.f32 %v610, 1.0
      %v658 = vadd.f32 %v612, 1.0
      %v659 = vadd.f32 %v614, 1.0
      %v660 = vadd.f32 %v616, 1.0
      %v661 = vadd.f32 %v618, 1.0
      %v662 = vadd.f32 %v620, 1.0
      %v663 = vadd.f32 %v622, 1.0
      %v664 = vadd.f32 %v624, 1.0
      %v665 = vadd.f32 %v626, 1.0
      %v666 = vadd.f32 %v628, 1.0
      %v667 = vadd.f32 %v630, 1.0
      %v668 = vadd.f32 %v632, 1.0
      %v669 = vrcp.pop %v633
      %v670 = vmul.f32 %v633, %v669
      %v671 = vsub.f32 1.0, %v670
      %v672 = vmul.f32 %v669, %v671
      %v673 = vadd.f32 %v669, %v672
      %vm674 = vweird.f32 %v633
      %vm675 = vweird.f32 %v669
      %vm676 = vmor %vm674, %vm675
      %v677 = vsel %vm676, %v669, %v673
      %v678 = vand.u32 2147483647, %v633
      %vm679 = vcmp.eq.f32.partialorder %v678, 8.507059e+37
      %v680 = vand.u32 %v633, 2147483648
      %v681 = vor.u32 1.1754944e-38, %v680
      %v682 = vsel %vm679, %v681, %v677
      %v683 = vmul.f32 1.0, %v682
      %v684 = vrcp.pop %v634
      %v685 = vmul.f32 %v634, %v684
      %v686 = vsub.f32 1.0, %v685
      %v687 = vmul.f32 %v684, %v686
      %v688 = vadd.f32 %v684, %v687
      %vm689 = vweird.f32 %v634
      %vm690 = vweird.f32 %v684
      %vm691 = vmor %vm689, %vm690
      %v692 = vsel %vm691, %v684, %v688
      %v693 = vand.u32 2147483647, %v634
      %vm694 = vcmp.eq.f32.partialorder %v693, 8.507059e+37
      %v695 = vand.u32 %v634, 2147483648
      %v696 = vor.u32 1.1754944e-38, %v695
      %v697 = vsel %vm694, %v696, %v692
      %v698 = vmul.f32 1.0, %v697
      %v699 = vrcp.pop %v635
      %v700 = vmul.f32 %v635, %v699
      %v701 = vsub.f32 1.0, %v700
      %v702 = vmul.f32 %v699, %v701
      %v703 = vadd.f32 %v699, %v702
      %vm704 = vweird.f32 %v635
      %vm705 = vweird.f32 %v699
      %vm706 = vmor %vm704, %vm705
      %v707 = vsel %vm706, %v699, %v703
      %v708 = vand.u32 2147483647, %v635
      %vm709 = vcmp.eq.f32.partialorder %v708, 8.507059e+37
      %v710 = vand.u32 %v635, 2147483648
      %v711 = vor.u32 1.1754944e-38, %v710
      %v712 = vsel %vm709, %v711, %v707
      %v713 = vmul.f32 1.0, %v712
      %v714 = vrcp.pop %v636
      %v715 = vmul.f32 %v636, %v714
      %v716 = vsub.f32 1.0, %v715
      %v717 = vmul.f32 %v714, %v716
      %v718 = vadd.f32 %v714, %v717
      %vm719 = vweird.f32 %v636
      %vm720 = vweird.f32 %v714
      %vm721 = vmor %vm719, %vm720
      %v722 = vsel %vm721, %v714, %v718
      %v723 = vand.u32 2147483647, %v636
      %vm724 = vcmp.eq.f32.partialorder %v723, 8.507059e+37
      %v725 = vand.u32 %v636, 2147483648
      %v726 = vor.u32 1.1754944e-38, %v725
      %v727 = vsel %vm724, %v726, %v722
      %v728 = vmul.f32 1.0, %v727
      %v729 = vrcp.pop %v637
      %v730 = vmul.f32 %v637, %v729
      %v731 = vsub.f32 1.0, %v730
      %v732 = vmul.f32 %v729, %v731
      %v733 = vadd.f32 %v729, %v732
      %vm734 = vweird.f32 %v637
      %vm735 = vweird.f32 %v729
      %vm736 = vmor %vm734, %vm735
      %v737 = vsel %vm736, %v729, %v733
      %v738 = vand.u32 2147483647, %v637
      %vm739 = vcmp.eq.f32.partialorder %v738, 8.507059e+37
      %v740 = vand.u32 %v637, 2147483648
      %v741 = vor.u32 1.1754944e-38, %v740
      %v742 = vsel %vm739, %v741, %v737
      %v743 = vmul.f32 1.0, %v742
      %v744 = vrcp.pop %v638
      %v745 = vmul.f32 %v638, %v744
      %v746 = vsub.f32 1.0, %v745
      %v747 = vmul.f32 %v744, %v746
      %v748 = vadd.f32 %v744, %v747
      %vm749 = vweird.f32 %v638
      %vm750 = vweird.f32 %v744
      %vm751 = vmor %vm749, %vm750
      %v752 = vsel %vm751, %v744, %v748
      %v753 = vand.u32 2147483647, %v638
      %vm754 = vcmp.eq.f32.partialorder %v753, 8.507059e+37
      %v755 = vand.u32 %v638, 2147483648
      %v756 = vor.u32 1.1754944e-38, %v755
      %v757 = vsel %vm754, %v756, %v752
      %v758 = vmul.f32 1.0, %v757
      %v759 = vrcp.pop %v639
      %v760 = vmul.f32 %v639, %v759
      %v761 = vsub.f32 1.0, %v760
      %v762 = vmul.f32 %v759, %v761
      %v763 = vadd.f32 %v759, %v762
      %vm764 = vweird.f32 %v639
      %vm765 = vweird.f32 %v759
      %vm766 = vmor %vm764, %vm765
      %v767 = vsel %vm766, %v759, %v763
      %v768 = vand.u32 2147483647, %v639
      %vm769 = vcmp.eq.f32.partialorder %v768, 8.507059e+37
      %v770 = vand.u32 %v639, 2147483648
      %v771 = vor.u32 1.1754944e-38, %v770
      %v772 = vsel %vm769, %v771, %v767
      %v773 = vmul.f32 1.0, %v772
      %v774 = vrcp.pop %v640
      %v775 = vmul.f32 %v640, %v774
      %v776 = vsub.f32 1.0, %v775
      %v777 = vmul.f32 %v774, %v776
      %v778 = vadd.f32 %v774, %v777
      %vm779 = vweird.f32 %v640
      %vm780 = vweird.f32 %v774
      %vm781 = vmor %vm779, %vm780
      %v782 = vsel %vm781, %v774, %v778
      %v783 = vand.u32 2147483647, %v640
      %vm784 = vcmp.eq.f32.partialorder %v783, 8.507059e+37
      %v785 = vand.u32 %v640, 2147483648
      %v786 = vor.u32 1.1754944e-38, %v785
      %v787 = vsel %vm784, %v786, %v782
      %v788 = vmul.f32 1.0, %v787
      %v789 = vrcp.pop %v641
      %v790 = vmul.f32 %v641, %v789
      %v791 = vsub.f32 1.0, %v790
      %v792 = vmul.f32 %v789, %v791
      %v793 = vadd.f32 %v789, %v792
      %vm794 = vweird.f32 %v641
      %vm795 = vweird.f32 %v789
      %vm796 = vmor %vm794, %vm795
      %v797 = vsel %vm796, %v789, %v793
      %v798 = vand.u32 2147483647, %v641
      %vm799 = vcmp.eq.f32.partialorder %v798, 8.507059e+37
      %v800 = vand.u32 %v641, 2147483648
      %v801 = vor.u32 1.1754944e-38, %v800
      %v802 = vsel %vm799, %v801, %v797
      %v803 = vmul.f32 1.0, %v802
      %v804 = vrcp.pop %v642
      %v805 = vmul.f32 %v642, %v804
      %v806 = vsub.f32 1.0, %v805
      %v807 = vmul.f32 %v804, %v806
      %v808 = vadd.f32 %v804, %v807
      %vm809 = vweird.f32 %v642
      %vm810 = vweird.f32 %v804
      %vm811 = vmor %vm809, %vm810
      %v812 = vsel %vm811, %v804, %v808
      %v813 = vand.u32 2147483647, %v642
      %vm814 = vcmp.eq.f32.partialorder %v813, 8.507059e+37
      %v815 = vand.u32 %v642, 2147483648
      %v816 = vor.u32 1.1754944e-38, %v815
      %v817 = vsel %vm814, %v816, %v812
      %v818 = vmul.f32 1.0, %v817
      %v819 = vrcp.pop %v643
      %v820 = vmul.f32 %v643, %v819
      %v821 = vsub.f32 1.0, %v820
      %v822 = vmul.f32 %v819, %v821
      %v823 = vadd.f32 %v819, %v822
      %vm824 = vweird.f32 %v643
      %vm825 = vweird.f32 %v819
      %vm826 = vmor %vm824, %vm825
      %v827 = vsel %vm826, %v819, %v823
      %v828 = vand.u32 2147483647, %v643
      %vm829 = vcmp.eq.f32.partialorder %v828, 8.507059e+37
      %v830 = vand.u32 %v643, 2147483648
      %v831 = vor.u32 1.1754944e-38, %v830
      %v832 = vsel %vm829, %v831, %v827
      %v833 = vmul.f32 1.0, %v832
      %v834 = vrcp.pop %v644
      %v835 = vmul.f32 %v644, %v834
      %v836 = vsub.f32 1.0, %v835
      %v837 = vmul.f32 %v834, %v836
      %v838 = vadd.f32 %v834, %v837
      %vm839 = vweird.f32 %v644
      %vm840 = vweird.f32 %v834
      %vm841 = vmor %vm839, %vm840
      %v842 = vsel %vm841, %v834, %v838
      %v843 = vand.u32 2147483647, %v644
      %vm844 = vcmp.eq.f32.partialorder %v843, 8.507059e+37
      %v845 = vand.u32 %v644, 2147483648
      %v846 = vor.u32 1.1754944e-38, %v845
      %v847 = vsel %vm844, %v846, %v842
      %v848 = vmul.f32 1.0, %v847
      %v849 = vrcp.pop %v645
      %v850 = vmul.f32 %v645, %v849
      %v851 = vsub.f32 1.0, %v850
      %v852 = vmul.f32 %v849, %v851
      %v853 = vadd.f32 %v849, %v852
      %vm854 = vweird.f32 %v645
      %vm855 = vweird.f32 %v849
      %vm856 = vmor %vm854, %vm855
      %v857 = vsel %vm856, %v849, %v853
      %v858 = vand.u32 2147483647, %v645
      %vm859 = vcmp.eq.f32.partialorder %v858, 8.507059e+37
      %v860 = vand.u32 %v645, 2147483648
      %v861 = vor.u32 1.1754944e-38, %v860
      %v862 = vsel %vm859, %v861, %v857
      %v863 = vmul.f32 1.0, %v862
      %v864 = vrcp.pop %v646
      %v865 = vmul.f32 %v646, %v864
      %v866 = vsub.f32 1.0, %v865
      %v867 = vmul.f32 %v864, %v866
      %v868 = vadd.f32 %v864, %v867
      %vm869 = vweird.f32 %v646
      %vm870 = vweird.f32 %v864
      %vm871 = vmor %vm869, %vm870
      %v872 = vsel %vm871, %v864, %v868
      %v873 = vand.u32 2147483647, %v646
      %vm874 = vcmp.eq.f32.partialorder %v873, 8.507059e+37
      %v875 = vand.u32 %v646, 2147483648
      %v876 = vor.u32 1.1754944e-38, %v875
      %v877 = vsel %vm874, %v876, %v872
      %v878 = vmul.f32 1.0, %v877
      %v879 = vrcp.pop %v647
      %v880 = vmul.f32 %v647, %v879
      %v881 = vsub.f32 1.0, %v880
      %v882 = vmul.f32 %v879, %v881
      %v883 = vadd.f32 %v879, %v882
      %vm884 = vweird.f32 %v647
      %vm885 = vweird.f32 %v879
      %vm886 = vmor %vm884, %vm885
      %v887 = vsel %vm886, %v879, %v883
      %v888 = vand.u32 2147483647, %v647
      %vm889 = vcmp.eq.f32.partialorder %v888, 8.507059e+37
      %v890 = vand.u32 %v647, 2147483648
      %v891 = vor.u32 1.1754944e-38, %v890
      %v892 = vsel %vm889, %v891, %v887
      %v893 = vmul.f32 1.0, %v892
      %v894 = vrcp.pop %v648
      %v895 = vmul.f32 %v648, %v894
      %v896 = vsub.f32 1.0, %v895
      %v897 = vmul.f32 %v894, %v896
      %v898 = vadd.f32 %v894, %v897
      %vm899 = vweird.f32 %v648
      %vm900 = vweird.f32 %v894
      %vm901 = vmor %vm899, %vm900
      %v902 = vsel %vm901, %v894, %v898
      %v903 = vand.u32 2147483647, %v648
      %vm904 = vcmp.eq.f32.partialorder %v903, 8.507059e+37
      %v905 = vand.u32 %v648, 2147483648
      %v906 = vor.u32 1.1754944e-38, %v905
      %v907 = vsel %vm904, %v906, %v902
      %v908 = vmul.f32 1.0, %v907
      %v909 = vrcp.pop %v649
      %v910 = vmul.f32 %v649, %v909
      %v911 = vsub.f32 1.0, %v910
      %v912 = vmul.f32 %v909, %v911
      %v913 = vadd.f32 %v909, %v912
      %vm914 = vweird.f32 %v649
      %vm915 = vweird.f32 %v909
      %vm916 = vmor %vm914, %vm915
      %v917 = vsel %vm916, %v909, %v913
      %v918 = vand.u32 2147483647, %v649
      %vm919 = vcmp.eq.f32.partialorder %v918, 8.507059e+37
      %v920 = vand.u32 %v649, 2147483648
      %v921 = vor.u32 1.1754944e-38, %v920
      %v922 = vsel %vm919, %v921, %v917
      %v923 = vmul.f32 1.0, %v922
      %v924 = vrcp.pop %v650
      %v925 = vmul.f32 %v650, %v924
      %v926 = vsub.f32 1.0, %v925
      %v927 = vmul.f32 %v924, %v926
      %v928 = vadd.f32 %v924, %v927
      %vm929 = vweird.f32 %v650
      %vm930 = vweird.f32 %v924
      %vm931 = vmor %vm929, %vm930
      %v932 = vsel %vm931, %v924, %v928
      %v933 = vand.u32 2147483647, %v650
      %vm934 = vcmp.eq.f32.partialorder %v933, 8.507059e+37
      %v935 = vand.u32 %v650, 2147483648
      %v936 = vor.u32 1.1754944e-38, %v935
      %v937 = vsel %vm934, %v936, %v932
      %v938 = vmul.f32 1.0, %v937
      %v939 = vrcp.pop %v651
      %v940 = vmul.f32 %v651, %v939
      %v941 = vsub.f32 1.0, %v940
      %v942 = vmul.f32 %v939, %v941
      %v943 = vadd.f32 %v939, %v942
      %vm944 = vweird.f32 %v651
      %vm945 = vweird.f32 %v939
      %vm946 = vmor %vm944, %vm945
      %v947 = vsel %vm946, %v939, %v943
      %v948 = vand.u32 2147483647, %v651
      %vm949 = vcmp.eq.f32.partialorder %v948, 8.507059e+37
      %v950 = vand.u32 %v651, 2147483648
      %v951 = vor.u32 1.1754944e-38, %v950
      %v952 = vsel %vm949, %v951, %v947
      %v953 = vmul.f32 1.0, %v952
      %v954 = vrcp.pop %v652
      %v955 = vmul.f32 %v652, %v954
      %v956 = vsub.f32 1.0, %v955
      %v957 = vmul.f32 %v954, %v956
      %v958 = vadd.f32 %v954, %v957
      %vm959 = vweird.f32 %v652
      %vm960 = vweird.f32 %v954
      %vm961 = vmor %vm959, %vm960
      %v962 = vsel %vm961, %v954, %v958
      %v963 = vand.u32 2147483647, %v652
      %vm964 = vcmp.eq.f32.partialorder %v963, 8.507059e+37
      %v965 = vand.u32 %v652, 2147483648
      %v966 = vor.u32 1.1754944e-38, %v965
      %v967 = vsel %vm964, %v966, %v962
      %v968 = vmul.f32 1.0, %v967
      %v969 = vrcp.pop %v653
      %v970 = vmul.f32 %v653, %v969
      %v971 = vsub.f32 1.0, %v970
      %v972 = vmul.f32 %v969, %v971
      %v973 = vadd.f32 %v969, %v972
      %vm974 = vweird.f32 %v653
      %vm975 = vweird.f32 %v969
      %vm976 = vmor %vm974, %vm975
      %v977 = vsel %vm976, %v969, %v973
      %v978 = vand.u32 2147483647, %v653
      %vm979 = vcmp.eq.f32.partialorder %v978, 8.507059e+37
      %v980 = vand.u32 %v653, 2147483648
      %v981 = vor.u32 1.1754944e-38, %v980
      %v982 = vsel %vm979, %v981, %v977
      %v983 = vmul.f32 1.0, %v982
      %v984 = vrcp.pop %v654
      %v985 = vmul.f32 %v654, %v984
      %v986 = vsub.f32 1.0, %v985
      %v987 = vmul.f32 %v984, %v986
      %v988 = vadd.f32 %v984, %v987
      %vm989 = vweird.f32 %v654
      %vm990 = vweird.f32 %v984
      %vm991 = vmor %vm989, %vm990
      %v992 = vsel %vm991, %v984, %v988
      %v993 = vand.u32 2147483647, %v654
      %vm994 = vcmp.eq.f32.partialorder %v993, 8.507059e+37
      %v995 = vand.u32 %v654, 2147483648
      %v996 = vor.u32 1.1754944e-38, %v995
      %v997 = vsel %vm994, %v996, %v992
      %v998 = vmul.f32 1.0, %v997
      %v999 = vrcp.pop %v655
      %v1000 = vmul.f32 %v655, %v999
      %v1001 = vsub.f32 1.0, %v1000
      %v1002 = vmul.f32 %v999, %v1001
      %v1003 = vadd.f32 %v999, %v1002
      %vm1004 = vweird.f32 %v655
      %vm1005 = vweird.f32 %v999
      %vm1006 = vmor %vm1004, %vm1005
      %v1007 = vsel %vm1006, %v999, %v1003
      %v1008 = vand.u32 2147483647, %v655
      %vm1009 = vcmp.eq.f32.partialorder %v1008, 8.507059e+37
      %v1010 = vand.u32 %v655, 2147483648
      %v1011 = vor.u32 1.1754944e-38, %v1010
      %v1012 = vsel %vm1009, %v1011, %v1007
      %v1013 = vmul.f32 1.0, %v1012
      %v1014 = vrcp.pop %v656
      %v1015 = vmul.f32 %v656, %v1014
      %v1016 = vsub.f32 1.0, %v1015
      %v1017 = vmul.f32 %v1014, %v1016
      %v1018 = vadd.f32 %v1014, %v1017
      %vm1019 = vweird.f32 %v656
      %vm1020 = vweird.f32 %v1014
      %vm1021 = vmor %vm1019, %vm1020
      %v1022 = vsel %vm1021, %v1014, %v1018
      %v1023 = vand.u32 2147483647, %v656
      %vm1024 = vcmp.eq.f32.partialorder %v1023, 8.507059e+37
      %v1025 = vand.u32 %v656, 2147483648
      %v1026 = vor.u32 1.1754944e-38, %v1025
      %v1027 = vsel %vm1024, %v1026, %v1022
      %v1028 = vmul.f32 1.0, %v1027
      %v1029 = vrcp.pop %v657
      %v1030 = vmul.f32 %v657, %v1029
      %v1031 = vsub.f32 1.0, %v1030
      %v1032 = vmul.f32 %v1029, %v1031
      %v1033 = vadd.f32 %v1029, %v1032
      %vm1034 = vweird.f32 %v657
      %vm1035 = vweird.f32 %v1029
      %vm1036 = vmor %vm1034, %vm1035
      %v1037 = vsel %vm1036, %v1029, %v1033
      %v1038 = vand.u32 2147483647, %v657
      %vm1039 = vcmp.eq.f32.partialorder %v1038, 8.507059e+37
      %v1040 = vand.u32 %v657, 2147483648
      %v1041 = vor.u32 1.1754944e-38, %v1040
      %v1042 = vsel %vm1039, %v1041, %v1037
      %v1043 = vmul.f32 1.0, %v1042
      %v1044 = vrcp.pop %v658
      %v1045 = vmul.f32 %v658, %v1044
      %v1046 = vsub.f32 1.0, %v1045
      %v1047 = vmul.f32 %v1044, %v1046
      %v1048 = vadd.f32 %v1044, %v1047
      %vm1049 = vweird.f32 %v658
      %vm1050 = vweird.f32 %v1044
      %vm1051 = vmor %vm1049, %vm1050
      %v1052 = vsel %vm1051, %v1044, %v1048
      %v1053 = vand.u32 2147483647, %v658
      %vm1054 = vcmp.eq.f32.partialorder %v1053, 8.507059e+37
      %v1055 = vand.u32 %v658, 2147483648
      %v1056 = vor.u32 1.1754944e-38, %v1055
      %v1057 = vsel %vm1054, %v1056, %v1052
      %v1058 = vmul.f32 1.0, %v1057
      %v1059 = vrcp.pop %v659
      %v1060 = vmul.f32 %v659, %v1059
      %v1061 = vsub.f32 1.0, %v1060
      %v1062 = vmul.f32 %v1059, %v1061
      %v1063 = vadd.f32 %v1059, %v1062
      %vm1064 = vweird.f32 %v659
      %vm1065 = vweird.f32 %v1059
      %vm1066 = vmor %vm1064, %vm1065
      %v1067 = vsel %vm1066, %v1059, %v1063
      %v1068 = vand.u32 2147483647, %v659
      %vm1069 = vcmp.eq.f32.partialorder %v1068, 8.507059e+37
      %v1070 = vand.u32 %v659, 2147483648
      %v1071 = vor.u32 1.1754944e-38, %v1070
      %v1072 = vsel %vm1069, %v1071, %v1067
      %v1073 = vmul.f32 1.0, %v1072
      %v1074 = vrcp.pop %v660
      %v1075 = vmul.f32 %v660, %v1074
      %v1076 = vsub.f32 1.0, %v1075
      %v1077 = vmul.f32 %v1074, %v1076
      %v1078 = vadd.f32 %v1074, %v1077
      %vm1079 = vweird.f32 %v660
      %vm1080 = vweird.f32 %v1074
      %vm1081 = vmor %vm1079, %vm1080
      %v1082 = vsel %vm1081, %v1074, %v1078
      %v1083 = vand.u32 2147483647, %v660
      %vm1084 = vcmp.eq.f32.partialorder %v1083, 8.507059e+37
      %v1085 = vand.u32 %v660, 2147483648
      %v1086 = vor.u32 1.1754944e-38, %v1085
      %v1087 = vsel %vm1084, %v1086, %v1082
      %v1088 = vmul.f32 1.0, %v1087
      %v1089 = vrcp.pop %v661
      %v1090 = vmul.f32 %v661, %v1089
      %v1091 = vsub.f32 1.0, %v1090
      %v1092 = vmul.f32 %v1089, %v1091
      %v1093 = vadd.f32 %v1089, %v1092
      %vm1094 = vweird.f32 %v661
      %vm1095 = vweird.f32 %v1089
      %vm1096 = vmor %vm1094, %vm1095
      %v1097 = vsel %vm1096, %v1089, %v1093
      %v1098 = vand.u32 2147483647, %v661
      %vm1099 = vcmp.eq.f32.partialorder %v1098, 8.507059e+37
      %v1100 = vand.u32 %v661, 2147483648
      %v1101 = vor.u32 1.1754944e-38, %v1100
      %v1102 = vsel %vm1099, %v1101, %v1097
      %v1103 = vmul.f32 1.0, %v1102
      %v1104 = vrcp.pop %v662
      %v1105 = vmul.f32 %v662, %v1104
      %v1106 = vsub.f32 1.0, %v1105
      %v1107 = vmul.f32 %v1104, %v1106
      %v1108 = vadd.f32 %v1104, %v1107
      %vm1109 = vweird.f32 %v662
      %vm1110 = vweird.f32 %v1104
      %vm1111 = vmor %vm1109, %vm1110
      %v1112 = vsel %vm1111, %v1104, %v1108
      %v1113 = vand.u32 2147483647, %v662
      %vm1114 = vcmp.eq.f32.partialorder %v1113, 8.507059e+37
      %v1115 = vand.u32 %v662, 2147483648
      %v1116 = vor.u32 1.1754944e-38, %v1115
      %v1117 = vsel %vm1114, %v1116, %v1112
      %v1118 = vmul.f32 1.0, %v1117
      %v1119 = vrcp.pop %v663
      %v1120 = vmul.f32 %v663, %v1119
      %v1121 = vsub.f32 1.0, %v1120
      %v1122 = vmul.f32 %v1119, %v1121
      %v1123 = vadd.f32 %v1119, %v1122
      %vm1124 = vweird.f32 %v663
      %vm1125 = vweird.f32 %v1119
      %vm1126 = vmor %vm1124, %vm1125
      %v1127 = vsel %vm1126, %v1119, %v1123
      %v1128 = vand.u32 2147483647, %v663
      %vm1129 = vcmp.eq.f32.partialorder %v1128, 8.507059e+37
      %v1130 = vand.u32 %v663, 2147483648
      %v1131 = vor.u32 1.1754944e-38, %v1130
      %v1132 = vsel %vm1129, %v1131, %v1127
      %v1133 = vmul.f32 1.0, %v1132
      %v1134 = vrcp.pop %v664
      %v1135 = vmul.f32 %v664, %v1134
      %v1136 = vsub.f32 1.0, %v1135
      %v1137 = vmul.f32 %v1134, %v1136
      %v1138 = vadd.f32 %v1134, %v1137
      %vm1139 = vweird.f32 %v664
      %vm1140 = vweird.f32 %v1134
      %vm1141 = vmor %vm1139, %vm1140
      %v1142 = vsel %vm1141, %v1134, %v1138
      %v1143 = vand.u32 2147483647, %v664
      %vm1144 = vcmp.eq.f32.partialorder %v1143, 8.507059e+37
      %v1145 = vand.u32 %v664, 2147483648
      %v1146 = vor.u32 1.1754944e-38, %v1145
      %v1147 = vsel %vm1144, %v1146, %v1142
      %v1148 = vmul.f32 1.0, %v1147
      %v1149 = vrcp.pop %v665
      %v1150 = vmul.f32 %v665, %v1149
      %v1151 = vsub.f32 1.0, %v1150
      %v1152 = vmul.f32 %v1149, %v1151
      %v1153 = vadd.f32 %v1149, %v1152
      %vm1154 = vweird.f32 %v665
      %vm1155 = vweird.f32 %v1149
      %vm1156 = vmor %vm1154, %vm1155
      %v1157 = vsel %vm1156, %v1149, %v1153
      %v1158 = vand.u32 2147483647, %v665
      %vm1159 = vcmp.eq.f32.partialorder %v1158, 8.507059e+37
      %v1160 = vand.u32 %v665, 2147483648
      %v1161 = vor.u32 1.1754944e-38, %v1160
      %v1162 = vsel %vm1159, %v1161, %v1157
      %v1163 = vmul.f32 1.0, %v1162
      %v1164 = vrcp.pop %v666
      %v1165 = vmul.f32 %v666, %v1164
      %v1166 = vsub.f32 1.0, %v1165
      %v1167 = vmul.f32 %v1164, %v1166
      %v1168 = vadd.f32 %v1164, %v1167
      %vm1169 = vweird.f32 %v666
      %vm1170 = vweird.f32 %v1164
      %vm1171 = vmor %vm1169, %vm1170
      %v1172 = vsel %vm1171, %v1164, %v1168
      %v1173 = vand.u32 2147483647, %v666
      %vm1174 = vcmp.eq.f32.partialorder %v1173, 8.507059e+37
      %v1175 = vand.u32 %v666, 2147483648
      %v1176 = vor.u32 1.1754944e-38, %v1175
      %v1177 = vsel %vm1174, %v1176, %v1172
      %v1178 = vmul.f32 1.0, %v1177
      %v1179 = vrcp.pop %v667
      %v1180 = vmul.f32 %v667, %v1179
      %v1181 = vsub.f32 1.0, %v1180
      %v1182 = vmul.f32 %v1179, %v1181
      %v1183 = vadd.f32 %v1179, %v1182
      %vm1184 = vweird.f32 %v667
      %vm1185 = vweird.f32 %v1179
      %vm1186 = vmor %vm1184, %vm1185
      %v1187 = vsel %vm1186, %v1179, %v1183
      %v1188 = vand.u32 2147483647, %v667
      %vm1189 = vcmp.eq.f32.partialorder %v1188, 8.507059e+37
      %v1190 = vand.u32 %v667, 2147483648
      %v1191 = vor.u32 1.1754944e-38, %v1190
      %v1192 = vsel %vm1189, %v1191, %v1187
      %v1193 = vmul.f32 1.0, %v1192
      %v1194 = vrcp.pop %v668
      %v1195 = vmul.f32 %v668, %v1194
      %v1196 = vsub.f32 1.0, %v1195
      %v1197 = vmul.f32 %v1194, %v1196
      %v1198 = vadd.f32 %v1194, %v1197
      %vm1199 = vweird.f32 %v668
      %vm1200 = vweird.f32 %v1194
      %vm1201 = vmor %vm1199, %vm1200
      %v1202 = vsel %vm1201, %v1194, %v1198
      %v1203 = vand.u32 2147483647, %v668
      %vm1204 = vcmp.eq.f32.partialorder %v1203, 8.507059e+37
      %v1205 = vand.u32 %v668, 2147483648
      %v1206 = vor.u32 1.1754944e-38, %v1205
      %v1207 = vsel %vm1204, %v1206, %v1202
      %v1208 = vmul.f32 1.0, %v1207
      %1245 = vrot.lane.b32.xlu0 %v489, 64
      %v1246 = vpop.permute.xlu0 %1245
      %1247 = vrot.lane.b32.xlu0 %v490, 64
      %v1248 = vpop.permute.xlu0 %1247
      %1249 = vrot.lane.b32.xlu0 %v491, 64
      %v1250 = vpop.permute.xlu0 %1249
      %1251 = vrot.lane.b32.xlu0 %v492, 64
      %v1252 = vpop.permute.xlu0 %1251
      %1253 = vrot.lane.b32.xlu0 %v493, 64
      %v1254 = vpop.permute.xlu0 %1253
      %1255 = vrot.lane.b32.xlu0 %v494, 64
      %v1256 = vpop.permute.xlu0 %1255
      %1257 = vrot.lane.b32.xlu0 %v495, 64
      %v1258 = vpop.permute.xlu0 %1257
      %1259 = vrot.lane.b32.xlu0 %v496, 64
      %v1260 = vpop.permute.xlu0 %1259
      %1261 = vrot.lane.b32.xlu0 %v497, 64
      %v1262 = vpop.permute.xlu0 %1261
      %1263 = vrot.lane.b32.xlu0 %v498, 64
      %v1264 = vpop.permute.xlu0 %1263
      %1265 = vrot.lane.b32.xlu0 %v499, 64
      %v1266 = vpop.permute.xlu0 %1265
      %1267 = vrot.lane.b32.xlu0 %v500, 64
      %v1268 = vpop.permute.xlu0 %1267
      %1269 = vrot.lane.b32.xlu0 %v501, 64
      %v1270 = vpop.permute.xlu0 %1269
      %1271 = vrot.lane.b32.xlu0 %v502, 64
      %v1272 = vpop.permute.xlu0 %1271
      %1273 = vrot.lane.b32.xlu0 %v503, 64
      %v1274 = vpop.permute.xlu0 %1273
      %1275 = vrot.lane.b32.xlu0 %v504, 64
      %v1276 = vpop.permute.xlu0 %1275
      %1277 = vrot.lane.b32.xlu0 %v505, 64
      %v1278 = vpop.permute.xlu0 %1277
      %1279 = vrot.lane.b32.xlu0 %v506, 64
      %v1280 = vpop.permute.xlu0 %1279
      %1281 = vrot.lane.b32.xlu0 %v507, 64
      %v1282 = vpop.permute.xlu0 %1281
      %1283 = vrot.lane.b32.xlu0 %v508, 64
      %v1284 = vpop.permute.xlu0 %1283
      %1285 = vrot.lane.b32.xlu0 %v509, 64
      %v1286 = vpop.permute.xlu0 %1285
      %1287 = vrot.lane.b32.xlu0 %v510, 64
      %v1288 = vpop.permute.xlu0 %1287
      %1289 = vrot.lane.b32.xlu0 %v511, 64
      %v1290 = vpop.permute.xlu0 %1289
      %1291 = vrot.lane.b32.xlu0 %v512, 64
      %v1292 = vpop.permute.xlu0 %1291
      %1293 = vrot.lane.b32.xlu0 %v513, 64
      %v1294 = vpop.permute.xlu0 %1293
      %1295 = vrot.lane.b32.xlu0 %v514, 64
      %v1296 = vpop.permute.xlu0 %1295
      %1297 = vrot.lane.b32.xlu0 %v515, 64
      %v1298 = vpop.permute.xlu0 %1297
      %1299 = vrot.lane.b32.xlu0 %v516, 64
      %v1300 = vpop.permute.xlu0 %1299
      %1301 = vrot.lane.b32.xlu0 %v517, 64
      %v1302 = vpop.permute.xlu0 %1301
      %1303 = vrot.lane.b32.xlu0 %v518, 64
      %v1304 = vpop.permute.xlu0 %1303
      %1305 = vrot.lane.b32.xlu0 %v519, 64
      %v1306 = vpop.permute.xlu0 %1305
      %1307 = vrot.lane.b32.xlu0 %v520, 64
      %v1308 = vpop.permute.xlu0 %1307
      %1309 = vrot.lane.b32.xlu0 %v521, 64
      %v1310 = vpop.permute.xlu0 %1309
      %1311 = vrot.lane.b32.xlu0 %v522, 64
      %v1312 = vpop.permute.xlu0 %1311
      %1313 = vrot.lane.b32.xlu0 %v523, 64
      %v1314 = vpop.permute.xlu0 %1313
      %1315 = vrot.lane.b32.xlu0 %v524, 64
      %v1316 = vpop.permute.xlu0 %1315
      %v1353 = vmul.f32 %v683, %v1246
      %v1354 = vmul.f32 %v698, %v1248
      %v1355 = vmul.f32 %v713, %v1250
      %v1356 = vmul.f32 %v728, %v1252
      %v1357 = vmul.f32 %v743, %v1254
      %v1358 = vmul.f32 %v758, %v1256
      %v1359 = vmul.f32 %v773, %v1258
      %v1360 = vmul.f32 %v788, %v1260
      %v1361 = vmul.f32 %v803, %v1262
      %v1362 = vmul.f32 %v818, %v1264
      %v1363 = vmul.f32 %v833, %v1266
      %v1364 = vmul.f32 %v848, %v1268
      %v1365 = vmul.f32 %v863, %v1270
      %v1366 = vmul.f32 %v878, %v1272
      %v1367 = vmul.f32 %v893, %v1274
      %v1368 = vmul.f32 %v908, %v1276
      %v1369 = vmul.f32 %v923, %v1278
      %v1370 = vmul.f32 %v938, %v1280
      %v1371 = vmul.f32 %v953, %v1282
      %v1372 = vmul.f32 %v968, %v1284
      %v1373 = vmul.f32 %v983, %v1286
      %v1374 = vmul.f32 %v998, %v1288
      %v1375 = vmul.f32 %v1013, %v1290
      %v1376 = vmul.f32 %v1028, %v1292
      %v1377 = vmul.f32 %v1043, %v1294
      %v1378 = vmul.f32 %v1058, %v1296
      %v1379 = vmul.f32 %v1073, %v1298
      %v1380 = vmul.f32 %v1088, %v1300
      %v1381 = vmul.f32 %v1103, %v1302
      %v1382 = vmul.f32 %v1118, %v1304
      %v1383 = vmul.f32 %v1133, %v1306
      %v1384 = vmul.f32 %v1148, %v1308
      %v1385 = vmul.f32 %v1163, %v1310
      %v1386 = vmul.f32 %v1178, %v1312
      %v1387 = vmul.f32 %v1193, %v1314
      %v1388 = vmul.f32 %v1208, %v1316
      %v1389 = vsub.f32 1.0, %v683
      %v1390 = vsub.f32 1.0, %v698
      %v1391 = vsub.f32 1.0, %v713
      %v1392 = vsub.f32 1.0, %v728
      %v1393 = vsub.f32 1.0, %v743
      %v1394 = vsub.f32 1.0, %v758
      %v1395 = vsub.f32 1.0, %v773
      %v1396 = vsub.f32 1.0, %v788
      %v1397 = vsub.f32 1.0, %v803
      %v1398 = vsub.f32 1.0, %v818
      %v1399 = vsub.f32 1.0, %v833
      %v1400 = vsub.f32 1.0, %v848
      %v1401 = vsub.f32 1.0, %v863
      %v1402 = vsub.f32 1.0, %v878
      %v1403 = vsub.f32 1.0, %v893
      %v1404 = vsub.f32 1.0, %v908
      %v1405 = vsub.f32 1.0, %v923
      %v1406 = vsub.f32 1.0, %v938
      %v1407 = vsub.f32 1.0, %v953
      %v1408 = vsub.f32 1.0, %v968
      %v1409 = vsub.f32 1.0, %v983
      %v1410 = vsub.f32 1.0, %v998
      %v1411 = vsub.f32 1.0, %v1013
      %v1412 = vsub.f32 1.0, %v1028
      %v1413 = vsub.f32 1.0, %v1043
      %v1414 = vsub.f32 1.0, %v1058
      %v1415 = vsub.f32 1.0, %v1073
      %v1416 = vsub.f32 1.0, %v1088
      %v1417 = vsub.f32 1.0, %v1103
      %v1418 = vsub.f32 1.0, %v1118
      %v1419 = vsub.f32 1.0, %v1133
      %v1420 = vsub.f32 1.0, %v1148
      %v1421 = vsub.f32 1.0, %v1163
      %v1422 = vsub.f32 1.0, %v1178
      %v1423 = vsub.f32 1.0, %v1193
      %v1424 = vsub.f32 1.0, %v1208
      %v1425 = vld [vmem:[%s269] sm:$0xff]
      %v1426 = vld [vmem:[%s269 + $0x8] sm:$0xff]
      %v1427 = vld [vmem:[%s269 + $0x10] sm:$0xff]
      %v1428 = vld [vmem:[%s269 + $0x18] sm:$0xff]
      %v1429 = vld [vmem:[%s269 + $0x20] sm:$0xff]
      %v1430 = vld [vmem:[%s269 + $0x28] sm:$0xff]
      %v1431 = vld [vmem:[%s269 + $0x30] sm:$0xff]
      %v1432 = vld [vmem:[%s269 + $0x38] sm:$0xff]
      %v1433 = vld [vmem:[%s269 + $0x40] sm:$0xff]
      %v1434 = vld [vmem:[%s269 + $0x48] sm:$0xff]
      %v1435 = vld [vmem:[%s269 + $0x50] sm:$0xff]
      %v1436 = vld [vmem:[%s269 + $0x58] sm:$0xff]
      %v1437 = vld [vmem:[%s269 + $0x60] sm:$0xff]
      %v1438 = vld [vmem:[%s269 + $0x68] sm:$0xff]
      %v1439 = vld [vmem:[%s269 + $0x70] sm:$0xff]
      %v1440 = vld [vmem:[%s269 + $0x78] sm:$0xff]
      %v1441 = vld [vmem:[%s269 + $0x80] sm:$0xff]
      %v1442 = vld [vmem:[%s269 + $0x88] sm:$0xff]
      %v1443 = vld [vmem:[%s269 + $0x90] sm:$0xff]
      %v1444 = vld [vmem:[%s269 + $0x98] sm:$0xff]
      %v1445 = vld [vmem:[%s269 + $0xa0] sm:$0xff]
      %v1446 = vld [vmem:[%s269 + $0xa8] sm:$0xff]
      %v1447 = vld [vmem:[%s269 + $0xb0] sm:$0xff]
      %v1448 = vld [vmem:[%s269 + $0xb8] sm:$0xff]
      %v1449 = vld [vmem:[%s269 + $0xc0] sm:$0xff]
      %v1450 = vld [vmem:[%s269 + $0xc8] sm:$0xff]
      %v1451 = vld [vmem:[%s269 + $0xd0] sm:$0xff]
      %v1452 = vld [vmem:[%s269 + $0xd8] sm:$0xff]
      %v1453 = vld [vmem:[%s269 + $0xe0] sm:$0xff]
      %v1454 = vld [vmem:[%s269 + $0xe8] sm:$0xff]
      %v1455 = vld [vmem:[%s269 + $0xf0] sm:$0xff]
      %v1456 = vld [vmem:[%s269 + $0xf8] sm:$0xff]
      %v1457 = vld [vmem:[%s269 + $0x100] sm:$0xff]
      %v1458 = vld [vmem:[%s269 + $0x108] sm:$0xff]
      %v1459 = vld [vmem:[%s269 + $0x110] sm:$0xff]
      %v1460 = vld [vmem:[%s269 + $0x118] sm:$0xff]
      %1497 = vrot.lane.b32.xlu0 %v1425, 64
      %v1498 = vpop.permute.xlu0 %1497
      %1499 = vrot.lane.b32.xlu0 %v1426, 64
      %v1500 = vpop.permute.xlu0 %1499
      %1501 = vrot.lane.b32.xlu0 %v1427, 64
      %v1502 = vpop.permute.xlu0 %1501
      %1503 = vrot.lane.b32.xlu0 %v1428, 64
      %v1504 = vpop.permute.xlu0 %1503
      %1505 = vrot.lane.b32.xlu0 %v1429, 64
      %v1506 = vpop.permute.xlu0 %1505
      %1507 = vrot.lane.b32.xlu0 %v1430, 64
      %v1508 = vpop.permute.xlu0 %1507
      %1509 = vrot.lane.b32.xlu0 %v1431, 64
      %v1510 = vpop.permute.xlu0 %1509
      %1511 = vrot.lane.b32.xlu0 %v1432, 64
      %v1512 = vpop.permute.xlu0 %1511
      %1513 = vrot.lane.b32.xlu0 %v1433, 64
      %v1514 = vpop.permute.xlu0 %1513
      %1515 = vrot.lane.b32.xlu0 %v1434, 64
      %v1516 = vpop.permute.xlu0 %1515
      %1517 = vrot.lane.b32.xlu0 %v1435, 64
      %v1518 = vpop.permute.xlu0 %1517
      %1519 = vrot.lane.b32.xlu0 %v1436, 64
      %v1520 = vpop.permute.xlu0 %1519
      %1521 = vrot.lane.b32.xlu0 %v1437, 64
      %v1522 = vpop.permute.xlu0 %1521
      %1523 = vrot.lane.b32.xlu0 %v1438, 64
      %v1524 = vpop.permute.xlu0 %1523
      %1525 = vrot.lane.b32.xlu0 %v1439, 64
      %v1526 = vpop.permute.xlu0 %1525
      %1527 = vrot.lane.b32.xlu0 %v1440, 64
      %v1528 = vpop.permute.xlu0 %1527
      %1529 = vrot.lane.b32.xlu0 %v1441, 64
      %v1530 = vpop.permute.xlu0 %1529
      %1531 = vrot.lane.b32.xlu0 %v1442, 64
      %v1532 = vpop.permute.xlu0 %1531
      %1533 = vrot.lane.b32.xlu0 %v1443, 64
      %v1534 = vpop.permute.xlu0 %1533
      %1535 = vrot.lane.b32.xlu0 %v1444, 64
      %v1536 = vpop.permute.xlu0 %1535
      %1537 = vrot.lane.b32.xlu0 %v1445, 64
      %v1538 = vpop.permute.xlu0 %1537
      %1539 = vrot.lane.b32.xlu0 %v1446, 64
      %v1540 = vpop.permute.xlu0 %1539
      %1541 = vrot.lane.b32.xlu0 %v1447, 64
      %v1542 = vpop.permute.xlu0 %1541
      %1543 = vrot.lane.b32.xlu0 %v1448, 64
      %v1544 = vpop.permute.xlu0 %1543
      %1545 = vrot.lane.b32.xlu0 %v1449, 64
      %v1546 = vpop.permute.xlu0 %1545
      %1547 = vrot.lane.b32.xlu0 %v1450, 64
      %v1548 = vpop.permute.xlu0 %1547
      %1549 = vrot.lane.b32.xlu0 %v1451, 64
      %v1550 = vpop.permute.xlu0 %1549
      %1551 = vrot.lane.b32.xlu0 %v1452, 64
      %v1552 = vpop.permute.xlu0 %1551
      %1553 = vrot.lane.b32.xlu0 %v1453, 64
      %v1554 = vpop.permute.xlu0 %1553
      %1555 = vrot.lane.b32.xlu0 %v1454, 64
      %v1556 = vpop.permute.xlu0 %1555
      %1557 = vrot.lane.b32.xlu0 %v1455, 64
      %v1558 = vpop.permute.xlu0 %1557
      %1559 = vrot.lane.b32.xlu0 %v1456, 64
      %v1560 = vpop.permute.xlu0 %1559
      %1561 = vrot.lane.b32.xlu0 %v1457, 64
      %v1562 = vpop.permute.xlu0 %1561
      %1563 = vrot.lane.b32.xlu0 %v1458, 64
      %v1564 = vpop.permute.xlu0 %1563
      %1565 = vrot.lane.b32.xlu0 %v1459, 64
      %v1566 = vpop.permute.xlu0 %1565
      %1567 = vrot.lane.b32.xlu0 %v1460, 64
      %v1568 = vpop.permute.xlu0 %1567
      %v1605 = vmul.f32 %v1389, %v1498
      %v1606 = vmul.f32 %v1390, %v1500
      %v1607 = vmul.f32 %v1391, %v1502
      %v1608 = vmul.f32 %v1392, %v1504
      %v1609 = vmul.f32 %v1393, %v1506
      %v1610 = vmul.f32 %v1394, %v1508
      %v1611 = vmul.f32 %v1395, %v1510
      %v1612 = vmul.f32 %v1396, %v1512
      %v1613 = vmul.f32 %v1397, %v1514
      %v1614 = vmul.f32 %v1398, %v1516
      %v1615 = vmul.f32 %v1399, %v1518
      %v1616 = vmul.f32 %v1400, %v1520
      %v1617 = vmul.f32 %v1401, %v1522
      %v1618 = vmul.f32 %v1402, %v1524
      %v1619 = vmul.f32 %v1403, %v1526
      %v1620 = vmul.f32 %v1404, %v1528
      %v1621 = vmul.f32 %v1405, %v1530
      %v1622 = vmul.f32 %v1406, %v1532
      %v1623 = vmul.f32 %v1407, %v1534
      %v1624 = vmul.f32 %v1408, %v1536
      %v1625 = vmul.f32 %v1409, %v1538
      %v1626 = vmul.f32 %v1410, %v1540
      %v1627 = vmul.f32 %v1411, %v1542
      %v1628 = vmul.f32 %v1412, %v1544
      %v1629 = vmul.f32 %v1413, %v1546
      %v1630 = vmul.f32 %v1414, %v1548
      %v1631 = vmul.f32 %v1415, %v1550
      %v1632 = vmul.f32 %v1416, %v1552
      %v1633 = vmul.f32 %v1417, %v1554
      %v1634 = vmul.f32 %v1418, %v1556
      %v1635 = vmul.f32 %v1419, %v1558
      %v1636 = vmul.f32 %v1420, %v1560
      %v1637 = vmul.f32 %v1421, %v1562
      %v1638 = vmul.f32 %v1422, %v1564
      %v1639 = vmul.f32 %v1423, %v1566
      %v1640 = vmul.f32 %v1424, %v1568
      %v1641 = vadd.f32 %v1353, %v1605
      %v1642 = vadd.f32 %v1354, %v1606
      %v1643 = vadd.f32 %v1355, %v1607
      %v1644 = vadd.f32 %v1356, %v1608
      %v1645 = vadd.f32 %v1357, %v1609
      %v1646 = vadd.f32 %v1358, %v1610
      %v1647 = vadd.f32 %v1359, %v1611
      %v1648 = vadd.f32 %v1360, %v1612
      %v1649 = vadd.f32 %v1361, %v1613
      %v1650 = vadd.f32 %v1362, %v1614
      %v1651 = vadd.f32 %v1363, %v1615
      %v1652 = vadd.f32 %v1364, %v1616
      %v1653 = vadd.f32 %v1365, %v1617
      %v1654 = vadd.f32 %v1366, %v1618
      %v1655 = vadd.f32 %v1367, %v1619
      %v1656 = vadd.f32 %v1368, %v1620
      %v1657 = vadd.f32 %v1369, %v1621
      %v1658 = vadd.f32 %v1370, %v1622
      %v1659 = vadd.f32 %v1371, %v1623
      %v1660 = vadd.f32 %v1372, %v1624
      %v1661 = vadd.f32 %v1373, %v1625
      %v1662 = vadd.f32 %v1374, %v1626
      %v1663 = vadd.f32 %v1375, %v1627
      %v1664 = vadd.f32 %v1376, %v1628
      %v1665 = vadd.f32 %v1377, %v1629
      %v1666 = vadd.f32 %v1378, %v1630
      %v1667 = vadd.f32 %v1379, %v1631
      %v1668 = vadd.f32 %v1380, %v1632
      %v1669 = vadd.f32 %v1381, %v1633
      %v1670 = vadd.f32 %v1382, %v1634
      %v1671 = vadd.f32 %v1383, %v1635
      %v1672 = vadd.f32 %v1384, %v1636
      %v1673 = vadd.f32 %v1385, %v1637
      %v1674 = vadd.f32 %v1386, %v1638
      %v1675 = vadd.f32 %v1387, %v1639
      %v1676 = vadd.f32 %v1388, %v1640
      %1713 = vrot.lane.b32.xlu0 %v1641, 64
      %v1714 = vpop.permute.xlu0 %1713
      %1715 = vrot.lane.b32.xlu0 %v1642, 64
      %v1716 = vpop.permute.xlu0 %1715
      %1717 = vrot.lane.b32.xlu0 %v1643, 64
      %v1718 = vpop.permute.xlu0 %1717
      %1719 = vrot.lane.b32.xlu0 %v1644, 64
      %v1720 = vpop.permute.xlu0 %1719
      %1721 = vrot.lane.b32.xlu0 %v1645, 64
      %v1722 = vpop.permute.xlu0 %1721
      %1723 = vrot.lane.b32.xlu0 %v1646, 64
      %v1724 = vpop.permute.xlu0 %1723
      %1725 = vrot.lane.b32.xlu0 %v1647, 64
      %v1726 = vpop.permute.xlu0 %1725
      %1727 = vrot.lane.b32.xlu0 %v1648, 64
      %v1728 = vpop.permute.xlu0 %1727
      %1729 = vrot.lane.b32.xlu0 %v1649, 64
      %v1730 = vpop.permute.xlu0 %1729
      %1731 = vrot.lane.b32.xlu0 %v1650, 64
      %v1732 = vpop.permute.xlu0 %1731
      %1733 = vrot.lane.b32.xlu0 %v1651, 64
      %v1734 = vpop.permute.xlu0 %1733
      %1735 = vrot.lane.b32.xlu0 %v1652, 64
      %v1736 = vpop.permute.xlu0 %1735
      %1737 = vrot.lane.b32.xlu0 %v1653, 64
      %v1738 = vpop.permute.xlu0 %1737
      %1739 = vrot.lane.b32.xlu0 %v1654, 64
      %v1740 = vpop.permute.xlu0 %1739
      %1741 = vrot.lane.b32.xlu0 %v1655, 64
      %v1742 = vpop.permute.xlu0 %1741
      %1743 = vrot.lane.b32.xlu0 %v1656, 64
      %v1744 = vpop.permute.xlu0 %1743
      %1745 = vrot.lane.b32.xlu0 %v1657, 64
      %v1746 = vpop.permute.xlu0 %1745
      %1747 = vrot.lane.b32.xlu0 %v1658, 64
      %v1748 = vpop.permute.xlu0 %1747
      %1749 = vrot.lane.b32.xlu0 %v1659, 64
      %v1750 = vpop.permute.xlu0 %1749
      %1751 = vrot.lane.b32.xlu0 %v1660, 64
      %v1752 = vpop.permute.xlu0 %1751
      %1753 = vrot.lane.b32.xlu0 %v1661, 64
      %v1754 = vpop.permute.xlu0 %1753
      %1755 = vrot.lane.b32.xlu0 %v1662, 64
      %v1756 = vpop.permute.xlu0 %1755
      %1757 = vrot.lane.b32.xlu0 %v1663, 64
      %v1758 = vpop.permute.xlu0 %1757
      %1759 = vrot.lane.b32.xlu0 %v1664, 64
      %v1760 = vpop.permute.xlu0 %1759
      %1761 = vrot.lane.b32.xlu0 %v1665, 64
      %v1762 = vpop.permute.xlu0 %1761
      %1763 = vrot.lane.b32.xlu0 %v1666, 64
      %v1764 = vpop.permute.xlu0 %1763
      %1765 = vrot.lane.b32.xlu0 %v1667, 64
      %v1766 = vpop.permute.xlu0 %1765
      %1767 = vrot.lane.b32.xlu0 %v1668, 64
      %v1768 = vpop.permute.xlu0 %1767
      %1769 = vrot.lane.b32.xlu0 %v1669, 64
      %v1770 = vpop.permute.xlu0 %1769
      %1771 = vrot.lane.b32.xlu0 %v1670, 64
      %v1772 = vpop.permute.xlu0 %1771
      %1773 = vrot.lane.b32.xlu0 %v1671, 64
      %v1774 = vpop.permute.xlu0 %1773
      %1775 = vrot.lane.b32.xlu0 %v1672, 64
      %v1776 = vpop.permute.xlu0 %1775
      %1777 = vrot.lane.b32.xlu0 %v1673, 64
      %v1778 = vpop.permute.xlu0 %1777
      %1779 = vrot.lane.b32.xlu0 %v1674, 64
      %v1780 = vpop.permute.xlu0 %1779
      %1781 = vrot.lane.b32.xlu0 %v1675, 64
      %v1782 = vpop.permute.xlu0 %1781
      %1783 = vrot.lane.b32.xlu0 %v1676, 64
      %v1784 = vpop.permute.xlu0 %1783
      %vm1821 = vcmask 523264
      %1822 = vst.msk [vmem:[%s275] sm:$0xff] %vm1821, %v1714
      %1823 = vst.msk [vmem:[%s275 + $0x8] sm:$0xff] %vm1821, %v1716
      %1824 = vst.msk [vmem:[%s275 + $0x10] sm:$0xff] %vm1821, %v1718
      %1825 = vst.msk [vmem:[%s275 + $0x18] sm:$0xff] %vm1821, %v1720
      %1826 = vst.msk [vmem:[%s275 + $0x20] sm:$0xff] %vm1821, %v1722
      %1827 = vst.msk [vmem:[%s275 + $0x28] sm:$0xff] %vm1821, %v1724
      %1828 = vst.msk [vmem:[%s275 + $0x30] sm:$0xff] %vm1821, %v1726
      %1829 = vst.msk [vmem:[%s275 + $0x38] sm:$0xff] %vm1821, %v1728
      %1830 = vst.msk [vmem:[%s275 + $0x40] sm:$0xff] %vm1821, %v1730
      %1831 = vst.msk [vmem:[%s275 + $0x48] sm:$0xff] %vm1821, %v1732
      %1832 = vst.msk [vmem:[%s275 + $0x50] sm:$0xff] %vm1821, %v1734
      %1833 = vst.msk [vmem:[%s275 + $0x58] sm:$0xff] %vm1821, %v1736
      %1834 = vst.msk [vmem:[%s275 + $0x60] sm:$0xff] %vm1821, %v1738
      %1835 = vst.msk [vmem:[%s275 + $0x68] sm:$0xff] %vm1821, %v1740
      %1836 = vst.msk [vmem:[%s275 + $0x70] sm:$0xff] %vm1821, %v1742
      %1837 = vst.msk [vmem:[%s275 + $0x78] sm:$0xff] %vm1821, %v1744
      %1838 = vst.msk [vmem:[%s275 + $0x80] sm:$0xff] %vm1821, %v1746
      %1839 = vst.msk [vmem:[%s275 + $0x88] sm:$0xff] %vm1821, %v1748
      %1840 = vst.msk [vmem:[%s275 + $0x90] sm:$0xff] %vm1821, %v1750
      %1841 = vst.msk [vmem:[%s275 + $0x98] sm:$0xff] %vm1821, %v1752
      %1842 = vst.msk [vmem:[%s275 + $0xa0] sm:$0xff] %vm1821, %v1754
      %1843 = vst.msk [vmem:[%s275 + $0xa8] sm:$0xff] %vm1821, %v1756
      %1844 = vst.msk [vmem:[%s275 + $0xb0] sm:$0xff] %vm1821, %v1758
      %1845 = vst.msk [vmem:[%s275 + $0xb8] sm:$0xff] %vm1821, %v1760
      %1846 = vst.msk [vmem:[%s275 + $0xc0] sm:$0xff] %vm1821, %v1762
      %1847 = vst.msk [vmem:[%s275 + $0xc8] sm:$0xff] %vm1821, %v1764
      %1848 = vst.msk [vmem:[%s275 + $0xd0] sm:$0xff] %vm1821, %v1766
      %1849 = vst.msk [vmem:[%s275 + $0xd8] sm:$0xff] %vm1821, %v1768
      %1850 = vst.msk [vmem:[%s275 + $0xe0] sm:$0xff] %vm1821, %v1770
      %1851 = vst.msk [vmem:[%s275 + $0xe8] sm:$0xff] %vm1821, %v1772
      %1852 = vst.msk [vmem:[%s275 + $0xf0] sm:$0xff] %vm1821, %v1774
      %1853 = vst.msk [vmem:[%s275 + $0xf8] sm:$0xff] %vm1821, %v1776
      %1854 = vst.msk [vmem:[%s275 + $0x100] sm:$0xff] %vm1821, %v1778
      %1855 = vst.msk [vmem:[%s275 + $0x108] sm:$0xff] %vm1821, %v1780
      %1856 = vst.msk [vmem:[%s275 + $0x110] sm:$0xff] %vm1821, %v1782
      %1857 = vst.msk [vmem:[%s275 + $0x118] sm:$0xff] %vm1821, %v1784
      %s1858 = smul.u32 36, %s17
      %p1859 = scmp.lt.s32.totalorder %s1858, 71
      %s1860 = scalar_select %p1859, %s1858, 71
      %s1861 = smul.addr %s1860, 8
      %s1862 = scalar_lea.vmem %s6, %s1861
      // Predicated region
      $region45: #{highway_layer.7} parent=43 // pred_check
        %p1863 = pneg %p171
      $region46: #{highway_layer.7} parent=43 // pred_check_branch
        %1865 = sbr.rel (%p1863) target = $region48
      $region47: #{highway_layer.7} parent=43 // pred_region
        %s1866 = smul.u32 36, %s17
      $region48: #{highway_layer.7} parent=43 // pred_fallthru
        _
    $region44: #{highway_layer.7} parent=5 // pred_fallthru
      _
    %p1867 = scmp.le.s32.totalorder 2, %s12
    // Predicated region
    $region49: #{highway_layer.7} parent=5 // pred_check
      %p1868 = pneg %p1867
    $region50: #{highway_layer.7} parent=5 // pred_check_branch
      %1870 = sbr.rel (%p1868) target = $region52
    $region51: #{highway_layer.7} parent=5 // pred_region
      %s1871 = ssub.s32 %s12, 2
      // Predicated region
      $region53: #{highway_layer.7} parent=51 // pred_check
        %p1872 = pneg %p177
      $region54: #{highway_layer.7} parent=51 // pred_check_branch
        %1874 = sbr.rel (%p1872) target = $region56
      $region55: #{highway_layer.7} parent=51 // pred_region
        %s1875 = smul.u32 36, %s18
        %p1876 = scmp.lt.s32.totalorder %s1875, 71
        %s1877 = scalar_select %p1876, %s1875, 71
        %s1878 = smul.addr %s1877, 8
        %s1879 = scalar_lea.vmem %s6, %s1878
      $region56: #{highway_layer.7} parent=51 // pred_fallthru
        _
    $region52: #{highway_layer.7} parent=5 // pred_fallthru
      _
  $region6: #{highway_layer.7} parent=0 // loop_footer
    %s16 = sadd.s32 1, %s12
  $region7: #{highway_layer.7} parent=0 // loop_footer_branch
    %11 = sbr.rel target = $region3
  $region8: #{highway_layer.7} parent=0 // loop_exit
    _

// kernel: highway_layer.6
$region0: #{highway_layer.6}
  #allocation0 [shape = 'u32[]', space=smem, size = 0x4, offset = 0x4, fixed_abs, tag = 'smem constant byte address 0x4 - core index']
  #allocation1 [shape = 'u32[72,128]{1,0:T(1,128)}', space=vmem, size = 0x9000, scoped, tag = 'internal scratch']
  %s0 = inlined_call_operand.vmem [shape: f32[2,326,64], index: 0, kind: input, shape index: {}]
  %s1 = inlined_call_operand.vmem [shape: f32[576,128], index: 1, kind: input, shape index: {}]
  %s2 = inlined_call_operand.vmem [shape: f32[2,288,128], index: 2, kind: output, shape index: {0}]
  %s3 = inlined_call_operand.vmem [shape: f32[2,1,128], index: 3, kind: output, shape index: {1}]
  %s4 = inlined_call_operand.vmem [shape: f32[2,1,128], index: 4, kind: output, shape index: {2}]
  %5 = xla_tuple %s2, %s3, %s4
  %s6 = sld [smem:[#allocation0]]
  $region61: #{highway_layer.6} parent=0
    _
  %s8 = ssub.s32 1, %s6
  %s9 = scalar_select 0, %s8, %s6
  loop: start=0, step=1, limit=4
  $region2: #{highway_layer.6} parent=0 // loop_pre_header
    _
  $region3: #{highway_layer.6} parent=0 // loop_header
    %s11 = sphi 0, %s15
    %p12 = scmp.ge.s32.totalorder %s11, 4
    %s18 = sphi 0, %s30
    %s19 = sphi 0, %s26
    %s20 = sphi 0, %s18
    %s21 = sphi 0, %s19
    %s22 = sphi 0, %s20
    %s23 = sphi 0, %s21
    %s35 = sphi 0, %s37
    %s38 = sphi 0, %s35
    %s39 = sphi 0, %s38
    %s55 = sphi 0, %s39
    %s59 = sphi 0, %s59
    %s61 = sphi 0, %s59
    %s62 = sphi 0, %s61
    %s76 = sphi 0, %s62
    %s84 = sphi 0, %s86
    %s87 = sphi 0, %s84
    %s88 = sphi 0, %s87
    %s104 = sphi 0, %s88
    %s110 = sphi 0, %s112
    %s113 = sphi 0, %s110
    %s114 = sphi 0, %s113
    %s130 = sphi 0, %s114
    %s136 = sphi 0, %s138
    %s139 = sphi 0, %s136
    %s140 = sphi 0, %s139
    %s156 = sphi 0, %s140
  $region4: #{highway_layer.6} parent=0 // loop_header_branch
    %14 = sbr.rel (%p12) target = $region8
  $region5: #{highway_layer.6} parent=0 // loop_body
    %s16 = ssub.s32 %s11, 1
    %s17 = ssub.s32 %s11, 2
    %s24 = sadd.s32 1, %s19
    %p25 = scmp.ge.s32.totalorder %s24, 1
    %s26 = scalar_select %p25, 0, %s24
    %s27 = sadd.s32 1, %s18
    %s28 = scalar_select %p25, %s27, %s18
    %p29 = scmp.ge.s32.totalorder %s28, 2
    %s30 = scalar_select %p29, 0, %s28
    %s31 = sadd.s32 %s18, %s19
    %s32 = sadd.s32 %s30, %s26
    %s33 = ssub.s32 %s31, %s32
    %p34 = scmp.eq.s32.totalorder %s33, 0
    %s36 = sadd.s32 %s35, 1
    %s37 = scalar_select %p34, %s35, %s36
    %p40 = pneg %p34
    %p41 = scmp.eq.s32.totalorder %s11, 1
    %p42 = por %p40, %p41
    %p43 = scmp.ne.s32.totalorder %s35, %s38
    %p44 = scmp.eq.s32.totalorder %s11, 0
    %p45 = por %p43, %p44
    %p46 = scmp.ne.s32.totalorder %s35, %s38
    %p47 = scmp.eq.s32.totalorder %s16, 1
    %p48 = por %p46, %p47
    %p49 = scmp.ne.s32.totalorder %s38, %s39
    %p50 = scmp.eq.s32.totalorder %s16, 0
    %p51 = por %p49, %p50
    %p52 = scmp.ne.s32.totalorder %s38, %s39
    %p53 = scmp.eq.s32.totalorder %s17, 1
    %p54 = por %p52, %p53
    %p56 = scmp.ne.s32.totalorder %s39, %s55
    %p57 = scmp.eq.s32.totalorder %s17, 0
    %p58 = por %p56, %p57
    %s60 = sadd.s32 %s59, 1
    %p63 = scmp.eq.s32.totalorder %s11, 1
    %p64 = scmp.ne.s32.totalorder %s59, %s61
    %p65 = scmp.eq.s32.totalorder %s11, 0
    %p66 = por %p64, %p65
    %p67 = scmp.ne.s32.totalorder %s59, %s61
    %p68 = scmp.eq.s32.totalorder %s16, 1
    %p69 = por %p67, %p68
    %p70 = scmp.ne.s32.totalorder %s61, %s62
    %p71 = scmp.eq.s32.totalorder %s16, 0
    %p72 = por %p70, %p71
    %p73 = scmp.ne.s32.totalorder %s61, %s62
    %p74 = scmp.eq.s32.totalorder %s17, 1
    %p75 = por %p73, %p74
    %p77 = scmp.ne.s32.totalorder %s62, %s76
    %p78 = scmp.eq.s32.totalorder %s17, 0
    %p79 = por %p77, %p78
    %s80 = sadd.s32 %s18, %s19
    %s81 = sadd.s32 %s30, %s26
    %s82 = ssub.s32 %s80, %s81
    %p83 = scmp.eq.s32.totalorder %s82, 0
    %s85 = sadd.s32 %s84, 1
    %s86 = scalar_select %p83, %s84, %s85
    %p89 = pneg %p83
    %p90 = scmp.eq.s32.totalorder %s11, 1
    %p91 = por %p89, %p90
    %p92 = scmp.ne.s32.totalorder %s84, %s87
    %p93 = scmp.eq.s32.totalorder %s11, 0
    %p94 = por %p92, %p93
    %p95 = scmp.ne.s32.totalorder %s84, %s87
    %p96 = scmp.eq.s32.totalorder %s16, 1
    %p97 = por %p95, %p96
    %p98 = scmp.ne.s32.totalorder %s87, %s88
    %p99 = scmp.eq.s32.totalorder %s16, 0
    %p100 = por %p98, %p99
    %p101 = scmp.ne.s32.totalorder %s87, %s88
    %p102 = scmp.eq.s32.totalorder %s17, 1
    %p103 = por %p101, %p102
    %p105 = scmp.ne.s32.totalorder %s88, %s104
    %p106 = scmp.eq.s32.totalorder %s17, 0
    %p107 = por %p105, %p106
    %s108 = ssub.s32 %s18, %s30
    %p109 = scmp.eq.s32.totalorder %s108, 0
    %s111 = sadd.s32 %s110, 1
    %s112 = scalar_select %p109, %s110, %s111
    %p115 = pneg %p109
    %p116 = scmp.eq.s32.totalorder %s11, 1
    %p117 = por %p115, %p116
    %p118 = scmp.ne.s32.totalorder %s110, %s113
    %p119 = scmp.eq.s32.totalorder %s11, 0
    %p120 = por %p118, %p119
    %p121 = scmp.ne.s32.totalorder %s110, %s113
    %p122 = scmp.eq.s32.totalorder %s16, 1
    %p123 = por %p121, %p122
    %p124 = scmp.ne.s32.totalorder %s113, %s114
    %p125 = scmp.eq.s32.totalorder %s16, 0
    %p126 = por %p124, %p125
    %p127 = scmp.ne.s32.totalorder %s113, %s114
    %p128 = scmp.eq.s32.totalorder %s17, 1
    %p129 = por %p127, %p128
    %p131 = scmp.ne.s32.totalorder %s114, %s130
    %p132 = scmp.eq.s32.totalorder %s17, 0
    %p133 = por %p131, %p132
    %s134 = ssub.s32 %s18, %s30
    %p135 = scmp.eq.s32.totalorder %s134, 0
    %s137 = sadd.s32 %s136, 1
    %s138 = scalar_select %p135, %s136, %s137
    %p141 = pneg %p135
    %p142 = scmp.eq.s32.totalorder %s11, 1
    %p143 = por %p141, %p142
    %p144 = scmp.ne.s32.totalorder %s136, %s139
    %p145 = scmp.eq.s32.totalorder %s11, 0
    %p146 = por %p144, %p145
    %p147 = scmp.ne.s32.totalorder %s136, %s139
    %p148 = scmp.eq.s32.totalorder %s16, 1
    %p149 = por %p147, %p148
    %p150 = scmp.ne.s32.totalorder %s139, %s140
    %p151 = scmp.eq.s32.totalorder %s16, 0
    %p152 = por %p150, %p151
    %p153 = scmp.ne.s32.totalorder %s139, %s140
    %p154 = scmp.eq.s32.totalorder %s17, 1
    %p155 = por %p153, %p154
    %p157 = scmp.ne.s32.totalorder %s140, %s156
    %p158 = scmp.eq.s32.totalorder %s17, 0
    %p159 = por %p157, %p158
    %p160 = scmp.le.s32.totalorder 1, %s11
    %p161 = scmp.lt.s32.totalorder %s11, 3
    %p162 = pnand %p160, %p161
    %p163 = pneg %p162
    // Predicated region
    $region9: #{highway_layer.6} parent=5 // pred_check
      _
    $region10: #{highway_layer.6} parent=5 // pred_check_branch
      %165 = sbr.rel (%p162) target = $region12
    $region11: #{highway_layer.6} parent=5 // pred_region
      %s166 = ssub.s32 %s11, 1
      // Predicated region
      $region13: #{highway_layer.6} parent=11 // pred_check
        %p167 = pneg %p72
      $region14: #{highway_layer.6} parent=11 // pred_check_branch
        %169 = sbr.rel (%p167) target = $region16
      $region15: #{highway_layer.6} parent=11 // pred_region
        _
      $region16: #{highway_layer.6} parent=11 // pred_fallthru
        _
    $region12: #{highway_layer.6} parent=5 // pred_fallthru
      _
    %p170 = scmp.lt.s32.totalorder %s11, 2
    // Predicated region
    $region17: #{highway_layer.6} parent=5 // pred_check
      %p171 = pneg %p170
    $region18: #{highway_layer.6} parent=5 // pred_check_branch
      %173 = sbr.rel (%p171) target = $region20
    $region19: #{highway_layer.6} parent=5 // pred_region
      // Predicated region
      $region21: #{highway_layer.6} parent=19 // pred_check
        %p174 = pneg %p45
      $region22: #{highway_layer.6} parent=19 // pred_check_branch
        %176 = sbr.rel (%p174) target = $region24
      $region23: #{highway_layer.6} parent=19 // pred_region
        %s177 = sadd.s32 %s18, %s19
        %p178 = scmp.lt.s32.totalorder %s177, 1
        %s179 = scalar_select %p178, %s177, 1
        %s180 = smul.addr %s179, 41
        %s181 = smul.addr %s180, 8
        %s182 = scalar_lea.vmem %s0, %s181
        %s183 = sadd.s32 %s18, %s19
      $region24: #{highway_layer.6} parent=19 // pred_fallthru
        _
    $region20: #{highway_layer.6} parent=5 // pred_fallthru
      _
    %p184 = scmp.le.s32.totalorder 1, %s11
    %p185 = scmp.lt.s32.totalorder %s11, 3
    %p186 = pnand %p184, %p185
    %p187 = pneg %p186
    // Predicated region
    $region25: #{highway_layer.6} parent=5 // pred_check
      _
    $region26: #{highway_layer.6} parent=5 // pred_check_branch
      %189 = sbr.rel (%p186) target = $region28
    $region27: #{highway_layer.6} parent=5 // pred_region
      %s190 = ssub.s32 %s11, 1
      %s191 = sadd.s32 %s20, %s21
      %p192 = scmp.lt.s32.totalorder %s191, 1
      %s193 = scalar_select %p192, %s191, 1
      %s194 = smul.addr %s193, 41
      %s195 = smul.addr %s194, 8
      %s196 = scalar_lea.vmem %s0, %s195
      %p197 = pneg %p51
      %p198 = pneg %p48
      %p199 = pneg %p72
      %p200 = pneg %p69
      %p201 = pneg %p100
      %p202 = pneg %p97
      %s203 = sadd.s32 %s20, %s21
      %p204 = scmp.lt.s32.totalorder %s203, 1
      %s205 = scalar_select %p204, %s203, 1
      %s206 = smul.addr %s205, 36
      %s207 = smul.addr %s206, 8
      %s208 = scalar_lea.vmem %s2, %s207
      %p209 = pneg %p126
      %p210 = pneg %p123
      %p211 = scmp.lt.s32.totalorder %s20, 1
      %s212 = scalar_select %p211, %s20, 1
      %s213 = scalar_lea.vmem %s3, %s212
      %p214 = pneg %p152
      %p215 = pneg %p149
      %p216 = scmp.lt.s32.totalorder %s20, 1
      %s217 = scalar_select %p216, %s20, 1
      %s218 = scalar_lea.vmem %s4, %s217
      %s219 = sadd.s32 %s20, %s21
      %p220 = scmp.lt.s32.totalorder %s219, 1
      %s221 = scalar_select %p220, %s219, 1
      %s222 = smul.addr %s221, 41
      %s223 = smul.addr %s222, 8
      %s224 = scalar_lea.vmem %s0, %s223
      %s225 = sadd.s32 %s20, %s21
      %s226 = sadd.s32 %s20, %s21
      %p227 = scmp.lt.s32.totalorder %s226, 1
      %s228 = scalar_select %p227, %s226, 1
      %s229 = smul.addr %s228, 36
      %s230 = smul.addr %s229, 8
      %s231 = scalar_lea.vmem %s2, %s230
      %s232 = sadd.s32 %s20, %s21
      %p233 = scmp.lt.s32.totalorder %s20, 1
      %s234 = scalar_select %p233, %s20, 1
      %s235 = scalar_lea.vmem %s3, %s234
      %p236 = scmp.lt.s32.totalorder %s20, 1
      %s237 = scalar_select %p236, %s20, 1
      %s238 = scalar_lea.vmem %s4, %s237
      %v239 = vld [vmem:[%s224] sm:$0xff]
      %v240 = vld [vmem:[%s224 + $0x8] sm:$0xff]
      %v241 = vld [vmem:[%s224 + $0x10] sm:$0xff]
      %v242 = vld [vmem:[%s224 + $0x18] sm:$0xff]
      %v243 = vld [vmem:[%s224 + $0x20] sm:$0xff]
      %v244 = vld [vmem:[%s224 + $0x28] sm:$0xff]
      %v245 = vld [vmem:[%s224 + $0x30] sm:$0xff]
      %v246 = vld [vmem:[%s224 + $0x38] sm:$0xff]
      %v247 = vld [vmem:[%s224 + $0x40] sm:$0xff]
      %v248 = vld [vmem:[%s224 + $0x48] sm:$0xff]
      %v249 = vld [vmem:[%s224 + $0x50] sm:$0xff]
      %v250 = vld [vmem:[%s224 + $0x58] sm:$0xff]
      %v251 = vld [vmem:[%s224 + $0x60] sm:$0xff]
      %v252 = vld [vmem:[%s224 + $0x68] sm:$0xff]
      %v253 = vld [vmem:[%s224 + $0x70] sm:$0xff]
      %v254 = vld [vmem:[%s224 + $0x78] sm:$0xff]
      %v255 = vld [vmem:[%s224 + $0x80] sm:$0xff]
      %v256 = vld [vmem:[%s224 + $0x88] sm:$0xff]
      %v257 = vld [vmem:[%s224 + $0x90] sm:$0xff]
      %v258 = vld [vmem:[%s224 + $0x98] sm:$0xff]
      %v259 = vld [vmem:[%s224 + $0xa0] sm:$0xff]
      %v260 = vld [vmem:[%s224 + $0xa8] sm:$0xff]
      %v261 = vld [vmem:[%s224 + $0xb0] sm:$0xff]
      %v262 = vld [vmem:[%s224 + $0xb8] sm:$0xff]
      %v263 = vld [vmem:[%s224 + $0xc0] sm:$0xff]
      %v264 = vld [vmem:[%s224 + $0xc8] sm:$0xff]
      %v265 = vld [vmem:[%s224 + $0xd0] sm:$0xff]
      %v266 = vld [vmem:[%s224 + $0xd8] sm:$0xff]
      %v267 = vld [vmem:[%s224 + $0xe0] sm:$0xff]
      %v268 = vld [vmem:[%s224 + $0xe8] sm:$0xff]
      %v269 = vld [vmem:[%s224 + $0xf0] sm:$0xff]
      %v270 = vld [vmem:[%s224 + $0xf8] sm:$0xff]
      %v271 = vld [vmem:[%s224 + $0x100] sm:$0xff]
      %v272 = vld [vmem:[%s224 + $0x108] sm:$0xff]
      %v273 = vld [vmem:[%s224 + $0x110] sm:$0xff]
      %v274 = vld [vmem:[%s224 + $0x118] sm:$0xff]
      %v275 = vld [vmem:[%s1] sm:$0xff]
      %v276 = vld [vmem:[%s1 + $0x8] sm:$0xff]
      %v277 = vld [vmem:[%s1 + $0x10] sm:$0xff]
      %v278 = vld [vmem:[%s1 + $0x18] sm:$0xff]
      %v279 = vld [vmem:[%s1 + $0x20] sm:$0xff]
      %v280 = vld [vmem:[%s1 + $0x28] sm:$0xff]
      %v281 = vld [vmem:[%s1 + $0x30] sm:$0xff]
      %v282 = vld [vmem:[%s1 + $0x38] sm:$0xff]
      %v283 = vld [vmem:[%s224 + $0x1] sm:$0xff]
      %v284 = vld [vmem:[%s224 + $0x9] sm:$0xff]
      %v285 = vld [vmem:[%s224 + $0x11] sm:$0xff]
      %v286 = vld [vmem:[%s224 + $0x19] sm:$0xff]
      %v287 = vld [vmem:[%s224 + $0x21] sm:$0xff]
      %v288 = vld [vmem:[%s224 + $0x29] sm:$0xff]
      %v289 = vld [vmem:[%s224 + $0x31] sm:$0xff]
      %v290 = vld [vmem:[%s224 + $0x39] sm:$0xff]
      %v291 = vld [vmem:[%s224 + $0x41] sm:$0xff]
      %v292 = vld [vmem:[%s224 + $0x49] sm:$0xff]
      %v293 = vld [vmem:[%s224 + $0x51] sm:$0xff]
      %v294 = vld [vmem:[%s224 + $0x59] sm:$0xff]
      %v295 = vld [vmem:[%s224 + $0x61] sm:$0xff]
      %v296 = vld [vmem:[%s224 + $0x69] sm:$0xff]
      %v297 = vld [vmem:[%s224 + $0x71] sm:$0xff]
      %v298 = vld [vmem:[%s224 + $0x79] sm:$0xff]
      %v299 = vld [vmem:[%s224 + $0x81] sm:$0xff]
      %v300 = vld [vmem:[%s224 + $0x89] sm:$0xff]
      %v301 = vld [vmem:[%s224 + $0x91] sm:$0xff]
      %v302 = vld [vmem:[%s224 + $0x99] sm:$0xff]
      %v303 = vld [vmem:[%s224 + $0xa1] sm:$0xff]
      %v304 = vld [vmem:[%s224 + $0xa9] sm:$0xff]
      %v305 = vld [vmem:[%s224 + $0xb1] sm:$0xff]
      %v306 = vld [vmem:[%s224 + $0xb9] sm:$0xff]
      %v307 = vld [vmem:[%s224 + $0xc1] sm:$0xff]
      %v308 = vld [vmem:[%s224 + $0xc9] sm:$0xff]
      %v309 = vld [vmem:[%s224 + $0xd1] sm:$0xff]
      %v310 = vld [vmem:[%s224 + $0xd9] sm:$0xff]
      %v311 = vld [vmem:[%s224 + $0xe1] sm:$0xff]
      %v312 = vld [vmem:[%s224 + $0xe9] sm:$0xff]
      %v313 = vld [vmem:[%s224 + $0xf1] sm:$0xff]
      %v314 = vld [vmem:[%s224 + $0xf9] sm:$0xff]
      %v315 = vld [vmem:[%s224 + $0x101] sm:$0xff]
      %v316 = vld [vmem:[%s224 + $0x109] sm:$0xff]
      %v317 = vld [vmem:[%s224 + $0x111] sm:$0xff]
      %v318 = vld [vmem:[%s224 + $0x119] sm:$0xff]
      %v319 = vld [vmem:[%s1 + $0x40] sm:$0xff]
      %v320 = vld [vmem:[%s1 + $0x48] sm:$0xff]
      %v321 = vld [vmem:[%s1 + $0x50] sm:$0xff]
      %v322 = vld [vmem:[%s1 + $0x58] sm:$0xff]
      %v323 = vld [vmem:[%s1 + $0x60] sm:$0xff]
      %v324 = vld [vmem:[%s1 + $0x68] sm:$0xff]
      %v325 = vld [vmem:[%s1 + $0x70] sm:$0xff]
      %v326 = vld [vmem:[%s1 + $0x78] sm:$0xff]
      %vm327 = vcmask 523264
      %v329 = vsel %vm327, %v283, 0
      %v332 = vsel %vm327, %v284, 0
      %v335 = vsel %vm327, %v285, 0
      %v338 = vsel %vm327, %v286, 0
      %v341 = vsel %vm327, %v287, 0
      %v344 = vsel %vm327, %v288, 0
      %v347 = vsel %vm327, %v289, 0
      %v350 = vsel %vm327, %v290, 0
      %v353 = vsel %vm327, %v291, 0
      %v356 = vsel %vm327, %v292, 0
      %v359 = vsel %vm327, %v293, 0
      %v362 = vsel %vm327, %v294, 0
      %v365 = vsel %vm327, %v295, 0
      %v368 = vsel %vm327, %v296, 0
      %v371 = vsel %vm327, %v297, 0
      %v374 = vsel %vm327, %v298, 0
      %v377 = vsel %vm327, %v299, 0
      %v380 = vsel %vm327, %v300, 0
      %v383 = vsel %vm327, %v301, 0
      %v386 = vsel %vm327, %v302, 0
      %v389 = vsel %vm327, %v303, 0
      %v392 = vsel %vm327, %v304, 0
      %v395 = vsel %vm327, %v305, 0
      %v398 = vsel %vm327, %v306, 0
      %v401 = vsel %vm327, %v307, 0
      %v404 = vsel %vm327, %v308, 0
      %v407 = vsel %vm327, %v309, 0
      %v410 = vsel %vm327, %v310, 0
      %v413 = vsel %vm327, %v311, 0
      %v416 = vsel %vm327, %v312, 0
      %v419 = vsel %vm327, %v313, 0
      %v422 = vsel %vm327, %v314, 0
      %v425 = vsel %vm327, %v315, 0
      %v428 = vsel %vm327, %v316, 0
      %v431 = vsel %vm327, %v317, 0
      %v434 = vsel %vm327, %v318, 0
      %436 = vmatpush.msra.mxu0 0.0
      %437 = vmatpush.msra.mxu0 0.0
      %438 = vmatpush.msra.mxu0 0.0
      %439 = vmatpush.msra.mxu0 0.0
      %440 = vmatpush.msra.mxu0 0.0
      %441 = vmatpush.msra.mxu0 0.0
      %442 = vmatpush.msra.mxu0 0.0
      %443 = vmatpush.msra.mxu0 0.0
      %444 = vmatpush.msra.mxu0 %v326
      %445 = vmatpush.msra.mxu0 %v325
      %446 = vmatpush.msra.mxu0 %v324
      %447 = vmatpush.msra.mxu0 %v323
      %448 = vmatpush.msra.mxu0 %v322
      %449 = vmatpush.msra.mxu0 %v321
      %450 = vmatpush.msra.mxu0 %v320
      %451 = vmatpush.msra.mxu0 %v319
      %452 = vmatmul.f32.gmra.mxu0 %v329
      %v453 = vpop.f32.mrf.mxu0
      %v454 = vadd.f32 0.0, %v453
      %455 = vmatmul.f32.gmra.mxu0 %v332
      %v456 = vpop.f32.mrf.mxu0
      %v457 = vadd.f32 0.0, %v456
      %458 = vmatmul.f32.gmra.mxu0 %v335
      %v459 = vpop.f32.mrf.mxu0
      %v460 = vadd.f32 0.0, %v459
      %461 = vmatmul.f32.gmra.mxu0 %v338
      %v462 = vpop.f32.mrf.mxu0
      %v463 = vadd.f32 0.0, %v462
      %464 = vmatmul.f32.gmra.mxu0 %v341
      %v465 = vpop.f32.mrf.mxu0
      %v466 = vadd.f32 0.0, %v465
      %467 = vmatmul.f32.gmra.mxu0 %v344
      %v468 = vpop.f32.mrf.mxu0
      %v469 = vadd.f32 0.0, %v468
      %470 = vmatmul.f32.gmra.mxu0 %v347
      %v471 = vpop.f32.mrf.mxu0
      %v472 = vadd.f32 0.0, %v471
      %473 = vmatmul.f32.gmra.mxu0 %v350
      %v474 = vpop.f32.mrf.mxu0
      %v475 = vadd.f32 0.0, %v474
      %476 = vmatmul.f32.gmra.mxu0 %v353
      %v477 = vpop.f32.mrf.mxu0
      %v478 = vadd.f32 0.0, %v477
      %479 = vmatmul.f32.gmra.mxu0 %v356
      %v480 = vpop.f32.mrf.mxu0
      %v481 = vadd.f32 0.0, %v480
      %482 = vmatmul.f32.gmra.mxu0 %v359
      %v483 = vpop.f32.mrf.mxu0
      %v484 = vadd.f32 0.0, %v483
      %485 = vmatmul.f32.gmra.mxu0 %v362
      %v486 = vpop.f32.mrf.mxu0
      %v487 = vadd.f32 0.0, %v486
      %488 = vmatmul.f32.gmra.mxu0 %v365
      %v489 = vpop.f32.mrf.mxu0
      %v490 = vadd.f32 0.0, %v489
      %491 = vmatmul.f32.gmra.mxu0 %v368
      %v492 = vpop.f32.mrf.mxu0
      %v493 = vadd.f32 0.0, %v492
      %494 = vmatmul.f32.gmra.mxu0 %v371
      %v495 = vpop.f32.mrf.mxu0
      %v496 = vadd.f32 0.0, %v495
      %497 = vmatmul.f32.gmra.mxu0 %v374
      %v498 = vpop.f32.mrf.mxu0
      %v499 = vadd.f32 0.0, %v498
      %500 = vmatmul.f32.gmra.mxu0 %v377
      %v501 = vpop.f32.mrf.mxu0
      %v502 = vadd.f32 0.0, %v501
      %503 = vmatmul.f32.gmra.mxu0 %v380
      %v504 = vpop.f32.mrf.mxu0
      %v505 = vadd.f32 0.0, %v504
      %506 = vmatmul.f32.gmra.mxu0 %v383
      %v507 = vpop.f32.mrf.mxu0
      %v508 = vadd.f32 0.0, %v507
      %509 = vmatmul.f32.gmra.mxu0 %v386
      %v510 = vpop.f32.mrf.mxu0
      %v511 = vadd.f32 0.0, %v510
      %512 = vmatmul.f32.gmra.mxu0 %v389
      %v513 = vpop.f32.mrf.mxu0
      %v514 = vadd.f32 0.0, %v513
      %515 = vmatmul.f32.gmra.mxu0 %v392
      %v516 = vpop.f32.mrf.mxu0
      %v517 = vadd.f32 0.0, %v516
      %518 = vmatmul.f32.gmra.mxu0 %v395
      %v519 = vpop.f32.mrf.mxu0
      %v520 = vadd.f32 0.0, %v519
      %521 = vmatmul.f32.gmra.mxu0 %v398
      %v522 = vpop.f32.mrf.mxu0
      %v523 = vadd.f32 0.0, %v522
      %524 = vmatmul.f32.gmra.mxu0 %v401
      %v525 = vpop.f32.mrf.mxu0
      %v526 = vadd.f32 0.0, %v525
      %527 = vmatmul.f32.gmra.mxu0 %v404
      %v528 = vpop.f32.mrf.mxu0
      %v529 = vadd.f32 0.0, %v528
      %530 = vmatmul.f32.gmra.mxu0 %v407
      %v531 = vpop.f32.mrf.mxu0
      %v532 = vadd.f32 0.0, %v531
      %533 = vmatmul.f32.gmra.mxu0 %v410
      %v534 = vpop.f32.mrf.mxu0
      %v535 = vadd.f32 0.0, %v534
      %536 = vmatmul.f32.gmra.mxu0 %v413
      %v537 = vpop.f32.mrf.mxu0
      %v538 = vadd.f32 0.0, %v537
      %539 = vmatmul.f32.gmra.mxu0 %v416
      %v540 = vpop.f32.mrf.mxu0
      %v541 = vadd.f32 0.0, %v540
      %542 = vmatmul.f32.gmra.mxu0 %v419
      %v543 = vpop.f32.mrf.mxu0
      %v544 = vadd.f32 0.0, %v543
      %545 = vmatmul.f32.gmra.mxu0 %v422
      %v546 = vpop.f32.mrf.mxu0
      %v547 = vadd.f32 0.0, %v546
      %548 = vmatmul.f32.gmra.mxu0 %v425
      %v549 = vpop.f32.mrf.mxu0
      %v550 = vadd.f32 0.0, %v549
      %551 = vmatmul.f32.gmra.mxu0 %v428
      %v552 = vpop.f32.mrf.mxu0
      %v553 = vadd.f32 0.0, %v552
      %554 = vmatmul.f32.gmra.mxu0 %v431
      %v555 = vpop.f32.mrf.mxu0
      %v556 = vadd.f32 0.0, %v555
      %557 = vmatmul.f32.gmra.mxu0 %v434
      %v558 = vpop.f32.mrf.mxu0
      %v559 = vadd.f32 0.0, %v558
      %560 = vdwg.mxu0
      %v562 = vsel %vm327, %v239, 0
      %v565 = vsel %vm327, %v240, 0
      %v568 = vsel %vm327, %v241, 0
      %v571 = vsel %vm327, %v242, 0
      %v574 = vsel %vm327, %v243, 0
      %v577 = vsel %vm327, %v244, 0
      %v580 = vsel %vm327, %v245, 0
      %v583 = vsel %vm327, %v246, 0
      %v586 = vsel %vm327, %v247, 0
      %v589 = vsel %vm327, %v248, 0
      %v592 = vsel %vm327, %v249, 0
      %v595 = vsel %vm327, %v250, 0
      %v598 = vsel %vm327, %v251, 0
      %v601 = vsel %vm327, %v252, 0
      %v604 = vsel %vm327, %v253, 0
      %v607 = vsel %vm327, %v254, 0
      %v610 = vsel %vm327, %v255, 0
      %v613 = vsel %vm327, %v256, 0
      %v616 = vsel %vm327, %v257, 0
      %v619 = vsel %vm327, %v258, 0
      %v622 = vsel %vm327, %v259, 0
      %v625 = vsel %vm327, %v260, 0
      %v628 = vsel %vm327, %v261, 0
      %v631 = vsel %vm327, %v262, 0
      %v634 = vsel %vm327, %v263, 0
      %v637 = vsel %vm327, %v264, 0
      %v640 = vsel %vm327, %v265, 0
      %v643 = vsel %vm327, %v266, 0
      %v646 = vsel %vm327, %v267, 0
      %v649 = vsel %vm327, %v268, 0
      %v652 = vsel %vm327, %v269, 0
      %v655 = vsel %vm327, %v270, 0
      %v658 = vsel %vm327, %v271, 0
      %v661 = vsel %vm327, %v272, 0
      %v664 = vsel %vm327, %v273, 0
      %v667 = vsel %vm327, %v274, 0
      %669 = vmatpush.msra.mxu0 0.0
      %670 = vmatpush.msra.mxu0 0.0
      %671 = vmatpush.msra.mxu0 0.0
      %672 = vmatpush.msra.mxu0 0.0
      %673 = vmatpush.msra.mxu0 0.0
      %674 = vmatpush.msra.mxu0 0.0
      %675 = vmatpush.msra.mxu0 0.0
      %676 = vmatpush.msra.mxu0 0.0
      %677 = vmatpush.msra.mxu0 %v282
      %678 = vmatpush.msra.mxu0 %v281
      %679 = vmatpush.msra.mxu0 %v280
      %680 = vmatpush.msra.mxu0 %v279
      %681 = vmatpush.msra.mxu0 %v278
      %682 = vmatpush.msra.mxu0 %v277
      %683 = vmatpush.msra.mxu0 %v276
      %684 = vmatpush.msra.mxu0 %v275
      %685 = vmatmul.f32.gmra.mxu0 %v562
      %v686 = vpop.f32.mrf.mxu0
      %v687 = vadd.f32 %v454, %v686
      %688 = vmatmul.f32.gmra.mxu0 %v565
      %v689 = vpop.f32.mrf.mxu0
      %v690 = vadd.f32 %v457, %v689
      %691 = vmatmul.f32.gmra.mxu0 %v568
      %v692 = vpop.f32.mrf.mxu0
      %v693 = vadd.f32 %v460, %v692
      %694 = vmatmul.f32.gmra.mxu0 %v571
      %v695 = vpop.f32.mrf.mxu0
      %v696 = vadd.f32 %v463, %v695
      %697 = vmatmul.f32.gmra.mxu0 %v574
      %v698 = vpop.f32.mrf.mxu0
      %v699 = vadd.f32 %v466, %v698
      %700 = vmatmul.f32.gmra.mxu0 %v577
      %v701 = vpop.f32.mrf.mxu0
      %v702 = vadd.f32 %v469, %v701
      %703 = vmatmul.f32.gmra.mxu0 %v580
      %v704 = vpop.f32.mrf.mxu0
      %v705 = vadd.f32 %v472, %v704
      %706 = vmatmul.f32.gmra.mxu0 %v583
      %v707 = vpop.f32.mrf.mxu0
      %v708 = vadd.f32 %v475, %v707
      %709 = vmatmul.f32.gmra.mxu0 %v586
      %v710 = vpop.f32.mrf.mxu0
      %v711 = vadd.f32 %v478, %v710
      %712 = vmatmul.f32.gmra.mxu0 %v589
      %v713 = vpop.f32.mrf.mxu0
      %v714 = vadd.f32 %v481, %v713
      %715 = vmatmul.f32.gmra.mxu0 %v592
      %v716 = vpop.f32.mrf.mxu0
      %v717 = vadd.f32 %v484, %v716
      %718 = vmatmul.f32.gmra.mxu0 %v595
      %v719 = vpop.f32.mrf.mxu0
      %v720 = vadd.f32 %v487, %v719
      %721 = vmatmul.f32.gmra.mxu0 %v598
      %v722 = vpop.f32.mrf.mxu0
      %v723 = vadd.f32 %v490, %v722
      %724 = vmatmul.f32.gmra.mxu0 %v601
      %v725 = vpop.f32.mrf.mxu0
      %v726 = vadd.f32 %v493, %v725
      %727 = vmatmul.f32.gmra.mxu0 %v604
      %v728 = vpop.f32.mrf.mxu0
      %v729 = vadd.f32 %v496, %v728
      %730 = vmatmul.f32.gmra.mxu0 %v607
      %v731 = vpop.f32.mrf.mxu0
      %v732 = vadd.f32 %v499, %v731
      %733 = vmatmul.f32.gmra.mxu0 %v610
      %v734 = vpop.f32.mrf.mxu0
      %v735 = vadd.f32 %v502, %v734
      %736 = vmatmul.f32.gmra.mxu0 %v613
      %v737 = vpop.f32.mrf.mxu0
      %v738 = vadd.f32 %v505, %v737
      %739 = vmatmul.f32.gmra.mxu0 %v616
      %v740 = vpop.f32.mrf.mxu0
      %v741 = vadd.f32 %v508, %v740
      %742 = vmatmul.f32.gmra.mxu0 %v619
      %v743 = vpop.f32.mrf.mxu0
      %v744 = vadd.f32 %v511, %v743
      %745 = vmatmul.f32.gmra.mxu0 %v622
      %v746 = vpop.f32.mrf.mxu0
      %v747 = vadd.f32 %v514, %v746
      %748 = vmatmul.f32.gmra.mxu0 %v625
      %v749 = vpop.f32.mrf.mxu0
      %v750 = vadd.f32 %v517, %v749
      %751 = vmatmul.f32.gmra.mxu0 %v628
      %v752 = vpop.f32.mrf.mxu0
      %v753 = vadd.f32 %v520, %v752
      %754 = vmatmul.f32.gmra.mxu0 %v631
      %v755 = vpop.f32.mrf.mxu0
      %v756 = vadd.f32 %v523, %v755
      %757 = vmatmul.f32.gmra.mxu0 %v634
      %v758 = vpop.f32.mrf.mxu0
      %v759 = vadd.f32 %v526, %v758
      %760 = vmatmul.f32.gmra.mxu0 %v637
      %v761 = vpop.f32.mrf.mxu0
      %v762 = vadd.f32 %v529, %v761
      %763 = vmatmul.f32.gmra.mxu0 %v640
      %v764 = vpop.f32.mrf.mxu0
      %v765 = vadd.f32 %v532, %v764
      %766 = vmatmul.f32.gmra.mxu0 %v643
      %v767 = vpop.f32.mrf.mxu0
      %v768 = vadd.f32 %v535, %v767
      %769 = vmatmul.f32.gmra.mxu0 %v646
      %v770 = vpop.f32.mrf.mxu0
      %v771 = vadd.f32 %v538, %v770
      %772 = vmatmul.f32.gmra.mxu0 %v649
      %v773 = vpop.f32.mrf.mxu0
      %v774 = vadd.f32 %v541, %v773
      %775 = vmatmul.f32.gmra.mxu0 %v652
      %v776 = vpop.f32.mrf.mxu0
      %v777 = vadd.f32 %v544, %v776
      %778 = vmatmul.f32.gmra.mxu0 %v655
      %v779 = vpop.f32.mrf.mxu0
      %v780 = vadd.f32 %v547, %v779
      %781 = vmatmul.f32.gmra.mxu0 %v658
      %v782 = vpop.f32.mrf.mxu0
      %v783 = vadd.f32 %v550, %v782
      %784 = vmatmul.f32.gmra.mxu0 %v661
      %v785 = vpop.f32.mrf.mxu0
      %v786 = vadd.f32 %v553, %v785
      %787 = vmatmul.f32.gmra.mxu0 %v664
      %v788 = vpop.f32.mrf.mxu0
      %v789 = vadd.f32 %v556, %v788
      %790 = vmatmul.f32.gmra.mxu0 %v667
      %v791 = vpop.f32.mrf.mxu0
      %v792 = vadd.f32 %v559, %v791
      %793 = vdwg.mxu0
      %v794 = vld [vmem:[%s224 + $0x2] sm:$0xff]
      %v795 = vld [vmem:[%s224 + $0xa] sm:$0xff]
      %v796 = vld [vmem:[%s224 + $0x12] sm:$0xff]
      %v797 = vld [vmem:[%s224 + $0x1a] sm:$0xff]
      %v798 = vld [vmem:[%s224 + $0x22] sm:$0xff]
      %v799 = vld [vmem:[%s224 + $0x2a] sm:$0xff]
      %v800 = vld [vmem:[%s224 + $0x32] sm:$0xff]
      %v801 = vld [vmem:[%s224 + $0x3a] sm:$0xff]
      %v802 = vld [vmem:[%s224 + $0x42] sm:$0xff]
      %v803 = vld [vmem:[%s224 + $0x4a] sm:$0xff]
      %v804 = vld [vmem:[%s224 + $0x52] sm:$0xff]
      %v805 = vld [vmem:[%s224 + $0x5a] sm:$0xff]
      %v806 = vld [vmem:[%s224 + $0x62] sm:$0xff]
      %v807 = vld [vmem:[%s224 + $0x6a] sm:$0xff]
      %v808 = vld [vmem:[%s224 + $0x72] sm:$0xff]
      %v809 = vld [vmem:[%s224 + $0x7a] sm:$0xff]
      %v810 = vld [vmem:[%s224 + $0x82] sm:$0xff]
      %v811 = vld [vmem:[%s224 + $0x8a] sm:$0xff]
      %v812 = vld [vmem:[%s224 + $0x92] sm:$0xff]
      %v813 = vld [vmem:[%s224 + $0x9a] sm:$0xff]
      %v814 = vld [vmem:[%s224 + $0xa2] sm:$0xff]
      %v815 = vld [vmem:[%s224 + $0xaa] sm:$0xff]
      %v816 = vld [vmem:[%s224 + $0xb2] sm:$0xff]
      %v817 = vld [vmem:[%s224 + $0xba] sm:$0xff]
      %v818 = vld [vmem:[%s224 + $0xc2] sm:$0xff]
      %v819 = vld [vmem:[%s224 + $0xca] sm:$0xff]
      %v820 = vld [vmem:[%s224 + $0xd2] sm:$0xff]
      %v821 = vld [vmem:[%s224 + $0xda] sm:$0xff]
      %v822 = vld [vmem:[%s224 + $0xe2] sm:$0xff]
      %v823 = vld [vmem:[%s224 + $0xea] sm:$0xff]
      %v824 = vld [vmem:[%s224 + $0xf2] sm:$0xff]
      %v825 = vld [vmem:[%s224 + $0xfa] sm:$0xff]
      %v826 = vld [vmem:[%s224 + $0x102] sm:$0xff]
      %v827 = vld [vmem:[%s224 + $0x10a] sm:$0xff]
      %v828 = vld [vmem:[%s224 + $0x112] sm:$0xff]
      %v829 = vld [vmem:[%s224 + $0x11a] sm:$0xff]
      %v830 = vld [vmem:[%s1 + $0x80] sm:$0xff]
      %v831 = vld [vmem:[%s1 + $0x88] sm:$0xff]
      %v832 = vld [vmem:[%s1 + $0x90] sm:$0xff]
      %v833 = vld [vmem:[%s1 + $0x98] sm:$0xff]
      %v834 = vld [vmem:[%s1 + $0xa0] sm:$0xff]
      %v835 = vld [vmem:[%s1 + $0xa8] sm:$0xff]
      %v836 = vld [vmem:[%s1 + $0xb0] sm:$0xff]
      %v837 = vld [vmem:[%s1 + $0xb8] sm:$0xff]
      %v839 = vsel %vm327, %v794, 0
      %v842 = vsel %vm327, %v795, 0
      %v845 = vsel %vm327, %v796, 0
      %v848 = vsel %vm327, %v797, 0
      %v851 = vsel %vm327, %v798, 0
      %v854 = vsel %vm327, %v799, 0
      %v857 = vsel %vm327, %v800, 0
      %v860 = vsel %vm327, %v801, 0
      %v863 = vsel %vm327, %v802, 0
      %v866 = vsel %vm327, %v803, 0
      %v869 = vsel %vm327, %v804, 0
      %v872 = vsel %vm327, %v805, 0
      %v875 = vsel %vm327, %v806, 0
      %v878 = vsel %vm327, %v807, 0
      %v881 = vsel %vm327, %v808, 0
      %v884 = vsel %vm327, %v809, 0
      %v887 = vsel %vm327, %v810, 0
      %v890 = vsel %vm327, %v811, 0
      %v893 = vsel %vm327, %v812, 0
      %v896 = vsel %vm327, %v813, 0
      %v899 = vsel %vm327, %v814, 0
      %v902 = vsel %vm327, %v815, 0
      %v905 = vsel %vm327, %v816, 0
      %v908 = vsel %vm327, %v817, 0
      %v911 = vsel %vm327, %v818, 0
      %v914 = vsel %vm327, %v819, 0
      %v917 = vsel %vm327, %v820, 0
      %v920 = vsel %vm327, %v821, 0
      %v923 = vsel %vm327, %v822, 0
      %v926 = vsel %vm327, %v823, 0
      %v929 = vsel %vm327, %v824, 0
      %v932 = vsel %vm327, %v825, 0
      %v935 = vsel %vm327, %v826, 0
      %v938 = vsel %vm327, %v827, 0
      %v941 = vsel %vm327, %v828, 0
      %v944 = vsel %vm327, %v829, 0
      %946 = vmatpush.msra.mxu0 0.0
      %947 = vmatpush.msra.mxu0 0.0
      %948 = vmatpush.msra.mxu0 0.0
      %949 = vmatpush.msra.mxu0 0.0
      %950 = vmatpush.msra.mxu0 0.0
      %951 = vmatpush.msra.mxu0 0.0
      %952 = vmatpush.msra.mxu0 0.0
      %953 = vmatpush.msra.mxu0 0.0
      %954 = vmatpush.msra.mxu0 %v837
      %955 = vmatpush.msra.mxu0 %v836
      %956 = vmatpush.msra.mxu0 %v835
      %957 = vmatpush.msra.mxu0 %v834
      %958 = vmatpush.msra.mxu0 %v833
      %959 = vmatpush.msra.mxu0 %v832
      %960 = vmatpush.msra.mxu0 %v831
      %961 = vmatpush.msra.mxu0 %v830
      %962 = vmatmul.f32.gmra.mxu0 %v839
      %v963 = vpop.f32.mrf.mxu0
      %v964 = vadd.f32 0.0, %v963
      %965 = vmatmul.f32.gmra.mxu0 %v842
      %v966 = vpop.f32.mrf.mxu0
      %v967 = vadd.f32 0.0, %v966
      %968 = vmatmul.f32.gmra.mxu0 %v845
      %v969 = vpop.f32.mrf.mxu0
      %v970 = vadd.f32 0.0, %v969
      %971 = vmatmul.f32.gmra.mxu0 %v848
      %v972 = vpop.f32.mrf.mxu0
      %v973 = vadd.f32 0.0, %v972
      %974 = vmatmul.f32.gmra.mxu0 %v851
      %v975 = vpop.f32.mrf.mxu0
      %v976 = vadd.f32 0.0, %v975
      %977 = vmatmul.f32.gmra.mxu0 %v854
      %v978 = vpop.f32.mrf.mxu0
      %v979 = vadd.f32 0.0, %v978
      %980 = vmatmul.f32.gmra.mxu0 %v857
      %v981 = vpop.f32.mrf.mxu0
      %v982 = vadd.f32 0.0, %v981
      %983 = vmatmul.f32.gmra.mxu0 %v860
      %v984 = vpop.f32.mrf.mxu0
      %v985 = vadd.f32 0.0, %v984
      %986 = vmatmul.f32.gmra.mxu0 %v863
      %v987 = vpop.f32.mrf.mxu0
      %v988 = vadd.f32 0.0, %v987
      %989 = vmatmul.f32.gmra.mxu0 %v866
      %v990 = vpop.f32.mrf.mxu0
      %v991 = vadd.f32 0.0, %v990
      %992 = vmatmul.f32.gmra.mxu0 %v869
      %v993 = vpop.f32.mrf.mxu0
      %v994 = vadd.f32 0.0, %v993
      %995 = vmatmul.f32.gmra.mxu0 %v872
      %v996 = vpop.f32.mrf.mxu0
      %v997 = vadd.f32 0.0, %v996
      %998 = vmatmul.f32.gmra.mxu0 %v875
      %v999 = vpop.f32.mrf.mxu0
      %v1000 = vadd.f32 0.0, %v999
      %1001 = vmatmul.f32.gmra.mxu0 %v878
      %v1002 = vpop.f32.mrf.mxu0
      %v1003 = vadd.f32 0.0, %v1002
      %1004 = vmatmul.f32.gmra.mxu0 %v881
      %v1005 = vpop.f32.mrf.mxu0
      %v1006 = vadd.f32 0.0, %v1005
      %1007 = vmatmul.f32.gmra.mxu0 %v884
      %v1008 = vpop.f32.mrf.mxu0
      %v1009 = vadd.f32 0.0, %v1008
      %1010 = vmatmul.f32.gmra.mxu0 %v887
      %v1011 = vpop.f32.mrf.mxu0
      %v1012 = vadd.f32 0.0, %v1011
      %1013 = vmatmul.f32.gmra.mxu0 %v890
      %v1014 = vpop.f32.mrf.mxu0
      %v1015 = vadd.f32 0.0, %v1014
      %1016 = vmatmul.f32.gmra.mxu0 %v893
      %v1017 = vpop.f32.mrf.mxu0
      %v1018 = vadd.f32 0.0, %v1017
      %1019 = vmatmul.f32.gmra.mxu0 %v896
      %v1020 = vpop.f32.mrf.mxu0
      %v1021 = vadd.f32 0.0, %v1020
      %1022 = vmatmul.f32.gmra.mxu0 %v899
      %v1023 = vpop.f32.mrf.mxu0
      %v1024 = vadd.f32 0.0, %v1023
      %1025 = vmatmul.f32.gmra.mxu0 %v902
      %v1026 = vpop.f32.mrf.mxu0
      %v1027 = vadd.f32 0.0, %v1026
      %1028 = vmatmul.f32.gmra.mxu0 %v905
      %v1029 = vpop.f32.mrf.mxu0
      %v1030 = vadd.f32 0.0, %v1029
      %1031 = vmatmul.f32.gmra.mxu0 %v908
      %v1032 = vpop.f32.mrf.mxu0
      %v1033 = vadd.f32 0.0, %v1032
      %1034 = vmatmul.f32.gmra.mxu0 %v911
      %v1035 = vpop.f32.mrf.mxu0
      %v1036 = vadd.f32 0.0, %v1035
      %1037 = vmatmul.f32.gmra.mxu0 %v914
      %v1038 = vpop.f32.mrf.mxu0
      %v1039 = vadd.f32 0.0, %v1038
      %1040 = vmatmul.f32.gmra.mxu0 %v917
      %v1041 = vpop.f32.mrf.mxu0
      %v1042 = vadd.f32 0.0, %v1041
      %1043 = vmatmul.f32.gmra.mxu0 %v920
      %v1044 = vpop.f32.mrf.mxu0
      %v1045 = vadd.f32 0.0, %v1044
      %1046 = vmatmul.f32.gmra.mxu0 %v923
      %v1047 = vpop.f32.mrf.mxu0
      %v1048 = vadd.f32 0.0, %v1047
      %1049 = vmatmul.f32.gmra.mxu0 %v926
      %v1050 = vpop.f32.mrf.mxu0
      %v1051 = vadd.f32 0.0, %v1050
      %1052 = vmatmul.f32.gmra.mxu0 %v929
      %v1053 = vpop.f32.mrf.mxu0
      %v1054 = vadd.f32 0.0, %v1053
      %1055 = vmatmul.f32.gmra.mxu0 %v932
      %v1056 = vpop.f32.mrf.mxu0
      %v1057 = vadd.f32 0.0, %v1056
      %1058 = vmatmul.f32.gmra.mxu0 %v935
      %v1059 = vpop.f32.mrf.mxu0
      %v1060 = vadd.f32 0.0, %v1059
      %1061 = vmatmul.f32.gmra.mxu0 %v938
      %v1062 = vpop.f32.mrf.mxu0
      %v1063 = vadd.f32 0.0, %v1062
      %1064 = vmatmul.f32.gmra.mxu0 %v941
      %v1065 = vpop.f32.mrf.mxu0
      %v1066 = vadd.f32 0.0, %v1065
      %1067 = vmatmul.f32.gmra.mxu0 %v944
      %v1068 = vpop.f32.mrf.mxu0
      %v1069 = vadd.f32 0.0, %v1068
      %1070 = vdwg.mxu0
      %v1071 = vadd.f32 %v687, %v964
      %v1072 = vadd.f32 %v690, %v967
      %v1073 = vadd.f32 %v693, %v970
      %v1074 = vadd.f32 %v696, %v973
      %v1075 = vadd.f32 %v699, %v976
      %v1076 = vadd.f32 %v702, %v979
      %v1077 = vadd.f32 %v705, %v982
      %v1078 = vadd.f32 %v708, %v985
      %v1079 = vadd.f32 %v711, %v988
      %v1080 = vadd.f32 %v714, %v991
      %v1081 = vadd.f32 %v717, %v994
      %v1082 = vadd.f32 %v720, %v997
      %v1083 = vadd.f32 %v723, %v1000
      %v1084 = vadd.f32 %v726, %v1003
      %v1085 = vadd.f32 %v729, %v1006
      %v1086 = vadd.f32 %v732, %v1009
      %v1087 = vadd.f32 %v735, %v1012
      %v1088 = vadd.f32 %v738, %v1015
      %v1089 = vadd.f32 %v741, %v1018
      %v1090 = vadd.f32 %v744, %v1021
      %v1091 = vadd.f32 %v747, %v1024
      %v1092 = vadd.f32 %v750, %v1027
      %v1093 = vadd.f32 %v753, %v1030
      %v1094 = vadd.f32 %v756, %v1033
      %v1095 = vadd.f32 %v759, %v1036
      %v1096 = vadd.f32 %v762, %v1039
      %v1097 = vadd.f32 %v765, %v1042
      %v1098 = vadd.f32 %v768, %v1045
      %v1099 = vadd.f32 %v771, %v1048
      %v1100 = vadd.f32 %v774, %v1051
      %v1101 = vadd.f32 %v777, %v1054
      %v1102 = vadd.f32 %v780, %v1057
      %v1103 = vadd.f32 %v783, %v1060
      %v1104 = vadd.f32 %v786, %v1063
      %v1105 = vadd.f32 %v789, %v1066
      %v1106 = vadd.f32 %v792, %v1069
      %v1107 = vld [vmem:[%s224 + $0x12] sm:$0xff]
      %v1108 = vld [vmem:[%s224 + $0x1a] sm:$0xff]
      %v1109 = vld [vmem:[%s224 + $0x22] sm:$0xff]
      %v1110 = vld [vmem:[%s224 + $0x2a] sm:$0xff]
      %v1111 = vld [vmem:[%s224 + $0x32] sm:$0xff]
      %v1112 = vld [vmem:[%s224 + $0x3a] sm:$0xff]
      %v1113 = vld [vmem:[%s224 + $0x42] sm:$0xff]
      %v1114 = vld [vmem:[%s224 + $0x4a] sm:$0xff]
      %v1115 = vld [vmem:[%s224 + $0x52] sm:$0xff]
      %v1116 = vld [vmem:[%s224 + $0x5a] sm:$0xff]
      %v1117 = vld [vmem:[%s224 + $0x62] sm:$0xff]
      %v1118 = vld [vmem:[%s224 + $0x6a] sm:$0xff]
      %v1119 = vld [vmem:[%s224 + $0x72] sm:$0xff]
      %v1120 = vld [vmem:[%s224 + $0x7a] sm:$0xff]
      %v1121 = vld [vmem:[%s224 + $0x82] sm:$0xff]
      %v1122 = vld [vmem:[%s224 + $0x8a] sm:$0xff]
      %v1123 = vld [vmem:[%s224 + $0x92] sm:$0xff]
      %v1124 = vld [vmem:[%s224 + $0x9a] sm:$0xff]
      %v1125 = vld [vmem:[%s224 + $0xa2] sm:$0xff]
      %v1126 = vld [vmem:[%s224 + $0xaa] sm:$0xff]
      %v1127 = vld [vmem:[%s224 + $0xb2] sm:$0xff]
      %v1128 = vld [vmem:[%s224 + $0xba] sm:$0xff]
      %v1129 = vld [vmem:[%s224 + $0xc2] sm:$0xff]
      %v1130 = vld [vmem:[%s224 + $0xca] sm:$0xff]
      %v1131 = vld [vmem:[%s224 + $0xd2] sm:$0xff]
      %v1132 = vld [vmem:[%s224 + $0xda] sm:$0xff]
      %v1133 = vld [vmem:[%s224 + $0xe2] sm:$0xff]
      %v1134 = vld [vmem:[%s224 + $0xea] sm:$0xff]
      %v1135 = vld [vmem:[%s224 + $0xf2] sm:$0xff]
      %v1136 = vld [vmem:[%s224 + $0xfa] sm:$0xff]
      %v1137 = vld [vmem:[%s224 + $0x102] sm:$0xff]
      %v1138 = vld [vmem:[%s224 + $0x10a] sm:$0xff]
      %v1139 = vld [vmem:[%s224 + $0x112] sm:$0xff]
      %v1140 = vld [vmem:[%s224 + $0x11a] sm:$0xff]
      %v1141 = vld [vmem:[%s224 + $0x122] sm:$0xff]
      %v1142 = vld [vmem:[%s224 + $0x12a] sm:$0xff]
      %v1143 = vld [vmem:[%s1 + $0xc0] sm:$0xff]
      %v1144 = vld [vmem:[%s1 + $0xc8] sm:$0xff]
      %v1145 = vld [vmem:[%s1 + $0xd0] sm:$0xff]
      %v1146 = vld [vmem:[%s1 + $0xd8] sm:$0xff]
      %v1147 = vld [vmem:[%s1 + $0xe0] sm:$0xff]
      %v1148 = vld [vmem:[%s1 + $0xe8] sm:$0xff]
      %v1149 = vld [vmem:[%s1 + $0xf0] sm:$0xff]
      %v1150 = vld [vmem:[%s1 + $0xf8] sm:$0xff]
      %v1152 = vsel %vm327, %v1107, 0
      %v1155 = vsel %vm327, %v1108, 0
      %v1158 = vsel %vm327, %v1109, 0
      %v1161 = vsel %vm327, %v1110, 0
      %v1164 = vsel %vm327, %v1111, 0
      %v1167 = vsel %vm327, %v1112, 0
      %v1170 = vsel %vm327, %v1113, 0
      %v1173 = vsel %vm327, %v1114, 0
      %v1176 = vsel %vm327, %v1115, 0
      %v1179 = vsel %vm327, %v1116, 0
      %v1182 = vsel %vm327, %v1117, 0
      %v1185 = vsel %vm327, %v1118, 0
      %v1188 = vsel %vm327, %v1119, 0
      %v1191 = vsel %vm327, %v1120, 0
      %v1194 = vsel %vm327, %v1121, 0
      %v1197 = vsel %vm327, %v1122, 0
      %v1200 = vsel %vm327, %v1123, 0
      %v1203 = vsel %vm327, %v1124, 0
      %v1206 = vsel %vm327, %v1125, 0
      %v1209 = vsel %vm327, %v1126, 0
      %v1212 = vsel %vm327, %v1127, 0
      %v1215 = vsel %vm327, %v1128, 0
      %v1218 = vsel %vm327, %v1129, 0
      %v1221 = vsel %vm327, %v1130, 0
      %v1224 = vsel %vm327, %v1131, 0
      %v1227 = vsel %vm327, %v1132, 0
      %v1230 = vsel %vm327, %v1133, 0
      %v1233 = vsel %vm327, %v1134, 0
      %v1236 = vsel %vm327, %v1135, 0
      %v1239 = vsel %vm327, %v1136, 0
      %v1242 = vsel %vm327, %v1137, 0
      %v1245 = vsel %vm327, %v1138, 0
      %v1248 = vsel %vm327, %v1139, 0
      %v1251 = vsel %vm327, %v1140, 0
      %v1254 = vsel %vm327, %v1141, 0
      %v1257 = vsel %vm327, %v1142, 0
      %1259 = vmatpush.msra.mxu0 0.0
      %1260 = vmatpush.msra.mxu0 0.0
      %1261 = vmatpush.msra.mxu0 0.0
      %1262 = vmatpush.msra.mxu0 0.0
      %1263 = vmatpush.msra.mxu0 0.0
      %1264 = vmatpush.msra.mxu0 0.0
      %1265 = vmatpush.msra.mxu0 0.0
      %1266 = vmatpush.msra.mxu0 0.0
      %1267 = vmatpush.msra.mxu0 %v1150
      %1268 = vmatpush.msra.mxu0 %v1149
      %1269 = vmatpush.msra.mxu0 %v1148
      %1270 = vmatpush.msra.mxu0 %v1147
      %1271 = vmatpush.msra.mxu0 %v1146
      %1272 = vmatpush.msra.mxu0 %v1145
      %1273 = vmatpush.msra.mxu0 %v1144
      %1274 = vmatpush.msra.mxu0 %v1143
      %1275 = vmatmul.f32.gmra.mxu0 %v1152
      %v1276 = vpop.f32.mrf.mxu0
      %v1277 = vadd.f32 0.0, %v1276
      %1278 = vmatmul.f32.gmra.mxu0 %v1155
      %v1279 = vpop.f32.mrf.mxu0
      %v1280 = vadd.f32 0.0, %v1279
      %1281 = vmatmul.f32.gmra.mxu0 %v1158
      %v1282 = vpop.f32.mrf.mxu0
      %v1283 = vadd.f32 0.0, %v1282
      %1284 = vmatmul.f32.gmra.mxu0 %v1161
      %v1285 = vpop.f32.mrf.mxu0
      %v1286 = vadd.f32 0.0, %v1285
      %1287 = vmatmul.f32.gmra.mxu0 %v1164
      %v1288 = vpop.f32.mrf.mxu0
      %v1289 = vadd.f32 0.0, %v1288
      %1290 = vmatmul.f32.gmra.mxu0 %v1167
      %v1291 = vpop.f32.mrf.mxu0
      %v1292 = vadd.f32 0.0, %v1291
      %1293 = vmatmul.f32.gmra.mxu0 %v1170
      %v1294 = vpop.f32.mrf.mxu0
      %v1295 = vadd.f32 0.0, %v1294
      %1296 = vmatmul.f32.gmra.mxu0 %v1173
      %v1297 = vpop.f32.mrf.mxu0
      %v1298 = vadd.f32 0.0, %v1297
      %1299 = vmatmul.f32.gmra.mxu0 %v1176
      %v1300 = vpop.f32.mrf.mxu0
      %v1301 = vadd.f32 0.0, %v1300
      %1302 = vmatmul.f32.gmra.mxu0 %v1179
      %v1303 = vpop.f32.mrf.mxu0
      %v1304 = vadd.f32 0.0, %v1303
      %1305 = vmatmul.f32.gmra.mxu0 %v1182
      %v1306 = vpop.f32.mrf.mxu0
      %v1307 = vadd.f32 0.0, %v1306
      %1308 = vmatmul.f32.gmra.mxu0 %v1185
      %v1309 = vpop.f32.mrf.mxu0
      %v1310 = vadd.f32 0.0, %v1309
      %1311 = vmatmul.f32.gmra.mxu0 %v1188
      %v1312 = vpop.f32.mrf.mxu0
      %v1313 = vadd.f32 0.0, %v1312
      %1314 = vmatmul.f32.gmra.mxu0 %v1191
      %v1315 = vpop.f32.mrf.mxu0
      %v1316 = vadd.f32 0.0, %v1315
      %1317 = vmatmul.f32.gmra.mxu0 %v1194
      %v1318 = vpop.f32.mrf.mxu0
      %v1319 = vadd.f32 0.0, %v1318
      %1320 = vmatmul.f32.gmra.mxu0 %v1197
      %v1321 = vpop.f32.mrf.mxu0
      %v1322 = vadd.f32 0.0, %v1321
      %1323 = vmatmul.f32.gmra.mxu0 %v1200
      %v1324 = vpop.f32.mrf.mxu0
      %v1325 = vadd.f32 0.0, %v1324
      %1326 = vmatmul.f32.gmra.mxu0 %v1203
      %v1327 = vpop.f32.mrf.mxu0
      %v1328 = vadd.f32 0.0, %v1327
      %1329 = vmatmul.f32.gmra.mxu0 %v1206
      %v1330 = vpop.f32.mrf.mxu0
      %v1331 = vadd.f32 0.0, %v1330
      %1332 = vmatmul.f32.gmra.mxu0 %v1209
      %v1333 = vpop.f32.mrf.mxu0
      %v1334 = vadd.f32 0.0, %v1333
      %1335 = vmatmul.f32.gmra.mxu0 %v1212
      %v1336 = vpop.f32.mrf.mxu0
      %v1337 = vadd.f32 0.0, %v1336
      %1338 = vmatmul.f32.gmra.mxu0 %v1215
      %v1339 = vpop.f32.mrf.mxu0
      %v1340 = vadd.f32 0.0, %v1339
      %1341 = vmatmul.f32.gmra.mxu0 %v1218
      %v1342 = vpop.f32.mrf.mxu0
      %v1343 = vadd.f32 0.0, %v1342
      %1344 = vmatmul.f32.gmra.mxu0 %v1221
      %v1345 = vpop.f32.mrf.mxu0
      %v1346 = vadd.f32 0.0, %v1345
      %1347 = vmatmul.f32.gmra.mxu0 %v1224
      %v1348 = vpop.f32.mrf.mxu0
      %v1349 = vadd.f32 0.0, %v1348
      %1350 = vmatmul.f32.gmra.mxu0 %v1227
      %v1351 = vpop.f32.mrf.mxu0
      %v1352 = vadd.f32 0.0, %v1351
      %1353 = vmatmul.f32.gmra.mxu0 %v1230
      %v1354 = vpop.f32.mrf.mxu0
      %v1355 = vadd.f32 0.0, %v1354
      %1356 = vmatmul.f32.gmra.mxu0 %v1233
      %v1357 = vpop.f32.mrf.mxu0
      %v1358 = vadd.f32 0.0, %v1357
      %1359 = vmatmul.f32.gmra.mxu0 %v1236
      %v1360 = vpop.f32.mrf.mxu0
      %v1361 = vadd.f32 0.0, %v1360
      %1362 = vmatmul.f32.gmra.mxu0 %v1239
      %v1363 = vpop.f32.mrf.mxu0
      %v1364 = vadd.f32 0.0, %v1363
      %1365 = vmatmul.f32.gmra.mxu0 %v1242
      %v1366 = vpop.f32.mrf.mxu0
      %v1367 = vadd.f32 0.0, %v1366
      %1368 = vmatmul.f32.gmra.mxu0 %v1245
      %v1369 = vpop.f32.mrf.mxu0
      %v1370 = vadd.f32 0.0, %v1369
      %1371 = vmatmul.f32.gmra.mxu0 %v1248
      %v1372 = vpop.f32.mrf.mxu0
      %v1373 = vadd.f32 0.0, %v1372
      %1374 = vmatmul.f32.gmra.mxu0 %v1251
      %v1375 = vpop.f32.mrf.mxu0
      %v1376 = vadd.f32 0.0, %v1375
      %1377 = vmatmul.f32.gmra.mxu0 %v1254
      %v1378 = vpop.f32.mrf.mxu0
      %v1379 = vadd.f32 0.0, %v1378
      %1380 = vmatmul.f32.gmra.mxu0 %v1257
      %v1381 = vpop.f32.mrf.mxu0
      %v1382 = vadd.f32 0.0, %v1381
      %1383 = vdwg.mxu0
      %v1384 = vadd.f32 %v1071, %v1277
      %v1385 = vadd.f32 %v1072, %v1280
      %v1386 = vadd.f32 %v1073, %v1283
      %v1387 = vadd.f32 %v1074, %v1286
      %v1388 = vadd.f32 %v1075, %v1289
      %v1389 = vadd.f32 %v1076, %v1292
      %v1390 = vadd.f32 %v1077, %v1295
      %v1391 = vadd.f32 %v1078, %v1298
      %v1392 = vadd.f32 %v1079, %v1301
      %v1393 = vadd.f32 %v1080, %v1304
      %v1394 = vadd.f32 %v1081, %v1307
      %v1395 = vadd.f32 %v1082, %v1310
      %v1396 = vadd.f32 %v1083, %v1313
      %v1397 = vadd.f32 %v1084, %v1316
      %v1398 = vadd.f32 %v1085, %v1319
      %v1399 = vadd.f32 %v1086, %v1322
      %v1400 = vadd.f32 %v1087, %v1325
      %v1401 = vadd.f32 %v1088, %v1328
      %v1402 = vadd.f32 %v1089, %v1331
      %v1403 = vadd.f32 %v1090, %v1334
      %v1404 = vadd.f32 %v1091, %v1337
      %v1405 = vadd.f32 %v1092, %v1340
      %v1406 = vadd.f32 %v1093, %v1343
      %v1407 = vadd.f32 %v1094, %v1346
      %v1408 = vadd.f32 %v1095, %v1349
      %v1409 = vadd.f32 %v1096, %v1352
      %v1410 = vadd.f32 %v1097, %v1355
      %v1411 = vadd.f32 %v1098, %v1358
      %v1412 = vadd.f32 %v1099, %v1361
      %v1413 = vadd.f32 %v1100, %v1364
      %v1414 = vadd.f32 %v1101, %v1367
      %v1415 = vadd.f32 %v1102, %v1370
      %v1416 = vadd.f32 %v1103, %v1373
      %v1417 = vadd.f32 %v1104, %v1376
      %v1418 = vadd.f32 %v1105, %v1379
      %v1419 = vadd.f32 %v1106, %v1382
      %v1420 = vld [vmem:[%s224 + $0x13] sm:$0xff]
      %v1421 = vld [vmem:[%s224 + $0x1b] sm:$0xff]
      %v1422 = vld [vmem:[%s224 + $0x23] sm:$0xff]
      %v1423 = vld [vmem:[%s224 + $0x2b] sm:$0xff]
      %v1424 = vld [vmem:[%s224 + $0x33] sm:$0xff]
      %v1425 = vld [vmem:[%s224 + $0x3b] sm:$0xff]
      %v1426 = vld [vmem:[%s224 + $0x43] sm:$0xff]
      %v1427 = vld [vmem:[%s224 + $0x4b] sm:$0xff]
      %v1428 = vld [vmem:[%s224 + $0x53] sm:$0xff]
      %v1429 = vld [vmem:[%s224 + $0x5b] sm:$0xff]
      %v1430 = vld [vmem:[%s224 + $0x63] sm:$0xff]
      %v1431 = vld [vmem:[%s224 + $0x6b] sm:$0xff]
      %v1432 = vld [vmem:[%s224 + $0x73] sm:$0xff]
      %v1433 = vld [vmem:[%s224 + $0x7b] sm:$0xff]
      %v1434 = vld [vmem:[%s224 + $0x83] sm:$0xff]
      %v1435 = vld [vmem:[%s224 + $0x8b] sm:$0xff]
      %v1436 = vld [vmem:[%s224 + $0x93] sm:$0xff]
      %v1437 = vld [vmem:[%s224 + $0x9b] sm:$0xff]
      %v1438 = vld [vmem:[%s224 + $0xa3] sm:$0xff]
      %v1439 = vld [vmem:[%s224 + $0xab] sm:$0xff]
      %v1440 = vld [vmem:[%s224 + $0xb3] sm:$0xff]
      %v1441 = vld [vmem:[%s224 + $0xbb] sm:$0xff]
      %v1442 = vld [vmem:[%s224 + $0xc3] sm:$0xff]
      %v1443 = vld [vmem:[%s224 + $0xcb] sm:$0xff]
      %v1444 = vld [vmem:[%s224 + $0xd3] sm:$0xff]
      %v1445 = vld [vmem:[%s224 + $0xdb] sm:$0xff]
      %v1446 = vld [vmem:[%s224 + $0xe3] sm:$0xff]
      %v1447 = vld [vmem:[%s224 + $0xeb] sm:$0xff]
      %v1448 = vld [vmem:[%s224 + $0xf3] sm:$0xff]
      %v1449 = vld [vmem:[%s224 + $0xfb] sm:$0xff]
      %v1450 = vld [vmem:[%s224 + $0x103] sm:$0xff]
      %v1451 = vld [vmem:[%s224 + $0x10b] sm:$0xff]
      %v1452 = vld [vmem:[%s224 + $0x113] sm:$0xff]
      %v1453 = vld [vmem:[%s224 + $0x11b] sm:$0xff]
      %v1454 = vld [vmem:[%s224 + $0x123] sm:$0xff]
      %v1455 = vld [vmem:[%s224 + $0x12b] sm:$0xff]
      %v1456 = vld [vmem:[%s1 + $0x100] sm:$0xff]
      %v1457 = vld [vmem:[%s1 + $0x108] sm:$0xff]
      %v1458 = vld [vmem:[%s1 + $0x110] sm:$0xff]
      %v1459 = vld [vmem:[%s1 + $0x118] sm:$0xff]
      %v1460 = vld [vmem:[%s1 + $0x120] sm:$0xff]
      %v1461 = vld [vmem:[%s1 + $0x128] sm:$0xff]
      %v1462 = vld [vmem:[%s1 + $0x130] sm:$0xff]
      %v1463 = vld [vmem:[%s1 + $0x138] sm:$0xff]
      %v1465 = vsel %vm327, %v1420, 0
      %v1468 = vsel %vm327, %v1421, 0
      %v1471 = vsel %vm327, %v1422, 0
      %v1474 = vsel %vm327, %v1423, 0
      %v1477 = vsel %vm327, %v1424, 0
      %v1480 = vsel %vm327, %v1425, 0
      %v1483 = vsel %vm327, %v1426, 0
      %v1486 = vsel %vm327, %v1427, 0
      %v1489 = vsel %vm327, %v1428, 0
      %v1492 = vsel %vm327, %v1429, 0
      %v1495 = vsel %vm327, %v1430, 0
      %v1498 = vsel %vm327, %v1431, 0
      %v1501 = vsel %vm327, %v1432, 0
      %v1504 = vsel %vm327, %v1433, 0
      %v1507 = vsel %vm327, %v1434, 0
      %v1510 = vsel %vm327, %v1435, 0
      %v1513 = vsel %vm327, %v1436, 0
      %v1516 = vsel %vm327, %v1437, 0
      %v1519 = vsel %vm327, %v1438, 0
      %v1522 = vsel %vm327, %v1439, 0
      %v1525 = vsel %vm327, %v1440, 0
      %v1528 = vsel %vm327, %v1441, 0
      %v1531 = vsel %vm327, %v1442, 0
      %v1534 = vsel %vm327, %v1443, 0
      %v1537 = vsel %vm327, %v1444, 0
      %v1540 = vsel %vm327, %v1445, 0
      %v1543 = vsel %vm327, %v1446, 0
      %v1546 = vsel %vm327, %v1447, 0
      %v1549 = vsel %vm327, %v1448, 0
      %v1552 = vsel %vm327, %v1449, 0
      %v1555 = vsel %vm327, %v1450, 0
      %v1558 = vsel %vm327, %v1451, 0
      %v1561 = vsel %vm327, %v1452, 0
      %v1564 = vsel %vm327, %v1453, 0
      %v1567 = vsel %vm327, %v1454, 0
      %v1570 = vsel %vm327, %v1455, 0
      %1572 = vmatpush.msra.mxu0 0.0
      %1573 = vmatpush.msra.mxu0 0.0
      %1574 = vmatpush.msra.mxu0 0.0
      %1575 = vmatpush.msra.mxu0 0.0
      %1576 = vmatpush.msra.mxu0 0.0
      %1577 = vmatpush.msra.mxu0 0.0
      %1578 = vmatpush.msra.mxu0 0.0
      %1579 = vmatpush.msra.mxu0 0.0
      %1580 = vmatpush.msra.mxu0 %v1463
      %1581 = vmatpush.msra.mxu0 %v1462
      %1582 = vmatpush.msra.mxu0 %v1461
      %1583 = vmatpush.msra.mxu0 %v1460
      %1584 = vmatpush.msra.mxu0 %v1459
      %1585 = vmatpush.msra.mxu0 %v1458
      %1586 = vmatpush.msra.mxu0 %v1457
      %1587 = vmatpush.msra.mxu0 %v1456
      %1588 = vmatmul.f32.gmra.mxu0 %v1465
      %v1589 = vpop.f32.mrf.mxu0
      %v1590 = vadd.f32 0.0, %v1589
      %1591 = vmatmul.f32.gmra.mxu0 %v1468
      %v1592 = vpop.f32.mrf.mxu0
      %v1593 = vadd.f32 0.0, %v1592
      %1594 = vmatmul.f32.gmra.mxu0 %v1471
      %v1595 = vpop.f32.mrf.mxu0
      %v1596 = vadd.f32 0.0, %v1595
      %1597 = vmatmul.f32.gmra.mxu0 %v1474
      %v1598 = vpop.f32.mrf.mxu0
      %v1599 = vadd.f32 0.0, %v1598
      %1600 = vmatmul.f32.gmra.mxu0 %v1477
      %v1601 = vpop.f32.mrf.mxu0
      %v1602 = vadd.f32 0.0, %v1601
      %1603 = vmatmul.f32.gmra.mxu0 %v1480
      %v1604 = vpop.f32.mrf.mxu0
      %v1605 = vadd.f32 0.0, %v1604
      %1606 = vmatmul.f32.gmra.mxu0 %v1483
      %v1607 = vpop.f32.mrf.mxu0
      %v1608 = vadd.f32 0.0, %v1607
      %1609 = vmatmul.f32.gmra.mxu0 %v1486
      %v1610 = vpop.f32.mrf.mxu0
      %v1611 = vadd.f32 0.0, %v1610
      %1612 = vmatmul.f32.gmra.mxu0 %v1489
      %v1613 = vpop.f32.mrf.mxu0
      %v1614 = vadd.f32 0.0, %v1613
      %1615 = vmatmul.f32.gmra.mxu0 %v1492
      %v1616 = vpop.f32.mrf.mxu0
      %v1617 = vadd.f32 0.0, %v1616
      %1618 = vmatmul.f32.gmra.mxu0 %v1495
      %v1619 = vpop.f32.mrf.mxu0
      %v1620 = vadd.f32 0.0, %v1619
      %1621 = vmatmul.f32.gmra.mxu0 %v1498
      %v1622 = vpop.f32.mrf.mxu0
      %v1623 = vadd.f32 0.0, %v1622
      %1624 = vmatmul.f32.gmra.mxu0 %v1501
      %v1625 = vpop.f32.mrf.mxu0
      %v1626 = vadd.f32 0.0, %v1625
      %1627 = vmatmul.f32.gmra.mxu0 %v1504
      %v1628 = vpop.f32.mrf.mxu0
      %v1629 = vadd.f32 0.0, %v1628
      %1630 = vmatmul.f32.gmra.mxu0 %v1507
      %v1631 = vpop.f32.mrf.mxu0
      %v1632 = vadd.f32 0.0, %v1631
      %1633 = vmatmul.f32.gmra.mxu0 %v1510
      %v1634 = vpop.f32.mrf.mxu0
      %v1635 = vadd.f32 0.0, %v1634
      %1636 = vmatmul.f32.gmra.mxu0 %v1513
      %v1637 = vpop.f32.mrf.mxu0
      %v1638 = vadd.f32 0.0, %v1637
      %1639 = vmatmul.f32.gmra.mxu0 %v1516
      %v1640 = vpop.f32.mrf.mxu0
      %v1641 = vadd.f32 0.0, %v1640
      %1642 = vmatmul.f32.gmra.mxu0 %v1519
      %v1643 = vpop.f32.mrf.mxu0
      %v1644 = vadd.f32 0.0, %v1643
      %1645 = vmatmul.f32.gmra.mxu0 %v1522
      %v1646 = vpop.f32.mrf.mxu0
      %v1647 = vadd.f32 0.0, %v1646
      %1648 = vmatmul.f32.gmra.mxu0 %v1525
      %v1649 = vpop.f32.mrf.mxu0
      %v1650 = vadd.f32 0.0, %v1649
      %1651 = vmatmul.f32.gmra.mxu0 %v1528
      %v1652 = vpop.f32.mrf.mxu0
      %v1653 = vadd.f32 0.0, %v1652
      %1654 = vmatmul.f32.gmra.mxu0 %v1531
      %v1655 = vpop.f32.mrf.mxu0
      %v1656 = vadd.f32 0.0, %v1655
      %1657 = vmatmul.f32.gmra.mxu0 %v1534
      %v1658 = vpop.f32.mrf.mxu0
      %v1659 = vadd.f32 0.0, %v1658
      %1660 = vmatmul.f32.gmra.mxu0 %v1537
      %v1661 = vpop.f32.mrf.mxu0
      %v1662 = vadd.f32 0.0, %v1661
      %1663 = vmatmul.f32.gmra.mxu0 %v1540
      %v1664 = vpop.f32.mrf.mxu0
      %v1665 = vadd.f32 0.0, %v1664
      %1666 = vmatmul.f32.gmra.mxu0 %v1543
      %v1667 = vpop.f32.mrf.mxu0
      %v1668 = vadd.f32 0.0, %v1667
      %1669 = vmatmul.f32.gmra.mxu0 %v1546
      %v1670 = vpop.f32.mrf.mxu0
      %v1671 = vadd.f32 0.0, %v1670
      %1672 = vmatmul.f32.gmra.mxu0 %v1549
      %v1673 = vpop.f32.mrf.mxu0
      %v1674 = vadd.f32 0.0, %v1673
      %1675 = vmatmul.f32.gmra.mxu0 %v1552
      %v1676 = vpop.f32.mrf.mxu0
      %v1677 = vadd.f32 0.0, %v1676
      %1678 = vmatmul.f32.gmra.mxu0 %v1555
      %v1679 = vpop.f32.mrf.mxu0
      %v1680 = vadd.f32 0.0, %v1679
      %1681 = vmatmul.f32.gmra.mxu0 %v1558
      %v1682 = vpop.f32.mrf.mxu0
      %v1683 = vadd.f32 0.0, %v1682
      %1684 = vmatmul.f32.gmra.mxu0 %v1561
      %v1685 = vpop.f32.mrf.mxu0
      %v1686 = vadd.f32 0.0, %v1685
      %1687 = vmatmul.f32.gmra.mxu0 %v1564
      %v1688 = vpop.f32.mrf.mxu0
      %v1689 = vadd.f32 0.0, %v1688
      %1690 = vmatmul.f32.gmra.mxu0 %v1567
      %v1691 = vpop.f32.mrf.mxu0
      %v1692 = vadd.f32 0.0, %v1691
      %1693 = vmatmul.f32.gmra.mxu0 %v1570
      %v1694 = vpop.f32.mrf.mxu0
      %v1695 = vadd.f32 0.0, %v1694
      %1696 = vdwg.mxu0
      %v1697 = vadd.f32 %v1384, %v1590
      %v1698 = vadd.f32 %v1385, %v1593
      %v1699 = vadd.f32 %v1386, %v1596
      %v1700 = vadd.f32 %v1387, %v1599
      %v1701 = vadd.f32 %v1388, %v1602
      %v1702 = vadd.f32 %v1389, %v1605
      %v1703 = vadd.f32 %v1390, %v1608
      %v1704 = vadd.f32 %v1391, %v1611
      %v1705 = vadd.f32 %v1392, %v1614
      %v1706 = vadd.f32 %v1393, %v1617
      %v1707 = vadd.f32 %v1394, %v1620
      %v1708 = vadd.f32 %v1395, %v1623
      %v1709 = vadd.f32 %v1396, %v1626
      %v1710 = vadd.f32 %v1397, %v1629
      %v1711 = vadd.f32 %v1398, %v1632
      %v1712 = vadd.f32 %v1399, %v1635
      %v1713 = vadd.f32 %v1400, %v1638
      %v1714 = vadd.f32 %v1401, %v1641
      %v1715 = vadd.f32 %v1402, %v1644
      %v1716 = vadd.f32 %v1403, %v1647
      %v1717 = vadd.f32 %v1404, %v1650
      %v1718 = vadd.f32 %v1405, %v1653
      %v1719 = vadd.f32 %v1406, %v1656
      %v1720 = vadd.f32 %v1407, %v1659
      %v1721 = vadd.f32 %v1408, %v1662
      %v1722 = vadd.f32 %v1409, %v1665
      %v1723 = vadd.f32 %v1410, %v1668
      %v1724 = vadd.f32 %v1411, %v1671
      %v1725 = vadd.f32 %v1412, %v1674
      %v1726 = vadd.f32 %v1413, %v1677
      %v1727 = vadd.f32 %v1414, %v1680
      %v1728 = vadd.f32 %v1415, %v1683
      %v1729 = vadd.f32 %v1416, %v1686
      %v1730 = vadd.f32 %v1417, %v1689
      %v1731 = vadd.f32 %v1418, %v1692
      %v1732 = vadd.f32 %v1419, %v1695
      %v1733 = vld [vmem:[%s224 + $0x14] sm:$0xff]
      %v1734 = vld [vmem:[%s224 + $0x1c] sm:$0xff]
      %v1735 = vld [vmem:[%s224 + $0x24] sm:$0xff]
      %v1736 = vld [vmem:[%s224 + $0x2c] sm:$0xff]
      %v1737 = vld [vmem:[%s224 + $0x34] sm:$0xff]
      %v1738 = vld [vmem:[%s224 + $0x3c] sm:$0xff]
      %v1739 = vld [vmem:[%s224 + $0x44] sm:$0xff]
      %v1740 = vld [vmem:[%s224 + $0x4c] sm:$0xff]
      %v1741 = vld [vmem:[%s224 + $0x54] sm:$0xff]
      %v1742 = vld [vmem:[%s224 + $0x5c] sm:$0xff]
      %v1743 = vld [vmem:[%s224 + $0x64] sm:$0xff]
      %v1744 = vld [vmem:[%s224 + $0x6c] sm:$0xff]
      %v1745 = vld [vmem:[%s224 + $0x74] sm:$0xff]
      %v1746 = vld [vmem:[%s224 + $0x7c] sm:$0xff]
      %v1747 = vld [vmem:[%s224 + $0x84] sm:$0xff]
      %v1748 = vld [vmem:[%s224 + $0x8c] sm:$0xff]
      %v1749 = vld [vmem:[%s224 + $0x94] sm:$0xff]
      %v1750 = vld [vmem:[%s224 + $0x9c] sm:$0xff]
      %v1751 = vld [vmem:[%s224 + $0xa4] sm:$0xff]
      %v1752 = vld [vmem:[%s224 + $0xac] sm:$0xff]
      %v1753 = vld [vmem:[%s224 + $0xb4] sm:$0xff]
      %v1754 = vld [vmem:[%s224 + $0xbc] sm:$0xff]
      %v1755 = vld [vmem:[%s224 + $0xc4] sm:$0xff]
      %v1756 = vld [vmem:[%s224 + $0xcc] sm:$0xff]
      %v1757 = vld [vmem:[%s224 + $0xd4] sm:$0xff]
      %v1758 = vld [vmem:[%s224 + $0xdc] sm:$0xff]
      %v1759 = vld [vmem:[%s224 + $0xe4] sm:$0xff]
      %v1760 = vld [vmem:[%s224 + $0xec] sm:$0xff]
      %v1761 = vld [vmem:[%s224 + $0xf4] sm:$0xff]
      %v1762 = vld [vmem:[%s224 + $0xfc] sm:$0xff]
      %v1763 = vld [vmem:[%s224 + $0x104] sm:$0xff]
      %v1764 = vld [vmem:[%s224 + $0x10c] sm:$0xff]
      %v1765 = vld [vmem:[%s224 + $0x114] sm:$0xff]
      %v1766 = vld [vmem:[%s224 + $0x11c] sm:$0xff]
      %v1767 = vld [vmem:[%s224 + $0x124] sm:$0xff]
      %v1768 = vld [vmem:[%s224 + $0x12c] sm:$0xff]
      %v1769 = vld [vmem:[%s1 + $0x140] sm:$0xff]
      %v1770 = vld [vmem:[%s1 + $0x148] sm:$0xff]
      %v1771 = vld [vmem:[%s1 + $0x150] sm:$0xff]
      %v1772 = vld [vmem:[%s1 + $0x158] sm:$0xff]
      %v1773 = vld [vmem:[%s1 + $0x160] sm:$0xff]
      %v1774 = vld [vmem:[%s1 + $0x168] sm:$0xff]
      %v1775 = vld [vmem:[%s1 + $0x170] sm:$0xff]
      %v1776 = vld [vmem:[%s1 + $0x178] sm:$0xff]
      %v1778 = vsel %vm327, %v1733, 0
      %v1781 = vsel %vm327, %v1734, 0
      %v1784 = vsel %vm327, %v1735, 0
      %v1787 = vsel %vm327, %v1736, 0
      %v1790 = vsel %vm327, %v1737, 0
      %v1793 = vsel %vm327, %v1738, 0
      %v1796 = vsel %vm327, %v1739, 0
      %v1799 = vsel %vm327, %v1740, 0
      %v1802 = vsel %vm327, %v1741, 0
      %v1805 = vsel %vm327, %v1742, 0
      %v1808 = vsel %vm327, %v1743, 0
      %v1811 = vsel %vm327, %v1744, 0
      %v1814 = vsel %vm327, %v1745, 0
      %v1817 = vsel %vm327, %v1746, 0
      %v1820 = vsel %vm327, %v1747, 0
      %v1823 = vsel %vm327, %v1748, 0
      %v1826 = vsel %vm327, %v1749, 0
      %v1829 = vsel %vm327, %v1750, 0
      %v1832 = vsel %vm327, %v1751, 0
      %v1835 = vsel %vm327, %v1752, 0
      %v1838 = vsel %vm327, %v1753, 0
      %v1841 = vsel %vm327, %v1754, 0
      %v1844 = vsel %vm327, %v1755, 0
      %v1847 = vsel %vm327, %v1756, 0
      %v1850 = vsel %vm327, %v1757, 0
      %v1853 = vsel %vm327, %v1758, 0
      %v1856 = vsel %vm327, %v1759, 0
      %v1859 = vsel %vm327, %v1760, 0
      %v1862 = vsel %vm327, %v1761, 0
      %v1865 = vsel %vm327, %v1762, 0
      %v1868 = vsel %vm327, %v1763, 0
      %v1871 = vsel %vm327, %v1764, 0
      %v1874 = vsel %vm327, %v1765, 0
      %v1877 = vsel %vm327, %v1766, 0
      %v1880 = vsel %vm327, %v1767, 0
      %v1883 = vsel %vm327, %v1768, 0
      %1885 = vmatpush.msra.mxu0 0.0
      %1886 = vmatpush.msra.mxu0 0.0
      %1887 = vmatpush.msra.mxu0 0.0
      %1888 = vmatpush.msra.mxu0 0.0
      %1889 = vmatpush.msra.mxu0 0.0
      %1890 = vmatpush.msra.mxu0 0.0
      %1891 = vmatpush.msra.mxu0 0.0
      %1892 = vmatpush.msra.mxu0 0.0
      %1893 = vmatpush.msra.mxu0 %v1776
      %1894 = vmatpush.msra.mxu0 %v1775
      %1895 = vmatpush.msra.mxu0 %v1774
      %1896 = vmatpush.msra.mxu0 %v1773
      %1897 = vmatpush.msra.mxu0 %v1772
      %1898 = vmatpush.msra.mxu0 %v1771
      %1899 = vmatpush.msra.mxu0 %v1770
      %1900 = vmatpush.msra.mxu0 %v1769
      %1901 = vmatmul.f32.gmra.mxu0 %v1778
      %v1902 = vpop.f32.mrf.mxu0
      %v1903 = vadd.f32 0.0, %v1902
      %1904 = vmatmul.f32.gmra.mxu0 %v1781
      %v1905 = vpop.f32.mrf.mxu0
      %v1906 = vadd.f32 0.0, %v1905
      %1907 = vmatmul.f32.gmra.mxu0 %v1784
      %v1908 = vpop.f32.mrf.mxu0
      %v1909 = vadd.f32 0.0, %v1908
      %1910 = vmatmul.f32.gmra.mxu0 %v1787
      %v1911 = vpop.f32.mrf.mxu0
      %v1912 = vadd.f32 0.0, %v1911
      %1913 = vmatmul.f32.gmra.mxu0 %v1790
      %v1914 = vpop.f32.mrf.mxu0
      %v1915 = vadd.f32 0.0, %v1914
      %1916 = vmatmul.f32.gmra.mxu0 %v1793
      %v1917 = vpop.f32.mrf.mxu0
      %v1918 = vadd.f32 0.0, %v1917
      %1919 = vmatmul.f32.gmra.mxu0 %v1796
      %v1920 = vpop.f32.mrf.mxu0
      %v1921 = vadd.f32 0.0, %v1920
      %1922 = vmatmul.f32.gmra.mxu0 %v1799
      %v1923 = vpop.f32.mrf.mxu0
      %v1924 = vadd.f32 0.0, %v1923
      %1925 = vmatmul.f32.gmra.mxu0 %v1802
      %v1926 = vpop.f32.mrf.mxu0
      %v1927 = vadd.f32 0.0, %v1926
      %1928 = vmatmul.f32.gmra.mxu0 %v1805
      %v1929 = vpop.f32.mrf.mxu0
      %v1930 = vadd.f32 0.0, %v1929
      %1931 = vmatmul.f32.gmra.mxu0 %v1808
      %v1932 = vpop.f32.mrf.mxu0
      %v1933 = vadd.f32 0.0, %v1932
      %1934 = vmatmul.f32.gmra.mxu0 %v1811
      %v1935 = vpop.f32.mrf.mxu0
      %v1936 = vadd.f32 0.0, %v1935
      %1937 = vmatmul.f32.gmra.mxu0 %v1814
      %v1938 = vpop.f32.mrf.mxu0
      %v1939 = vadd.f32 0.0, %v1938
      %1940 = vmatmul.f32.gmra.mxu0 %v1817
      %v1941 = vpop.f32.mrf.mxu0
      %v1942 = vadd.f32 0.0, %v1941
      %1943 = vmatmul.f32.gmra.mxu0 %v1820
      %v1944 = vpop.f32.mrf.mxu0
      %v1945 = vadd.f32 0.0, %v1944
      %1946 = vmatmul.f32.gmra.mxu0 %v1823
      %v1947 = vpop.f32.mrf.mxu0
      %v1948 = vadd.f32 0.0, %v1947
      %1949 = vmatmul.f32.gmra.mxu0 %v1826
      %v1950 = vpop.f32.mrf.mxu0
      %v1951 = vadd.f32 0.0, %v1950
      %1952 = vmatmul.f32.gmra.mxu0 %v1829
      %v1953 = vpop.f32.mrf.mxu0
      %v1954 = vadd.f32 0.0, %v1953
      %1955 = vmatmul.f32.gmra.mxu0 %v1832
      %v1956 = vpop.f32.mrf.mxu0
      %v1957 = vadd.f32 0.0, %v1956
      %1958 = vmatmul.f32.gmra.mxu0 %v1835
      %v1959 = vpop.f32.mrf.mxu0
      %v1960 = vadd.f32 0.0, %v1959
      %1961 = vmatmul.f32.gmra.mxu0 %v1838
      %v1962 = vpop.f32.mrf.mxu0
      %v1963 = vadd.f32 0.0, %v1962
      %1964 = vmatmul.f32.gmra.mxu0 %v1841
      %v1965 = vpop.f32.mrf.mxu0
      %v1966 = vadd.f32 0.0, %v1965
      %1967 = vmatmul.f32.gmra.mxu0 %v1844
      %v1968 = vpop.f32.mrf.mxu0
      %v1969 = vadd.f32 0.0, %v1968
      %1970 = vmatmul.f32.gmra.mxu0 %v1847
      %v1971 = vpop.f32.mrf.mxu0
      %v1972 = vadd.f32 0.0, %v1971
      %1973 = vmatmul.f32.gmra.mxu0 %v1850
      %v1974 = vpop.f32.mrf.mxu0
      %v1975 = vadd.f32 0.0, %v1974
      %1976 = vmatmul.f32.gmra.mxu0 %v1853
      %v1977 = vpop.f32.mrf.mxu0
      %v1978 = vadd.f32 0.0, %v1977
      %1979 = vmatmul.f32.gmra.mxu0 %v1856
      %v1980 = vpop.f32.mrf.mxu0
      %v1981 = vadd.f32 0.0, %v1980
      %1982 = vmatmul.f32.gmra.mxu0 %v1859
      %v1983 = vpop.f32.mrf.mxu0
      %v1984 = vadd.f32 0.0, %v1983
      %1985 = vmatmul.f32.gmra.mxu0 %v1862
      %v1986 = vpop.f32.mrf.mxu0
      %v1987 = vadd.f32 0.0, %v1986
      %1988 = vmatmul.f32.gmra.mxu0 %v1865
      %v1989 = vpop.f32.mrf.mxu0
      %v1990 = vadd.f32 0.0, %v1989
      %1991 = vmatmul.f32.gmra.mxu0 %v1868
      %v1992 = vpop.f32.mrf.mxu0
      %v1993 = vadd.f32 0.0, %v1992
      %1994 = vmatmul.f32.gmra.mxu0 %v1871
      %v1995 = vpop.f32.mrf.mxu0
      %v1996 = vadd.f32 0.0, %v1995
      %1997 = vmatmul.f32.gmra.mxu0 %v1874
      %v1998 = vpop.f32.mrf.mxu0
      %v1999 = vadd.f32 0.0, %v1998
      %2000 = vmatmul.f32.gmra.mxu0 %v1877
      %v2001 = vpop.f32.mrf.mxu0
      %v2002 = vadd.f32 0.0, %v2001
      %2003 = vmatmul.f32.gmra.mxu0 %v1880
      %v2004 = vpop.f32.mrf.mxu0
      %v2005 = vadd.f32 0.0, %v2004
      %2006 = vmatmul.f32.gmra.mxu0 %v1883
      %v2007 = vpop.f32.mrf.mxu0
      %v2008 = vadd.f32 0.0, %v2007
      %2009 = vdwg.mxu0
      %v2010 = vadd.f32 %v1697, %v1903
      %v2011 = vadd.f32 %v1698, %v1906
      %v2012 = vadd.f32 %v1699, %v1909
      %v2013 = vadd.f32 %v1700, %v1912
      %v2014 = vadd.f32 %v1701, %v1915
      %v2015 = vadd.f32 %v1702, %v1918
      %v2016 = vadd.f32 %v1703, %v1921
      %v2017 = vadd.f32 %v1704, %v1924
      %v2018 = vadd.f32 %v1705, %v1927
      %v2019 = vadd.f32 %v1706, %v1930
      %v2020 = vadd.f32 %v1707, %v1933
      %v2021 = vadd.f32 %v1708, %v1936
      %v2022 = vadd.f32 %v1709, %v1939
      %v2023 = vadd.f32 %v1710, %v1942
      %v2024 = vadd.f32 %v1711, %v1945
      %v2025 = vadd.f32 %v1712, %v1948
      %v2026 = vadd.f32 %v1713, %v1951
      %v2027 = vadd.f32 %v1714, %v1954
      %v2028 = vadd.f32 %v1715, %v1957
      %v2029 = vadd.f32 %v1716, %v1960
      %v2030 = vadd.f32 %v1717, %v1963
      %v2031 = vadd.f32 %v1718, %v1966
      %v2032 = vadd.f32 %v1719, %v1969
      %v2033 = vadd.f32 %v1720, %v1972
      %v2034 = vadd.f32 %v1721, %v1975
      %v2035 = vadd.f32 %v1722, %v1978
      %v2036 = vadd.f32 %v1723, %v1981
      %v2037 = vadd.f32 %v1724, %v1984
      %v2038 = vadd.f32 %v1725, %v1987
      %v2039 = vadd.f32 %v1726, %v1990
      %v2040 = vadd.f32 %v1727, %v1993
      %v2041 = vadd.f32 %v1728, %v1996
      %v2042 = vadd.f32 %v1729, %v1999
      %v2043 = vadd.f32 %v1730, %v2002
      %v2044 = vadd.f32 %v1731, %v2005
      %v2045 = vadd.f32 %v1732, %v2008
      %v2046 = vld [vmem:[%s224 + $0x24] sm:$0xff]
      %v2047 = vld [vmem:[%s224 + $0x2c] sm:$0xff]
      %v2048 = vld [vmem:[%s224 + $0x34] sm:$0xff]
      %v2049 = vld [vmem:[%s224 + $0x3c] sm:$0xff]
      %v2050 = vld [vmem:[%s224 + $0x44] sm:$0xff]
      %v2051 = vld [vmem:[%s224 + $0x4c] sm:$0xff]
      %v2052 = vld [vmem:[%s224 + $0x54] sm:$0xff]
      %v2053 = vld [vmem:[%s224 + $0x5c] sm:$0xff]
      %v2054 = vld [vmem:[%s224 + $0x64] sm:$0xff]
      %v2055 = vld [vmem:[%s224 + $0x6c] sm:$0xff]
      %v2056 = vld [vmem:[%s224 + $0x74] sm:$0xff]
      %v2057 = vld [vmem:[%s224 + $0x7c] sm:$0xff]
      %v2058 = vld [vmem:[%s224 + $0x84] sm:$0xff]
      %v2059 = vld [vmem:[%s224 + $0x8c] sm:$0xff]
      %v2060 = vld [vmem:[%s224 + $0x94] sm:$0xff]
      %v2061 = vld [vmem:[%s224 + $0x9c] sm:$0xff]
      %v2062 = vld [vmem:[%s224 + $0xa4] sm:$0xff]
      %v2063 = vld [vmem:[%s224 + $0xac] sm:$0xff]
      %v2064 = vld [vmem:[%s224 + $0xb4] sm:$0xff]
      %v2065 = vld [vmem:[%s224 + $0xbc] sm:$0xff]
      %v2066 = vld [vmem:[%s224 + $0xc4] sm:$0xff]
      %v2067 = vld [vmem:[%s224 + $0xcc] sm:$0xff]
      %v2068 = vld [vmem:[%s224 + $0xd4] sm:$0xff]
      %v2069 = vld [vmem:[%s224 + $0xdc] sm:$0xff]
      %v2070 = vld [vmem:[%s224 + $0xe4] sm:$0xff]
      %v2071 = vld [vmem:[%s224 + $0xec] sm:$0xff]
      %v2072 = vld [vmem:[%s224 + $0xf4] sm:$0xff]
      %v2073 = vld [vmem:[%s224 + $0xfc] sm:$0xff]
      %v2074 = vld [vmem:[%s224 + $0x104] sm:$0xff]
      %v2075 = vld [vmem:[%s224 + $0x10c] sm:$0xff]
      %v2076 = vld [vmem:[%s224 + $0x114] sm:$0xff]
      %v2077 = vld [vmem:[%s224 + $0x11c] sm:$0xff]
      %v2078 = vld [vmem:[%s224 + $0x124] sm:$0xff]
      %v2079 = vld [vmem:[%s224 + $0x12c] sm:$0xff]
      %v2080 = vld [vmem:[%s224 + $0x134] sm:$0xff]
      %v2081 = vld [vmem:[%s224 + $0x13c] sm:$0xff]
      %v2082 = vld [vmem:[%s1 + $0x180] sm:$0xff]
      %v2083 = vld [vmem:[%s1 + $0x188] sm:$0xff]
      %v2084 = vld [vmem:[%s1 + $0x190] sm:$0xff]
      %v2085 = vld [vmem:[%s1 + $0x198] sm:$0xff]
      %v2086 = vld [vmem:[%s1 + $0x1a0] sm:$0xff]
      %v2087 = vld [vmem:[%s1 + $0x1a8] sm:$0xff]
      %v2088 = vld [vmem:[%s1 + $0x1b0] sm:$0xff]
      %v2089 = vld [vmem:[%s1 + $0x1b8] sm:$0xff]
      %v2091 = vsel %vm327, %v2046, 0
      %v2094 = vsel %vm327, %v2047, 0
      %v2097 = vsel %vm327, %v2048, 0
      %v2100 = vsel %vm327, %v2049, 0
      %v2103 = vsel %vm327, %v2050, 0
      %v2106 = vsel %vm327, %v2051, 0
      %v2109 = vsel %vm327, %v2052, 0
      %v2112 = vsel %vm327, %v2053, 0
      %v2115 = vsel %vm327, %v2054, 0
      %v2118 = vsel %vm327, %v2055, 0
      %v2121 = vsel %vm327, %v2056, 0
      %v2124 = vsel %vm327, %v2057, 0
      %v2127 = vsel %vm327, %v2058, 0
      %v2130 = vsel %vm327, %v2059, 0
      %v2133 = vsel %vm327, %v2060, 0
      %v2136 = vsel %vm327, %v2061, 0
      %v2139 = vsel %vm327, %v2062, 0
      %v2142 = vsel %vm327, %v2063, 0
      %v2145 = vsel %vm327, %v2064, 0
      %v2148 = vsel %vm327, %v2065, 0
      %v2151 = vsel %vm327, %v2066, 0
      %v2154 = vsel %vm327, %v2067, 0
      %v2157 = vsel %vm327, %v2068, 0
      %v2160 = vsel %vm327, %v2069, 0
      %v2163 = vsel %vm327, %v2070, 0
      %v2166 = vsel %vm327, %v2071, 0
      %v2169 = vsel %vm327, %v2072, 0
      %v2172 = vsel %vm327, %v2073, 0
      %v2175 = vsel %vm327, %v2074, 0
      %v2178 = vsel %vm327, %v2075, 0
      %v2181 = vsel %vm327, %v2076, 0
      %v2184 = vsel %vm327, %v2077, 0
      %v2187 = vsel %vm327, %v2078, 0
      %v2190 = vsel %vm327, %v2079, 0
      %v2193 = vsel %vm327, %v2080, 0
      %v2196 = vsel %vm327, %v2081, 0
      %2198 = vmatpush.msra.mxu0 0.0
      %2199 = vmatpush.msra.mxu0 0.0
      %2200 = vmatpush.msra.mxu0 0.0
      %2201 = vmatpush.msra.mxu0 0.0
      %2202 = vmatpush.msra.mxu0 0.0
      %2203 = vmatpush.msra.mxu0 0.0
      %2204 = vmatpush.msra.mxu0 0.0
      %2205 = vmatpush.msra.mxu0 0.0
      %2206 = vmatpush.msra.mxu0 %v2089
      %2207 = vmatpush.msra.mxu0 %v2088
      %2208 = vmatpush.msra.mxu0 %v2087
      %2209 = vmatpush.msra.mxu0 %v2086
      %2210 = vmatpush.msra.mxu0 %v2085
      %2211 = vmatpush.msra.mxu0 %v2084
      %2212 = vmatpush.msra.mxu0 %v2083
      %2213 = vmatpush.msra.mxu0 %v2082
      %2214 = vmatmul.f32.gmra.mxu0 %v2091
      %v2215 = vpop.f32.mrf.mxu0
      %v2216 = vadd.f32 0.0, %v2215
      %2217 = vmatmul.f32.gmra.mxu0 %v2094
      %v2218 = vpop.f32.mrf.mxu0
      %v2219 = vadd.f32 0.0, %v2218
      %2220 = vmatmul.f32.gmra.mxu0 %v2097
      %v2221 = vpop.f32.mrf.mxu0
      %v2222 = vadd.f32 0.0, %v2221
      %2223 = vmatmul.f32.gmra.mxu0 %v2100
      %v2224 = vpop.f32.mrf.mxu0
      %v2225 = vadd.f32 0.0, %v2224
      %2226 = vmatmul.f32.gmra.mxu0 %v2103
      %v2227 = vpop.f32.mrf.mxu0
      %v2228 = vadd.f32 0.0, %v2227
      %2229 = vmatmul.f32.gmra.mxu0 %v2106
      %v2230 = vpop.f32.mrf.mxu0
      %v2231 = vadd.f32 0.0, %v2230
      %2232 = vmatmul.f32.gmra.mxu0 %v2109
      %v2233 = vpop.f32.mrf.mxu0
      %v2234 = vadd.f32 0.0, %v2233
      %2235 = vmatmul.f32.gmra.mxu0 %v2112
      %v2236 = vpop.f32.mrf.mxu0
      %v2237 = vadd.f32 0.0, %v2236
      %2238 = vmatmul.f32.gmra.mxu0 %v2115
      %v2239 = vpop.f32.mrf.mxu0
      %v2240 = vadd.f32 0.0, %v2239
      %2241 = vmatmul.f32.gmra.mxu0 %v2118
      %v2242 = vpop.f32.mrf.mxu0
      %v2243 = vadd.f32 0.0, %v2242
      %2244 = vmatmul.f32.gmra.mxu0 %v2121
      %v2245 = vpop.f32.mrf.mxu0
      %v2246 = vadd.f32 0.0, %v2245
      %2247 = vmatmul.f32.gmra.mxu0 %v2124
      %v2248 = vpop.f32.mrf.mxu0
      %v2249 = vadd.f32 0.0, %v2248
      %2250 = vmatmul.f32.gmra.mxu0 %v2127
      %v2251 = vpop.f32.mrf.mxu0
      %v2252 = vadd.f32 0.0, %v2251
      %2253 = vmatmul.f32.gmra.mxu0 %v2130
      %v2254 = vpop.f32.mrf.mxu0
      %v2255 = vadd.f32 0.0, %v2254
      %2256 = vmatmul.f32.gmra.mxu0 %v2133
      %v2257 = vpop.f32.mrf.mxu0
      %v2258 = vadd.f32 0.0, %v2257
      %2259 = vmatmul.f32.gmra.mxu0 %v2136
      %v2260 = vpop.f32.mrf.mxu0
      %v2261 = vadd.f32 0.0, %v2260
      %2262 = vmatmul.f32.gmra.mxu0 %v2139
      %v2263 = vpop.f32.mrf.mxu0
      %v2264 = vadd.f32 0.0, %v2263
      %2265 = vmatmul.f32.gmra.mxu0 %v2142
      %v2266 = vpop.f32.mrf.mxu0
      %v2267 = vadd.f32 0.0, %v2266
      %2268 = vmatmul.f32.gmra.mxu0 %v2145
      %v2269 = vpop.f32.mrf.mxu0
      %v2270 = vadd.f32 0.0, %v2269
      %2271 = vmatmul.f32.gmra.mxu0 %v2148
      %v2272 = vpop.f32.mrf.mxu0
      %v2273 = vadd.f32 0.0, %v2272
      %2274 = vmatmul.f32.gmra.mxu0 %v2151
      %v2275 = vpop.f32.mrf.mxu0
      %v2276 = vadd.f32 0.0, %v2275
      %2277 = vmatmul.f32.gmra.mxu0 %v2154
      %v2278 = vpop.f32.mrf.mxu0
      %v2279 = vadd.f32 0.0, %v2278
      %2280 = vmatmul.f32.gmra.mxu0 %v2157
      %v2281 = vpop.f32.mrf.mxu0
      %v2282 = vadd.f32 0.0, %v2281
      %2283 = vmatmul.f32.gmra.mxu0 %v2160
      %v2284 = vpop.f32.mrf.mxu0
      %v2285 = vadd.f32 0.0, %v2284
      %2286 = vmatmul.f32.gmra.mxu0 %v2163
      %v2287 = vpop.f32.mrf.mxu0
      %v2288 = vadd.f32 0.0, %v2287
      %2289 = vmatmul.f32.gmra.mxu0 %v2166
      %v2290 = vpop.f32.mrf.mxu0
      %v2291 = vadd.f32 0.0, %v2290
      %2292 = vmatmul.f32.gmra.mxu0 %v2169
      %v2293 = vpop.f32.mrf.mxu0
      %v2294 = vadd.f32 0.0, %v2293
      %2295 = vmatmul.f32.gmra.mxu0 %v2172
      %v2296 = vpop.f32.mrf.mxu0
      %v2297 = vadd.f32 0.0, %v2296
      %2298 = vmatmul.f32.gmra.mxu0 %v2175
      %v2299 = vpop.f32.mrf.mxu0
      %v2300 = vadd.f32 0.0, %v2299
      %2301 = vmatmul.f32.gmra.mxu0 %v2178
      %v2302 = vpop.f32.mrf.mxu0
      %v2303 = vadd.f32 0.0, %v2302
      %2304 = vmatmul.f32.gmra.mxu0 %v2181
      %v2305 = vpop.f32.mrf.mxu0
      %v2306 = vadd.f32 0.0, %v2305
      %2307 = vmatmul.f32.gmra.mxu0 %v2184
      %v2308 = vpop.f32.mrf.mxu0
      %v2309 = vadd.f32 0.0, %v2308
      %2310 = vmatmul.f32.gmra.mxu0 %v2187
      %v2311 = vpop.f32.mrf.mxu0
      %v2312 = vadd.f32 0.0, %v2311
      %2313 = vmatmul.f32.gmra.mxu0 %v2190
      %v2314 = vpop.f32.mrf.mxu0
      %v2315 = vadd.f32 0.0, %v2314
      %2316 = vmatmul.f32.gmra.mxu0 %v2193
      %v2317 = vpop.f32.mrf.mxu0
      %v2318 = vadd.f32 0.0, %v2317
      %2319 = vmatmul.f32.gmra.mxu0 %v2196
      %v2320 = vpop.f32.mrf.mxu0
      %v2321 = vadd.f32 0.0, %v2320
      %2322 = vdwg.mxu0
      %v2323 = vadd.f32 %v2010, %v2216
      %v2324 = vadd.f32 %v2011, %v2219
      %v2325 = vadd.f32 %v2012, %v2222
      %v2326 = vadd.f32 %v2013, %v2225
      %v2327 = vadd.f32 %v2014, %v2228
      %v2328 = vadd.f32 %v2015, %v2231
      %v2329 = vadd.f32 %v2016, %v2234
      %v2330 = vadd.f32 %v2017, %v2237
      %v2331 = vadd.f32 %v2018, %v2240
      %v2332 = vadd.f32 %v2019, %v2243
      %v2333 = vadd.f32 %v2020, %v2246
      %v2334 = vadd.f32 %v2021, %v2249
      %v2335 = vadd.f32 %v2022, %v2252
      %v2336 = vadd.f32 %v2023, %v2255
      %v2337 = vadd.f32 %v2024, %v2258
      %v2338 = vadd.f32 %v2025, %v2261
      %v2339 = vadd.f32 %v2026, %v2264
      %v2340 = vadd.f32 %v2027, %v2267
      %v2341 = vadd.f32 %v2028, %v2270
      %v2342 = vadd.f32 %v2029, %v2273
      %v2343 = vadd.f32 %v2030, %v2276
      %v2344 = vadd.f32 %v2031, %v2279
      %v2345 = vadd.f32 %v2032, %v2282
      %v2346 = vadd.f32 %v2033, %v2285
      %v2347 = vadd.f32 %v2034, %v2288
      %v2348 = vadd.f32 %v2035, %v2291
      %v2349 = vadd.f32 %v2036, %v2294
      %v2350 = vadd.f32 %v2037, %v2297
      %v2351 = vadd.f32 %v2038, %v2300
      %v2352 = vadd.f32 %v2039, %v2303
      %v2353 = vadd.f32 %v2040, %v2306
      %v2354 = vadd.f32 %v2041, %v2309
      %v2355 = vadd.f32 %v2042, %v2312
      %v2356 = vadd.f32 %v2043, %v2315
      %v2357 = vadd.f32 %v2044, %v2318
      %v2358 = vadd.f32 %v2045, %v2321
      %v2359 = vld [vmem:[%s224 + $0x25] sm:$0xff]
      %v2360 = vld [vmem:[%s224 + $0x2d] sm:$0xff]
      %v2361 = vld [vmem:[%s224 + $0x35] sm:$0xff]
      %v2362 = vld [vmem:[%s224 + $0x3d] sm:$0xff]
      %v2363 = vld [vmem:[%s224 + $0x45] sm:$0xff]
      %v2364 = vld [vmem:[%s224 + $0x4d] sm:$0xff]
      %v2365 = vld [vmem:[%s224 + $0x55] sm:$0xff]
      %v2366 = vld [vmem:[%s224 + $0x5d] sm:$0xff]
      %v2367 = vld [vmem:[%s224 + $0x65] sm:$0xff]
      %v2368 = vld [vmem:[%s224 + $0x6d] sm:$0xff]
      %v2369 = vld [vmem:[%s224 + $0x75] sm:$0xff]
      %v2370 = vld [vmem:[%s224 + $0x7d] sm:$0xff]
      %v2371 = vld [vmem:[%s224 + $0x85] sm:$0xff]
      %v2372 = vld [vmem:[%s224 + $0x8d] sm:$0xff]
      %v2373 = vld [vmem:[%s224 + $0x95] sm:$0xff]
      %v2374 = vld [vmem:[%s224 + $0x9d] sm:$0xff]
      %v2375 = vld [vmem:[%s224 + $0xa5] sm:$0xff]
      %v2376 = vld [vmem:[%s224 + $0xad] sm:$0xff]
      %v2377 = vld [vmem:[%s224 + $0xb5] sm:$0xff]
      %v2378 = vld [vmem:[%s224 + $0xbd] sm:$0xff]
      %v2379 = vld [vmem:[%s224 + $0xc5] sm:$0xff]
      %v2380 = vld [vmem:[%s224 + $0xcd] sm:$0xff]
      %v2381 = vld [vmem:[%s224 + $0xd5] sm:$0xff]
      %v2382 = vld [vmem:[%s224 + $0xdd] sm:$0xff]
      %v2383 = vld [vmem:[%s224 + $0xe5] sm:$0xff]
      %v2384 = vld [vmem:[%s224 + $0xed] sm:$0xff]
      %v2385 = vld [vmem:[%s224 + $0xf5] sm:$0xff]
      %v2386 = vld [vmem:[%s224 + $0xfd] sm:$0xff]
      %v2387 = vld [vmem:[%s224 + $0x105] sm:$0xff]
      %v2388 = vld [vmem:[%s224 + $0x10d] sm:$0xff]
      %v2389 = vld [vmem:[%s224 + $0x115] sm:$0xff]
      %v2390 = vld [vmem:[%s224 + $0x11d] sm:$0xff]
      %v2391 = vld [vmem:[%s224 + $0x125] sm:$0xff]
      %v2392 = vld [vmem:[%s224 + $0x12d] sm:$0xff]
      %v2393 = vld [vmem:[%s224 + $0x135] sm:$0xff]
      %v2394 = vld [vmem:[%s224 + $0x13d] sm:$0xff]
      %v2395 = vld [vmem:[%s1 + $0x1c0] sm:$0xff]
      %v2396 = vld [vmem:[%s1 + $0x1c8] sm:$0xff]
      %v2397 = vld [vmem:[%s1 + $0x1d0] sm:$0xff]
      %v2398 = vld [vmem:[%s1 + $0x1d8] sm:$0xff]
      %v2399 = vld [vmem:[%s1 + $0x1e0] sm:$0xff]
      %v2400 = vld [vmem:[%s1 + $0x1e8] sm:$0xff]
      %v2401 = vld [vmem:[%s1 + $0x1f0] sm:$0xff]
      %v2402 = vld [vmem:[%s1 + $0x1f8] sm:$0xff]
      %v2404 = vsel %vm327, %v2359, 0
      %v2407 = vsel %vm327, %v2360, 0
      %v2410 = vsel %vm327, %v2361, 0
      %v2413 = vsel %vm327, %v2362, 0
      %v2416 = vsel %vm327, %v2363, 0
      %v2419 = vsel %vm327, %v2364, 0
      %v2422 = vsel %vm327, %v2365, 0
      %v2425 = vsel %vm327, %v2366, 0
      %v2428 = vsel %vm327, %v2367, 0
      %v2431 = vsel %vm327, %v2368, 0
      %v2434 = vsel %vm327, %v2369, 0
      %v2437 = vsel %vm327, %v2370, 0
      %v2440 = vsel %vm327, %v2371, 0
      %v2443 = vsel %vm327, %v2372, 0
      %v2446 = vsel %vm327, %v2373, 0
      %v2449 = vsel %vm327, %v2374, 0
      %v2452 = vsel %vm327, %v2375, 0
      %v2455 = vsel %vm327, %v2376, 0
      %v2458 = vsel %vm327, %v2377, 0
      %v2461 = vsel %vm327, %v2378, 0
      %v2464 = vsel %vm327, %v2379, 0
      %v2467 = vsel %vm327, %v2380, 0
      %v2470 = vsel %vm327, %v2381, 0
      %v2473 = vsel %vm327, %v2382, 0
      %v2476 = vsel %vm327, %v2383, 0
      %v2479 = vsel %vm327, %v2384, 0
      %v2482 = vsel %vm327, %v2385, 0
      %v2485 = vsel %vm327, %v2386, 0
      %v2488 = vsel %vm327, %v2387, 0
      %v2491 = vsel %vm327, %v2388, 0
      %v2494 = vsel %vm327, %v2389, 0
      %v2497 = vsel %vm327, %v2390, 0
      %v2500 = vsel %vm327, %v2391, 0
      %v2503 = vsel %vm327, %v2392, 0
      %v2506 = vsel %vm327, %v2393, 0
      %v2509 = vsel %vm327, %v2394, 0
      %2511 = vmatpush.msra.mxu0 0.0
      %2512 = vmatpush.msra.mxu0 0.0
      %2513 = vmatpush.msra.mxu0 0.0
      %2514 = vmatpush.msra.mxu0 0.0
      %2515 = vmatpush.msra.mxu0 0.0
      %2516 = vmatpush.msra.mxu0 0.0
      %2517 = vmatpush.msra.mxu0 0.0
      %2518 = vmatpush.msra.mxu0 0.0
      %2519 = vmatpush.msra.mxu0 %v2402
      %2520 = vmatpush.msra.mxu0 %v2401
      %2521 = vmatpush.msra.mxu0 %v2400
      %2522 = vmatpush.msra.mxu0 %v2399
      %2523 = vmatpush.msra.mxu0 %v2398
      %2524 = vmatpush.msra.mxu0 %v2397
      %2525 = vmatpush.msra.mxu0 %v2396
      %2526 = vmatpush.msra.mxu0 %v2395
      %2527 = vmatmul.f32.gmra.mxu0 %v2404
      %v2528 = vpop.f32.mrf.mxu0
      %v2529 = vadd.f32 0.0, %v2528
      %2530 = vmatmul.f32.gmra.mxu0 %v2407
      %v2531 = vpop.f32.mrf.mxu0
      %v2532 = vadd.f32 0.0, %v2531
      %2533 = vmatmul.f32.gmra.mxu0 %v2410
      %v2534 = vpop.f32.mrf.mxu0
      %v2535 = vadd.f32 0.0, %v2534
      %2536 = vmatmul.f32.gmra.mxu0 %v2413
      %v2537 = vpop.f32.mrf.mxu0
      %v2538 = vadd.f32 0.0, %v2537
      %2539 = vmatmul.f32.gmra.mxu0 %v2416
      %v2540 = vpop.f32.mrf.mxu0
      %v2541 = vadd.f32 0.0, %v2540
      %2542 = vmatmul.f32.gmra.mxu0 %v2419
      %v2543 = vpop.f32.mrf.mxu0
      %v2544 = vadd.f32 0.0, %v2543
      %2545 = vmatmul.f32.gmra.mxu0 %v2422
      %v2546 = vpop.f32.mrf.mxu0
      %v2547 = vadd.f32 0.0, %v2546
      %2548 = vmatmul.f32.gmra.mxu0 %v2425
      %v2549 = vpop.f32.mrf.mxu0
      %v2550 = vadd.f32 0.0, %v2549
      %2551 = vmatmul.f32.gmra.mxu0 %v2428
      %v2552 = vpop.f32.mrf.mxu0
      %v2553 = vadd.f32 0.0, %v2552
      %2554 = vmatmul.f32.gmra.mxu0 %v2431
      %v2555 = vpop.f32.mrf.mxu0
      %v2556 = vadd.f32 0.0, %v2555
      %2557 = vmatmul.f32.gmra.mxu0 %v2434
      %v2558 = vpop.f32.mrf.mxu0
      %v2559 = vadd.f32 0.0, %v2558
      %2560 = vmatmul.f32.gmra.mxu0 %v2437
      %v2561 = vpop.f32.mrf.mxu0
      %v2562 = vadd.f32 0.0, %v2561
      %2563 = vmatmul.f32.gmra.mxu0 %v2440
      %v2564 = vpop.f32.mrf.mxu0
      %v2565 = vadd.f32 0.0, %v2564
      %2566 = vmatmul.f32.gmra.mxu0 %v2443
      %v2567 = vpop.f32.mrf.mxu0
      %v2568 = vadd.f32 0.0, %v2567
      %2569 = vmatmul.f32.gmra.mxu0 %v2446
      %v2570 = vpop.f32.mrf.mxu0
      %v2571 = vadd.f32 0.0, %v2570
      %2572 = vmatmul.f32.gmra.mxu0 %v2449
      %v2573 = vpop.f32.mrf.mxu0
      %v2574 = vadd.f32 0.0, %v2573
      %2575 = vmatmul.f32.gmra.mxu0 %v2452
      %v2576 = vpop.f32.mrf.mxu0
      %v2577 = vadd.f32 0.0, %v2576
      %2578 = vmatmul.f32.gmra.mxu0 %v2455
      %v2579 = vpop.f32.mrf.mxu0
      %v2580 = vadd.f32 0.0, %v2579
      %2581 = vmatmul.f32.gmra.mxu0 %v2458
      %v2582 = vpop.f32.mrf.mxu0
      %v2583 = vadd.f32 0.0, %v2582
      %2584 = vmatmul.f32.gmra.mxu0 %v2461
      %v2585 = vpop.f32.mrf.mxu0
      %v2586 = vadd.f32 0.0, %v2585
      %2587 = vmatmul.f32.gmra.mxu0 %v2464
      %v2588 = vpop.f32.mrf.mxu0
      %v2589 = vadd.f32 0.0, %v2588
      %2590 = vmatmul.f32.gmra.mxu0 %v2467
      %v2591 = vpop.f32.mrf.mxu0
      %v2592 = vadd.f32 0.0, %v2591
      %2593 = vmatmul.f32.gmra.mxu0 %v2470
      %v2594 = vpop.f32.mrf.mxu0
      %v2595 = vadd.f32 0.0, %v2594
      %2596 = vmatmul.f32.gmra.mxu0 %v2473
      %v2597 = vpop.f32.mrf.mxu0
      %v2598 = vadd.f32 0.0, %v2597
      %2599 = vmatmul.f32.gmra.mxu0 %v2476
      %v2600 = vpop.f32.mrf.mxu0
      %v2601 = vadd.f32 0.0, %v2600
      %2602 = vmatmul.f32.gmra.mxu0 %v2479
      %v2603 = vpop.f32.mrf.mxu0
      %v2604 = vadd.f32 0.0, %v2603
      %2605 = vmatmul.f32.gmra.mxu0 %v2482
      %v2606 = vpop.f32.mrf.mxu0
      %v2607 = vadd.f32 0.0, %v2606
      %2608 = vmatmul.f32.gmra.mxu0 %v2485
      %v2609 = vpop.f32.mrf.mxu0
      %v2610 = vadd.f32 0.0, %v2609
      %2611 = vmatmul.f32.gmra.mxu0 %v2488
      %v2612 = vpop.f32.mrf.mxu0
      %v2613 = vadd.f32 0.0, %v2612
      %2614 = vmatmul.f32.gmra.mxu0 %v2491
      %v2615 = vpop.f32.mrf.mxu0
      %v2616 = vadd.f32 0.0, %v2615
      %2617 = vmatmul.f32.gmra.mxu0 %v2494
      %v2618 = vpop.f32.mrf.mxu0
      %v2619 = vadd.f32 0.0, %v2618
      %2620 = vmatmul.f32.gmra.mxu0 %v2497
      %v2621 = vpop.f32.mrf.mxu0
      %v2622 = vadd.f32 0.0, %v2621
      %2623 = vmatmul.f32.gmra.mxu0 %v2500
      %v2624 = vpop.f32.mrf.mxu0
      %v2625 = vadd.f32 0.0, %v2624
      %2626 = vmatmul.f32.gmra.mxu0 %v2503
      %v2627 = vpop.f32.mrf.mxu0
      %v2628 = vadd.f32 0.0, %v2627
      %2629 = vmatmul.f32.gmra.mxu0 %v2506
      %v2630 = vpop.f32.mrf.mxu0
      %v2631 = vadd.f32 0.0, %v2630
      %2632 = vmatmul.f32.gmra.mxu0 %v2509
      %v2633 = vpop.f32.mrf.mxu0
      %v2634 = vadd.f32 0.0, %v2633
      %2635 = vdwg.mxu0
      %v2636 = vadd.f32 %v2323, %v2529
      %v2637 = vadd.f32 %v2324, %v2532
      %v2638 = vadd.f32 %v2325, %v2535
      %v2639 = vadd.f32 %v2326, %v2538
      %v2640 = vadd.f32 %v2327, %v2541
      %v2641 = vadd.f32 %v2328, %v2544
      %v2642 = vadd.f32 %v2329, %v2547
      %v2643 = vadd.f32 %v2330, %v2550
      %v2644 = vadd.f32 %v2331, %v2553
      %v2645 = vadd.f32 %v2332, %v2556
      %v2646 = vadd.f32 %v2333, %v2559
      %v2647 = vadd.f32 %v2334, %v2562
      %v2648 = vadd.f32 %v2335, %v2565
      %v2649 = vadd.f32 %v2336, %v2568
      %v2650 = vadd.f32 %v2337, %v2571
      %v2651 = vadd.f32 %v2338, %v2574
      %v2652 = vadd.f32 %v2339, %v2577
      %v2653 = vadd.f32 %v2340, %v2580
      %v2654 = vadd.f32 %v2341, %v2583
      %v2655 = vadd.f32 %v2342, %v2586
      %v2656 = vadd.f32 %v2343, %v2589
      %v2657 = vadd.f32 %v2344, %v2592
      %v2658 = vadd.f32 %v2345, %v2595
      %v2659 = vadd.f32 %v2346, %v2598
      %v2660 = vadd.f32 %v2347, %v2601
      %v2661 = vadd.f32 %v2348, %v2604
      %v2662 = vadd.f32 %v2349, %v2607
      %v2663 = vadd.f32 %v2350, %v2610
      %v2664 = vadd.f32 %v2351, %v2613
      %v2665 = vadd.f32 %v2352, %v2616
      %v2666 = vadd.f32 %v2353, %v2619
      %v2667 = vadd.f32 %v2354, %v2622
      %v2668 = vadd.f32 %v2355, %v2625
      %v2669 = vadd.f32 %v2356, %v2628
      %v2670 = vadd.f32 %v2357, %v2631
      %v2671 = vadd.f32 %v2358, %v2634
      %v2672 = vld [vmem:[%s224 + $0x26] sm:$0xff]
      %v2673 = vld [vmem:[%s224 + $0x2e] sm:$0xff]
      %v2674 = vld [vmem:[%s224 + $0x36] sm:$0xff]
      %v2675 = vld [vmem:[%s224 + $0x3e] sm:$0xff]
      %v2676 = vld [vmem:[%s224 + $0x46] sm:$0xff]
      %v2677 = vld [vmem:[%s224 + $0x4e] sm:$0xff]
      %v2678 = vld [vmem:[%s224 + $0x56] sm:$0xff]
      %v2679 = vld [vmem:[%s224 + $0x5e] sm:$0xff]
      %v2680 = vld [vmem:[%s224 + $0x66] sm:$0xff]
      %v2681 = vld [vmem:[%s224 + $0x6e] sm:$0xff]
      %v2682 = vld [vmem:[%s224 + $0x76] sm:$0xff]
      %v2683 = vld [vmem:[%s224 + $0x7e] sm:$0xff]
      %v2684 = vld [vmem:[%s224 + $0x86] sm:$0xff]
      %v2685 = vld [vmem:[%s224 + $0x8e] sm:$0xff]
      %v2686 = vld [vmem:[%s224 + $0x96] sm:$0xff]
      %v2687 = vld [vmem:[%s224 + $0x9e] sm:$0xff]
      %v2688 = vld [vmem:[%s224 + $0xa6] sm:$0xff]
      %v2689 = vld [vmem:[%s224 + $0xae] sm:$0xff]
      %v2690 = vld [vmem:[%s224 + $0xb6] sm:$0xff]
      %v2691 = vld [vmem:[%s224 + $0xbe] sm:$0xff]
      %v2692 = vld [vmem:[%s224 + $0xc6] sm:$0xff]
      %v2693 = vld [vmem:[%s224 + $0xce] sm:$0xff]
      %v2694 = vld [vmem:[%s224 + $0xd6] sm:$0xff]
      %v2695 = vld [vmem:[%s224 + $0xde] sm:$0xff]
      %v2696 = vld [vmem:[%s224 + $0xe6] sm:$0xff]
      %v2697 = vld [vmem:[%s224 + $0xee] sm:$0xff]
      %v2698 = vld [vmem:[%s224 + $0xf6] sm:$0xff]
      %v2699 = vld [vmem:[%s224 + $0xfe] sm:$0xff]
      %v2700 = vld [vmem:[%s224 + $0x106] sm:$0xff]
      %v2701 = vld [vmem:[%s224 + $0x10e] sm:$0xff]
      %v2702 = vld [vmem:[%s224 + $0x116] sm:$0xff]
      %v2703 = vld [vmem:[%s224 + $0x11e] sm:$0xff]
      %v2704 = vld [vmem:[%s224 + $0x126] sm:$0xff]
      %v2705 = vld [vmem:[%s224 + $0x12e] sm:$0xff]
      %v2706 = vld [vmem:[%s224 + $0x136] sm:$0xff]
      %v2707 = vld [vmem:[%s224 + $0x13e] sm:$0xff]
      %v2708 = vld [vmem:[%s1 + $0x200] sm:$0xff]
      %v2709 = vld [vmem:[%s1 + $0x208] sm:$0xff]
      %v2710 = vld [vmem:[%s1 + $0x210] sm:$0xff]
      %v2711 = vld [vmem:[%s1 + $0x218] sm:$0xff]
      %v2712 = vld [vmem:[%s1 + $0x220] sm:$0xff]
      %v2713 = vld [vmem:[%s1 + $0x228] sm:$0xff]
      %v2714 = vld [vmem:[%s1 + $0x230] sm:$0xff]
      %v2715 = vld [vmem:[%s1 + $0x238] sm:$0xff]
      %v2717 = vsel %vm327, %v2672, 0
      %v2720 = vsel %vm327, %v2673, 0
      %v2723 = vsel %vm327, %v2674, 0
      %v2726 = vsel %vm327, %v2675, 0
      %v2729 = vsel %vm327, %v2676, 0
      %v2732 = vsel %vm327, %v2677, 0
      %v2735 = vsel %vm327, %v2678, 0
      %v2738 = vsel %vm327, %v2679, 0
      %v2741 = vsel %vm327, %v2680, 0
      %v2744 = vsel %vm327, %v2681, 0
      %v2747 = vsel %vm327, %v2682, 0
      %v2750 = vsel %vm327, %v2683, 0
      %v2753 = vsel %vm327, %v2684, 0
      %v2756 = vsel %vm327, %v2685, 0
      %v2759 = vsel %vm327, %v2686, 0
      %v2762 = vsel %vm327, %v2687, 0
      %v2765 = vsel %vm327, %v2688, 0
      %v2768 = vsel %vm327, %v2689, 0
      %v2771 = vsel %vm327, %v2690, 0
      %v2774 = vsel %vm327, %v2691, 0
      %v2777 = vsel %vm327, %v2692, 0
      %v2780 = vsel %vm327, %v2693, 0
      %v2783 = vsel %vm327, %v2694, 0
      %v2786 = vsel %vm327, %v2695, 0
      %v2789 = vsel %vm327, %v2696, 0
      %v2792 = vsel %vm327, %v2697, 0
      %v2795 = vsel %vm327, %v2698, 0
      %v2798 = vsel %vm327, %v2699, 0
      %v2801 = vsel %vm327, %v2700, 0
      %v2804 = vsel %vm327, %v2701, 0
      %v2807 = vsel %vm327, %v2702, 0
      %v2810 = vsel %vm327, %v2703, 0
      %v2813 = vsel %vm327, %v2704, 0
      %v2816 = vsel %vm327, %v2705, 0
      %v2819 = vsel %vm327, %v2706, 0
      %v2822 = vsel %vm327, %v2707, 0
      %2824 = vmatpush.msra.mxu0 0.0
      %2825 = vmatpush.msra.mxu0 0.0
      %2826 = vmatpush.msra.mxu0 0.0
      %2827 = vmatpush.msra.mxu0 0.0
      %2828 = vmatpush.msra.mxu0 0.0
      %2829 = vmatpush.msra.mxu0 0.0
      %2830 = vmatpush.msra.mxu0 0.0
      %2831 = vmatpush.msra.mxu0 0.0
      %2832 = vmatpush.msra.mxu0 %v2715
      %2833 = vmatpush.msra.mxu0 %v2714
      %2834 = vmatpush.msra.mxu0 %v2713
      %2835 = vmatpush.msra.mxu0 %v2712
      %2836 = vmatpush.msra.mxu0 %v2711
      %2837 = vmatpush.msra.mxu0 %v2710
      %2838 = vmatpush.msra.mxu0 %v2709
      %2839 = vmatpush.msra.mxu0 %v2708
      %2840 = vmatmul.f32.gmra.mxu0 %v2717
      %v2841 = vpop.f32.mrf.mxu0
      %v2842 = vadd.f32 0.0, %v2841
      %2843 = vmatmul.f32.gmra.mxu0 %v2720
      %v2844 = vpop.f32.mrf.mxu0
      %v2845 = vadd.f32 0.0, %v2844
      %2846 = vmatmul.f32.gmra.mxu0 %v2723
      %v2847 = vpop.f32.mrf.mxu0
      %v2848 = vadd.f32 0.0, %v2847
      %2849 = vmatmul.f32.gmra.mxu0 %v2726
      %v2850 = vpop.f32.mrf.mxu0
      %v2851 = vadd.f32 0.0, %v2850
      %2852 = vmatmul.f32.gmra.mxu0 %v2729
      %v2853 = vpop.f32.mrf.mxu0
      %v2854 = vadd.f32 0.0, %v2853
      %2855 = vmatmul.f32.gmra.mxu0 %v2732
      %v2856 = vpop.f32.mrf.mxu0
      %v2857 = vadd.f32 0.0, %v2856
      %2858 = vmatmul.f32.gmra.mxu0 %v2735
      %v2859 = vpop.f32.mrf.mxu0
      %v2860 = vadd.f32 0.0, %v2859
      %2861 = vmatmul.f32.gmra.mxu0 %v2738
      %v2862 = vpop.f32.mrf.mxu0
      %v2863 = vadd.f32 0.0, %v2862
      %2864 = vmatmul.f32.gmra.mxu0 %v2741
      %v2865 = vpop.f32.mrf.mxu0
      %v2866 = vadd.f32 0.0, %v2865
      %2867 = vmatmul.f32.gmra.mxu0 %v2744
      %v2868 = vpop.f32.mrf.mxu0
      %v2869 = vadd.f32 0.0, %v2868
      %2870 = vmatmul.f32.gmra.mxu0 %v2747
      %v2871 = vpop.f32.mrf.mxu0
      %v2872 = vadd.f32 0.0, %v2871
      %2873 = vmatmul.f32.gmra.mxu0 %v2750
      %v2874 = vpop.f32.mrf.mxu0
      %v2875 = vadd.f32 0.0, %v2874
      %2876 = vmatmul.f32.gmra.mxu0 %v2753
      %v2877 = vpop.f32.mrf.mxu0
      %v2878 = vadd.f32 0.0, %v2877
      %2879 = vmatmul.f32.gmra.mxu0 %v2756
      %v2880 = vpop.f32.mrf.mxu0
      %v2881 = vadd.f32 0.0, %v2880
      %2882 = vmatmul.f32.gmra.mxu0 %v2759
      %v2883 = vpop.f32.mrf.mxu0
      %v2884 = vadd.f32 0.0, %v2883
      %2885 = vmatmul.f32.gmra.mxu0 %v2762
      %v2886 = vpop.f32.mrf.mxu0
      %v2887 = vadd.f32 0.0, %v2886
      %2888 = vmatmul.f32.gmra.mxu0 %v2765
      %v2889 = vpop.f32.mrf.mxu0
      %v2890 = vadd.f32 0.0, %v2889
      %2891 = vmatmul.f32.gmra.mxu0 %v2768
      %v2892 = vpop.f32.mrf.mxu0
      %v2893 = vadd.f32 0.0, %v2892
      %2894 = vmatmul.f32.gmra.mxu0 %v2771
      %v2895 = vpop.f32.mrf.mxu0
      %v2896 = vadd.f32 0.0, %v2895
      %2897 = vmatmul.f32.gmra.mxu0 %v2774
      %v2898 = vpop.f32.mrf.mxu0
      %v2899 = vadd.f32 0.0, %v2898
      %2900 = vmatmul.f32.gmra.mxu0 %v2777
      %v2901 = vpop.f32.mrf.mxu0
      %v2902 = vadd.f32 0.0, %v2901
      %2903 = vmatmul.f32.gmra.mxu0 %v2780
      %v2904 = vpop.f32.mrf.mxu0
      %v2905 = vadd.f32 0.0, %v2904
      %2906 = vmatmul.f32.gmra.mxu0 %v2783
      %v2907 = vpop.f32.mrf.mxu0
      %v2908 = vadd.f32 0.0, %v2907
      %2909 = vmatmul.f32.gmra.mxu0 %v2786
      %v2910 = vpop.f32.mrf.mxu0
      %v2911 = vadd.f32 0.0, %v2910
      %2912 = vmatmul.f32.gmra.mxu0 %v2789
      %v2913 = vpop.f32.mrf.mxu0
      %v2914 = vadd.f32 0.0, %v2913
      %2915 = vmatmul.f32.gmra.mxu0 %v2792
      %v2916 = vpop.f32.mrf.mxu0
      %v2917 = vadd.f32 0.0, %v2916
      %2918 = vmatmul.f32.gmra.mxu0 %v2795
      %v2919 = vpop.f32.mrf.mxu0
      %v2920 = vadd.f32 0.0, %v2919
      %2921 = vmatmul.f32.gmra.mxu0 %v2798
      %v2922 = vpop.f32.mrf.mxu0
      %v2923 = vadd.f32 0.0, %v2922
      %2924 = vmatmul.f32.gmra.mxu0 %v2801
      %v2925 = vpop.f32.mrf.mxu0
      %v2926 = vadd.f32 0.0, %v2925
      %2927 = vmatmul.f32.gmra.mxu0 %v2804
      %v2928 = vpop.f32.mrf.mxu0
      %v2929 = vadd.f32 0.0, %v2928
      %2930 = vmatmul.f32.gmra.mxu0 %v2807
      %v2931 = vpop.f32.mrf.mxu0
      %v2932 = vadd.f32 0.0, %v2931
      %2933 = vmatmul.f32.gmra.mxu0 %v2810
      %v2934 = vpop.f32.mrf.mxu0
      %v2935 = vadd.f32 0.0, %v2934
      %2936 = vmatmul.f32.gmra.mxu0 %v2813
      %v2937 = vpop.f32.mrf.mxu0
      %v2938 = vadd.f32 0.0, %v2937
      %2939 = vmatmul.f32.gmra.mxu0 %v2816
      %v2940 = vpop.f32.mrf.mxu0
      %v2941 = vadd.f32 0.0, %v2940
      %2942 = vmatmul.f32.gmra.mxu0 %v2819
      %v2943 = vpop.f32.mrf.mxu0
      %v2944 = vadd.f32 0.0, %v2943
      %2945 = vmatmul.f32.gmra.mxu0 %v2822
      %v2946 = vpop.f32.mrf.mxu0
      %v2947 = vadd.f32 0.0, %v2946
      %2948 = vdwg.mxu0
      %v2949 = vadd.f32 %v2636, %v2842
      %v2950 = vadd.f32 %v2637, %v2845
      %v2951 = vadd.f32 %v2638, %v2848
      %v2952 = vadd.f32 %v2639, %v2851
      %v2953 = vadd.f32 %v2640, %v2854
      %v2954 = vadd.f32 %v2641, %v2857
      %v2955 = vadd.f32 %v2642, %v2860
      %v2956 = vadd.f32 %v2643, %v2863
      %v2957 = vadd.f32 %v2644, %v2866
      %v2958 = vadd.f32 %v2645, %v2869
      %v2959 = vadd.f32 %v2646, %v2872
      %v2960 = vadd.f32 %v2647, %v2875
      %v2961 = vadd.f32 %v2648, %v2878
      %v2962 = vadd.f32 %v2649, %v2881
      %v2963 = vadd.f32 %v2650, %v2884
      %v2964 = vadd.f32 %v2651, %v2887
      %v2965 = vadd.f32 %v2652, %v2890
      %v2966 = vadd.f32 %v2653, %v2893
      %v2967 = vadd.f32 %v2654, %v2896
      %v2968 = vadd.f32 %v2655, %v2899
      %v2969 = vadd.f32 %v2656, %v2902
      %v2970 = vadd.f32 %v2657, %v2905
      %v2971 = vadd.f32 %v2658, %v2908
      %v2972 = vadd.f32 %v2659, %v2911
      %v2973 = vadd.f32 %v2660, %v2914
      %v2974 = vadd.f32 %v2661, %v2917
      %v2975 = vadd.f32 %v2662, %v2920
      %v2976 = vadd.f32 %v2663, %v2923
      %v2977 = vadd.f32 %v2664, %v2926
      %v2978 = vadd.f32 %v2665, %v2929
      %v2979 = vadd.f32 %v2666, %v2932
      %v2980 = vadd.f32 %v2667, %v2935
      %v2981 = vadd.f32 %v2668, %v2938
      %v2982 = vadd.f32 %v2669, %v2941
      %v2983 = vadd.f32 %v2670, %v2944
      %v2984 = vadd.f32 %v2671, %v2947
      %2985 = vst [vmem:[%s231] sm:$0xff] %v2949
      %2986 = vst [vmem:[%s231 + $0x8] sm:$0xff] %v2950
      %2987 = vst [vmem:[%s231 + $0x10] sm:$0xff] %v2951
      %2988 = vst [vmem:[%s231 + $0x18] sm:$0xff] %v2952
      %2989 = vst [vmem:[%s231 + $0x20] sm:$0xff] %v2953
      %2990 = vst [vmem:[%s231 + $0x28] sm:$0xff] %v2954
      %2991 = vst [vmem:[%s231 + $0x30] sm:$0xff] %v2955
      %2992 = vst [vmem:[%s231 + $0x38] sm:$0xff] %v2956
      %2993 = vst [vmem:[%s231 + $0x40] sm:$0xff] %v2957
      %2994 = vst [vmem:[%s231 + $0x48] sm:$0xff] %v2958
      %2995 = vst [vmem:[%s231 + $0x50] sm:$0xff] %v2959
      %2996 = vst [vmem:[%s231 + $0x58] sm:$0xff] %v2960
      %2997 = vst [vmem:[%s231 + $0x60] sm:$0xff] %v2961
      %2998 = vst [vmem:[%s231 + $0x68] sm:$0xff] %v2962
      %2999 = vst [vmem:[%s231 + $0x70] sm:$0xff] %v2963
      %3000 = vst [vmem:[%s231 + $0x78] sm:$0xff] %v2964
      %3001 = vst [vmem:[%s231 + $0x80] sm:$0xff] %v2965
      %3002 = vst [vmem:[%s231 + $0x88] sm:$0xff] %v2966
      %3003 = vst [vmem:[%s231 + $0x90] sm:$0xff] %v2967
      %3004 = vst [vmem:[%s231 + $0x98] sm:$0xff] %v2968
      %3005 = vst [vmem:[%s231 + $0xa0] sm:$0xff] %v2969
      %3006 = vst [vmem:[%s231 + $0xa8] sm:$0xff] %v2970
      %3007 = vst [vmem:[%s231 + $0xb0] sm:$0xff] %v2971
      %3008 = vst [vmem:[%s231 + $0xb8] sm:$0xff] %v2972
      %3009 = vst [vmem:[%s231 + $0xc0] sm:$0xff] %v2973
      %3010 = vst [vmem:[%s231 + $0xc8] sm:$0xff] %v2974
      %3011 = vst [vmem:[%s231 + $0xd0] sm:$0xff] %v2975
      %3012 = vst [vmem:[%s231 + $0xd8] sm:$0xff] %v2976
      %3013 = vst [vmem:[%s231 + $0xe0] sm:$0xff] %v2977
      %3014 = vst [vmem:[%s231 + $0xe8] sm:$0xff] %v2978
      %3015 = vst [vmem:[%s231 + $0xf0] sm:$0xff] %v2979
      %3016 = vst [vmem:[%s231 + $0xf8] sm:$0xff] %v2980
      %3017 = vst [vmem:[%s231 + $0x100] sm:$0xff] %v2981
      %3018 = vst [vmem:[%s231 + $0x108] sm:$0xff] %v2982
      %3019 = vst [vmem:[%s231 + $0x110] sm:$0xff] %v2983
      %3020 = vst [vmem:[%s231 + $0x118] sm:$0xff] %v2984
      %v3021 = vlaneseq
      %v3022 = vshrl.u32 %v3021, 7
      %v3023 = vadd.s32 %v3022, 8
      %v3024 = vadd.s32 %v3022, 16
      %v3025 = vadd.s32 %v3022, 24
      %v3026 = vadd.s32 %v3022, 32
      %v3027 = vadd.s32 %v3022, 40
      %v3028 = vadd.s32 %v3022, 48
      %v3029 = vadd.s32 %v3022, 56
      %v3030 = vadd.s32 %v3022, 64
      %v3031 = vadd.s32 %v3022, 72
      %v3032 = vadd.s32 %v3022, 80
      %v3033 = vadd.s32 %v3022, 88
      %v3034 = vadd.s32 %v3022, 96
      %v3035 = vadd.s32 %v3022, 104
      %v3036 = vadd.s32 %v3022, 112
      %v3037 = vadd.s32 %v3022, 120
      %v3038 = vadd.s32 %v3022, 128
      %v3039 = vadd.s32 %v3022, 136
      %v3040 = vadd.s32 %v3022, 144
      %v3041 = vadd.s32 %v3022, 152
      %v3042 = vadd.s32 %v3022, 160
      %v3043 = vadd.s32 %v3022, 168
      %v3044 = vadd.s32 %v3022, 176
      %v3045 = vadd.s32 %v3022, 184
      %v3046 = vadd.s32 %v3022, 192
      %v3047 = vadd.s32 %v3022, 200
      %v3048 = vadd.s32 %v3022, 208
      %v3049 = vadd.s32 %v3022, 216
      %v3050 = vadd.s32 %v3022, 224
      %v3051 = vadd.s32 %v3022, 232
      %v3052 = vadd.s32 %v3022, 240
      %v3053 = vadd.s32 %v3022, 248
      %v3054 = vadd.s32 %v3022, 256
      %v3055 = vadd.s32 %v3022, 264
      %v3056 = vadd.s32 %v3022, 272
      %v3057 = vadd.s32 %v3022, 280
      %vm3058 = vcmp.lt.s32.totalorder %v3022, 0
      %v3059 = vsub.s32 0, %v3022
      %v3060 = vsel %vm3058, %v3059, %v3022
      %v3061 = vand.u32 %v3060, 65535
      %v3062 = vshrl.u32 %v3060, 16
      %v3064 = vmul.u32 %v3061, 14564
      %v3065 = vmul.u32 %v3061, 58254
      %v3066 = vmul.u32 %v3062, 14564
      %v3067 = vmul.u32 %v3062, 58254
      %v3068 = vshll.u32 %v3065, 16
      %v3069 = vshrl.u32 %v3065, 16
      %v3070 = vshll.u32 %v3066, 16
      %v3071 = vshrl.u32 %v3066, 16
      %vm3072 = vc.u32 %v3064, %v3068
      %v3073 = vsel %vm3072, 1, 0
      %v3074 = vadd.s32 %v3064, %v3068
      %v3075 = vadd.s32 %v3067, %v3073
      %vm3076 = vc.u32 %v3074, %v3070
      %v3077 = vsel %vm3076, 1, 0
      %v3078 = vadd.s32 %v3074, %v3070
      %v3079 = vadd.s32 %v3075, %v3077
      %v3080 = vadd.s32 %v3079, %v3069
      %v3081 = vadd.s32 %v3080, %v3071
      %v3082 = vshrl.u32 %v3081, 4
      %v3083 = vmul.u32 %v3082, 18
      %v3084 = vsub.s32 %v3060, %v3083
      %v3085 = vsub.s32 0, %v3084
      %v3086 = vsel %vm3058, %v3085, %v3084
      %vm3087 = vcmp.lt.s32.totalorder %v3023, 0
      %v3088 = vsub.s32 0, %v3023
      %v3089 = vsel %vm3087, %v3088, %v3023
      %v3090 = vand.u32 %v3089, 65535
      %v3091 = vshrl.u32 %v3089, 16
      %v3093 = vmul.u32 %v3090, 14564
      %v3094 = vmul.u32 %v3090, 58254
      %v3095 = vmul.u32 %v3091, 14564
      %v3096 = vmul.u32 %v3091, 58254
      %v3097 = vshll.u32 %v3094, 16
      %v3098 = vshrl.u32 %v3094, 16
      %v3099 = vshll.u32 %v3095, 16
      %v3100 = vshrl.u32 %v3095, 16
      %vm3101 = vc.u32 %v3093, %v3097
      %v3102 = vsel %vm3101, 1, 0
      %v3103 = vadd.s32 %v3093, %v3097
      %v3104 = vadd.s32 %v3096, %v3102
      %vm3105 = vc.u32 %v3103, %v3099
      %v3106 = vsel %vm3105, 1, 0
      %v3107 = vadd.s32 %v3103, %v3099
      %v3108 = vadd.s32 %v3104, %v3106
      %v3109 = vadd.s32 %v3108, %v3098
      %v3110 = vadd.s32 %v3109, %v3100
      %v3111 = vshrl.u32 %v3110, 4
      %v3112 = vmul.u32 %v3111, 18
      %v3113 = vsub.s32 %v3089, %v3112
      %v3114 = vsub.s32 0, %v3113
      %v3115 = vsel %vm3087, %v3114, %v3113
      %vm3116 = vcmp.lt.s32.totalorder %v3024, 0
      %v3117 = vsub.s32 0, %v3024
      %v3118 = vsel %vm3116, %v3117, %v3024
      %v3119 = vand.u32 %v3118, 65535
      %v3120 = vshrl.u32 %v3118, 16
      %v3122 = vmul.u32 %v3119, 14564
      %v3123 = vmul.u32 %v3119, 58254
      %v3124 = vmul.u32 %v3120, 14564
      %v3125 = vmul.u32 %v3120, 58254
      %v3126 = vshll.u32 %v3123, 16
      %v3127 = vshrl.u32 %v3123, 16
      %v3128 = vshll.u32 %v3124, 16
      %v3129 = vshrl.u32 %v3124, 16
      %vm3130 = vc.u32 %v3122, %v3126
      %v3131 = vsel %vm3130, 1, 0
      %v3132 = vadd.s32 %v3122, %v3126
      %v3133 = vadd.s32 %v3125, %v3131
      %vm3134 = vc.u32 %v3132, %v3128
      %v3135 = vsel %vm3134, 1, 0
      %v3136 = vadd.s32 %v3132, %v3128
      %v3137 = vadd.s32 %v3133, %v3135
      %v3138 = vadd.s32 %v3137, %v3127
      %v3139 = vadd.s32 %v3138, %v3129
      %v3140 = vshrl.u32 %v3139, 4
      %v3141 = vmul.u32 %v3140, 18
      %v3142 = vsub.s32 %v3118, %v3141
      %v3143 = vsub.s32 0, %v3142
      %v3144 = vsel %vm3116, %v3143, %v3142
      %vm3145 = vcmp.lt.s32.totalorder %v3025, 0
      %v3146 = vsub.s32 0, %v3025
      %v3147 = vsel %vm3145, %v3146, %v3025
      %v3148 = vand.u32 %v3147, 65535
      %v3149 = vshrl.u32 %v3147, 16
      %v3151 = vmul.u32 %v3148, 14564
      %v3152 = vmul.u32 %v3148, 58254
      %v3153 = vmul.u32 %v3149, 14564
      %v3154 = vmul.u32 %v3149, 58254
      %v3155 = vshll.u32 %v3152, 16
      %v3156 = vshrl.u32 %v3152, 16
      %v3157 = vshll.u32 %v3153, 16
      %v3158 = vshrl.u32 %v3153, 16
      %vm3159 = vc.u32 %v3151, %v3155
      %v3160 = vsel %vm3159, 1, 0
      %v3161 = vadd.s32 %v3151, %v3155
      %v3162 = vadd.s32 %v3154, %v3160
      %vm3163 = vc.u32 %v3161, %v3157
      %v3164 = vsel %vm3163, 1, 0
      %v3165 = vadd.s32 %v3161, %v3157
      %v3166 = vadd.s32 %v3162, %v3164
      %v3167 = vadd.s32 %v3166, %v3156
      %v3168 = vadd.s32 %v3167, %v3158
      %v3169 = vshrl.u32 %v3168, 4
      %v3170 = vmul.u32 %v3169, 18
      %v3171 = vsub.s32 %v3147, %v3170
      %v3172 = vsub.s32 0, %v3171
      %v3173 = vsel %vm3145, %v3172, %v3171
      %vm3174 = vcmp.lt.s32.totalorder %v3026, 0
      %v3175 = vsub.s32 0, %v3026
      %v3176 = vsel %vm3174, %v3175, %v3026
      %v3177 = vand.u32 %v3176, 65535
      %v3178 = vshrl.u32 %v3176, 16
      %v3180 = vmul.u32 %v3177, 14564
      %v3181 = vmul.u32 %v3177, 58254
      %v3182 = vmul.u32 %v3178, 14564
      %v3183 = vmul.u32 %v3178, 58254
      %v3184 = vshll.u32 %v3181, 16
      %v3185 = vshrl.u32 %v3181, 16
      %v3186 = vshll.u32 %v3182, 16
      %v3187 = vshrl.u32 %v3182, 16
      %vm3188 = vc.u32 %v3180, %v3184
      %v3189 = vsel %vm3188, 1, 0
      %v3190 = vadd.s32 %v3180, %v3184
      %v3191 = vadd.s32 %v3183, %v3189
      %vm3192 = vc.u32 %v3190, %v3186
      %v3193 = vsel %vm3192, 1, 0
      %v3194 = vadd.s32 %v3190, %v3186
      %v3195 = vadd.s32 %v3191, %v3193
      %v3196 = vadd.s32 %v3195, %v3185
      %v3197 = vadd.s32 %v3196, %v3187
      %v3198 = vshrl.u32 %v3197, 4
      %v3199 = vmul.u32 %v3198, 18
      %v3200 = vsub.s32 %v3176, %v3199
      %v3201 = vsub.s32 0, %v3200
      %v3202 = vsel %vm3174, %v3201, %v3200
      %vm3203 = vcmp.lt.s32.totalorder %v3027, 0
      %v3204 = vsub.s32 0, %v3027
      %v3205 = vsel %vm3203, %v3204, %v3027
      %v3206 = vand.u32 %v3205, 65535
      %v3207 = vshrl.u32 %v3205, 16
      %v3209 = vmul.u32 %v3206, 14564
      %v3210 = vmul.u32 %v3206, 58254
      %v3211 = vmul.u32 %v3207, 14564
      %v3212 = vmul.u32 %v3207, 58254
      %v3213 = vshll.u32 %v3210, 16
      %v3214 = vshrl.u32 %v3210, 16
      %v3215 = vshll.u32 %v3211, 16
      %v3216 = vshrl.u32 %v3211, 16
      %vm3217 = vc.u32 %v3209, %v3213
      %v3218 = vsel %vm3217, 1, 0
      %v3219 = vadd.s32 %v3209, %v3213
      %v3220 = vadd.s32 %v3212, %v3218
      %vm3221 = vc.u32 %v3219, %v3215
      %v3222 = vsel %vm3221, 1, 0
      %v3223 = vadd.s32 %v3219, %v3215
      %v3224 = vadd.s32 %v3220, %v3222
      %v3225 = vadd.s32 %v3224, %v3214
      %v3226 = vadd.s32 %v3225, %v3216
      %v3227 = vshrl.u32 %v3226, 4
      %v3228 = vmul.u32 %v3227, 18
      %v3229 = vsub.s32 %v3205, %v3228
      %v3230 = vsub.s32 0, %v3229
      %v3231 = vsel %vm3203, %v3230, %v3229
      %vm3232 = vcmp.lt.s32.totalorder %v3028, 0
      %v3233 = vsub.s32 0, %v3028
      %v3234 = vsel %vm3232, %v3233, %v3028
      %v3235 = vand.u32 %v3234, 65535
      %v3236 = vshrl.u32 %v3234, 16
      %v3238 = vmul.u32 %v3235, 14564
      %v3239 = vmul.u32 %v3235, 58254
      %v3240 = vmul.u32 %v3236, 14564
      %v3241 = vmul.u32 %v3236, 58254
      %v3242 = vshll.u32 %v3239, 16
      %v3243 = vshrl.u32 %v3239, 16
      %v3244 = vshll.u32 %v3240, 16
      %v3245 = vshrl.u32 %v3240, 16
      %vm3246 = vc.u32 %v3238, %v3242
      %v3247 = vsel %vm3246, 1, 0
      %v3248 = vadd.s32 %v3238, %v3242
      %v3249 = vadd.s32 %v3241, %v3247
      %vm3250 = vc.u32 %v3248, %v3244
      %v3251 = vsel %vm3250, 1, 0
      %v3252 = vadd.s32 %v3248, %v3244
      %v3253 = vadd.s32 %v3249, %v3251
      %v3254 = vadd.s32 %v3253, %v3243
      %v3255 = vadd.s32 %v3254, %v3245
      %v3256 = vshrl.u32 %v3255, 4
      %v3257 = vmul.u32 %v3256, 18
      %v3258 = vsub.s32 %v3234, %v3257
      %v3259 = vsub.s32 0, %v3258
      %v3260 = vsel %vm3232, %v3259, %v3258
      %vm3261 = vcmp.lt.s32.totalorder %v3029, 0
      %v3262 = vsub.s32 0, %v3029
      %v3263 = vsel %vm3261, %v3262, %v3029
      %v3264 = vand.u32 %v3263, 65535
      %v3265 = vshrl.u32 %v3263, 16
      %v3267 = vmul.u32 %v3264, 14564
      %v3268 = vmul.u32 %v3264, 58254
      %v3269 = vmul.u32 %v3265, 14564
      %v3270 = vmul.u32 %v3265, 58254
      %v3271 = vshll.u32 %v3268, 16
      %v3272 = vshrl.u32 %v3268, 16
      %v3273 = vshll.u32 %v3269, 16
      %v3274 = vshrl.u32 %v3269, 16
      %vm3275 = vc.u32 %v3267, %v3271
      %v3276 = vsel %vm3275, 1, 0
      %v3277 = vadd.s32 %v3267, %v3271
      %v3278 = vadd.s32 %v3270, %v3276
      %vm3279 = vc.u32 %v3277, %v3273
      %v3280 = vsel %vm3279, 1, 0
      %v3281 = vadd.s32 %v3277, %v3273
      %v3282 = vadd.s32 %v3278, %v3280
      %v3283 = vadd.s32 %v3282, %v3272
      %v3284 = vadd.s32 %v3283, %v3274
      %v3285 = vshrl.u32 %v3284, 4
      %v3286 = vmul.u32 %v3285, 18
      %v3287 = vsub.s32 %v3263, %v3286
      %v3288 = vsub.s32 0, %v3287
      %v3289 = vsel %vm3261, %v3288, %v3287
      %vm3290 = vcmp.lt.s32.totalorder %v3030, 0
      %v3291 = vsub.s32 0, %v3030
      %v3292 = vsel %vm3290, %v3291, %v3030
      %v3293 = vand.u32 %v3292, 65535
      %v3294 = vshrl.u32 %v3292, 16
      %v3296 = vmul.u32 %v3293, 14564
      %v3297 = vmul.u32 %v3293, 58254
      %v3298 = vmul.u32 %v3294, 14564
      %v3299 = vmul.u32 %v3294, 58254
      %v3300 = vshll.u32 %v3297, 16
      %v3301 = vshrl.u32 %v3297, 16
      %v3302 = vshll.u32 %v3298, 16
      %v3303 = vshrl.u32 %v3298, 16
      %vm3304 = vc.u32 %v3296, %v3300
      %v3305 = vsel %vm3304, 1, 0
      %v3306 = vadd.s32 %v3296, %v3300
      %v3307 = vadd.s32 %v3299, %v3305
      %vm3308 = vc.u32 %v3306, %v3302
      %v3309 = vsel %vm3308, 1, 0
      %v3310 = vadd.s32 %v3306, %v3302
      %v3311 = vadd.s32 %v3307, %v3309
      %v3312 = vadd.s32 %v3311, %v3301
      %v3313 = vadd.s32 %v3312, %v3303
      %v3314 = vshrl.u32 %v3313, 4
      %v3315 = vmul.u32 %v3314, 18
      %v3316 = vsub.s32 %v3292, %v3315
      %v3317 = vsub.s32 0, %v3316
      %v3318 = vsel %vm3290, %v3317, %v3316
      %vm3319 = vcmp.lt.s32.totalorder %v3031, 0
      %v3320 = vsub.s32 0, %v3031
      %v3321 = vsel %vm3319, %v3320, %v3031
      %v3322 = vand.u32 %v3321, 65535
      %v3323 = vshrl.u32 %v3321, 16
      %v3325 = vmul.u32 %v3322, 14564
      %v3326 = vmul.u32 %v3322, 58254
      %v3327 = vmul.u32 %v3323, 14564
      %v3328 = vmul.u32 %v3323, 58254
      %v3329 = vshll.u32 %v3326, 16
      %v3330 = vshrl.u32 %v3326, 16
      %v3331 = vshll.u32 %v3327, 16
      %v3332 = vshrl.u32 %v3327, 16
      %vm3333 = vc.u32 %v3325, %v3329
      %v3334 = vsel %vm3333, 1, 0
      %v3335 = vadd.s32 %v3325, %v3329
      %v3336 = vadd.s32 %v3328, %v3334
      %vm3337 = vc.u32 %v3335, %v3331
      %v3338 = vsel %vm3337, 1, 0
      %v3339 = vadd.s32 %v3335, %v3331
      %v3340 = vadd.s32 %v3336, %v3338
      %v3341 = vadd.s32 %v3340, %v3330
      %v3342 = vadd.s32 %v3341, %v3332
      %v3343 = vshrl.u32 %v3342, 4
      %v3344 = vmul.u32 %v3343, 18
      %v3345 = vsub.s32 %v3321, %v3344
      %v3346 = vsub.s32 0, %v3345
      %v3347 = vsel %vm3319, %v3346, %v3345
      %vm3348 = vcmp.lt.s32.totalorder %v3032, 0
      %v3349 = vsub.s32 0, %v3032
      %v3350 = vsel %vm3348, %v3349, %v3032
      %v3351 = vand.u32 %v3350, 65535
      %v3352 = vshrl.u32 %v3350, 16
      %v3354 = vmul.u32 %v3351, 14564
      %v3355 = vmul.u32 %v3351, 58254
      %v3356 = vmul.u32 %v3352, 14564
      %v3357 = vmul.u32 %v3352, 58254
      %v3358 = vshll.u32 %v3355, 16
      %v3359 = vshrl.u32 %v3355, 16
      %v3360 = vshll.u32 %v3356, 16
      %v3361 = vshrl.u32 %v3356, 16
      %vm3362 = vc.u32 %v3354, %v3358
      %v3363 = vsel %vm3362, 1, 0
      %v3364 = vadd.s32 %v3354, %v3358
      %v3365 = vadd.s32 %v3357, %v3363
      %vm3366 = vc.u32 %v3364, %v3360
      %v3367 = vsel %vm3366, 1, 0
      %v3368 = vadd.s32 %v3364, %v3360
      %v3369 = vadd.s32 %v3365, %v3367
      %v3370 = vadd.s32 %v3369, %v3359
      %v3371 = vadd.s32 %v3370, %v3361
      %v3372 = vshrl.u32 %v3371, 4
      %v3373 = vmul.u32 %v3372, 18
      %v3374 = vsub.s32 %v3350, %v3373
      %v3375 = vsub.s32 0, %v3374
      %v3376 = vsel %vm3348, %v3375, %v3374
      %vm3377 = vcmp.lt.s32.totalorder %v3033, 0
      %v3378 = vsub.s32 0, %v3033
      %v3379 = vsel %vm3377, %v3378, %v3033
      %v3380 = vand.u32 %v3379, 65535
      %v3381 = vshrl.u32 %v3379, 16
      %v3383 = vmul.u32 %v3380, 14564
      %v3384 = vmul.u32 %v3380, 58254
      %v3385 = vmul.u32 %v3381, 14564
      %v3386 = vmul.u32 %v3381, 58254
      %v3387 = vshll.u32 %v3384, 16
      %v3388 = vshrl.u32 %v3384, 16
      %v3389 = vshll.u32 %v3385, 16
      %v3390 = vshrl.u32 %v3385, 16
      %vm3391 = vc.u32 %v3383, %v3387
      %v3392 = vsel %vm3391, 1, 0
      %v3393 = vadd.s32 %v3383, %v3387
      %v3394 = vadd.s32 %v3386, %v3392
      %vm3395 = vc.u32 %v3393, %v3389
      %v3396 = vsel %vm3395, 1, 0
      %v3397 = vadd.s32 %v3393, %v3389
      %v3398 = vadd.s32 %v3394, %v3396
      %v3399 = vadd.s32 %v3398, %v3388
      %v3400 = vadd.s32 %v3399, %v3390
      %v3401 = vshrl.u32 %v3400, 4
      %v3402 = vmul.u32 %v3401, 18
      %v3403 = vsub.s32 %v3379, %v3402
      %v3404 = vsub.s32 0, %v3403
      %v3405 = vsel %vm3377, %v3404, %v3403
      %vm3406 = vcmp.lt.s32.totalorder %v3034, 0
      %v3407 = vsub.s32 0, %v3034
      %v3408 = vsel %vm3406, %v3407, %v3034
      %v3409 = vand.u32 %v3408, 65535
      %v3410 = vshrl.u32 %v3408, 16
      %v3412 = vmul.u32 %v3409, 14564
      %v3413 = vmul.u32 %v3409, 58254
      %v3414 = vmul.u32 %v3410, 14564
      %v3415 = vmul.u32 %v3410, 58254
      %v3416 = vshll.u32 %v3413, 16
      %v3417 = vshrl.u32 %v3413, 16
      %v3418 = vshll.u32 %v3414, 16
      %v3419 = vshrl.u32 %v3414, 16
      %vm3420 = vc.u32 %v3412, %v3416
      %v3421 = vsel %vm3420, 1, 0
      %v3422 = vadd.s32 %v3412, %v3416
      %v3423 = vadd.s32 %v3415, %v3421
      %vm3424 = vc.u32 %v3422, %v3418
      %v3425 = vsel %vm3424, 1, 0
      %v3426 = vadd.s32 %v3422, %v3418
      %v3427 = vadd.s32 %v3423, %v3425
      %v3428 = vadd.s32 %v3427, %v3417
      %v3429 = vadd.s32 %v3428, %v3419
      %v3430 = vshrl.u32 %v3429, 4
      %v3431 = vmul.u32 %v3430, 18
      %v3432 = vsub.s32 %v3408, %v3431
      %v3433 = vsub.s32 0, %v3432
      %v3434 = vsel %vm3406, %v3433, %v3432
      %vm3435 = vcmp.lt.s32.totalorder %v3035, 0
      %v3436 = vsub.s32 0, %v3035
      %v3437 = vsel %vm3435, %v3436, %v3035
      %v3438 = vand.u32 %v3437, 65535
      %v3439 = vshrl.u32 %v3437, 16
      %v3441 = vmul.u32 %v3438, 14564
      %v3442 = vmul.u32 %v3438, 58254
      %v3443 = vmul.u32 %v3439, 14564
      %v3444 = vmul.u32 %v3439, 58254
      %v3445 = vshll.u32 %v3442, 16
      %v3446 = vshrl.u32 %v3442, 16
      %v3447 = vshll.u32 %v3443, 16
      %v3448 = vshrl.u32 %v3443, 16
      %vm3449 = vc.u32 %v3441, %v3445
      %v3450 = vsel %vm3449, 1, 0
      %v3451 = vadd.s32 %v3441, %v3445
      %v3452 = vadd.s32 %v3444, %v3450
      %vm3453 = vc.u32 %v3451, %v3447
      %v3454 = vsel %vm3453, 1, 0
      %v3455 = vadd.s32 %v3451, %v3447
      %v3456 = vadd.s32 %v3452, %v3454
      %v3457 = vadd.s32 %v3456, %v3446
      %v3458 = vadd.s32 %v3457, %v3448
      %v3459 = vshrl.u32 %v3458, 4
      %v3460 = vmul.u32 %v3459, 18
      %v3461 = vsub.s32 %v3437, %v3460
      %v3462 = vsub.s32 0, %v3461
      %v3463 = vsel %vm3435, %v3462, %v3461
      %vm3464 = vcmp.lt.s32.totalorder %v3036, 0
      %v3465 = vsub.s32 0, %v3036
      %v3466 = vsel %vm3464, %v3465, %v3036
      %v3467 = vand.u32 %v3466, 65535
      %v3468 = vshrl.u32 %v3466, 16
      %v3470 = vmul.u32 %v3467, 14564
      %v3471 = vmul.u32 %v3467, 58254
      %v3472 = vmul.u32 %v3468, 14564
      %v3473 = vmul.u32 %v3468, 58254
      %v3474 = vshll.u32 %v3471, 16
      %v3475 = vshrl.u32 %v3471, 16
      %v3476 = vshll.u32 %v3472, 16
      %v3477 = vshrl.u32 %v3472, 16
      %vm3478 = vc.u32 %v3470, %v3474
      %v3479 = vsel %vm3478, 1, 0
      %v3480 = vadd.s32 %v3470, %v3474
      %v3481 = vadd.s32 %v3473, %v3479
      %vm3482 = vc.u32 %v3480, %v3476
      %v3483 = vsel %vm3482, 1, 0
      %v3484 = vadd.s32 %v3480, %v3476
      %v3485 = vadd.s32 %v3481, %v3483
      %v3486 = vadd.s32 %v3485, %v3475
      %v3487 = vadd.s32 %v3486, %v3477
      %v3488 = vshrl.u32 %v3487, 4
      %v3489 = vmul.u32 %v3488, 18
      %v3490 = vsub.s32 %v3466, %v3489
      %v3491 = vsub.s32 0, %v3490
      %v3492 = vsel %vm3464, %v3491, %v3490
      %vm3493 = vcmp.lt.s32.totalorder %v3037, 0
      %v3494 = vsub.s32 0, %v3037
      %v3495 = vsel %vm3493, %v3494, %v3037
      %v3496 = vand.u32 %v3495, 65535
      %v3497 = vshrl.u32 %v3495, 16
      %v3499 = vmul.u32 %v3496, 14564
      %v3500 = vmul.u32 %v3496, 58254
      %v3501 = vmul.u32 %v3497, 14564
      %v3502 = vmul.u32 %v3497, 58254
      %v3503 = vshll.u32 %v3500, 16
      %v3504 = vshrl.u32 %v3500, 16
      %v3505 = vshll.u32 %v3501, 16
      %v3506 = vshrl.u32 %v3501, 16
      %vm3507 = vc.u32 %v3499, %v3503
      %v3508 = vsel %vm3507, 1, 0
      %v3509 = vadd.s32 %v3499, %v3503
      %v3510 = vadd.s32 %v3502, %v3508
      %vm3511 = vc.u32 %v3509, %v3505
      %v3512 = vsel %vm3511, 1, 0
      %v3513 = vadd.s32 %v3509, %v3505
      %v3514 = vadd.s32 %v3510, %v3512
      %v3515 = vadd.s32 %v3514, %v3504
      %v3516 = vadd.s32 %v3515, %v3506
      %v3517 = vshrl.u32 %v3516, 4
      %v3518 = vmul.u32 %v3517, 18
      %v3519 = vsub.s32 %v3495, %v3518
      %v3520 = vsub.s32 0, %v3519
      %v3521 = vsel %vm3493, %v3520, %v3519
      %vm3522 = vcmp.lt.s32.totalorder %v3038, 0
      %v3523 = vsub.s32 0, %v3038
      %v3524 = vsel %vm3522, %v3523, %v3038
      %v3525 = vand.u32 %v3524, 65535
      %v3526 = vshrl.u32 %v3524, 16
      %v3528 = vmul.u32 %v3525, 14564
      %v3529 = vmul.u32 %v3525, 58254
      %v3530 = vmul.u32 %v3526, 14564
      %v3531 = vmul.u32 %v3526, 58254
      %v3532 = vshll.u32 %v3529, 16
      %v3533 = vshrl.u32 %v3529, 16
      %v3534 = vshll.u32 %v3530, 16
      %v3535 = vshrl.u32 %v3530, 16
      %vm3536 = vc.u32 %v3528, %v3532
      %v3537 = vsel %vm3536, 1, 0
      %v3538 = vadd.s32 %v3528, %v3532
      %v3539 = vadd.s32 %v3531, %v3537
      %vm3540 = vc.u32 %v3538, %v3534
      %v3541 = vsel %vm3540, 1, 0
      %v3542 = vadd.s32 %v3538, %v3534
      %v3543 = vadd.s32 %v3539, %v3541
      %v3544 = vadd.s32 %v3543, %v3533
      %v3545 = vadd.s32 %v3544, %v3535
      %v3546 = vshrl.u32 %v3545, 4
      %v3547 = vmul.u32 %v3546, 18
      %v3548 = vsub.s32 %v3524, %v3547
      %v3549 = vsub.s32 0, %v3548
      %v3550 = vsel %vm3522, %v3549, %v3548
      %vm3551 = vcmp.lt.s32.totalorder %v3039, 0
      %v3552 = vsub.s32 0, %v3039
      %v3553 = vsel %vm3551, %v3552, %v3039
      %v3554 = vand.u32 %v3553, 65535
      %v3555 = vshrl.u32 %v3553, 16
      %v3557 = vmul.u32 %v3554, 14564
      %v3558 = vmul.u32 %v3554, 58254
      %v3559 = vmul.u32 %v3555, 14564
      %v3560 = vmul.u32 %v3555, 58254
      %v3561 = vshll.u32 %v3558, 16
      %v3562 = vshrl.u32 %v3558, 16
      %v3563 = vshll.u32 %v3559, 16
      %v3564 = vshrl.u32 %v3559, 16
      %vm3565 = vc.u32 %v3557, %v3561
      %v3566 = vsel %vm3565, 1, 0
      %v3567 = vadd.s32 %v3557, %v3561
      %v3568 = vadd.s32 %v3560, %v3566
      %vm3569 = vc.u32 %v3567, %v3563
      %v3570 = vsel %vm3569, 1, 0
      %v3571 = vadd.s32 %v3567, %v3563
      %v3572 = vadd.s32 %v3568, %v3570
      %v3573 = vadd.s32 %v3572, %v3562
      %v3574 = vadd.s32 %v3573, %v3564
      %v3575 = vshrl.u32 %v3574, 4
      %v3576 = vmul.u32 %v3575, 18
      %v3577 = vsub.s32 %v3553, %v3576
      %v3578 = vsub.s32 0, %v3577
      %v3579 = vsel %vm3551, %v3578, %v3577
      %vm3580 = vcmp.lt.s32.totalorder %v3040, 0
      %v3581 = vsub.s32 0, %v3040
      %v3582 = vsel %vm3580, %v3581, %v3040
      %v3583 = vand.u32 %v3582, 65535
      %v3584 = vshrl.u32 %v3582, 16
      %v3586 = vmul.u32 %v3583, 14564
      %v3587 = vmul.u32 %v3583, 58254
      %v3588 = vmul.u32 %v3584, 14564
      %v3589 = vmul.u32 %v3584, 58254
      %v3590 = vshll.u32 %v3587, 16
      %v3591 = vshrl.u32 %v3587, 16
      %v3592 = vshll.u32 %v3588, 16
      %v3593 = vshrl.u32 %v3588, 16
      %vm3594 = vc.u32 %v3586, %v3590
      %v3595 = vsel %vm3594, 1, 0
      %v3596 = vadd.s32 %v3586, %v3590
      %v3597 = vadd.s32 %v3589, %v3595
      %vm3598 = vc.u32 %v3596, %v3592
      %v3599 = vsel %vm3598, 1, 0
      %v3600 = vadd.s32 %v3596, %v3592
      %v3601 = vadd.s32 %v3597, %v3599
      %v3602 = vadd.s32 %v3601, %v3591
      %v3603 = vadd.s32 %v3602, %v3593
      %v3604 = vshrl.u32 %v3603, 4
      %v3605 = vmul.u32 %v3604, 18
      %v3606 = vsub.s32 %v3582, %v3605
      %v3607 = vsub.s32 0, %v3606
      %v3608 = vsel %vm3580, %v3607, %v3606
      %vm3609 = vcmp.lt.s32.totalorder %v3041, 0
      %v3610 = vsub.s32 0, %v3041
      %v3611 = vsel %vm3609, %v3610, %v3041
      %v3612 = vand.u32 %v3611, 65535
      %v3613 = vshrl.u32 %v3611, 16
      %v3615 = vmul.u32 %v3612, 14564
      %v3616 = vmul.u32 %v3612, 58254
      %v3617 = vmul.u32 %v3613, 14564
      %v3618 = vmul.u32 %v3613, 58254
      %v3619 = vshll.u32 %v3616, 16
      %v3620 = vshrl.u32 %v3616, 16
      %v3621 = vshll.u32 %v3617, 16
      %v3622 = vshrl.u32 %v3617, 16
      %vm3623 = vc.u32 %v3615, %v3619
      %v3624 = vsel %vm3623, 1, 0
      %v3625 = vadd.s32 %v3615, %v3619
      %v3626 = vadd.s32 %v3618, %v3624
      %vm3627 = vc.u32 %v3625, %v3621
      %v3628 = vsel %vm3627, 1, 0
      %v3629 = vadd.s32 %v3625, %v3621
      %v3630 = vadd.s32 %v3626, %v3628
      %v3631 = vadd.s32 %v3630, %v3620
      %v3632 = vadd.s32 %v3631, %v3622
      %v3633 = vshrl.u32 %v3632, 4
      %v3634 = vmul.u32 %v3633, 18
      %v3635 = vsub.s32 %v3611, %v3634
      %v3636 = vsub.s32 0, %v3635
      %v3637 = vsel %vm3609, %v3636, %v3635
      %vm3638 = vcmp.lt.s32.totalorder %v3042, 0
      %v3639 = vsub.s32 0, %v3042
      %v3640 = vsel %vm3638, %v3639, %v3042
      %v3641 = vand.u32 %v3640, 65535
      %v3642 = vshrl.u32 %v3640, 16
      %v3644 = vmul.u32 %v3641, 14564
      %v3645 = vmul.u32 %v3641, 58254
      %v3646 = vmul.u32 %v3642, 14564
      %v3647 = vmul.u32 %v3642, 58254
      %v3648 = vshll.u32 %v3645, 16
      %v3649 = vshrl.u32 %v3645, 16
      %v3650 = vshll.u32 %v3646, 16
      %v3651 = vshrl.u32 %v3646, 16
      %vm3652 = vc.u32 %v3644, %v3648
      %v3653 = vsel %vm3652, 1, 0
      %v3654 = vadd.s32 %v3644, %v3648
      %v3655 = vadd.s32 %v3647, %v3653
      %vm3656 = vc.u32 %v3654, %v3650
      %v3657 = vsel %vm3656, 1, 0
      %v3658 = vadd.s32 %v3654, %v3650
      %v3659 = vadd.s32 %v3655, %v3657
      %v3660 = vadd.s32 %v3659, %v3649
      %v3661 = vadd.s32 %v3660, %v3651
      %v3662 = vshrl.u32 %v3661, 4
      %v3663 = vmul.u32 %v3662, 18
      %v3664 = vsub.s32 %v3640, %v3663
      %v3665 = vsub.s32 0, %v3664
      %v3666 = vsel %vm3638, %v3665, %v3664
      %vm3667 = vcmp.lt.s32.totalorder %v3043, 0
      %v3668 = vsub.s32 0, %v3043
      %v3669 = vsel %vm3667, %v3668, %v3043
      %v3670 = vand.u32 %v3669, 65535
      %v3671 = vshrl.u32 %v3669, 16
      %v3673 = vmul.u32 %v3670, 14564
      %v3674 = vmul.u32 %v3670, 58254
      %v3675 = vmul.u32 %v3671, 14564
      %v3676 = vmul.u32 %v3671, 58254
      %v3677 = vshll.u32 %v3674, 16
      %v3678 = vshrl.u32 %v3674, 16
      %v3679 = vshll.u32 %v3675, 16
      %v3680 = vshrl.u32 %v3675, 16
      %vm3681 = vc.u32 %v3673, %v3677
      %v3682 = vsel %vm3681, 1, 0
      %v3683 = vadd.s32 %v3673, %v3677
      %v3684 = vadd.s32 %v3676, %v3682
      %vm3685 = vc.u32 %v3683, %v3679
      %v3686 = vsel %vm3685, 1, 0
      %v3687 = vadd.s32 %v3683, %v3679
      %v3688 = vadd.s32 %v3684, %v3686
      %v3689 = vadd.s32 %v3688, %v3678
      %v3690 = vadd.s32 %v3689, %v3680
      %v3691 = vshrl.u32 %v3690, 4
      %v3692 = vmul.u32 %v3691, 18
      %v3693 = vsub.s32 %v3669, %v3692
      %v3694 = vsub.s32 0, %v3693
      %v3695 = vsel %vm3667, %v3694, %v3693
      %vm3696 = vcmp.lt.s32.totalorder %v3044, 0
      %v3697 = vsub.s32 0, %v3044
      %v3698 = vsel %vm3696, %v3697, %v3044
      %v3699 = vand.u32 %v3698, 65535
      %v3700 = vshrl.u32 %v3698, 16
      %v3702 = vmul.u32 %v3699, 14564
      %v3703 = vmul.u32 %v3699, 58254
      %v3704 = vmul.u32 %v3700, 14564
      %v3705 = vmul.u32 %v3700, 58254
      %v3706 = vshll.u32 %v3703, 16
      %v3707 = vshrl.u32 %v3703, 16
      %v3708 = vshll.u32 %v3704, 16
      %v3709 = vshrl.u32 %v3704, 16
      %vm3710 = vc.u32 %v3702, %v3706
      %v3711 = vsel %vm3710, 1, 0
      %v3712 = vadd.s32 %v3702, %v3706
      %v3713 = vadd.s32 %v3705, %v3711
      %vm3714 = vc.u32 %v3712, %v3708
      %v3715 = vsel %vm3714, 1, 0
      %v3716 = vadd.s32 %v3712, %v3708
      %v3717 = vadd.s32 %v3713, %v3715
      %v3718 = vadd.s32 %v3717, %v3707
      %v3719 = vadd.s32 %v3718, %v3709
      %v3720 = vshrl.u32 %v3719, 4
      %v3721 = vmul.u32 %v3720, 18
      %v3722 = vsub.s32 %v3698, %v3721
      %v3723 = vsub.s32 0, %v3722
      %v3724 = vsel %vm3696, %v3723, %v3722
      %vm3725 = vcmp.lt.s32.totalorder %v3045, 0
      %v3726 = vsub.s32 0, %v3045
      %v3727 = vsel %vm3725, %v3726, %v3045
      %v3728 = vand.u32 %v3727, 65535
      %v3729 = vshrl.u32 %v3727, 16
      %v3731 = vmul.u32 %v3728, 14564
      %v3732 = vmul.u32 %v3728, 58254
      %v3733 = vmul.u32 %v3729, 14564
      %v3734 = vmul.u32 %v3729, 58254
      %v3735 = vshll.u32 %v3732, 16
      %v3736 = vshrl.u32 %v3732, 16
      %v3737 = vshll.u32 %v3733, 16
      %v3738 = vshrl.u32 %v3733, 16
      %vm3739 = vc.u32 %v3731, %v3735
      %v3740 = vsel %vm3739, 1, 0
      %v3741 = vadd.s32 %v3731, %v3735
      %v3742 = vadd.s32 %v3734, %v3740
      %vm3743 = vc.u32 %v3741, %v3737
      %v3744 = vsel %vm3743, 1, 0
      %v3745 = vadd.s32 %v3741, %v3737
      %v3746 = vadd.s32 %v3742, %v3744
      %v3747 = vadd.s32 %v3746, %v3736
      %v3748 = vadd.s32 %v3747, %v3738
      %v3749 = vshrl.u32 %v3748, 4
      %v3750 = vmul.u32 %v3749, 18
      %v3751 = vsub.s32 %v3727, %v3750
      %v3752 = vsub.s32 0, %v3751
      %v3753 = vsel %vm3725, %v3752, %v3751
      %vm3754 = vcmp.lt.s32.totalorder %v3046, 0
      %v3755 = vsub.s32 0, %v3046
      %v3756 = vsel %vm3754, %v3755, %v3046
      %v3757 = vand.u32 %v3756, 65535
      %v3758 = vshrl.u32 %v3756, 16
      %v3760 = vmul.u32 %v3757, 14564
      %v3761 = vmul.u32 %v3757, 58254
      %v3762 = vmul.u32 %v3758, 14564
      %v3763 = vmul.u32 %v3758, 58254
      %v3764 = vshll.u32 %v3761, 16
      %v3765 = vshrl.u32 %v3761, 16
      %v3766 = vshll.u32 %v3762, 16
      %v3767 = vshrl.u32 %v3762, 16
      %vm3768 = vc.u32 %v3760, %v3764
      %v3769 = vsel %vm3768, 1, 0
      %v3770 = vadd.s32 %v3760, %v3764
      %v3771 = vadd.s32 %v3763, %v3769
      %vm3772 = vc.u32 %v3770, %v3766
      %v3773 = vsel %vm3772, 1, 0
      %v3774 = vadd.s32 %v3770, %v3766
      %v3775 = vadd.s32 %v3771, %v3773
      %v3776 = vadd.s32 %v3775, %v3765
      %v3777 = vadd.s32 %v3776, %v3767
      %v3778 = vshrl.u32 %v3777, 4
      %v3779 = vmul.u32 %v3778, 18
      %v3780 = vsub.s32 %v3756, %v3779
      %v3781 = vsub.s32 0, %v3780
      %v3782 = vsel %vm3754, %v3781, %v3780
      %vm3783 = vcmp.lt.s32.totalorder %v3047, 0
      %v3784 = vsub.s32 0, %v3047
      %v3785 = vsel %vm3783, %v3784, %v3047
      %v3786 = vand.u32 %v3785, 65535
      %v3787 = vshrl.u32 %v3785, 16
      %v3789 = vmul.u32 %v3786, 14564
      %v3790 = vmul.u32 %v3786, 58254
      %v3791 = vmul.u32 %v3787, 14564
      %v3792 = vmul.u32 %v3787, 58254
      %v3793 = vshll.u32 %v3790, 16
      %v3794 = vshrl.u32 %v3790, 16
      %v3795 = vshll.u32 %v3791, 16
      %v3796 = vshrl.u32 %v3791, 16
      %vm3797 = vc.u32 %v3789, %v3793
      %v3798 = vsel %vm3797, 1, 0
      %v3799 = vadd.s32 %v3789, %v3793
      %v3800 = vadd.s32 %v3792, %v3798
      %vm3801 = vc.u32 %v3799, %v3795
      %v3802 = vsel %vm3801, 1, 0
      %v3803 = vadd.s32 %v3799, %v3795
      %v3804 = vadd.s32 %v3800, %v3802
      %v3805 = vadd.s32 %v3804, %v3794
      %v3806 = vadd.s32 %v3805, %v3796
      %v3807 = vshrl.u32 %v3806, 4
      %v3808 = vmul.u32 %v3807, 18
      %v3809 = vsub.s32 %v3785, %v3808
      %v3810 = vsub.s32 0, %v3809
      %v3811 = vsel %vm3783, %v3810, %v3809
      %vm3812 = vcmp.lt.s32.totalorder %v3048, 0
      %v3813 = vsub.s32 0, %v3048
      %v3814 = vsel %vm3812, %v3813, %v3048
      %v3815 = vand.u32 %v3814, 65535
      %v3816 = vshrl.u32 %v3814, 16
      %v3818 = vmul.u32 %v3815, 14564
      %v3819 = vmul.u32 %v3815, 58254
      %v3820 = vmul.u32 %v3816, 14564
      %v3821 = vmul.u32 %v3816, 58254
      %v3822 = vshll.u32 %v3819, 16
      %v3823 = vshrl.u32 %v3819, 16
      %v3824 = vshll.u32 %v3820, 16
      %v3825 = vshrl.u32 %v3820, 16
      %vm3826 = vc.u32 %v3818, %v3822
      %v3827 = vsel %vm3826, 1, 0
      %v3828 = vadd.s32 %v3818, %v3822
      %v3829 = vadd.s32 %v3821, %v3827
      %vm3830 = vc.u32 %v3828, %v3824
      %v3831 = vsel %vm3830, 1, 0
      %v3832 = vadd.s32 %v3828, %v3824
      %v3833 = vadd.s32 %v3829, %v3831
      %v3834 = vadd.s32 %v3833, %v3823
      %v3835 = vadd.s32 %v3834, %v3825
      %v3836 = vshrl.u32 %v3835, 4
      %v3837 = vmul.u32 %v3836, 18
      %v3838 = vsub.s32 %v3814, %v3837
      %v3839 = vsub.s32 0, %v3838
      %v3840 = vsel %vm3812, %v3839, %v3838
      %vm3841 = vcmp.lt.s32.totalorder %v3049, 0
      %v3842 = vsub.s32 0, %v3049
      %v3843 = vsel %vm3841, %v3842, %v3049
      %v3844 = vand.u32 %v3843, 65535
      %v3845 = vshrl.u32 %v3843, 16
      %v3847 = vmul.u32 %v3844, 14564
      %v3848 = vmul.u32 %v3844, 58254
      %v3849 = vmul.u32 %v3845, 14564
      %v3850 = vmul.u32 %v3845, 58254
      %v3851 = vshll.u32 %v3848, 16
      %v3852 = vshrl.u32 %v3848, 16
      %v3853 = vshll.u32 %v3849, 16
      %v3854 = vshrl.u32 %v3849, 16
      %vm3855 = vc.u32 %v3847, %v3851
      %v3856 = vsel %vm3855, 1, 0
      %v3857 = vadd.s32 %v3847, %v3851
      %v3858 = vadd.s32 %v3850, %v3856
      %vm3859 = vc.u32 %v3857, %v3853
      %v3860 = vsel %vm3859, 1, 0
      %v3861 = vadd.s32 %v3857, %v3853
      %v3862 = vadd.s32 %v3858, %v3860
      %v3863 = vadd.s32 %v3862, %v3852
      %v3864 = vadd.s32 %v3863, %v3854
      %v3865 = vshrl.u32 %v3864, 4
      %v3866 = vmul.u32 %v3865, 18
      %v3867 = vsub.s32 %v3843, %v3866
      %v3868 = vsub.s32 0, %v3867
      %v3869 = vsel %vm3841, %v3868, %v3867
      %vm3870 = vcmp.lt.s32.totalorder %v3050, 0
      %v3871 = vsub.s32 0, %v3050
      %v3872 = vsel %vm3870, %v3871, %v3050
      %v3873 = vand.u32 %v3872, 65535
      %v3874 = vshrl.u32 %v3872, 16
      %v3876 = vmul.u32 %v3873, 14564
      %v3877 = vmul.u32 %v3873, 58254
      %v3878 = vmul.u32 %v3874, 14564
      %v3879 = vmul.u32 %v3874, 58254
      %v3880 = vshll.u32 %v3877, 16
      %v3881 = vshrl.u32 %v3877, 16
      %v3882 = vshll.u32 %v3878, 16
      %v3883 = vshrl.u32 %v3878, 16
      %vm3884 = vc.u32 %v3876, %v3880
      %v3885 = vsel %vm3884, 1, 0
      %v3886 = vadd.s32 %v3876, %v3880
      %v3887 = vadd.s32 %v3879, %v3885
      %vm3888 = vc.u32 %v3886, %v3882
      %v3889 = vsel %vm3888, 1, 0
      %v3890 = vadd.s32 %v3886, %v3882
      %v3891 = vadd.s32 %v3887, %v3889
      %v3892 = vadd.s32 %v3891, %v3881
      %v3893 = vadd.s32 %v3892, %v3883
      %v3894 = vshrl.u32 %v3893, 4
      %v3895 = vmul.u32 %v3894, 18
      %v3896 = vsub.s32 %v3872, %v3895
      %v3897 = vsub.s32 0, %v3896
      %v3898 = vsel %vm3870, %v3897, %v3896
      %vm3899 = vcmp.lt.s32.totalorder %v3051, 0
      %v3900 = vsub.s32 0, %v3051
      %v3901 = vsel %vm3899, %v3900, %v3051
      %v3902 = vand.u32 %v3901, 65535
      %v3903 = vshrl.u32 %v3901, 16
      %v3905 = vmul.u32 %v3902, 14564
      %v3906 = vmul.u32 %v3902, 58254
      %v3907 = vmul.u32 %v3903, 14564
      %v3908 = vmul.u32 %v3903, 58254
      %v3909 = vshll.u32 %v3906, 16
      %v3910 = vshrl.u32 %v3906, 16
      %v3911 = vshll.u32 %v3907, 16
      %v3912 = vshrl.u32 %v3907, 16
      %vm3913 = vc.u32 %v3905, %v3909
      %v3914 = vsel %vm3913, 1, 0
      %v3915 = vadd.s32 %v3905, %v3909
      %v3916 = vadd.s32 %v3908, %v3914
      %vm3917 = vc.u32 %v3915, %v3911
      %v3918 = vsel %vm3917, 1, 0
      %v3919 = vadd.s32 %v3915, %v3911
      %v3920 = vadd.s32 %v3916, %v3918
      %v3921 = vadd.s32 %v3920, %v3910
      %v3922 = vadd.s32 %v3921, %v3912
      %v3923 = vshrl.u32 %v3922, 4
      %v3924 = vmul.u32 %v3923, 18
      %v3925 = vsub.s32 %v3901, %v3924
      %v3926 = vsub.s32 0, %v3925
      %v3927 = vsel %vm3899, %v3926, %v3925
      %vm3928 = vcmp.lt.s32.totalorder %v3052, 0
      %v3929 = vsub.s32 0, %v3052
      %v3930 = vsel %vm3928, %v3929, %v3052
      %v3931 = vand.u32 %v3930, 65535
      %v3932 = vshrl.u32 %v3930, 16
      %v3934 = vmul.u32 %v3931, 14564
      %v3935 = vmul.u32 %v3931, 58254
      %v3936 = vmul.u32 %v3932, 14564
      %v3937 = vmul.u32 %v3932, 58254
      %v3938 = vshll.u32 %v3935, 16
      %v3939 = vshrl.u32 %v3935, 16
      %v3940 = vshll.u32 %v3936, 16
      %v3941 = vshrl.u32 %v3936, 16
      %vm3942 = vc.u32 %v3934, %v3938
      %v3943 = vsel %vm3942, 1, 0
      %v3944 = vadd.s32 %v3934, %v3938
      %v3945 = vadd.s32 %v3937, %v3943
      %vm3946 = vc.u32 %v3944, %v3940
      %v3947 = vsel %vm3946, 1, 0
      %v3948 = vadd.s32 %v3944, %v3940
      %v3949 = vadd.s32 %v3945, %v3947
      %v3950 = vadd.s32 %v3949, %v3939
      %v3951 = vadd.s32 %v3950, %v3941
      %v3952 = vshrl.u32 %v3951, 4
      %v3953 = vmul.u32 %v3952, 18
      %v3954 = vsub.s32 %v3930, %v3953
      %v3955 = vsub.s32 0, %v3954
      %v3956 = vsel %vm3928, %v3955, %v3954
      %vm3957 = vcmp.lt.s32.totalorder %v3053, 0
      %v3958 = vsub.s32 0, %v3053
      %v3959 = vsel %vm3957, %v3958, %v3053
      %v3960 = vand.u32 %v3959, 65535
      %v3961 = vshrl.u32 %v3959, 16
      %v3963 = vmul.u32 %v3960, 14564
      %v3964 = vmul.u32 %v3960, 58254
      %v3965 = vmul.u32 %v3961, 14564
      %v3966 = vmul.u32 %v3961, 58254
      %v3967 = vshll.u32 %v3964, 16
      %v3968 = vshrl.u32 %v3964, 16
      %v3969 = vshll.u32 %v3965, 16
      %v3970 = vshrl.u32 %v3965, 16
      %vm3971 = vc.u32 %v3963, %v3967
      %v3972 = vsel %vm3971, 1, 0
      %v3973 = vadd.s32 %v3963, %v3967
      %v3974 = vadd.s32 %v3966, %v3972
      %vm3975 = vc.u32 %v3973, %v3969
      %v3976 = vsel %vm3975, 1, 0
      %v3977 = vadd.s32 %v3973, %v3969
      %v3978 = vadd.s32 %v3974, %v3976
      %v3979 = vadd.s32 %v3978, %v3968
      %v3980 = vadd.s32 %v3979, %v3970
      %v3981 = vshrl.u32 %v3980, 4
      %v3982 = vmul.u32 %v3981, 18
      %v3983 = vsub.s32 %v3959, %v3982
      %v3984 = vsub.s32 0, %v3983
      %v3985 = vsel %vm3957, %v3984, %v3983
      %vm3986 = vcmp.lt.s32.totalorder %v3054, 0
      %v3987 = vsub.s32 0, %v3054
      %v3988 = vsel %vm3986, %v3987, %v3054
      %v3989 = vand.u32 %v3988, 65535
      %v3990 = vshrl.u32 %v3988, 16
      %v3992 = vmul.u32 %v3989, 14564
      %v3993 = vmul.u32 %v3989, 58254
      %v3994 = vmul.u32 %v3990, 14564
      %v3995 = vmul.u32 %v3990, 58254
      %v3996 = vshll.u32 %v3993, 16
      %v3997 = vshrl.u32 %v3993, 16
      %v3998 = vshll.u32 %v3994, 16
      %v3999 = vshrl.u32 %v3994, 16
      %vm4000 = vc.u32 %v3992, %v3996
      %v4001 = vsel %vm4000, 1, 0
      %v4002 = vadd.s32 %v3992, %v3996
      %v4003 = vadd.s32 %v3995, %v4001
      %vm4004 = vc.u32 %v4002, %v3998
      %v4005 = vsel %vm4004, 1, 0
      %v4006 = vadd.s32 %v4002, %v3998
      %v4007 = vadd.s32 %v4003, %v4005
      %v4008 = vadd.s32 %v4007, %v3997
      %v4009 = vadd.s32 %v4008, %v3999
      %v4010 = vshrl.u32 %v4009, 4
      %v4011 = vmul.u32 %v4010, 18
      %v4012 = vsub.s32 %v3988, %v4011
      %v4013 = vsub.s32 0, %v4012
      %v4014 = vsel %vm3986, %v4013, %v4012
      %vm4015 = vcmp.lt.s32.totalorder %v3055, 0
      %v4016 = vsub.s32 0, %v3055
      %v4017 = vsel %vm4015, %v4016, %v3055
      %v4018 = vand.u32 %v4017, 65535
      %v4019 = vshrl.u32 %v4017, 16
      %v4021 = vmul.u32 %v4018, 14564
      %v4022 = vmul.u32 %v4018, 58254
      %v4023 = vmul.u32 %v4019, 14564
      %v4024 = vmul.u32 %v4019, 58254
      %v4025 = vshll.u32 %v4022, 16
      %v4026 = vshrl.u32 %v4022, 16
      %v4027 = vshll.u32 %v4023, 16
      %v4028 = vshrl.u32 %v4023, 16
      %vm4029 = vc.u32 %v4021, %v4025
      %v4030 = vsel %vm4029, 1, 0
      %v4031 = vadd.s32 %v4021, %v4025
      %v4032 = vadd.s32 %v4024, %v4030
      %vm4033 = vc.u32 %v4031, %v4027
      %v4034 = vsel %vm4033, 1, 0
      %v4035 = vadd.s32 %v4031, %v4027
      %v4036 = vadd.s32 %v4032, %v4034
      %v4037 = vadd.s32 %v4036, %v4026
      %v4038 = vadd.s32 %v4037, %v4028
      %v4039 = vshrl.u32 %v4038, 4
      %v4040 = vmul.u32 %v4039, 18
      %v4041 = vsub.s32 %v4017, %v4040
      %v4042 = vsub.s32 0, %v4041
      %v4043 = vsel %vm4015, %v4042, %v4041
      %vm4044 = vcmp.lt.s32.totalorder %v3056, 0
      %v4045 = vsub.s32 0, %v3056
      %v4046 = vsel %vm4044, %v4045, %v3056
      %v4047 = vand.u32 %v4046, 65535
      %v4048 = vshrl.u32 %v4046, 16
      %v4050 = vmul.u32 %v4047, 14564
      %v4051 = vmul.u32 %v4047, 58254
      %v4052 = vmul.u32 %v4048, 14564
      %v4053 = vmul.u32 %v4048, 58254
      %v4054 = vshll.u32 %v4051, 16
      %v4055 = vshrl.u32 %v4051, 16
      %v4056 = vshll.u32 %v4052, 16
      %v4057 = vshrl.u32 %v4052, 16
      %vm4058 = vc.u32 %v4050, %v4054
      %v4059 = vsel %vm4058, 1, 0
      %v4060 = vadd.s32 %v4050, %v4054
      %v4061 = vadd.s32 %v4053, %v4059
      %vm4062 = vc.u32 %v4060, %v4056
      %v4063 = vsel %vm4062, 1, 0
      %v4064 = vadd.s32 %v4060, %v4056
      %v4065 = vadd.s32 %v4061, %v4063
      %v4066 = vadd.s32 %v4065, %v4055
      %v4067 = vadd.s32 %v4066, %v4057
      %v4068 = vshrl.u32 %v4067, 4
      %v4069 = vmul.u32 %v4068, 18
      %v4070 = vsub.s32 %v4046, %v4069
      %v4071 = vsub.s32 0, %v4070
      %v4072 = vsel %vm4044, %v4071, %v4070
      %vm4073 = vcmp.lt.s32.totalorder %v3057, 0
      %v4074 = vsub.s32 0, %v3057
      %v4075 = vsel %vm4073, %v4074, %v3057
      %v4076 = vand.u32 %v4075, 65535
      %v4077 = vshrl.u32 %v4075, 16
      %v4079 = vmul.u32 %v4076, 14564
      %v4080 = vmul.u32 %v4076, 58254
      %v4081 = vmul.u32 %v4077, 14564
      %v4082 = vmul.u32 %v4077, 58254
      %v4083 = vshll.u32 %v4080, 16
      %v4084 = vshrl.u32 %v4080, 16
      %v4085 = vshll.u32 %v4081, 16
      %v4086 = vshrl.u32 %v4081, 16
      %vm4087 = vc.u32 %v4079, %v4083
      %v4088 = vsel %vm4087, 1, 0
      %v4089 = vadd.s32 %v4079, %v4083
      %v4090 = vadd.s32 %v4082, %v4088
      %vm4091 = vc.u32 %v4089, %v4085
      %v4092 = vsel %vm4091, 1, 0
      %v4093 = vadd.s32 %v4089, %v4085
      %v4094 = vadd.s32 %v4090, %v4092
      %v4095 = vadd.s32 %v4094, %v4084
      %v4096 = vadd.s32 %v4095, %v4086
      %v4097 = vshrl.u32 %v4096, 4
      %v4098 = vmul.u32 %v4097, 18
      %v4099 = vsub.s32 %v4075, %v4098
      %v4100 = vsub.s32 0, %v4099
      %v4101 = vsel %vm4073, %v4100, %v4099
      %vm4102 = vcmp.ne.s32.totalorder %v3086, 0
      %vm4103 = vcmp.ne.s32.totalorder %v3115, 0
      %vm4104 = vcmp.ne.s32.totalorder %v3144, 0
      %vm4105 = vcmp.ne.s32.totalorder %v3173, 0
      %vm4106 = vcmp.ne.s32.totalorder %v3202, 0
      %vm4107 = vcmp.ne.s32.totalorder %v3231, 0
      %vm4108 = vcmp.ne.s32.totalorder %v3260, 0
      %vm4109 = vcmp.ne.s32.totalorder %v3289, 0
      %vm4110 = vcmp.ne.s32.totalorder %v3318, 0
      %vm4111 = vcmp.ne.s32.totalorder %v3347, 0
      %vm4112 = vcmp.ne.s32.totalorder %v3376, 0
      %vm4113 = vcmp.ne.s32.totalorder %v3405, 0
      %vm4114 = vcmp.ne.s32.totalorder %v3434, 0
      %vm4115 = vcmp.ne.s32.totalorder %v3463, 0
      %vm4116 = vcmp.ne.s32.totalorder %v3492, 0
      %vm4117 = vcmp.ne.s32.totalorder %v3521, 0
      %vm4118 = vcmp.ne.s32.totalorder %v3550, 0
      %vm4119 = vcmp.ne.s32.totalorder %v3579, 0
      %vm4120 = vcmp.ne.s32.totalorder %v3608, 0
      %vm4121 = vcmp.ne.s32.totalorder %v3637, 0
      %vm4122 = vcmp.ne.s32.totalorder %v3666, 0
      %vm4123 = vcmp.ne.s32.totalorder %v3695, 0
      %vm4124 = vcmp.ne.s32.totalorder %v3724, 0
      %vm4125 = vcmp.ne.s32.totalorder %v3753, 0
      %vm4126 = vcmp.ne.s32.totalorder %v3782, 0
      %vm4127 = vcmp.ne.s32.totalorder %v3811, 0
      %vm4128 = vcmp.ne.s32.totalorder %v3840, 0
      %vm4129 = vcmp.ne.s32.totalorder %v3869, 0
      %vm4130 = vcmp.ne.s32.totalorder %v3898, 0
      %vm4131 = vcmp.ne.s32.totalorder %v3927, 0
      %vm4132 = vcmp.ne.s32.totalorder %v3956, 0
      %vm4133 = vcmp.ne.s32.totalorder %v3985, 0
      %vm4134 = vcmp.ne.s32.totalorder %v4014, 0
      %vm4135 = vcmp.ne.s32.totalorder %v4043, 0
      %vm4136 = vcmp.ne.s32.totalorder %v4072, 0
      %vm4137 = vcmp.ne.s32.totalorder %v4101, 0
      %vm4138 = vcmp.lt.s32.totalorder %v3086, 0
      %vm4139 = vcmp.lt.s32.totalorder %v3115, 0
      %vm4140 = vcmp.lt.s32.totalorder %v3144, 0
      %vm4141 = vcmp.lt.s32.totalorder %v3173, 0
      %vm4142 = vcmp.lt.s32.totalorder %v3202, 0
      %vm4143 = vcmp.lt.s32.totalorder %v3231, 0
      %vm4144 = vcmp.lt.s32.totalorder %v3260, 0
      %vm4145 = vcmp.lt.s32.totalorder %v3289, 0
      %vm4146 = vcmp.lt.s32.totalorder %v3318, 0
      %vm4147 = vcmp.lt.s32.totalorder %v3347, 0
      %vm4148 = vcmp.lt.s32.totalorder %v3376, 0
      %vm4149 = vcmp.lt.s32.totalorder %v3405, 0
      %vm4150 = vcmp.lt.s32.totalorder %v3434, 0
      %vm4151 = vcmp.lt.s32.totalorder %v3463, 0
      %vm4152 = vcmp.lt.s32.totalorder %v3492, 0
      %vm4153 = vcmp.lt.s32.totalorder %v3521, 0
      %vm4154 = vcmp.lt.s32.totalorder %v3550, 0
      %vm4155 = vcmp.lt.s32.totalorder %v3579, 0
      %vm4156 = vcmp.lt.s32.totalorder %v3608, 0
      %vm4157 = vcmp.lt.s32.totalorder %v3637, 0
      %vm4158 = vcmp.lt.s32.totalorder %v3666, 0
      %vm4159 = vcmp.lt.s32.totalorder %v3695, 0
      %vm4160 = vcmp.lt.s32.totalorder %v3724, 0
      %vm4161 = vcmp.lt.s32.totalorder %v3753, 0
      %vm4162 = vcmp.lt.s32.totalorder %v3782, 0
      %vm4163 = vcmp.lt.s32.totalorder %v3811, 0
      %vm4164 = vcmp.lt.s32.totalorder %v3840, 0
      %vm4165 = vcmp.lt.s32.totalorder %v3869, 0
      %vm4166 = vcmp.lt.s32.totalorder %v3898, 0
      %vm4167 = vcmp.lt.s32.totalorder %v3927, 0
      %vm4168 = vcmp.lt.s32.totalorder %v3956, 0
      %vm4169 = vcmp.lt.s32.totalorder %v3985, 0
      %vm4170 = vcmp.lt.s32.totalorder %v4014, 0
      %vm4171 = vcmp.lt.s32.totalorder %v4043, 0
      %vm4172 = vcmp.lt.s32.totalorder %v4072, 0
      %vm4173 = vcmp.lt.s32.totalorder %v4101, 0
      %vm4174 = vmand %vm4138, %vm4102
      %vm4175 = vmand %vm4139, %vm4103
      %vm4176 = vmand %vm4140, %vm4104
      %vm4177 = vmand %vm4141, %vm4105
      %vm4178 = vmand %vm4142, %vm4106
      %vm4179 = vmand %vm4143, %vm4107
      %vm4180 = vmand %vm4144, %vm4108
      %vm4181 = vmand %vm4145, %vm4109
      %vm4182 = vmand %vm4146, %vm4110
      %vm4183 = vmand %vm4147, %vm4111
      %vm4184 = vmand %vm4148, %vm4112
      %vm4185 = vmand %vm4149, %vm4113
      %vm4186 = vmand %vm4150, %vm4114
      %vm4187 = vmand %vm4151, %vm4115
      %vm4188 = vmand %vm4152, %vm4116
      %vm4189 = vmand %vm4153, %vm4117
      %vm4190 = vmand %vm4154, %vm4118
      %vm4191 = vmand %vm4155, %vm4119
      %vm4192 = vmand %vm4156, %vm4120
      %vm4193 = vmand %vm4157, %vm4121
      %vm4194 = vmand %vm4158, %vm4122
      %vm4195 = vmand %vm4159, %vm4123
      %vm4196 = vmand %vm4160, %vm4124
      %vm4197 = vmand %vm4161, %vm4125
      %vm4198 = vmand %vm4162, %vm4126
      %vm4199 = vmand %vm4163, %vm4127
      %vm4200 = vmand %vm4164, %vm4128
      %vm4201 = vmand %vm4165, %vm4129
      %vm4202 = vmand %vm4166, %vm4130
      %vm4203 = vmand %vm4167, %vm4131
      %vm4204 = vmand %vm4168, %vm4132
      %vm4205 = vmand %vm4169, %vm4133
      %vm4206 = vmand %vm4170, %vm4134
      %vm4207 = vmand %vm4171, %vm4135
      %vm4208 = vmand %vm4172, %vm4136
      %vm4209 = vmand %vm4173, %vm4137
      %v4210 = vadd.s32 %v3086, 18
      %v4211 = vadd.s32 %v3115, 18
      %v4212 = vadd.s32 %v3144, 18
      %v4213 = vadd.s32 %v3173, 18
      %v4214 = vadd.s32 %v3202, 18
      %v4215 = vadd.s32 %v3231, 18
      %v4216 = vadd.s32 %v3260, 18
      %v4217 = vadd.s32 %v3289, 18
      %v4218 = vadd.s32 %v3318, 18
      %v4219 = vadd.s32 %v3347, 18
      %v4220 = vadd.s32 %v3376, 18
      %v4221 = vadd.s32 %v3405, 18
      %v4222 = vadd.s32 %v3434, 18
      %v4223 = vadd.s32 %v3463, 18
      %v4224 = vadd.s32 %v3492, 18
      %v4225 = vadd.s32 %v3521, 18
      %v4226 = vadd.s32 %v3550, 18
      %v4227 = vadd.s32 %v3579, 18
      %v4228 = vadd.s32 %v3608, 18
      %v4229 = vadd.s32 %v3637, 18
      %v4230 = vadd.s32 %v3666, 18
      %v4231 = vadd.s32 %v3695, 18
      %v4232 = vadd.s32 %v3724, 18
      %v4233 = vadd.s32 %v3753, 18
      %v4234 = vadd.s32 %v3782, 18
      %v4235 = vadd.s32 %v3811, 18
      %v4236 = vadd.s32 %v3840, 18
      %v4237 = vadd.s32 %v3869, 18
      %v4238 = vadd.s32 %v3898, 18
      %v4239 = vadd.s32 %v3927, 18
      %v4240 = vadd.s32 %v3956, 18
      %v4241 = vadd.s32 %v3985, 18
      %v4242 = vadd.s32 %v4014, 18
      %v4243 = vadd.s32 %v4043, 18
      %v4244 = vadd.s32 %v4072, 18
      %v4245 = vadd.s32 %v4101, 18
      %v4246 = vsel %vm4174, %v4210, %v3086
      %v4247 = vsel %vm4175, %v4211, %v3115
      %v4248 = vsel %vm4176, %v4212, %v3144
      %v4249 = vsel %vm4177, %v4213, %v3173
      %v4250 = vsel %vm4178, %v4214, %v3202
      %v4251 = vsel %vm4179, %v4215, %v3231
      %v4252 = vsel %vm4180, %v4216, %v3260
      %v4253 = vsel %vm4181, %v4217, %v3289
      %v4254 = vsel %vm4182, %v4218, %v3318
      %v4255 = vsel %vm4183, %v4219, %v3347
      %v4256 = vsel %vm4184, %v4220, %v3376
      %v4257 = vsel %vm4185, %v4221, %v3405
      %v4258 = vsel %vm4186, %v4222, %v3434
      %v4259 = vsel %vm4187, %v4223, %v3463
      %v4260 = vsel %vm4188, %v4224, %v3492
      %v4261 = vsel %vm4189, %v4225, %v3521
      %v4262 = vsel %vm4190, %v4226, %v3550
      %v4263 = vsel %vm4191, %v4227, %v3579
      %v4264 = vsel %vm4192, %v4228, %v3608
      %v4265 = vsel %vm4193, %v4229, %v3637
      %v4266 = vsel %vm4194, %v4230, %v3666
      %v4267 = vsel %vm4195, %v4231, %v3695
      %v4268 = vsel %vm4196, %v4232, %v3724
      %v4269 = vsel %vm4197, %v4233, %v3753
      %v4270 = vsel %vm4198, %v4234, %v3782
      %v4271 = vsel %vm4199, %v4235, %v3811
      %v4272 = vsel %vm4200, %v4236, %v3840
      %v4273 = vsel %vm4201, %v4237, %v3869
      %v4274 = vsel %vm4202, %v4238, %v3898
      %v4275 = vsel %vm4203, %v4239, %v3927
      %v4276 = vsel %vm4204, %v4240, %v3956
      %v4277 = vsel %vm4205, %v4241, %v3985
      %v4278 = vsel %vm4206, %v4242, %v4014
      %v4279 = vsel %vm4207, %v4243, %v4043
      %v4280 = vsel %vm4208, %v4244, %v4072
      %v4281 = vsel %vm4209, %v4245, %v4101
      %vm4282 = vcmp.lt.s32.totalorder %v4246, 16
      %vm4283 = vcmp.lt.s32.totalorder %v4247, 16
      %vm4284 = vcmp.lt.s32.totalorder %v4248, 16
      %vm4285 = vcmp.lt.s32.totalorder %v4249, 16
      %vm4286 = vcmp.lt.s32.totalorder %v4250, 16
      %vm4287 = vcmp.lt.s32.totalorder %v4251, 16
      %vm4288 = vcmp.lt.s32.totalorder %v4252, 16
      %vm4289 = vcmp.lt.s32.totalorder %v4253, 16
      %vm4290 = vcmp.lt.s32.totalorder %v4254, 16
      %vm4291 = vcmp.lt.s32.totalorder %v4255, 16
      %vm4292 = vcmp.lt.s32.totalorder %v4256, 16
      %vm4293 = vcmp.lt.s32.totalorder %v4257, 16
      %vm4294 = vcmp.lt.s32.totalorder %v4258, 16
      %vm4295 = vcmp.lt.s32.totalorder %v4259, 16
      %vm4296 = vcmp.lt.s32.totalorder %v4260, 16
      %vm4297 = vcmp.lt.s32.totalorder %v4261, 16
      %vm4298 = vcmp.lt.s32.totalorder %v4262, 16
      %vm4299 = vcmp.lt.s32.totalorder %v4263, 16
      %vm4300 = vcmp.lt.s32.totalorder %v4264, 16
      %vm4301 = vcmp.lt.s32.totalorder %v4265, 16
      %vm4302 = vcmp.lt.s32.totalorder %v4266, 16
      %vm4303 = vcmp.lt.s32.totalorder %v4267, 16
      %vm4304 = vcmp.lt.s32.totalorder %v4268, 16
      %vm4305 = vcmp.lt.s32.totalorder %v4269, 16
      %vm4306 = vcmp.lt.s32.totalorder %v4270, 16
      %vm4307 = vcmp.lt.s32.totalorder %v4271, 16
      %vm4308 = vcmp.lt.s32.totalorder %v4272, 16
      %vm4309 = vcmp.lt.s32.totalorder %v4273, 16
      %vm4310 = vcmp.lt.s32.totalorder %v4274, 16
      %vm4311 = vcmp.lt.s32.totalorder %v4275, 16
      %vm4312 = vcmp.lt.s32.totalorder %v4276, 16
      %vm4313 = vcmp.lt.s32.totalorder %v4277, 16
      %vm4314 = vcmp.lt.s32.totalorder %v4278, 16
      %vm4315 = vcmp.lt.s32.totalorder %v4279, 16
      %vm4316 = vcmp.lt.s32.totalorder %v4280, 16
      %vm4317 = vcmp.lt.s32.totalorder %v4281, 16
      %v4318 = vsel %vm4282, 1, 0
      %v4319 = vsel %vm4283, 1, 0
      %v4320 = vsel %vm4284, 1, 0
      %v4321 = vsel %vm4285, 1, 0
      %v4322 = vsel %vm4286, 1, 0
      %v4323 = vsel %vm4287, 1, 0
      %v4324 = vsel %vm4288, 1, 0
      %v4325 = vsel %vm4289, 1, 0
      %v4326 = vsel %vm4290, 1, 0
      %v4327 = vsel %vm4291, 1, 0
      %v4328 = vsel %vm4292, 1, 0
      %v4329 = vsel %vm4293, 1, 0
      %v4330 = vsel %vm4294, 1, 0
      %v4331 = vsel %vm4295, 1, 0
      %v4332 = vsel %vm4296, 1, 0
      %v4333 = vsel %vm4297, 1, 0
      %v4334 = vsel %vm4298, 1, 0
      %v4335 = vsel %vm4299, 1, 0
      %v4336 = vsel %vm4300, 1, 0
      %v4337 = vsel %vm4301, 1, 0
      %v4338 = vsel %vm4302, 1, 0
      %v4339 = vsel %vm4303, 1, 0
      %v4340 = vsel %vm4304, 1, 0
      %v4341 = vsel %vm4305, 1, 0
      %v4342 = vsel %vm4306, 1, 0
      %v4343 = vsel %vm4307, 1, 0
      %v4344 = vsel %vm4308, 1, 0
      %v4345 = vsel %vm4309, 1, 0
      %v4346 = vsel %vm4310, 1, 0
      %v4347 = vsel %vm4311, 1, 0
      %v4348 = vsel %vm4312, 1, 0
      %v4349 = vsel %vm4313, 1, 0
      %v4350 = vsel %vm4314, 1, 0
      %v4351 = vsel %vm4315, 1, 0
      %v4352 = vsel %vm4316, 1, 0
      %v4353 = vsel %vm4317, 1, 0
      %vm4354 = vcmp.eq.s32.totalorder %v4318, 1
      %vm4355 = vcmp.eq.s32.totalorder %v4319, 1
      %vm4356 = vcmp.eq.s32.totalorder %v4320, 1
      %vm4357 = vcmp.eq.s32.totalorder %v4321, 1
      %vm4358 = vcmp.eq.s32.totalorder %v4322, 1
      %vm4359 = vcmp.eq.s32.totalorder %v4323, 1
      %vm4360 = vcmp.eq.s32.totalorder %v4324, 1
      %vm4361 = vcmp.eq.s32.totalorder %v4325, 1
      %vm4362 = vcmp.eq.s32.totalorder %v4326, 1
      %vm4363 = vcmp.eq.s32.totalorder %v4327, 1
      %vm4364 = vcmp.eq.s32.totalorder %v4328, 1
      %vm4365 = vcmp.eq.s32.totalorder %v4329, 1
      %vm4366 = vcmp.eq.s32.totalorder %v4330, 1
      %vm4367 = vcmp.eq.s32.totalorder %v4331, 1
      %vm4368 = vcmp.eq.s32.totalorder %v4332, 1
      %vm4369 = vcmp.eq.s32.totalorder %v4333, 1
      %vm4370 = vcmp.eq.s32.totalorder %v4334, 1
      %vm4371 = vcmp.eq.s32.totalorder %v4335, 1
      %vm4372 = vcmp.eq.s32.totalorder %v4336, 1
      %vm4373 = vcmp.eq.s32.totalorder %v4337, 1
      %vm4374 = vcmp.eq.s32.totalorder %v4338, 1
      %vm4375 = vcmp.eq.s32.totalorder %v4339, 1
      %vm4376 = vcmp.eq.s32.totalorder %v4340, 1
      %vm4377 = vcmp.eq.s32.totalorder %v4341, 1
      %vm4378 = vcmp.eq.s32.totalorder %v4342, 1
      %vm4379 = vcmp.eq.s32.totalorder %v4343, 1
      %vm4380 = vcmp.eq.s32.totalorder %v4344, 1
      %vm4381 = vcmp.eq.s32.totalorder %v4345, 1
      %vm4382 = vcmp.eq.s32.totalorder %v4346, 1
      %vm4383 = vcmp.eq.s32.totalorder %v4347, 1
      %vm4384 = vcmp.eq.s32.totalorder %v4348, 1
      %vm4385 = vcmp.eq.s32.totalorder %v4349, 1
      %vm4386 = vcmp.eq.s32.totalorder %v4350, 1
      %vm4387 = vcmp.eq.s32.totalorder %v4351, 1
      %vm4388 = vcmp.eq.s32.totalorder %v4352, 1
      %vm4389 = vcmp.eq.s32.totalorder %v4353, 1
      %v4390 = vsel %vm4354, %v2949, 0.0
      %v4391 = vsel %vm4355, %v2950, 0.0
      %v4392 = vsel %vm4356, %v2951, 0.0
      %v4393 = vsel %vm4357, %v2952, 0.0
      %v4394 = vsel %vm4358, %v2953, 0.0
      %v4395 = vsel %vm4359, %v2954, 0.0
      %v4396 = vsel %vm4360, %v2955, 0.0
      %v4397 = vsel %vm4361, %v2956, 0.0
      %v4398 = vsel %vm4362, %v2957, 0.0
      %v4399 = vsel %vm4363, %v2958, 0.0
      %v4400 = vsel %vm4364, %v2959, 0.0
      %v4401 = vsel %vm4365, %v2960, 0.0
      %v4402 = vsel %vm4366, %v2961, 0.0
      %v4403 = vsel %vm4367, %v2962, 0.0
      %v4404 = vsel %vm4368, %v2963, 0.0
      %v4405 = vsel %vm4369, %v2964, 0.0
      %v4406 = vsel %vm4370, %v2965, 0.0
      %v4407 = vsel %vm4371, %v2966, 0.0
      %v4408 = vsel %vm4372, %v2967, 0.0
      %v4409 = vsel %vm4373, %v2968, 0.0
      %v4410 = vsel %vm4374, %v2969, 0.0
      %v4411 = vsel %vm4375, %v2970, 0.0
      %v4412 = vsel %vm4376, %v2971, 0.0
      %v4413 = vsel %vm4377, %v2972, 0.0
      %v4414 = vsel %vm4378, %v2973, 0.0
      %v4415 = vsel %vm4379, %v2974, 0.0
      %v4416 = vsel %vm4380, %v2975, 0.0
      %v4417 = vsel %vm4381, %v2976, 0.0
      %v4418 = vsel %vm4382, %v2977, 0.0
      %v4419 = vsel %vm4383, %v2978, 0.0
      %v4420 = vsel %vm4384, %v2979, 0.0
      %v4421 = vsel %vm4385, %v2980, 0.0
      %v4422 = vsel %vm4386, %v2981, 0.0
      %v4423 = vsel %vm4387, %v2982, 0.0
      %v4424 = vsel %vm4388, %v2983, 0.0
      %v4425 = vsel %vm4389, %v2984, 0.0
      %p4426 = scmp.eq.s32.totalorder %s21, 0
      // Predicated region
      $region29: #{highway_layer.6} parent=27 // pred_check
        %p4427 = pneg %p4426
      $region30: #{highway_layer.6} parent=27 // pred_check_branch
        %4429 = sbr.rel (%p4427) target = $region32
      $region31: #{highway_layer.6} parent=27 // pred_region
        %4430 = vst [vmem:[%s235] sm:$0x1] 0.0
        %4431 = vst [vmem:[%s238] sm:$0x1] 0.0
      $region32: #{highway_layer.6} parent=27 // pred_fallthru
        _
      %v4432 = vld [vmem:[%s235] sm:$0x1]
      %v4433 = vadd.f32 %v4390, %v4391
      %v4434 = vadd.f32 %v4433, %v4392
      %v4435 = vadd.f32 %v4434, %v4393
      %v4436 = vadd.f32 %v4435, %v4394
      %v4437 = vadd.f32 %v4436, %v4395
      %v4438 = vadd.f32 %v4437, %v4396
      %v4439 = vadd.f32 %v4438, %v4397
      %v4440 = vadd.f32 %v4439, %v4398
      %v4441 = vadd.f32 %v4440, %v4399
      %v4442 = vadd.f32 %v4441, %v4400
      %v4443 = vadd.f32 %v4442, %v4401
      %v4444 = vadd.f32 %v4443, %v4402
      %v4445 = vadd.f32 %v4444, %v4403
      %v4446 = vadd.f32 %v4445, %v4404
      %v4447 = vadd.f32 %v4446, %v4405
      %v4448 = vadd.f32 %v4447, %v4406
      %v4449 = vadd.f32 %v4448, %v4407
      %v4450 = vadd.f32 %v4449, %v4408
      %v4451 = vadd.f32 %v4450, %v4409
      %v4452 = vadd.f32 %v4451, %v4410
      %v4453 = vadd.f32 %v4452, %v4411
      %v4454 = vadd.f32 %v4453, %v4412
      %v4455 = vadd.f32 %v4454, %v4413
      %v4456 = vadd.f32 %v4455, %v4414
      %v4457 = vadd.f32 %v4456, %v4415
      %v4458 = vadd.f32 %v4457, %v4416
      %v4459 = vadd.f32 %v4458, %v4417
      %v4460 = vadd.f32 %v4459, %v4418
      %v4461 = vadd.f32 %v4460, %v4419
      %v4462 = vadd.f32 %v4461, %v4420
      %v4463 = vadd.f32 %v4462, %v4421
      %v4464 = vadd.f32 %v4463, %v4422
      %v4465 = vadd.f32 %v4464, %v4423
      %v4466 = vadd.f32 %v4465, %v4424
      %v4467 = vadd.f32 %v4466, %v4425
      %v4468 = vrot.slane %v4467, 4
      %v4469 = vadd.f32 %v4467, %v4468
      %v4470 = vrot.slane %v4469, 2
      %v4471 = vadd.f32 %v4469, %v4470
      %v4472 = vrot.slane %v4471, 1
      %v4473 = vadd.f32 %v4471, %v4472
      %v4474 = vadd.f32 %v4432, %v4473
      %4475 = vst [vmem:[%s235] sm:$0x1] %v4474
      %v4476 = vld [vmem:[%s238] sm:$0x1]
      %v4477 = vmul.f32 %v4390, %v4390
      %v4478 = vmul.f32 %v4391, %v4391
      %v4479 = vmul.f32 %v4392, %v4392
      %v4480 = vmul.f32 %v4393, %v4393
      %v4481 = vmul.f32 %v4394, %v4394
      %v4482 = vmul.f32 %v4395, %v4395
      %v4483 = vmul.f32 %v4396, %v4396
      %v4484 = vmul.f32 %v4397, %v4397
      %v4485 = vmul.f32 %v4398, %v4398
      %v4486 = vmul.f32 %v4399, %v4399
      %v4487 = vmul.f32 %v4400, %v4400
      %v4488 = vmul.f32 %v4401, %v4401
      %v4489 = vmul.f32 %v4402, %v4402
      %v4490 = vmul.f32 %v4403, %v4403
      %v4491 = vmul.f32 %v4404, %v4404
      %v4492 = vmul.f32 %v4405, %v4405
      %v4493 = vmul.f32 %v4406, %v4406
      %v4494 = vmul.f32 %v4407, %v4407
      %v4495 = vmul.f32 %v4408, %v4408
      %v4496 = vmul.f32 %v4409, %v4409
      %v4497 = vmul.f32 %v4410, %v4410
      %v4498 = vmul.f32 %v4411, %v4411
      %v4499 = vmul.f32 %v4412, %v4412
      %v4500 = vmul.f32 %v4413, %v4413
      %v4501 = vmul.f32 %v4414, %v4414
      %v4502 = vmul.f32 %v4415, %v4415
      %v4503 = vmul.f32 %v4416, %v4416
      %v4504 = vmul.f32 %v4417, %v4417
      %v4505 = vmul.f32 %v4418, %v4418
      %v4506 = vmul.f32 %v4419, %v4419
      %v4507 = vmul.f32 %v4420, %v4420
      %v4508 = vmul.f32 %v4421, %v4421
      %v4509 = vmul.f32 %v4422, %v4422
      %v4510 = vmul.f32 %v4423, %v4423
      %v4511 = vmul.f32 %v4424, %v4424
      %v4512 = vmul.f32 %v4425, %v4425
      %v4513 = vadd.f32 %v4477, %v4478
      %v4514 = vadd.f32 %v4513, %v4479
      %v4515 = vadd.f32 %v4514, %v4480
      %v4516 = vadd.f32 %v4515, %v4481
      %v4517 = vadd.f32 %v4516, %v4482
      %v4518 = vadd.f32 %v4517, %v4483
      %v4519 = vadd.f32 %v4518, %v4484
      %v4520 = vadd.f32 %v4519, %v4485
      %v4521 = vadd.f32 %v4520, %v4486
      %v4522 = vadd.f32 %v4521, %v4487
      %v4523 = vadd.f32 %v4522, %v4488
      %v4524 = vadd.f32 %v4523, %v4489
      %v4525 = vadd.f32 %v4524, %v4490
      %v4526 = vadd.f32 %v4525, %v4491
      %v4527 = vadd.f32 %v4526, %v4492
      %v4528 = vadd.f32 %v4527, %v4493
      %v4529 = vadd.f32 %v4528, %v4494
      %v4530 = vadd.f32 %v4529, %v4495
      %v4531 = vadd.f32 %v4530, %v4496
      %v4532 = vadd.f32 %v4531, %v4497
      %v4533 = vadd.f32 %v4532, %v4498
      %v4534 = vadd.f32 %v4533, %v4499
      %v4535 = vadd.f32 %v4534, %v4500
      %v4536 = vadd.f32 %v4535, %v4501
      %v4537 = vadd.f32 %v4536, %v4502
      %v4538 = vadd.f32 %v4537, %v4503
      %v4539 = vadd.f32 %v4538, %v4504
      %v4540 = vadd.f32 %v4539, %v4505
      %v4541 = vadd.f32 %v4540, %v4506
      %v4542 = vadd.f32 %v4541, %v4507
      %v4543 = vadd.f32 %v4542, %v4508
      %v4544 = vadd.f32 %v4543, %v4509
      %v4545 = vadd.f32 %v4544, %v4510
      %v4546 = vadd.f32 %v4545, %v4511
      %v4547 = vadd.f32 %v4546, %v4512
      %v4548 = vrot.slane %v4547, 4
      %v4549 = vadd.f32 %v4547, %v4548
      %v4550 = vrot.slane %v4549, 2
      %v4551 = vadd.f32 %v4549, %v4550
      %v4552 = vrot.slane %v4551, 1
      %v4553 = vadd.f32 %v4551, %v4552
      %v4554 = vadd.f32 %v4476, %v4553
      %4555 = vst [vmem:[%s238] sm:$0x1] %v4554
      %s4556 = sadd.s32 %s20, %s21
      %p4557 = scmp.lt.s32.totalorder %s4556, 1
      %s4558 = scalar_select %p4557, %s4556, 1
      %s4559 = smul.addr %s4558, 36
      %s4560 = smul.addr %s4559, 8
      %s4561 = scalar_lea.vmem %s2, %s4560
      %p4562 = scmp.lt.s32.totalorder %s20, 1
      %s4563 = scalar_select %p4562, %s20, 1
      %s4564 = scalar_lea.vmem %s3, %s4563
      %p4565 = scmp.lt.s32.totalorder %s20, 1
      %s4566 = scalar_select %p4565, %s20, 1
      %s4567 = scalar_lea.vmem %s4, %s4566
      // Predicated region
      $region33: #{highway_layer.6} parent=27 // pred_check
        %p4568 = pneg %p97
      $region34: #{highway_layer.6} parent=27 // pred_check_branch
        %4570 = sbr.rel (%p4568) target = $region36
      $region35: #{highway_layer.6} parent=27 // pred_region
        %s4571 = sadd.s32 %s20, %s21
      $region36: #{highway_layer.6} parent=27 // pred_fallthru
        _
      // Predicated region
      $region37: #{highway_layer.6} parent=27 // pred_check
        %p4572 = pneg %p123
      $region38: #{highway_layer.6} parent=27 // pred_check_branch
        %4574 = sbr.rel (%p4572) target = $region40
      $region39: #{highway_layer.6} parent=27 // pred_region
        _
      $region40: #{highway_layer.6} parent=27 // pred_fallthru
        _
      // Predicated region
      $region41: #{highway_layer.6} parent=27 // pred_check
        %p4575 = pneg %p149
      $region42: #{highway_layer.6} parent=27 // pred_check_branch
        %4577 = sbr.rel (%p4575) target = $region44
      $region43: #{highway_layer.6} parent=27 // pred_region
        _
      $region44: #{highway_layer.6} parent=27 // pred_fallthru
        _
    $region28: #{highway_layer.6} parent=5 // pred_fallthru
      _
    %p4578 = scmp.le.s32.totalorder 2, %s11
    // Predicated region
    $region45: #{highway_layer.6} parent=5 // pred_check
      %p4579 = pneg %p4578
    $region46: #{highway_layer.6} parent=5 // pred_check_branch
      %4581 = sbr.rel (%p4579) target = $region48
    $region47: #{highway_layer.6} parent=5 // pred_region
      %s4582 = ssub.s32 %s11, 2
      // Predicated region
      $region49: #{highway_layer.6} parent=47 // pred_check
        %p4583 = pneg %p103
      $region50: #{highway_layer.6} parent=47 // pred_check_branch
        %4585 = sbr.rel (%p4583) target = $region52
      $region51: #{highway_layer.6} parent=47 // pred_region
        %s4586 = sadd.s32 %s22, %s23
        %p4587 = scmp.lt.s32.totalorder %s4586, 1
        %s4588 = scalar_select %p4587, %s4586, 1
        %s4589 = smul.addr %s4588, 36
        %s4590 = smul.addr %s4589, 8
        %s4591 = scalar_lea.vmem %s2, %s4590
      $region52: #{highway_layer.6} parent=47 // pred_fallthru
        _
      // Predicated region
      $region53: #{highway_layer.6} parent=47 // pred_check
        %p4592 = pneg %p129
      $region54: #{highway_layer.6} parent=47 // pred_check_branch
        %4594 = sbr.rel (%p4592) target = $region56
      $region55: #{highway_layer.6} parent=47 // pred_region
        %p4595 = scmp.lt.s32.totalorder %s22, 1
        %s4596 = scalar_select %p4595, %s22, 1
        %s4597 = scalar_lea.vmem %s3, %s4596
      $region56: #{highway_layer.6} parent=47 // pred_fallthru
        _
      // Predicated region
      $region57: #{highway_layer.6} parent=47 // pred_check
        %p4598 = pneg %p155
      $region58: #{highway_layer.6} parent=47 // pred_check_branch
        %4600 = sbr.rel (%p4598) target = $region60
      $region59: #{highway_layer.6} parent=47 // pred_region
        %p4601 = scmp.lt.s32.totalorder %s22, 1
        %s4602 = scalar_select %p4601, %s22, 1
        %s4603 = scalar_lea.vmem %s4, %s4602
      $region60: #{highway_layer.6} parent=47 // pred_fallthru
        _
    $region48: #{highway_layer.6} parent=5 // pred_fallthru
      _
  $region6: #{highway_layer.6} parent=0 // loop_footer
    %s15 = sadd.s32 1, %s11
  $region7: #{highway_layer.6} parent=0 // loop_footer_branch
    %10 = sbr.rel target = $region3
  $region8: #{highway_layer.6} parent=0 // loop_exit
    _

</llo_original>
